<compile_context>
chip_gen: v6e
topology: v6e:2x2x1
jax: 0.10.0
libtpu: 0.0.40
codegen_flags: <defaults>
</compile_context>

<pallas_src>
import jax
import jax.numpy as jnp
from jax.experimental import pallas as pl
from jax.experimental.pallas import tpu as pltpu


# ------------------------------ helpers ------------------------------------ #

# Safe on all of v5e/v6e/v7x (v7x physical VMEM is 64 MiB; keep <= ~48 MiB there).
# v5e/v6e (128 MiB) could raise this to 64-96 MiB together with tm=1024 for large batches.
_VMEM_LIMIT_BYTES = 32 * 1024 * 1024


def _round_up(x, m):
    return ((x + m - 1) // m) * m


def _compiler_params():
    return pltpu.CompilerParams(
        dimension_semantics=("parallel",),   # 1-D grid over rows -> sharded across TCs on v7x
        vmem_limit_bytes=_VMEM_LIMIT_BYTES,
    )


# ----------------------------- Pallas kernels ------------------------------ #

def conv_matmul_stats_kernel(p_ref, w_ref, y_ref, s1_ref, s2_ref):
    """One M-tile of the im2col matmul + per-tile channel sum / sum-of-squares.

    p_ref:  (TM, K)       bf16 im2col patches
    w_ref:  (K, Cout)     bf16 weights (grid-invariant block, stays resident)
    y_ref:  (TM, Cout)    bf16 pre-BN activations (bf16 halves the HBM round trip)
    s1_ref: (1, 1, Cout)  f32 per-tile channel sum        (from the f32 accumulator)
    s2_ref: (1, 1, Cout)  f32 per-tile channel sum of squares
    """
    acc = jnp.dot(p_ref[...], w_ref[...], preferred_element_type=jnp.float32)
    y_ref[...] = acc.astype(y_ref.dtype)
    cout = acc.shape[1]
    s1_ref[...] = jnp.sum(acc, axis=0, keepdims=True).reshape(1, 1, cout)
    s2_ref[...] = jnp.sum(acc * acc, axis=0, keepdims=True).reshape(1, 1, cout)


def fc_head_kernel(x_ref, w1_ref, b1_ref, w2_ref, b2_ref, o_ref):
    """Fused Linear(6272->256) + ReLU + Linear(256->1) + Sigmoid on one batch tile.

    The 256->1 projection is a VPU multiply + lane reduction (w2 is a (1,256) row vector),
    avoiding a 1-column MXU pass that would use 1/256 of the array on v6e/v7x.
    """
    h = jnp.dot(x_ref[...], w1_ref[...], preferred_element_type=jnp.float32) + b1_ref[...]
    h = jnp.maximum(h, 0.0)
    z = jnp.sum(h * w2_ref[...], axis=1, keepdims=True) + b2_ref[...]
    o_ref[...] = pl.reciprocal(1.0 + jnp.exp(-z), approx=True)


# ------------------------------ glue (JAX) --------------------------------- #

def im2col(x_nhwc, k=3, stride=2, pad=1):
    """Extract conv patches.  Returns ((N*OH*OW, k*k*C), (N, OH, OW)); feature order [kh][kw][c]."""
    xp = jnp.pad(x_nhwc, ((0, 0), (pad, pad), (pad, pad), (0, 0)))
    N, Hp, Wp, C = xp.shape
    OH = (Hp - k) // stride + 1
    OW = (Wp - k) // stride + 1
    cols = []
    for kh in range(k):
        for kw in range(k):
            cols.append(
                jax.lax.slice(
                    xp,
                    (0, kh, kw, 0),
                    (N, kh + stride * (OH - 1) + 1, kw + stride * (OW - 1) + 1, C),
                    (1, stride, stride, 1),
                )
            )
    patches = jnp.concatenate(cols, axis=-1)          # (N, OH, OW, k*k*C)
    return patches.reshape(N * OH * OW, k * k * C), (N, OH, OW)


def conv_bn_lrelu_block(x_nhwc, w_mat, gamma, beta, *, tm_cap=512):
    """Conv(k3,s2,p1,no bias) + BatchNorm2d(batch stats) + LeakyReLU(0.2), Pallas-tiled over M.

    Two passes: (1) im2col matmul (bf16 operands, f32 accum) writing bf16 `y` + per-tile
    channel sums; (2) in-kernel BN finalize + scale/shift + LeakyReLU, bf16 output.
    """
    patches, (N, OH, OW) = im2col(x_nhwc, k=3, stride=2, pad=1)
    M, K = patches.shape
    Cout = w_mat.shape[1]

    # Tile over M.  Cap at tm_cap, but split into >= 2 tiles when there is enough work so both
    # v7x TensorCores get a grid step even at small batch (multiple of 16: bf16 sublane pairs).
    tm = min(tm_cap, _round_up(max(-(-M // 2), 8), 16))
    Mp = _round_up(M, tm)
    if Mp != M:
        patches = jnp.pad(patches, ((0, Mp - M), (0, 0)))  # zero rows -> zero stats contribution
    gm = Mp // tm

    # Pass 1: matmul + per-tile channel sums (bf16 y, f32 partial sums).
    y, s1, s2 = pl.pallas_call(
        conv_matmul_stats_kernel,
        out_shape=(
            jax.ShapeDtypeStruct((Mp, Cout), jnp.bfloat16),
            jax.ShapeDtypeStruct((gm, 1, Cout), jnp.float32),
            jax.ShapeDtypeStruct((gm, 1, Cout), jnp.float32),
        ),
        grid=(gm,),
        in_specs=[
            pl.BlockSpec((tm, K), lambda i: (i, 0)),
            pl.BlockSpec((K, Cout), lambda i: (0, 0)),           # weights resident
        ],
        out_specs=(
            pl.BlockSpec((tm, Cout), lambda i: (i, 0)),
            pl.BlockSpec((1, 1, Cout), lambda i: (i, 0, 0)),
            pl.BlockSpec((1, 1, Cout), lambda i: (i, 0, 0)),
        ),
        compiler_params=_compiler_params(),
    )(patches, w_mat)

    inv_m = 1.0 / float(M)  # true row count (training-mode biased variance), not padded Mp

    def bn_lrelu_kernel(s1_ref, s2_ref, g_ref, b_ref, y_ref, o_ref):
        """BN finalize (from per-tile sums) + scale/shift + LeakyReLU(0.2), all in f32."""
        mean = jnp.sum(s1_ref[...], axis=0) * inv_m                    # (1, Cout)
        ex2 = jnp.sum(s2_ref[...], axis=0) * inv_m
        # E[x^2]-E[x]^2 can go slightly negative in f32; clamp before rsqrt.
        var = jnp.maximum(ex2 - mean * mean, 0.0)
        scale = g_ref[...] * jax.lax.rsqrt(var + 1e-5)
        shift = b_ref[...] - mean * scale
        yhat = y_ref[...].astype(jnp.float32) * scale + shift
        o_ref[...] = jnp.where(yhat >= 0.0, yhat, 0.2 * yhat).astype(o_ref.dtype)

    # Pass 2: fused BN finalize + apply + LeakyReLU, tiled over M, bf16 in / bf16 out.
    out = pl.pallas_call(
        bn_lrelu_kernel,
        out_shape=jax.ShapeDtypeStruct((Mp, Cout), jnp.bfloat16),
        grid=(gm,),
        in_specs=[
            pl.BlockSpec((gm, 1, Cout), lambda i: (0, 0, 0)),    # partial sums (tiny, resident)
            pl.BlockSpec((gm, 1, Cout), lambda i: (0, 0, 0)),
            pl.BlockSpec((1, Cout), lambda i: (0, 0)),           # gamma
            pl.BlockSpec((1, Cout), lambda i: (0, 0)),           # beta
            pl.BlockSpec((tm, Cout), lambda i: (i, 0)),          # y tile
        ],
        out_specs=pl.BlockSpec((tm, Cout), lambda i: (i, 0)),
        compiler_params=_compiler_params(),
    )(s1, s2, gamma, beta, y)

    return out[:M].reshape(N, OH, OW, Cout)


def fc_head(flat, w1m, b1, w2m, b2, *, tn_cap=256):
    """Fused FC head, tiled over the batch with wfc1 kept resident in VMEM (~3.2 MiB bf16)."""
    N, K = flat.shape
    H = w1m.shape[1]
    tn = min(tn_cap, _round_up(max(-(-N // 2), 1), 8))   # >= 2 grid steps when batch is large
    Np = _round_up(N, tn)
    x = flat.astype(jnp.bfloat16)
    if Np != N:
        x = jnp.pad(x, ((0, Np - N), (0, 0)))
    gn = Np // tn

    out = pl.pallas_call(
        fc_head_kernel,
        out_shape=jax.ShapeDtypeStruct((Np, 1), jnp.float32),
        grid=(gn,),
        in_specs=[
            pl.BlockSpec((tn, K), lambda i: (i, 0)),
            pl.BlockSpec((K, H), lambda i: (0, 0)),   # wfc1 resident
            pl.BlockSpec((1, H), lambda i: (0, 0)),   # bfc1
            pl.BlockSpec((1, H), lambda i: (0, 0)),   # wfc2 as a (1,256) row vector
            pl.BlockSpec((1, 1), lambda i: (0, 0)),   # bfc2
        ],
        out_specs=pl.BlockSpec((tn, 1), lambda i: (i, 0)),
        compiler_params=_compiler_params(),
    )(x, w1m, b1, w2m, b2)
    return out[:N]


def prepare_params(params):
    """One-time transform of PyTorch-layout parameters into kernel-ready layout."""
    f32, bf16 = jnp.float32, jnp.bfloat16

    def conv_w_to_mat(w_oihw):  # (Cout,Cin,kh,kw) -> (kh*kw*Cin, Cout), matches im2col order
        Cout, Cin, kh, kw = w_oihw.shape
        return jnp.transpose(w_oihw, (2, 3, 1, 0)).reshape(kh * kw * Cin, Cout)

    # fc1: permute rows from torch NCHW-flatten order [c][h][w] to NHWC order [h][w][c]
    # so the kernel consumes h2.reshape(N, -1) directly (no activation transpose).
    wfc1 = jnp.transpose(params["wfc1"].reshape(128, 7, 7, 256), (1, 2, 0, 3)).reshape(7 * 7 * 128, 256)

    return {
        "w1m": conv_w_to_mat(params["w1"]).astype(bf16),        # (9, 64)   no Cout padding
        "g1": params["g1"].reshape(1, -1).astype(f32),
        "b1": params["b1"].reshape(1, -1).astype(f32),
        "w2m": conv_w_to_mat(params["w2"]).astype(bf16),        # (576, 128) K=576, no Cin padding
        "g2": params["g2"].reshape(1, -1).astype(f32),
        "b2": params["b2"].reshape(1, -1).astype(f32),
        "wfc1m": wfc1.astype(bf16),                             # (6272, 256)
        "bfc1m": params["bfc1"].reshape(1, 256).astype(f32),
        "wfc2m": params["wfc2"].reshape(1, 256).astype(f32),    # row vector for VPU reduce
        "bfc2m": params["bfc2"].reshape(1, 1).astype(f32),
    }


def netd_forward(x_nchw, p):
    # NCHW -> NHWC (Cin = 1); bf16 for MXU operands.
    x = jnp.transpose(x_nchw, (0, 2, 3, 1)).astype(jnp.bfloat16)
    h1 = conv_bn_lrelu_block(x, p["w1m"], p["g1"], p["b1"])    # (N, 14, 14, 64)
    h2 = conv_bn_lrelu_block(h1, p["w2m"], p["g2"], p["b2"])   # (N, 7, 7, 128)
    flat = h2.reshape(h2.shape[0], -1)                         # NHWC flatten; wfc1 rows pre-permuted
    return fc_head(flat, p["wfc1m"], p["bfc1m"], p["wfc2m"], p["bfc2m"])


# ------------------------- pure-JAX f32 reference --------------------------- #

def reference_forward(x_nchw, params):
    def block(x, w, g, b):
        y = jax.lax.conv_general_dilated(
            x, w, window_strides=(2, 2), padding=((1, 1), (1, 1)),
            dimension_numbers=("NCHW", "OIHW", "NCHW"))
        mean = jnp.mean(y, axis=(0, 2, 3), keepdims=True)
        var = jnp.var(y, axis=(0, 2, 3), keepdims=True)
        yhat = (y - mean) * jax.lax.rsqrt(var + 1e-5)
        yhat = yhat * g.reshape(1, -1, 1, 1) + b.reshape(1, -1, 1, 1)
        return jnp.where(yhat >= 0.0, yhat, 0.2 * yhat)

    h = block(x_nchw, params["w1"], params["g1"], params["b1"])
    h = block(h, params["w2"], params["g2"], params["b2"])
    flat = h.reshape(h.shape[0], -1)                      # NCHW flatten = torch.nn.Flatten order
    z = jnp.maximum(flat @ params["wfc1"] + params["bfc1"], 0.0)
    z = z @ params["wfc2"] + params["bfc2"]
    return jax.nn.sigmoid(z)


# --------------------------------- main ------------------------------------ #

if __name__ == "__main__":
    key = jax.random.PRNGKey(0)
    ks = jax.random.split(key, 5)

    # Deterministic synthetic parameters (shapes from NetD.__init__).
    # Linear weights stored as (in_features, out_features).
    params = {
        "w1": 0.10 * jax.random.normal(ks[0], (64, 1, 3, 3), jnp.float32),
        "g1": jnp.ones((64,), jnp.float32),
        "b1": jnp.zeros((64,), jnp.float32),
        "w2": 0.05 * jax.random.normal(ks[1], (128, 64, 3, 3), jnp.float32),
        "g2": jnp.ones((128,), jnp.float32),
        "b2": jnp.zeros((128,), jnp.float32),
        "wfc1": 0.02 * jax.random.normal(ks[2], (128 * 7 * 7, 256), jnp.float32),
        "bfc1": jnp.zeros((256,), jnp.float32),
        "wfc2": 0.05 * jax.random.normal(ks[3], (256, 1), jnp.float32),
        "bfc2": jnp.zeros((1,), jnp.float32),
    }

    # Input spatial size must be 28x28: the FC layer hard-codes 128*7*7 input features.
    x = jax.random.normal(ks[4], (2, 1, 28, 28), jnp.float32)

    kparams = prepare_params(params)
    y = jax.jit(netd_forward)(x, kparams)
    jax.block_until_ready(y)
    assert y.shape == (2, 1)
    assert bool(jnp.all(jnp.isfinite(y)))

    # Compare against a pure-JAX f32 reference (generous tolerance for bf16 matmul operands
    # and the bf16 pre-BN activation round trip).
    y_ref = reference_forward(x, params)
    assert bool(jnp.max(jnp.abs(y - y_ref)) < 5e-2), (y, y_ref)

    print("KERNEL_OK")
</pallas_src>

<mosaic_0001>
module attributes {stable_mosaic.version = 11 : i64} {
  func.func @conv_matmul_stats_kernel(%arg0: i32, %arg1: memref<208x9xbf16, #tpu.memory_space<vmem>>, %arg2: memref<9x64xbf16, #tpu.memory_space<vmem>>, %arg3: memref<208x64xbf16, #tpu.memory_space<vmem>>, %arg4: memref<1x1x64xf32, #tpu.memory_space<vmem>>, %arg5: memref<1x1x64xf32, #tpu.memory_space<vmem>>) attributes {dimension_semantics = [#tpu.dimension_semantics<parallel>], iteration_bounds = array<i64: 2>, scalar_prefetch = 0 : i64, scratch_operands = 0 : i64, tpu.core_type = #tpu.core_type<tc>, window_params = [{transform_indices = @transform_0, window_bounds = array<i64: 208, 9>}, {pipeline_mode = #tpu.pipeline_mode<synchronous>, transform_indices = @transform_1, window_bounds = array<i64: 9, 64>}, {transform_indices = @transform_2, window_bounds = array<i64: 208, 64>}, {transform_indices = @transform_3, window_bounds = array<i64: 1, 1, 64>}, {transform_indices = @transform_4, window_bounds = array<i64: 1, 1, 64>}]} {
    %c0 = arith.constant 0 : index
    %c0_0 = arith.constant 0 : index
    %0 = vector.load %arg1[%c0, %c0_0] : memref<208x9xbf16, #tpu.memory_space<vmem>>, vector<208x9xbf16>
    %c0_1 = arith.constant 0 : index
    %c0_2 = arith.constant 0 : index
    %1 = vector.load %arg2[%c0_1, %c0_2] : memref<9x64xbf16, #tpu.memory_space<vmem>>, vector<9x64xbf16>
    %cst = arith.constant dense<0.000000e+00> : vector<208x64xf32>
    %2 = tpu.matmul %0, %1, %cst {dimension_numbers = #tpu.dot_dimension_numbers<[1], [0], [0], [1], [0, 0, 1, 1], [], []>} : vector<208x9xbf16>, vector<9x64xbf16>, vector<208x64xf32> -> vector<208x64xf32>
    %3 = arith.truncf %2 : vector<208x64xf32> to vector<208x64xbf16>
    %c0_3 = arith.constant 0 : index
    %c0_4 = arith.constant 0 : index
    %4 = vector.load %arg3[%c0_3, %c0_4] : memref<208x64xbf16, #tpu.memory_space<vmem>>, vector<208x64xbf16>
    tpu.vector_store %arg3[%c0_3, %c0_4], %3 {strides = array<i32>} : memref<208x64xbf16, #tpu.memory_space<vmem>>, vector<208x64xbf16>,
    %cst_5 = arith.constant dense<0.000000e+00> : vector<64xf32>
    %5 = vector.multi_reduction <add>, %2, %cst_5 [0] : vector<208x64xf32> to vector<64xf32>
    %6 = vector.shape_cast %5 : vector<64xf32> to vector<1x64xf32>
    %7 = vector.shape_cast %6 : vector<1x64xf32> to vector<1x1x64xf32>
    %c0_6 = arith.constant 0 : index
    %c0_7 = arith.constant 0 : index
    %c0_8 = arith.constant 0 : index
    %8 = vector.load %arg4[%c0_6, %c0_7, %c0_8] : memref<1x1x64xf32, #tpu.memory_space<vmem>>, vector<1x1x64xf32>
    tpu.vector_store %arg4[%c0_6, %c0_7, %c0_8], %7 {strides = array<i32>} : memref<1x1x64xf32, #tpu.memory_space<vmem>>, vector<1x1x64xf32>,
    %9 = arith.mulf %2, %2 : vector<208x64xf32>
    %cst_9 = arith.constant dense<0.000000e+00> : vector<64xf32>
    %10 = vector.multi_reduction <add>, %9, %cst_9 [0] : vector<208x64xf32> to vector<64xf32>
    %11 = vector.shape_cast %10 : vector<64xf32> to vector<1x64xf32>
    %12 = vector.shape_cast %11 : vector<1x64xf32> to vector<1x1x64xf32>
    %c0_10 = arith.constant 0 : index
    %c0_11 = arith.constant 0 : index
    %c0_12 = arith.constant 0 : index
    %13 = vector.load %arg5[%c0_10, %c0_11, %c0_12] : memref<1x1x64xf32, #tpu.memory_space<vmem>>, vector<1x1x64xf32>
    tpu.vector_store %arg5[%c0_10, %c0_11, %c0_12], %12 {strides = array<i32>} : memref<1x1x64xf32, #tpu.memory_space<vmem>>, vector<1x1x64xf32>,
    return
  }
  func.func @transform_0(%arg0: i32) -> (i32, i32) {
    %c0_i32 = arith.constant 0 : i32
    %c0_i32_0 = arith.constant 0 : i32
    return %arg0, %c0_i32 : i32, i32
  }
  func.func @transform_1(%arg0: i32) -> (i32, i32) {
    %c0_i32 = arith.constant 0 : i32
    %c0_i32_0 = arith.constant 0 : i32
    %c0_i32_1 = arith.constant 0 : i32
    return %c0_i32, %c0_i32_0 : i32, i32
  }
  func.func @transform_2(%arg0: i32) -> (i32, i32) {
    %c0_i32 = arith.constant 0 : i32
    %c0_i32_0 = arith.constant 0 : i32
    return %arg0, %c0_i32 : i32, i32
  }
  func.func @transform_3(%arg0: i32) -> (i32, i32, i32) {
    %c0_i32 = arith.constant 0 : i32
    %c0_i32_0 = arith.constant 0 : i32
    %c0_i32_1 = arith.constant 0 : i32
    return %arg0, %c0_i32, %c0_i32_0 : i32, i32, i32
  }
  func.func @transform_4(%arg0: i32) -> (i32, i32, i32) {
    %c0_i32 = arith.constant 0 : i32
    %c0_i32_0 = arith.constant 0 : i32
    %c0_i32_1 = arith.constant 0 : i32
    return %arg0, %c0_i32, %c0_i32_0 : i32, i32, i32
  }
}

module attributes {stable_mosaic.version = 11 : i64} {
  func.func @bn_lrelu_kernel(%arg0: i32, %arg1: memref<2x1x64xf32, #tpu.memory_space<vmem>>, %arg2: memref<2x1x64xf32, #tpu.memory_space<vmem>>, %arg3: memref<1x64xf32, #tpu.memory_space<vmem>>, %arg4: memref<1x64xf32, #tpu.memory_space<vmem>>, %arg5: memref<208x64xbf16, #tpu.memory_space<vmem>>, %arg6: memref<208x64xbf16, #tpu.memory_space<vmem>>) attributes {dimension_semantics = [#tpu.dimension_semantics<parallel>], iteration_bounds = array<i64: 2>, scalar_prefetch = 0 : i64, scratch_operands = 0 : i64, tpu.core_type = #tpu.core_type<tc>, window_params = [{pipeline_mode = #tpu.pipeline_mode<synchronous>, transform_indices = @transform_0, window_bounds = array<i64: 2, 1, 64>}, {pipeline_mode = #tpu.pipeline_mode<synchronous>, transform_indices = @transform_1, window_bounds = array<i64: 2, 1, 64>}, {pipeline_mode = #tpu.pipeline_mode<synchronous>, transform_indices = @transform_2, window_bounds = array<i64: 1, 64>}, {pipeline_mode = #tpu.pipeline_mode<synchronous>, transform_indices = @transform_3, window_bounds = array<i64: 1, 64>}, {transform_indices = @transform_4, window_bounds = array<i64: 208, 64>}, {transform_indices = @transform_5, window_bounds = array<i64: 208, 64>}]} {
    %c0 = arith.constant 0 : index
    %c0_0 = arith.constant 0 : index
    %c0_1 = arith.constant 0 : index
    %0 = vector.load %arg1[%c0, %c0_0, %c0_1] : memref<2x1x64xf32, #tpu.memory_space<vmem>>, vector<2x1x64xf32>
    %cst = arith.constant dense<0.000000e+00> : vector<1x64xf32>
    %1 = vector.multi_reduction <add>, %0, %cst [0] : vector<2x1x64xf32> to vector<1x64xf32>
    %cst_2 = arith.constant 0.00255102036 : f32
    %2 = vector.broadcast %cst_2 : f32 to vector<1x64xf32>
    %3 = arith.mulf %1, %2 : vector<1x64xf32>
    %c0_3 = arith.constant 0 : index
    %c0_4 = arith.constant 0 : index
    %c0_5 = arith.constant 0 : index
    %4 = vector.load %arg2[%c0_3, %c0_4, %c0_5] : memref<2x1x64xf32, #tpu.memory_space<vmem>>, vector<2x1x64xf32>
    %cst_6 = arith.constant dense<0.000000e+00> : vector<1x64xf32>
    %5 = vector.multi_reduction <add>, %4, %cst_6 [0] : vector<2x1x64xf32> to vector<1x64xf32>
    %cst_7 = arith.constant 0.00255102036 : f32
    %6 = vector.broadcast %cst_7 : f32 to vector<1x64xf32>
    %7 = arith.mulf %5, %6 : vector<1x64xf32>
    %8 = arith.mulf %3, %3 : vector<1x64xf32>
    %9 = arith.subf %7, %8 : vector<1x64xf32>
    %cst_8 = arith.constant 0.000000e+00 : f32
    %10 = vector.broadcast %cst_8 : f32 to vector<1x64xf32>
    %11 = arith.maximumf %9, %10 : vector<1x64xf32>
    %c0_9 = arith.constant 0 : index
    %c0_10 = arith.constant 0 : index
    %12 = vector.load %arg3[%c0_9, %c0_10] : memref<1x64xf32, #tpu.memory_space<vmem>>, vector<1x64xf32>
    %cst_11 = arith.constant 9.99999974E-6 : f32
    %13 = vector.broadcast %cst_11 : f32 to vector<1x64xf32>
    %14 = arith.addf %11, %13 : vector<1x64xf32>
    %15 = math.rsqrt %14 : vector<1x64xf32>
    %16 = arith.mulf %12, %15 : vector<1x64xf32>
    %c0_12 = arith.constant 0 : index
    %c0_13 = arith.constant 0 : index
    %17 = vector.load %arg4[%c0_12, %c0_13] : memref<1x64xf32, #tpu.memory_space<vmem>>, vector<1x64xf32>
    %18 = arith.mulf %3, %16 : vector<1x64xf32>
    %19 = arith.subf %17, %18 : vector<1x64xf32>
    %c0_14 = arith.constant 0 : index
    %c0_15 = arith.constant 0 : index
    %20 = vector.load %arg5[%c0_14, %c0_15] : memref<208x64xbf16, #tpu.memory_space<vmem>>, vector<208x64xbf16>
    %21 = arith.extf %20 : vector<208x64xbf16> to vector<208x64xf32>
    %22 = vector.broadcast %16 : vector<1x64xf32> to vector<208x64xf32>
    %23 = arith.mulf %21, %22 : vector<208x64xf32>
    %24 = vector.broadcast %19 : vector<1x64xf32> to vector<208x64xf32>
    %25 = arith.addf %23, %24 : vector<208x64xf32>
    %cst_16 = arith.constant 0.000000e+00 : f32
    %26 = vector.broadcast %cst_16 : f32 to vector<208x64xf32>
    %27 = arith.cmpf oge, %25, %26 : vector<208x64xf32>
    %cst_17 = arith.constant 2.000000e-01 : f32
    %28 = vector.broadcast %cst_17 : f32 to vector<208x64xf32>
    %29 = arith.mulf %28, %25 : vector<208x64xf32>
    %30 = arith.select %27, %25, %29 : vector<208x64xi1>, vector<208x64xf32>
    %31 = arith.truncf %30 : vector<208x64xf32> to vector<208x64xbf16>
    %c0_18 = arith.constant 0 : index
    %c0_19 = arith.constant 0 : index
    %32 = vector.load %arg6[%c0_18, %c0_19] : memref<208x64xbf16, #tpu.memory_space<vmem>>, vector<208x64xbf16>
    tpu.vector_store %arg6[%c0_18, %c0_19], %31 {strides = array<i32>} : memref<208x64xbf16, #tpu.memory_space<vmem>>, vector<208x64xbf16>,
    return
  }
  func.func @transform_0(%arg0: i32) -> (i32, i32, i32) {
    %c0_i32 = arith.constant 0 : i32
    %c0_i32_0 = arith.constant 0 : i32
    %c0_i32_1 = arith.constant 0 : i32
    %c0_i32_2 = arith.constant 0 : i32
    return %c0_i32, %c0_i32_0, %c0_i32_1 : i32, i32, i32
  }
  func.func @transform_1(%arg0: i32) -> (i32, i32, i32) {
    %c0_i32 = arith.constant 0 : i32
    %c0_i32_0 = arith.constant 0 : i32
    %c0_i32_1 = arith.constant 0 : i32
    %c0_i32_2 = arith.constant 0 : i32
    return %c0_i32, %c0_i32_0, %c0_i32_1 : i32, i32, i32
  }
  func.func @transform_2(%arg0: i32) -> (i32, i32) {
    %c0_i32 = arith.constant 0 : i32
    %c0_i32_0 = arith.constant 0 : i32
    %c0_i32_1 = arith.constant 0 : i32
    return %c0_i32, %c0_i32_0 : i32, i32
  }
  func.func @transform_3(%arg0: i32) -> (i32, i32) {
    %c0_i32 = arith.constant 0 : i32
    %c0_i32_0 = arith.constant 0 : i32
    %c0_i32_1 = arith.constant 0 : i32
    return %c0_i32, %c0_i32_0 : i32, i32
  }
  func.func @transform_4(%arg0: i32) -> (i32, i32) {
    %c0_i32 = arith.constant 0 : i32
    %c0_i32_0 = arith.constant 0 : i32
    return %arg0, %c0_i32 : i32, i32
  }
  func.func @transform_5(%arg0: i32) -> (i32, i32) {
    %c0_i32 = arith.constant 0 : i32
    %c0_i32_0 = arith.constant 0 : i32
    return %arg0, %c0_i32 : i32, i32
  }
}

module attributes {stable_mosaic.version = 11 : i64} {
  func.func @conv_matmul_stats_kernel(%arg0: i32, %arg1: memref<64x576xbf16, #tpu.memory_space<vmem>>, %arg2: memref<576x128xbf16, #tpu.memory_space<vmem>>, %arg3: memref<64x128xbf16, #tpu.memory_space<vmem>>, %arg4: memref<1x1x128xf32, #tpu.memory_space<vmem>>, %arg5: memref<1x1x128xf32, #tpu.memory_space<vmem>>) attributes {dimension_semantics = [#tpu.dimension_semantics<parallel>], iteration_bounds = array<i64: 2>, scalar_prefetch = 0 : i64, scratch_operands = 0 : i64, tpu.core_type = #tpu.core_type<tc>, window_params = [{transform_indices = @transform_0, window_bounds = array<i64: 64, 576>}, {pipeline_mode = #tpu.pipeline_mode<synchronous>, transform_indices = @transform_1, window_bounds = array<i64: 576, 128>}, {transform_indices = @transform_2, window_bounds = array<i64: 64, 128>}, {transform_indices = @transform_3, window_bounds = array<i64: 1, 1, 128>}, {transform_indices = @transform_4, window_bounds = array<i64: 1, 1, 128>}]} {
    %c0 = arith.constant 0 : index
    %c0_0 = arith.constant 0 : index
    %0 = vector.load %arg1[%c0, %c0_0] : memref<64x576xbf16, #tpu.memory_space<vmem>>, vector<64x576xbf16>
    %c0_1 = arith.constant 0 : index
    %c0_2 = arith.constant 0 : index
    %1 = vector.load %arg2[%c0_1, %c0_2] : memref<576x128xbf16, #tpu.memory_space<vmem>>, vector<576x128xbf16>
    %cst = arith.constant dense<0.000000e+00> : vector<64x128xf32>
    %2 = tpu.matmul %0, %1, %cst {dimension_numbers = #tpu.dot_dimension_numbers<[1], [0], [0], [1], [0, 0, 1, 1], [], []>} : vector<64x576xbf16>, vector<576x128xbf16>, vector<64x128xf32> -> vector<64x128xf32>
    %3 = arith.truncf %2 : vector<64x128xf32> to vector<64x128xbf16>
    %c0_3 = arith.constant 0 : index
    %c0_4 = arith.constant 0 : index
    %4 = vector.load %arg3[%c0_3, %c0_4] : memref<64x128xbf16, #tpu.memory_space<vmem>>, vector<64x128xbf16>
    tpu.vector_store %arg3[%c0_3, %c0_4], %3 {strides = array<i32>} : memref<64x128xbf16, #tpu.memory_space<vmem>>, vector<64x128xbf16>,
    %cst_5 = arith.constant dense<0.000000e+00> : vector<128xf32>
    %5 = vector.multi_reduction <add>, %2, %cst_5 [0] : vector<64x128xf32> to vector<128xf32>
    %6 = vector.shape_cast %5 : vector<128xf32> to vector<1x128xf32>
    %7 = vector.shape_cast %6 : vector<1x128xf32> to vector<1x1x128xf32>
    %c0_6 = arith.constant 0 : index
    %c0_7 = arith.constant 0 : index
    %c0_8 = arith.constant 0 : index
    %8 = vector.load %arg4[%c0_6, %c0_7, %c0_8] : memref<1x1x128xf32, #tpu.memory_space<vmem>>, vector<1x1x128xf32>
    tpu.vector_store %arg4[%c0_6, %c0_7, %c0_8], %7 {strides = array<i32>} : memref<1x1x128xf32, #tpu.memory_space<vmem>>, vector<1x1x128xf32>,
    %9 = arith.mulf %2, %2 : vector<64x128xf32>
    %cst_9 = arith.constant dense<0.000000e+00> : vector<128xf32>
    %10 = vector.multi_reduction <add>, %9, %cst_9 [0] : vector<64x128xf32> to vector<128xf32>
    %11 = vector.shape_cast %10 : vector<128xf32> to vector<1x128xf32>
    %12 = vector.shape_cast %11 : vector<1x128xf32> to vector<1x1x128xf32>
    %c0_10 = arith.constant 0 : index
    %c0_11 = arith.constant 0 : index
    %c0_12 = arith.constant 0 : index
    %13 = vector.load %arg5[%c0_10, %c0_11, %c0_12] : memref<1x1x128xf32, #tpu.memory_space<vmem>>, vector<1x1x128xf32>
    tpu.vector_store %arg5[%c0_10, %c0_11, %c0_12], %12 {strides = array<i32>} : memref<1x1x128xf32, #tpu.memory_space<vmem>>, vector<1x1x128xf32>,
    return
  }
  func.func @transform_0(%arg0: i32) -> (i32, i32) {
    %c0_i32 = arith.constant 0 : i32
    %c0_i32_0 = arith.constant 0 : i32
    return %arg0, %c0_i32 : i32, i32
  }
  func.func @transform_1(%arg0: i32) -> (i32, i32) {
    %c0_i32 = arith.constant 0 : i32
    %c0_i32_0 = arith.constant 0 : i32
    %c0_i32_1 = arith.constant 0 : i32
    return %c0_i32, %c0_i32_0 : i32, i32
  }
  func.func @transform_2(%arg0: i32) -> (i32, i32) {
    %c0_i32 = arith.constant 0 : i32
    %c0_i32_0 = arith.constant 0 : i32
    return %arg0, %c0_i32 : i32, i32
  }
  func.func @transform_3(%arg0: i32) -> (i32, i32, i32) {
    %c0_i32 = arith.constant 0 : i32
    %c0_i32_0 = arith.constant 0 : i32
    %c0_i32_1 = arith.constant 0 : i32
    return %arg0, %c0_i32, %c0_i32_0 : i32, i32, i32
  }
  func.func @transform_4(%arg0: i32) -> (i32, i32, i32) {
    %c0_i32 = arith.constant 0 : i32
    %c0_i32_0 = arith.constant 0 : i32
    %c0_i32_1 = arith.constant 0 : i32
    return %arg0, %c0_i32, %c0_i32_0 : i32, i32, i32
  }
}

module attributes {stable_mosaic.version = 11 : i64} {
  func.func @bn_lrelu_kernel(%arg0: i32, %arg1: memref<2x1x128xf32, #tpu.memory_space<vmem>>, %arg2: memref<2x1x128xf32, #tpu.memory_space<vmem>>, %arg3: memref<1x128xf32, #tpu.memory_space<vmem>>, %arg4: memref<1x128xf32, #tpu.memory_space<vmem>>, %arg5: memref<64x128xbf16, #tpu.memory_space<vmem>>, %arg6: memref<64x128xbf16, #tpu.memory_space<vmem>>) attributes {dimension_semantics = [#tpu.dimension_semantics<parallel>], iteration_bounds = array<i64: 2>, scalar_prefetch = 0 : i64, scratch_operands = 0 : i64, tpu.core_type = #tpu.core_type<tc>, window_params = [{pipeline_mode = #tpu.pipeline_mode<synchronous>, transform_indices = @transform_0, window_bounds = array<i64: 2, 1, 128>}, {pipeline_mode = #tpu.pipeline_mode<synchronous>, transform_indices = @transform_1, window_bounds = array<i64: 2, 1, 128>}, {pipeline_mode = #tpu.pipeline_mode<synchronous>, transform_indices = @transform_2, window_bounds = array<i64: 1, 128>}, {pipeline_mode = #tpu.pipeline_mode<synchronous>, transform_indices = @transform_3, window_bounds = array<i64: 1, 128>}, {transform_indices = @transform_4, window_bounds = array<i64: 64, 128>}, {transform_indices = @transform_5, window_bounds = array<i64: 64, 128>}]} {
    %c0 = arith.constant 0 : index
    %c0_0 = arith.constant 0 : index
    %c0_1 = arith.constant 0 : index
    %0 = vector.load %arg1[%c0, %c0_0, %c0_1] : memref<2x1x128xf32, #tpu.memory_space<vmem>>, vector<2x1x128xf32>
    %cst = arith.constant dense<0.000000e+00> : vector<1x128xf32>
    %1 = vector.multi_reduction <add>, %0, %cst [0] : vector<2x1x128xf32> to vector<1x128xf32>
    %cst_2 = arith.constant 0.0102040814 : f32
    %2 = vector.broadcast %cst_2 : f32 to vector<1x128xf32>
    %3 = arith.mulf %1, %2 : vector<1x128xf32>
    %c0_3 = arith.constant 0 : index
    %c0_4 = arith.constant 0 : index
    %c0_5 = arith.constant 0 : index
    %4 = vector.load %arg2[%c0_3, %c0_4, %c0_5] : memref<2x1x128xf32, #tpu.memory_space<vmem>>, vector<2x1x128xf32>
    %cst_6 = arith.constant dense<0.000000e+00> : vector<1x128xf32>
    %5 = vector.multi_reduction <add>, %4, %cst_6 [0] : vector<2x1x128xf32> to vector<1x128xf32>
    %cst_7 = arith.constant 0.0102040814 : f32
    %6 = vector.broadcast %cst_7 : f32 to vector<1x128xf32>
    %7 = arith.mulf %5, %6 : vector<1x128xf32>
    %8 = arith.mulf %3, %3 : vector<1x128xf32>
    %9 = arith.subf %7, %8 : vector<1x128xf32>
    %cst_8 = arith.constant 0.000000e+00 : f32
    %10 = vector.broadcast %cst_8 : f32 to vector<1x128xf32>
    %11 = arith.maximumf %9, %10 : vector<1x128xf32>
    %c0_9 = arith.constant 0 : index
    %c0_10 = arith.constant 0 : index
    %12 = vector.load %arg3[%c0_9, %c0_10] : memref<1x128xf32, #tpu.memory_space<vmem>>, vector<1x128xf32>
    %cst_11 = arith.constant 9.99999974E-6 : f32
    %13 = vector.broadcast %cst_11 : f32 to vector<1x128xf32>
    %14 = arith.addf %11, %13 : vector<1x128xf32>
    %15 = math.rsqrt %14 : vector<1x128xf32>
    %16 = arith.mulf %12, %15 : vector<1x128xf32>
    %c0_12 = arith.constant 0 : index
    %c0_13 = arith.constant 0 : index
    %17 = vector.load %arg4[%c0_12, %c0_13] : memref<1x128xf32, #tpu.memory_space<vmem>>, vector<1x128xf32>
    %18 = arith.mulf %3, %16 : vector<1x128xf32>
    %19 = arith.subf %17, %18 : vector<1x128xf32>
    %c0_14 = arith.constant 0 : index
    %c0_15 = arith.constant 0 : index
    %20 = vector.load %arg5[%c0_14, %c0_15] : memref<64x128xbf16, #tpu.memory_space<vmem>>, vector<64x128xbf16>
    %21 = arith.extf %20 : vector<64x128xbf16> to vector<64x128xf32>
    %22 = vector.broadcast %16 : vector<1x128xf32> to vector<64x128xf32>
    %23 = arith.mulf %21, %22 : vector<64x128xf32>
    %24 = vector.broadcast %19 : vector<1x128xf32> to vector<64x128xf32>
    %25 = arith.addf %23, %24 : vector<64x128xf32>
    %cst_16 = arith.constant 0.000000e+00 : f32
    %26 = vector.broadcast %cst_16 : f32 to vector<64x128xf32>
    %27 = arith.cmpf oge, %25, %26 : vector<64x128xf32>
    %cst_17 = arith.constant 2.000000e-01 : f32
    %28 = vector.broadcast %cst_17 : f32 to vector<64x128xf32>
    %29 = arith.mulf %28, %25 : vector<64x128xf32>
    %30 = arith.select %27, %25, %29 : vector<64x128xi1>, vector<64x128xf32>
    %31 = arith.truncf %30 : vector<64x128xf32> to vector<64x128xbf16>
    %c0_18 = arith.constant 0 : index
    %c0_19 = arith.constant 0 : index
    %32 = vector.load %arg6[%c0_18, %c0_19] : memref<64x128xbf16, #tpu.memory_space<vmem>>, vector<64x128xbf16>
    tpu.vector_store %arg6[%c0_18, %c0_19], %31 {strides = array<i32>} : memref<64x128xbf16, #tpu.memory_space<vmem>>, vector<64x128xbf16>,
    return
  }
  func.func @transform_0(%arg0: i32) -> (i32, i32, i32) {
    %c0_i32 = arith.constant 0 : i32
    %c0_i32_0 = arith.constant 0 : i32
    %c0_i32_1 = arith.constant 0 : i32
    %c0_i32_2 = arith.constant 0 : i32
    return %c0_i32, %c0_i32_0, %c0_i32_1 : i32, i32, i32
  }
  func.func @transform_1(%arg0: i32) -> (i32, i32, i32) {
    %c0_i32 = arith.constant 0 : i32
    %c0_i32_0 = arith.constant 0 : i32
    %c0_i32_1 = arith.constant 0 : i32
    %c0_i32_2 = arith.constant 0 : i32
    return %c0_i32, %c0_i32_0, %c0_i32_1 : i32, i32, i32
  }
  func.func @transform_2(%arg0: i32) -> (i32, i32) {
    %c0_i32 = arith.constant 0 : i32
    %c0_i32_0 = arith.constant 0 : i32
    %c0_i32_1 = arith.constant 0 : i32
    return %c0_i32, %c0_i32_0 : i32, i32
  }
  func.func @transform_3(%arg0: i32) -> (i32, i32) {
    %c0_i32 = arith.constant 0 : i32
    %c0_i32_0 = arith.constant 0 : i32
    %c0_i32_1 = arith.constant 0 : i32
    return %c0_i32, %c0_i32_0 : i32, i32
  }
  func.func @transform_4(%arg0: i32) -> (i32, i32) {
    %c0_i32 = arith.constant 0 : i32
    %c0_i32_0 = arith.constant 0 : i32
    return %arg0, %c0_i32 : i32, i32
  }
  func.func @transform_5(%arg0: i32) -> (i32, i32) {
    %c0_i32 = arith.constant 0 : i32
    %c0_i32_0 = arith.constant 0 : i32
    return %arg0, %c0_i32 : i32, i32
  }
}

module attributes {stable_mosaic.version = 11 : i64} {
  func.func @fc_head_kernel(%arg0: i32, %arg1: memref<8x6272xbf16, #tpu.memory_space<vmem>>, %arg2: memref<6272x256xbf16, #tpu.memory_space<vmem>>, %arg3: memref<1x256xf32, #tpu.memory_space<vmem>>, %arg4: memref<1x256xf32, #tpu.memory_space<vmem>>, %arg5: memref<1x1xf32, #tpu.memory_space<vmem>>, %arg6: memref<8x1xf32, #tpu.memory_space<vmem>>) attributes {dimension_semantics = [#tpu.dimension_semantics<parallel>], iteration_bounds = array<i64: 1>, scalar_prefetch = 0 : i64, scratch_operands = 0 : i64, tpu.core_type = #tpu.core_type<tc>, window_params = [{transform_indices = @transform_0, window_bounds = array<i64: 8, 6272>}, {pipeline_mode = #tpu.pipeline_mode<synchronous>, transform_indices = @transform_1, window_bounds = array<i64: 6272, 256>}, {pipeline_mode = #tpu.pipeline_mode<synchronous>, transform_indices = @transform_2, window_bounds = array<i64: 1, 256>}, {pipeline_mode = #tpu.pipeline_mode<synchronous>, transform_indices = @transform_3, window_bounds = array<i64: 1, 256>}, {pipeline_mode = #tpu.pipeline_mode<synchronous>, transform_indices = @transform_4, window_bounds = array<i64: 1, 1>}, {transform_indices = @transform_5, window_bounds = array<i64: 8, 1>}]} {
    %c0 = arith.constant 0 : index
    %c0_0 = arith.constant 0 : index
    %0 = vector.load %arg1[%c0, %c0_0] : memref<8x6272xbf16, #tpu.memory_space<vmem>>, vector<8x6272xbf16>
    %c0_1 = arith.constant 0 : index
    %c0_2 = arith.constant 0 : index
    %1 = vector.load %arg2[%c0_1, %c0_2] : memref<6272x256xbf16, #tpu.memory_space<vmem>>, vector<6272x256xbf16>
    %cst = arith.constant dense<0.000000e+00> : vector<8x256xf32>
    %2 = tpu.matmul %0, %1, %cst {dimension_numbers = #tpu.dot_dimension_numbers<[1], [0], [0], [1], [0, 0, 1, 1], [], []>} : vector<8x6272xbf16>, vector<6272x256xbf16>, vector<8x256xf32> -> vector<8x256xf32>
    %c0_3 = arith.constant 0 : index
    %c0_4 = arith.constant 0 : index
    %3 = vector.load %arg3[%c0_3, %c0_4] : memref<1x256xf32, #tpu.memory_space<vmem>>, vector<1x256xf32>
    %4 = vector.broadcast %3 : vector<1x256xf32> to vector<8x256xf32>
    %5 = arith.addf %2, %4 : vector<8x256xf32>
    %cst_5 = arith.constant 0.000000e+00 : f32
    %6 = vector.broadcast %cst_5 : f32 to vector<8x256xf32>
    %7 = arith.maximumf %5, %6 : vector<8x256xf32>
    %c0_6 = arith.constant 0 : index
    %c0_7 = arith.constant 0 : index
    %8 = vector.load %arg4[%c0_6, %c0_7] : memref<1x256xf32, #tpu.memory_space<vmem>>, vector<1x256xf32>
    %9 = vector.broadcast %8 : vector<1x256xf32> to vector<8x256xf32>
    %10 = arith.mulf %7, %9 : vector<8x256xf32>
    %cst_8 = arith.constant dense<0.000000e+00> : vector<8xf32>
    %11 = vector.multi_reduction <add>, %10, %cst_8 [1] : vector<8x256xf32> to vector<8xf32>
    %12 = vector.shape_cast %11 : vector<8xf32> to vector<8x1xf32>
    %c0_9 = arith.constant 0 : index
    %c0_10 = arith.constant 0 : index
    %13 = vector.load %arg5[%c0_9, %c0_10] : memref<1x1xf32, #tpu.memory_space<vmem>>, vector<1x1xf32>
    %14 = vector.broadcast %13 : vector<1x1xf32> to vector<8x1xf32>
    %15 = arith.addf %12, %14 : vector<8x1xf32>
    %cst_11 = arith.constant 0.000000e+00 : f32
    %16 = vector.broadcast %cst_11 : f32 to vector<8x1xf32>
    %17 = arith.subf %16, %15 : vector<8x1xf32>
    %18 = math.exp %17 : vector<8x1xf32>
    %cst_12 = arith.constant 1.000000e+00 : f32
    %19 = vector.broadcast %cst_12 : f32 to vector<8x1xf32>
    %20 = arith.addf %19, %18 : vector<8x1xf32>
    %21 = tpu.reciprocal %20 {approx = true} : vector<8x1xf32> -> vector<8x1xf32>
    %c0_13 = arith.constant 0 : index
    %c0_14 = arith.constant 0 : index
    %22 = vector.load %arg6[%c0_13, %c0_14] : memref<8x1xf32, #tpu.memory_space<vmem>>, vector<8x1xf32>
    tpu.vector_store %arg6[%c0_13, %c0_14], %21 {strides = array<i32>} : memref<8x1xf32, #tpu.memory_space<vmem>>, vector<8x1xf32>,
    return
  }
  func.func @transform_0(%arg0: i32) -> (i32, i32) {
    %c0_i32 = arith.constant 0 : i32
    %c0_i32_0 = arith.constant 0 : i32
    return %arg0, %c0_i32 : i32, i32
  }
  func.func @transform_1(%arg0: i32) -> (i32, i32) {
    %c0_i32 = arith.constant 0 : i32
    %c0_i32_0 = arith.constant 0 : i32
    %c0_i32_1 = arith.constant 0 : i32
    return %c0_i32, %c0_i32_0 : i32, i32
  }
  func.func @transform_2(%arg0: i32) -> (i32, i32) {
    %c0_i32 = arith.constant 0 : i32
    %c0_i32_0 = arith.constant 0 : i32
    %c0_i32_1 = arith.constant 0 : i32
    return %c0_i32, %c0_i32_0 : i32, i32
  }
  func.func @transform_3(%arg0: i32) -> (i32, i32) {
    %c0_i32 = arith.constant 0 : i32
    %c0_i32_0 = arith.constant 0 : i32
    %c0_i32_1 = arith.constant 0 : i32
    return %c0_i32, %c0_i32_0 : i32, i32
  }
  func.func @transform_4(%arg0: i32) -> (i32, i32) {
    %c0_i32 = arith.constant 0 : i32
    %c0_i32_0 = arith.constant 0 : i32
    %c0_i32_1 = arith.constant 0 : i32
    return %c0_i32, %c0_i32_0 : i32, i32
  }
  func.func @transform_5(%arg0: i32) -> (i32, i32) {
    %c0_i32 = arith.constant 0 : i32
    %c0_i32_0 = arith.constant 0 : i32
    return %arg0, %c0_i32 : i32, i32
  }
}

</mosaic_0001>

<llo_original>
// kernel: netd_forward.6
$region0: #{netd_forward.6}
  #allocation0 [shape = 'u32[]', space=smem, size = 0x4, offset = 0x4, fixed_abs, tag = 'smem constant byte address 0x4 - core index']
  #allocation1 [shape = 'u32[144,128]{1,0:T(1,128)}', space=vmem, size = 0x12000, scoped, tag = 'internal scratch']
  %s0 = inlined_call_operand.vmem [shape: f32[2,1,64], index: 0, kind: input, shape index: {}]
  %s1 = inlined_call_operand.vmem [shape: f32[2,1,64], index: 1, kind: input, shape index: {}]
  %s2 = inlined_call_operand.hbm [shape: f32[1,64], index: 2, kind: input, shape index: {}]
  %s3 = inlined_call_operand.hbm [shape: f32[1,64], index: 3, kind: input, shape index: {}]
  %s4 = inlined_call_operand.vmem [shape: bf16[416,64], index: 4, kind: input, shape index: {}]
  %s5 = inlined_call_operand.vmem [shape: bf16[416,64], index: 5, kind: output, shape index: {}]
  %s6 = sld [smem:[#allocation0]]
  $region61: #{netd_forward.6} parent=0
    _
  %s8 = ssub.s32 1, %s6
  %s9 = scalar_select 0, %s8, %s6
  $region1: #{netd_forward.6} parent=0
    #allocation2 [shape = 'u8[512]{0}', space=vmem, size = 0x400, scoped, tag = 'input window, operand 2, single buffered']
    #allocation3 [shape = 's32[2]{0}', space=sflag, size = 0x8, scoped, tag = 'scoped memory for netd_forward.6']
    #allocation4 [shape = 'u8[512]{0}', space=vmem, size = 0x400, scoped, tag = 'input window, operand 3, single buffered']
    #allocation5 [shape = 's32[1]{0}', space=sflag, size = 0x4, scoped, tag = 'scoped memory for netd_forward.6']
    %10 = vsyncpa [#allocation3], 0
    %11 = vsyncpa [#allocation5], 0
    loop: start=0, step=1, limit=4
    $region2: #{netd_forward.6} parent=1 // loop_pre_header
      _
    $region3: #{netd_forward.6} parent=1 // loop_header
      %s13 = sphi 0, %s17
      %p14 = scmp.ge.s32.totalorder %s13, 4
      %s21 = sphi 0, %s21
      %s23 = sphi 0, %s21
      %s24 = sphi 0, %s23
      %s38 = sphi 0, %s24
      %s42 = sphi 0, %s42
      %s44 = sphi 0, %s42
      %s45 = sphi 0, %s44
      %s59 = sphi 0, %s45
      %s63 = sphi 0, %s63
      %s65 = sphi 0, %s63
      %s66 = sphi 0, %s65
      %s80 = sphi 0, %s66
      %s84 = sphi 0, %s84
      %s86 = sphi 0, %s84
      %s87 = sphi 0, %s86
      %s101 = sphi 0, %s87
      %s107 = sphi 0, %s109
      %s110 = sphi 0, %s107
      %s111 = sphi 0, %s110
      %s127 = sphi 0, %s111
      %s133 = sphi 0, %s135
      %s136 = sphi 0, %s133
      %s137 = sphi 0, %s136
      %s153 = sphi 0, %s137
    $region4: #{netd_forward.6} parent=1 // loop_header_branch
      %16 = sbr.rel (%p14) target = $region8
    $region5: #{netd_forward.6} parent=1 // loop_body
      %s18 = ssub.s32 %s13, 1
      %s19 = ssub.s32 %s13, 2
      %s20 = sadd.s32 %s13, 1
      %s22 = sadd.s32 %s21, 1
      %p25 = scmp.eq.s32.totalorder %s13, 1
      %p26 = scmp.ne.s32.totalorder %s21, %s23
      %p27 = scmp.eq.s32.totalorder %s13, 0
      %p28 = por %p26, %p27
      %p29 = scmp.ne.s32.totalorder %s21, %s23
      %p30 = scmp.eq.s32.totalorder %s18, 1
      %p31 = por %p29, %p30
      %p32 = scmp.ne.s32.totalorder %s23, %s24
      %p33 = scmp.eq.s32.totalorder %s18, 0
      %p34 = por %p32, %p33
      %p35 = scmp.ne.s32.totalorder %s23, %s24
      %p36 = scmp.eq.s32.totalorder %s19, 1
      %p37 = por %p35, %p36
      %p39 = scmp.ne.s32.totalorder %s24, %s38
      %p40 = scmp.eq.s32.totalorder %s19, 0
      %p41 = por %p39, %p40
      %s43 = sadd.s32 %s42, 1
      %p46 = scmp.eq.s32.totalorder %s13, 1
      %p47 = scmp.ne.s32.totalorder %s42, %s44
      %p48 = scmp.eq.s32.totalorder %s13, 0
      %p49 = por %p47, %p48
      %p50 = scmp.ne.s32.totalorder %s42, %s44
      %p51 = scmp.eq.s32.totalorder %s18, 1
      %p52 = por %p50, %p51
      %p53 = scmp.ne.s32.totalorder %s44, %s45
      %p54 = scmp.eq.s32.totalorder %s18, 0
      %p55 = por %p53, %p54
      %p56 = scmp.ne.s32.totalorder %s44, %s45
      %p57 = scmp.eq.s32.totalorder %s19, 1
      %p58 = por %p56, %p57
      %p60 = scmp.ne.s32.totalorder %s45, %s59
      %p61 = scmp.eq.s32.totalorder %s19, 0
      %p62 = por %p60, %p61
      %s64 = sadd.s32 %s63, 1
      %p67 = scmp.eq.s32.totalorder %s13, 1
      %p68 = scmp.ne.s32.totalorder %s63, %s65
      %p69 = scmp.eq.s32.totalorder %s13, 0
      %p70 = por %p68, %p69
      %p71 = scmp.ne.s32.totalorder %s63, %s65
      %p72 = scmp.eq.s32.totalorder %s18, 1
      %p73 = por %p71, %p72
      %p74 = scmp.ne.s32.totalorder %s65, %s66
      %p75 = scmp.eq.s32.totalorder %s18, 0
      %p76 = por %p74, %p75
      %p77 = scmp.ne.s32.totalorder %s65, %s66
      %p78 = scmp.eq.s32.totalorder %s19, 1
      %p79 = por %p77, %p78
      %p81 = scmp.ne.s32.totalorder %s66, %s80
      %p82 = scmp.eq.s32.totalorder %s19, 0
      %p83 = por %p81, %p82
      %s85 = sadd.s32 %s84, 1
      %p88 = scmp.eq.s32.totalorder %s13, 1
      %p89 = scmp.ne.s32.totalorder %s84, %s86
      %p90 = scmp.eq.s32.totalorder %s13, 0
      %p91 = por %p89, %p90
      %p92 = scmp.ne.s32.totalorder %s84, %s86
      %p93 = scmp.eq.s32.totalorder %s18, 1
      %p94 = por %p92, %p93
      %p95 = scmp.ne.s32.totalorder %s86, %s87
      %p96 = scmp.eq.s32.totalorder %s18, 0
      %p97 = por %p95, %p96
      %p98 = scmp.ne.s32.totalorder %s86, %s87
      %p99 = scmp.eq.s32.totalorder %s19, 1
      %p100 = por %p98, %p99
      %p102 = scmp.ne.s32.totalorder %s87, %s101
      %p103 = scmp.eq.s32.totalorder %s19, 0
      %p104 = por %p102, %p103
      %s105 = ssub.s32 %s13, %s20
      %p106 = scmp.eq.s32.totalorder %s105, 0
      %s108 = sadd.s32 %s107, 1
      %s109 = scalar_select %p106, %s107, %s108
      %p112 = pneg %p106
      %p113 = scmp.eq.s32.totalorder %s13, 1
      %p114 = por %p112, %p113
      %p115 = scmp.ne.s32.totalorder %s107, %s110
      %p116 = scmp.eq.s32.totalorder %s13, 0
      %p117 = por %p115, %p116
      %p118 = scmp.ne.s32.totalorder %s107, %s110
      %p119 = scmp.eq.s32.totalorder %s18, 1
      %p120 = por %p118, %p119
      %p121 = scmp.ne.s32.totalorder %s110, %s111
      %p122 = scmp.eq.s32.totalorder %s18, 0
      %p123 = por %p121, %p122
      %p124 = scmp.ne.s32.totalorder %s110, %s111
      %p125 = scmp.eq.s32.totalorder %s19, 1
      %p126 = por %p124, %p125
      %p128 = scmp.ne.s32.totalorder %s111, %s127
      %p129 = scmp.eq.s32.totalorder %s19, 0
      %p130 = por %p128, %p129
      %s131 = ssub.s32 %s13, %s20
      %p132 = scmp.eq.s32.totalorder %s131, 0
      %s134 = sadd.s32 %s133, 1
      %s135 = scalar_select %p132, %s133, %s134
      %p138 = pneg %p132
      %p139 = scmp.eq.s32.totalorder %s13, 1
      %p140 = por %p138, %p139
      %p141 = scmp.ne.s32.totalorder %s133, %s136
      %p142 = scmp.eq.s32.totalorder %s13, 0
      %p143 = por %p141, %p142
      %p144 = scmp.ne.s32.totalorder %s133, %s136
      %p145 = scmp.eq.s32.totalorder %s18, 1
      %p146 = por %p144, %p145
      %p147 = scmp.ne.s32.totalorder %s136, %s137
      %p148 = scmp.eq.s32.totalorder %s18, 0
      %p149 = por %p147, %p148
      %p150 = scmp.ne.s32.totalorder %s136, %s137
      %p151 = scmp.eq.s32.totalorder %s19, 1
      %p152 = por %p150, %p151
      %p154 = scmp.ne.s32.totalorder %s137, %s153
      %p155 = scmp.eq.s32.totalorder %s19, 0
      %p156 = por %p154, %p155
      %p157 = scmp.le.s32.totalorder 1, %s13
      %p158 = scmp.lt.s32.totalorder %s13, 3
      %p159 = pnand %p157, %p158
      %p160 = pneg %p159
      // Predicated region
      $region9: #{netd_forward.6} parent=5 // pred_check
        _
      $region10: #{netd_forward.6} parent=5 // pred_check_branch
        %162 = sbr.rel (%p159) target = $region12
      $region11: #{netd_forward.6} parent=5 // pred_region
        %s163 = ssub.s32 %s13, 1
        // Predicated region
        $region13: #{netd_forward.6} parent=11 // pred_check
          %p164 = pneg %p34
        $region14: #{netd_forward.6} parent=11 // pred_check_branch
          %166 = sbr.rel (%p164) target = $region16
        $region15: #{netd_forward.6} parent=11 // pred_region
          _
        $region16: #{netd_forward.6} parent=11 // pred_fallthru
          _
        // Predicated region
        $region17: #{netd_forward.6} parent=11 // pred_check
          %p167 = pneg %p55
        $region18: #{netd_forward.6} parent=11 // pred_check_branch
          %169 = sbr.rel (%p167) target = $region20
        $region19: #{netd_forward.6} parent=11 // pred_region
          _
        $region20: #{netd_forward.6} parent=11 // pred_fallthru
          _
        // Predicated region
        $region21: #{netd_forward.6} parent=11 // pred_check
          %p170 = pneg %p76
        $region22: #{netd_forward.6} parent=11 // pred_check_branch
          %172 = sbr.rel (%p170) target = $region24
        $region23: #{netd_forward.6} parent=11 // pred_region
          %s174 = ssub.s32 16, 16
          %175 = vsyncadd [#allocation3], %s174
          %s177 = sshll.u32 [#allocation2], 4
          %s178 = int_to_ptr.vmem [resolvable:$true] %s177
          %180 = dma.hbm_to_vmem [thread:$0]  %s2, 16, %s178, [#allocation3]
        $region24: #{netd_forward.6} parent=11 // pred_fallthru
          _
        // Predicated region
        $region25: #{netd_forward.6} parent=11 // pred_check
          %p181 = pneg %p97
        $region26: #{netd_forward.6} parent=11 // pred_check_branch
          %183 = sbr.rel (%p181) target = $region28
        $region27: #{netd_forward.6} parent=11 // pred_region
          %s185 = ssub.s32 16, 16
          %186 = vsyncadd [#allocation5], %s185
          %s188 = sshll.u32 [#allocation4], 4
          %s189 = int_to_ptr.vmem [resolvable:$true] %s188
          %191 = dma.hbm_to_vmem [thread:$0]  %s3, 16, %s189, [#allocation5]
        $region28: #{netd_forward.6} parent=11 // pred_fallthru
          _
      $region12: #{netd_forward.6} parent=5 // pred_fallthru
        _
      %p192 = scmp.lt.s32.totalorder %s13, 2
      // Predicated region
      $region29: #{netd_forward.6} parent=5 // pred_check
        %p193 = pneg %p192
      $region30: #{netd_forward.6} parent=5 // pred_check_branch
        %195 = sbr.rel (%p193) target = $region32
      $region31: #{netd_forward.6} parent=5 // pred_region
        // Predicated region
        $region33: #{netd_forward.6} parent=31 // pred_check
          %p196 = pneg %p117
        $region34: #{netd_forward.6} parent=31 // pred_check_branch
          %198 = sbr.rel (%p196) target = $region36
        $region35: #{netd_forward.6} parent=31 // pred_region
          %s199 = smul.u32 26, %s13
          %p200 = scmp.lt.s32.totalorder %s199, 51
          %s201 = scalar_select %p200, %s199, 51
          %s202 = smul.addr %s201, 4
          %s203 = scalar_lea.vmem %s4, %s202
          %s204 = smul.u32 26, %s13
        $region36: #{netd_forward.6} parent=31 // pred_fallthru
          _
      $region32: #{netd_forward.6} parent=5 // pred_fallthru
        _
      %p205 = scmp.le.s32.totalorder 1, %s13
      %p206 = scmp.lt.s32.totalorder %s13, 3
      %p207 = pnand %p205, %p206
      %p208 = pneg %p207
      // Predicated region
      $region37: #{netd_forward.6} parent=5 // pred_check
        _
      $region38: #{netd_forward.6} parent=5 // pred_check_branch
        %210 = sbr.rel (%p207) target = $region40
      $region39: #{netd_forward.6} parent=5 // pred_region
        %s211 = ssub.s32 %s13, 1
        // Predicated region
        $region41: #{netd_forward.6} parent=39 // pred_check
          %p212 = pneg %p76
        $region42: #{netd_forward.6} parent=39 // pred_check_branch
          %214 = sbr.rel (%p212) target = $region44
        $region43: #{netd_forward.6} parent=39 // pred_region
          %215 = dma.done [#allocation3], 16
        $region44: #{netd_forward.6} parent=39 // pred_fallthru
          _
        // Predicated region
        $region45: #{netd_forward.6} parent=39 // pred_check
          %p216 = pneg %p97
        $region46: #{netd_forward.6} parent=39 // pred_check_branch
          %218 = sbr.rel (%p216) target = $region48
        $region47: #{netd_forward.6} parent=39 // pred_region
          %219 = dma.done [#allocation5], 16
        $region48: #{netd_forward.6} parent=39 // pred_fallthru
          _
        %p220 = pneg %p34
        %p221 = pneg %p31
        %p222 = pneg %p55
        %p223 = pneg %p52
        %p224 = pneg %p76
        %p225 = pneg %p73
        %p226 = pneg %p97
        %p227 = pneg %p94
        %s228 = smul.u32 26, %s18
        %p229 = scmp.lt.s32.totalorder %s228, 51
        %s230 = scalar_select %p229, %s228, 51
        %s231 = smul.addr %s230, 4
        %s232 = scalar_lea.vmem %s4, %s231
        %p233 = pneg %p123
        %p234 = pneg %p120
        %p235 = pneg %p149
        %p236 = pneg %p146
        %s237 = smul.u32 26, %s18
        %p238 = scmp.lt.s32.totalorder %s237, 51
        %s239 = scalar_select %p238, %s237, 51
        %s240 = smul.addr %s239, 4
        %s241 = scalar_lea.vmem %s5, %s240
        %s242 = smul.u32 26, %s18
        %p243 = scmp.lt.s32.totalorder %s242, 51
        %s244 = scalar_select %p243, %s242, 51
        %s245 = smul.addr %s244, 4
        %s246 = scalar_lea.vmem %s4, %s245
        %s247 = smul.u32 26, %s18
        %s248 = smul.u32 26, %s18
        %p249 = scmp.lt.s32.totalorder %s248, 51
        %s250 = scalar_select %p249, %s248, 51
        %s251 = smul.addr %s250, 4
        %s252 = scalar_lea.vmem %s5, %s251
        %s253 = smul.u32 26, %s18
        %v254 = vld [vmem:[%s0] sm:$0x1]
        %v255 = vld [vmem:[%s0 + $0x1] sm:$0x1]
        %vm256 = vcmask 516096
        %v257 = vsel %vm256, %v254, 0.0
        %v258 = vsel %vm256, %v255, 0.0
        %v259 = vadd.f32 %v257, %v258
        %v260 = vmul.f32 %v259, 0.0025510204
        %v261 = vld [vmem:[%s1] sm:$0x1]
        %v262 = vld [vmem:[%s1 + $0x1] sm:$0x1]
        %v263 = vsel %vm256, %v261, 0.0
        %v264 = vsel %vm256, %v262, 0.0
        %v265 = vadd.f32 %v263, %v264
        %v266 = vmul.f32 %v265, 0.0025510204
        %v267 = vmul.f32 %v260, %v260
        %v268 = vsub.f32 %v266, %v267
        %v269 = vmax.f32 %v268, 0.0
        %v270 = vld [vmem:[#allocation2] sm:$0x1]
        %v271 = vadd.f32 %v269, 1e-05
        %v272 = vrsqrt.pop %v271
        %v273 = vmul.f32 %v270, %v272
        %v274 = vld [vmem:[#allocation4] sm:$0x1]
        %v275 = vmul.f32 %v260, %v273
        %v276 = vsub.f32 %v274, %v275
        %v277 = vld [vmem:[%s246] sm:$0xf]
        %v278 = vld [vmem:[%s246 + $0x4] sm:$0xf]
        %v279 = vld [vmem:[%s246 + $0x8] sm:$0xf]
        %v280 = vld [vmem:[%s246 + $0xc] sm:$0xf]
        %v281 = vld [vmem:[%s246 + $0x10] sm:$0xf]
        %v282 = vld [vmem:[%s246 + $0x14] sm:$0xf]
        %v283 = vld [vmem:[%s246 + $0x18] sm:$0xf]
        %v284 = vld [vmem:[%s246 + $0x1c] sm:$0xf]
        %v285 = vld [vmem:[%s246 + $0x20] sm:$0xf]
        %v286 = vld [vmem:[%s246 + $0x24] sm:$0xf]
        %v287 = vld [vmem:[%s246 + $0x28] sm:$0xf]
        %v288 = vld [vmem:[%s246 + $0x2c] sm:$0xf]
        %v289 = vld [vmem:[%s246 + $0x30] sm:$0xf]
        %v290 = vld [vmem:[%s246 + $0x34] sm:$0xf]
        %v291 = vld [vmem:[%s246 + $0x38] sm:$0xf]
        %v292 = vld [vmem:[%s246 + $0x3c] sm:$0xf]
        %v293 = vld [vmem:[%s246 + $0x40] sm:$0xf]
        %v294 = vld [vmem:[%s246 + $0x44] sm:$0xf]
        %v295 = vld [vmem:[%s246 + $0x48] sm:$0xf]
        %v296 = vld [vmem:[%s246 + $0x4c] sm:$0xf]
        %v297 = vld [vmem:[%s246 + $0x50] sm:$0xf]
        %v298 = vld [vmem:[%s246 + $0x54] sm:$0xf]
        %v299 = vld [vmem:[%s246 + $0x58] sm:$0xf]
        %v300 = vld [vmem:[%s246 + $0x5c] sm:$0xf]
        %v301 = vld [vmem:[%s246 + $0x60] sm:$0xf]
        %v302 = vld [vmem:[%s246 + $0x64] sm:$0xf]
        %v303 = vunpack.c.l.bf16 %v277
        %v304 = vunpack.c.l.bf16 %v278
        %v305 = vunpack.c.l.bf16 %v279
        %v306 = vunpack.c.l.bf16 %v280
        %v307 = vunpack.c.l.bf16 %v281
        %v308 = vunpack.c.l.bf16 %v282
        %v309 = vunpack.c.l.bf16 %v283
        %v310 = vunpack.c.l.bf16 %v284
        %v311 = vunpack.c.l.bf16 %v285
        %v312 = vunpack.c.l.bf16 %v286
        %v313 = vunpack.c.l.bf16 %v287
        %v314 = vunpack.c.l.bf16 %v288
        %v315 = vunpack.c.l.bf16 %v289
        %v316 = vunpack.c.l.bf16 %v290
        %v317 = vunpack.c.l.bf16 %v291
        %v318 = vunpack.c.l.bf16 %v292
        %v319 = vunpack.c.l.bf16 %v293
        %v320 = vunpack.c.l.bf16 %v294
        %v321 = vunpack.c.l.bf16 %v295
        %v322 = vunpack.c.l.bf16 %v296
        %v323 = vunpack.c.l.bf16 %v297
        %v324 = vunpack.c.l.bf16 %v298
        %v325 = vunpack.c.l.bf16 %v299
        %v326 = vunpack.c.l.bf16 %v300
        %v327 = vunpack.c.l.bf16 %v301
        %v328 = vunpack.c.l.bf16 %v302
        %v330 = vlaneseq
        %v331 = vshrl.u32 %v330, 7
        %v332 = vsub.s32 0, %v331
        %v333 = vrot.slane %v273, %v332
        %v335 = vmul.f32 %v303, %v333
        %v336 = vmul.f32 %v304, %v333
        %v337 = vmul.f32 %v305, %v333
        %v338 = vmul.f32 %v306, %v333
        %v339 = vmul.f32 %v307, %v333
        %v340 = vmul.f32 %v308, %v333
        %v341 = vmul.f32 %v309, %v333
        %v342 = vmul.f32 %v310, %v333
        %v343 = vmul.f32 %v311, %v333
        %v344 = vmul.f32 %v312, %v333
        %v345 = vmul.f32 %v313, %v333
        %v346 = vmul.f32 %v314, %v333
        %v347 = vmul.f32 %v315, %v333
        %v348 = vmul.f32 %v316, %v333
        %v349 = vmul.f32 %v317, %v333
        %v350 = vmul.f32 %v318, %v333
        %v351 = vmul.f32 %v319, %v333
        %v352 = vmul.f32 %v320, %v333
        %v353 = vmul.f32 %v321, %v333
        %v354 = vmul.f32 %v322, %v333
        %v355 = vmul.f32 %v323, %v333
        %v356 = vmul.f32 %v324, %v333
        %v357 = vmul.f32 %v325, %v333
        %v358 = vmul.f32 %v326, %v333
        %v359 = vmul.f32 %v327, %v333
        %v360 = vmul.f32 %v328, %v333
        %v362 = vlaneseq
        %v363 = vshrl.u32 %v362, 7
        %v364 = vsub.s32 0, %v363
        %v365 = vrot.slane %v276, %v364
        %v367 = vadd.f32 %v335, %v365
        %v368 = vadd.f32 %v336, %v365
        %v369 = vadd.f32 %v337, %v365
        %v370 = vadd.f32 %v338, %v365
        %v371 = vadd.f32 %v339, %v365
        %v372 = vadd.f32 %v340, %v365
        %v373 = vadd.f32 %v341, %v365
        %v374 = vadd.f32 %v342, %v365
        %v375 = vadd.f32 %v343, %v365
        %v376 = vadd.f32 %v344, %v365
        %v377 = vadd.f32 %v345, %v365
        %v378 = vadd.f32 %v346, %v365
        %v379 = vadd.f32 %v347, %v365
        %v380 = vadd.f32 %v348, %v365
        %v381 = vadd.f32 %v349, %v365
        %v382 = vadd.f32 %v350, %v365
        %v383 = vadd.f32 %v351, %v365
        %v384 = vadd.f32 %v352, %v365
        %v385 = vadd.f32 %v353, %v365
        %v386 = vadd.f32 %v354, %v365
        %v387 = vadd.f32 %v355, %v365
        %v388 = vadd.f32 %v356, %v365
        %v389 = vadd.f32 %v357, %v365
        %v390 = vadd.f32 %v358, %v365
        %v391 = vadd.f32 %v359, %v365
        %v392 = vadd.f32 %v360, %v365
        %vm393 = vcmp.ge.f32.partialorder %v367, 0.0
        %vm394 = vcmp.ge.f32.partialorder %v368, 0.0
        %vm395 = vcmp.ge.f32.partialorder %v369, 0.0
        %vm396 = vcmp.ge.f32.partialorder %v370, 0.0
        %vm397 = vcmp.ge.f32.partialorder %v371, 0.0
        %vm398 = vcmp.ge.f32.partialorder %v372, 0.0
        %vm399 = vcmp.ge.f32.partialorder %v373, 0.0
        %vm400 = vcmp.ge.f32.partialorder %v374, 0.0
        %vm401 = vcmp.ge.f32.partialorder %v375, 0.0
        %vm402 = vcmp.ge.f32.partialorder %v376, 0.0
        %vm403 = vcmp.ge.f32.partialorder %v377, 0.0
        %vm404 = vcmp.ge.f32.partialorder %v378, 0.0
        %vm405 = vcmp.ge.f32.partialorder %v379, 0.0
        %vm406 = vcmp.ge.f32.partialorder %v380, 0.0
        %vm407 = vcmp.ge.f32.partialorder %v381, 0.0
        %vm408 = vcmp.ge.f32.partialorder %v382, 0.0
        %vm409 = vcmp.ge.f32.partialorder %v383, 0.0
        %vm410 = vcmp.ge.f32.partialorder %v384, 0.0
        %vm411 = vcmp.ge.f32.partialorder %v385, 0.0
        %vm412 = vcmp.ge.f32.partialorder %v386, 0.0
        %vm413 = vcmp.ge.f32.partialorder %v387, 0.0
        %vm414 = vcmp.ge.f32.partialorder %v388, 0.0
        %vm415 = vcmp.ge.f32.partialorder %v389, 0.0
        %vm416 = vcmp.ge.f32.partialorder %v390, 0.0
        %vm417 = vcmp.ge.f32.partialorder %v391, 0.0
        %vm418 = vcmp.ge.f32.partialorder %v392, 0.0
        %v419 = vmul.f32 %v367, 0.2
        %v420 = vmul.f32 %v368, 0.2
        %v421 = vmul.f32 %v369, 0.2
        %v422 = vmul.f32 %v370, 0.2
        %v423 = vmul.f32 %v371, 0.2
        %v424 = vmul.f32 %v372, 0.2
        %v425 = vmul.f32 %v373, 0.2
        %v426 = vmul.f32 %v374, 0.2
        %v427 = vmul.f32 %v375, 0.2
        %v428 = vmul.f32 %v376, 0.2
        %v429 = vmul.f32 %v377, 0.2
        %v430 = vmul.f32 %v378, 0.2
        %v431 = vmul.f32 %v379, 0.2
        %v432 = vmul.f32 %v380, 0.2
        %v433 = vmul.f32 %v381, 0.2
        %v434 = vmul.f32 %v382, 0.2
        %v435 = vmul.f32 %v383, 0.2
        %v436 = vmul.f32 %v384, 0.2
        %v437 = vmul.f32 %v385, 0.2
        %v438 = vmul.f32 %v386, 0.2
        %v439 = vmul.f32 %v387, 0.2
        %v440 = vmul.f32 %v388, 0.2
        %v441 = vmul.f32 %v389, 0.2
        %v442 = vmul.f32 %v390, 0.2
        %v443 = vmul.f32 %v391, 0.2
        %v444 = vmul.f32 %v392, 0.2
        %v445 = vsel %vm393, %v367, %v419
        %v446 = vsel %vm394, %v368, %v420
        %v447 = vsel %vm395, %v369, %v421
        %v448 = vsel %vm396, %v370, %v422
        %v449 = vsel %vm397, %v371, %v423
        %v450 = vsel %vm398, %v372, %v424
        %v451 = vsel %vm399, %v373, %v425
        %v452 = vsel %vm400, %v374, %v426
        %v453 = vsel %vm401, %v375, %v427
        %v454 = vsel %vm402, %v376, %v428
        %v455 = vsel %vm403, %v377, %v429
        %v456 = vsel %vm404, %v378, %v430
        %v457 = vsel %vm405, %v379, %v431
        %v458 = vsel %vm406, %v380, %v432
        %v459 = vsel %vm407, %v381, %v433
        %v460 = vsel %vm408, %v382, %v434
        %v461 = vsel %vm409, %v383, %v435
        %v462 = vsel %vm410, %v384, %v436
        %v463 = vsel %vm411, %v385, %v437
        %v464 = vsel %vm412, %v386, %v438
        %v465 = vsel %vm413, %v387, %v439
        %v466 = vsel %vm414, %v388, %v440
        %v467 = vsel %vm415, %v389, %v441
        %v468 = vsel %vm416, %v390, %v442
        %v469 = vsel %vm417, %v391, %v443
        %v470 = vsel %vm418, %v392, %v444
        %v471 = vpack.c.bf16 %v446, %v445
        %v472 = vpack.c.bf16 %v448, %v447
        %v473 = vpack.c.bf16 %v450, %v449
        %v474 = vpack.c.bf16 %v452, %v451
        %v475 = vpack.c.bf16 %v454, %v453
        %v476 = vpack.c.bf16 %v456, %v455
        %v477 = vpack.c.bf16 %v458, %v457
        %v478 = vpack.c.bf16 %v460, %v459
        %v479 = vpack.c.bf16 %v462, %v461
        %v480 = vpack.c.bf16 %v464, %v463
        %v481 = vpack.c.bf16 %v466, %v465
        %v482 = vpack.c.bf16 %v468, %v467
        %v483 = vpack.c.bf16 %v470, %v469
        %v497 = vunpack.c.l.b16 %v471
        %v498 = vunpack.c.h.b16 %v471
        %v499 = vunpack.c.l.b16 %v472
        %v500 = vunpack.c.h.b16 %v472
        %v501 = vunpack.c.l.b16 %v473
        %v502 = vunpack.c.h.b16 %v473
        %v503 = vunpack.c.l.b16 %v474
        %v504 = vunpack.c.h.b16 %v474
        %v505 = vunpack.c.l.b16 %v475
        %v506 = vunpack.c.h.b16 %v475
        %v507 = vunpack.c.l.b16 %v476
        %v508 = vunpack.c.h.b16 %v476
        %v509 = vunpack.c.l.b16 %v477
        %v510 = vunpack.c.h.b16 %v477
        %v511 = vunpack.c.l.b16 %v478
        %v512 = vunpack.c.h.b16 %v478
        %v513 = vunpack.c.l.b16 %v479
        %v514 = vunpack.c.h.b16 %v479
        %v515 = vunpack.c.l.b16 %v480
        %v516 = vunpack.c.h.b16 %v480
        %v517 = vunpack.c.l.b16 %v481
        %v518 = vunpack.c.h.b16 %v481
        %v519 = vunpack.c.l.b16 %v482
        %v520 = vunpack.c.h.b16 %v482
        %v521 = vunpack.c.l.b16 %v483
        %v522 = vunpack.c.h.b16 %v483
        %v523 = vpack.c.b16 %v497, %v497
        %v524 = vpack.c.b16 %v498, %v498
        %v525 = vpack.c.b16 %v499, %v499
        %v526 = vpack.c.b16 %v500, %v500
        %v527 = vpack.c.b16 %v501, %v501
        %v528 = vpack.c.b16 %v502, %v502
        %v529 = vpack.c.b16 %v503, %v503
        %v530 = vpack.c.b16 %v504, %v504
        %v531 = vpack.c.b16 %v505, %v505
        %v532 = vpack.c.b16 %v506, %v506
        %v533 = vpack.c.b16 %v507, %v507
        %v534 = vpack.c.b16 %v508, %v508
        %v535 = vpack.c.b16 %v509, %v509
        %v536 = vpack.c.b16 %v510, %v510
        %v537 = vpack.c.b16 %v511, %v511
        %v538 = vpack.c.b16 %v512, %v512
        %v539 = vpack.c.b16 %v513, %v513
        %v540 = vpack.c.b16 %v514, %v514
        %v541 = vpack.c.b16 %v515, %v515
        %v542 = vpack.c.b16 %v516, %v516
        %v543 = vpack.c.b16 %v517, %v517
        %v544 = vpack.c.b16 %v518, %v518
        %v545 = vpack.c.b16 %v519, %v519
        %v546 = vpack.c.b16 %v520, %v520
        %v547 = vpack.c.b16 %v521, %v521
        %v548 = vpack.c.b16 %v522, %v522
        %vm575 = vcmask 519168
        %576 = vst.msk [vmem:[%s252] sm:$0xf] %vm575, %v523
        %577 = vst.msk [vmem:[%s252 + $0x4] sm:$0xf] %vm575, %v524
        %578 = vst.msk [vmem:[%s252 + $0x8] sm:$0xf] %vm575, %v525
        %579 = vst.msk [vmem:[%s252 + $0xc] sm:$0xf] %vm575, %v526
        %580 = vst.msk [vmem:[%s252 + $0x10] sm:$0xf] %vm575, %v527
        %581 = vst.msk [vmem:[%s252 + $0x14] sm:$0xf] %vm575, %v528
        %582 = vst.msk [vmem:[%s252 + $0x18] sm:$0xf] %vm575, %v529
        %583 = vst.msk [vmem:[%s252 + $0x1c] sm:$0xf] %vm575, %v530
        %584 = vst.msk [vmem:[%s252 + $0x20] sm:$0xf] %vm575, %v531
        %585 = vst.msk [vmem:[%s252 + $0x24] sm:$0xf] %vm575, %v532
        %586 = vst.msk [vmem:[%s252 + $0x28] sm:$0xf] %vm575, %v533
        %587 = vst.msk [vmem:[%s252 + $0x2c] sm:$0xf] %vm575, %v534
        %588 = vst.msk [vmem:[%s252 + $0x30] sm:$0xf] %vm575, %v535
        %589 = vst.msk [vmem:[%s252 + $0x34] sm:$0xf] %vm575, %v536
        %590 = vst.msk [vmem:[%s252 + $0x38] sm:$0xf] %vm575, %v537
        %591 = vst.msk [vmem:[%s252 + $0x3c] sm:$0xf] %vm575, %v538
        %592 = vst.msk [vmem:[%s252 + $0x40] sm:$0xf] %vm575, %v539
        %593 = vst.msk [vmem:[%s252 + $0x44] sm:$0xf] %vm575, %v540
        %594 = vst.msk [vmem:[%s252 + $0x48] sm:$0xf] %vm575, %v541
        %595 = vst.msk [vmem:[%s252 + $0x4c] sm:$0xf] %vm575, %v542
        %596 = vst.msk [vmem:[%s252 + $0x50] sm:$0xf] %vm575, %v543
        %597 = vst.msk [vmem:[%s252 + $0x54] sm:$0xf] %vm575, %v544
        %598 = vst.msk [vmem:[%s252 + $0x58] sm:$0xf] %vm575, %v545
        %599 = vst.msk [vmem:[%s252 + $0x5c] sm:$0xf] %vm575, %v546
        %600 = vst.msk [vmem:[%s252 + $0x60] sm:$0xf] %vm575, %v547
        %601 = vst.msk [vmem:[%s252 + $0x64] sm:$0xf] %vm575, %v548
        %s602 = smul.u32 26, %s18
        %p603 = scmp.lt.s32.totalorder %s602, 51
        %s604 = scalar_select %p603, %s602, 51
        %s605 = smul.addr %s604, 4
        %s606 = scalar_lea.vmem %s5, %s605
        // Predicated region
        $region49: #{netd_forward.6} parent=39 // pred_check
          %p607 = pneg %p146
        $region50: #{netd_forward.6} parent=39 // pred_check_branch
          %609 = sbr.rel (%p607) target = $region52
        $region51: #{netd_forward.6} parent=39 // pred_region
          %s610 = smul.u32 26, %s18
        $region52: #{netd_forward.6} parent=39 // pred_fallthru
          _
      $region40: #{netd_forward.6} parent=5 // pred_fallthru
        _
      %p611 = scmp.le.s32.totalorder 2, %s13
      // Predicated region
      $region53: #{netd_forward.6} parent=5 // pred_check
        %p612 = pneg %p611
      $region54: #{netd_forward.6} parent=5 // pred_check_branch
        %614 = sbr.rel (%p612) target = $region56
      $region55: #{netd_forward.6} parent=5 // pred_region
        %s615 = ssub.s32 %s13, 2
        // Predicated region
        $region57: #{netd_forward.6} parent=55 // pred_check
          %p616 = pneg %p152
        $region58: #{netd_forward.6} parent=55 // pred_check_branch
          %618 = sbr.rel (%p616) target = $region60
        $region59: #{netd_forward.6} parent=55 // pred_region
          %s619 = smul.u32 26, %s19
          %p620 = scmp.lt.s32.totalorder %s619, 51
          %s621 = scalar_select %p620, %s619, 51
          %s622 = smul.addr %s621, 4
          %s623 = scalar_lea.vmem %s5, %s622
        $region60: #{netd_forward.6} parent=55 // pred_fallthru
          _
      $region56: #{netd_forward.6} parent=5 // pred_fallthru
        _
    $region6: #{netd_forward.6} parent=1 // loop_footer
      %s17 = sadd.s32 1, %s13
    $region7: #{netd_forward.6} parent=1 // loop_footer_branch
      %12 = sbr.rel target = $region3
    $region8: #{netd_forward.6} parent=1 // loop_exit
      _
    %624 = vsyncpa [#allocation3], 1
    %s625 = scalar_lea.sflag [#allocation3], 1
    %626 = vsyncpa %s625, 1
    %627 = vsyncpa [#allocation5], 1

// kernel: netd_forward.5
$region0: #{netd_forward.5}
  #allocation0 [shape = 'u32[]', space=smem, size = 0x4, offset = 0x4, fixed_abs, tag = 'smem constant byte address 0x4 - core index']
  #allocation1 [shape = 'u32[144,128]{1,0:T(1,128)}', space=vmem, size = 0x12000, scoped, tag = 'internal scratch']
  %s0 = inlined_call_operand.vmem [shape: bf16[416,9], index: 0, kind: input, shape index: {}]
  %s1 = inlined_call_operand.hbm [shape: bf16[9,64], index: 1, kind: input, shape index: {}]
  %s2 = inlined_call_operand.vmem [shape: bf16[416,64], index: 2, kind: output, shape index: {0}]
  %s3 = inlined_call_operand.vmem [shape: f32[2,1,64], index: 3, kind: output, shape index: {1}]
  %s4 = inlined_call_operand.vmem [shape: f32[2,1,64], index: 4, kind: output, shape index: {2}]
  %5 = xla_tuple %s2, %s3, %s4
  %s6 = sld [smem:[#allocation0]]
  $region61: #{netd_forward.5} parent=0
    _
  %s8 = ssub.s32 1, %s6
  %s9 = scalar_select 0, %s8, %s6
  $region1: #{netd_forward.5} parent=0
    #allocation2 [shape = 'u8[4096]{0}', space=vmem, size = 0x1000, scoped, tag = 'input window, operand 1, single buffered']
    #allocation3 [shape = 's32[2]{0}', space=sflag, size = 0x8, scoped, tag = 'scoped memory for netd_forward.5']
    %10 = vsyncpa [#allocation3], 0
    loop: start=0, step=1, limit=4
    $region2: #{netd_forward.5} parent=1 // loop_pre_header
      _
    $region3: #{netd_forward.5} parent=1 // loop_header
      %s12 = sphi 0, %s16
      %p13 = scmp.ge.s32.totalorder %s12, 4
      %s22 = sphi 0, %s24
      %s25 = sphi 0, %s22
      %s26 = sphi 0, %s25
      %s42 = sphi 0, %s26
      %s46 = sphi 0, %s46
      %s48 = sphi 0, %s46
      %s49 = sphi 0, %s48
      %s63 = sphi 0, %s49
      %s69 = sphi 0, %s71
      %s72 = sphi 0, %s69
      %s73 = sphi 0, %s72
      %s89 = sphi 0, %s73
      %s95 = sphi 0, %s97
      %s98 = sphi 0, %s95
      %s99 = sphi 0, %s98
      %s115 = sphi 0, %s99
      %s121 = sphi 0, %s123
      %s124 = sphi 0, %s121
      %s125 = sphi 0, %s124
      %s141 = sphi 0, %s125
    $region4: #{netd_forward.5} parent=1 // loop_header_branch
      %15 = sbr.rel (%p13) target = $region8
    $region5: #{netd_forward.5} parent=1 // loop_body
      %s17 = ssub.s32 %s12, 1
      %s18 = ssub.s32 %s12, 2
      %s19 = sadd.s32 %s12, 1
      %s20 = ssub.s32 %s12, %s19
      %p21 = scmp.eq.s32.totalorder %s20, 0
      %s23 = sadd.s32 %s22, 1
      %s24 = scalar_select %p21, %s22, %s23
      %p27 = pneg %p21
      %p28 = scmp.eq.s32.totalorder %s12, 1
      %p29 = por %p27, %p28
      %p30 = scmp.ne.s32.totalorder %s22, %s25
      %p31 = scmp.eq.s32.totalorder %s12, 0
      %p32 = por %p30, %p31
      %p33 = scmp.ne.s32.totalorder %s22, %s25
      %p34 = scmp.eq.s32.totalorder %s17, 1
      %p35 = por %p33, %p34
      %p36 = scmp.ne.s32.totalorder %s25, %s26
      %p37 = scmp.eq.s32.totalorder %s17, 0
      %p38 = por %p36, %p37
      %p39 = scmp.ne.s32.totalorder %s25, %s26
      %p40 = scmp.eq.s32.totalorder %s18, 1
      %p41 = por %p39, %p40
      %p43 = scmp.ne.s32.totalorder %s26, %s42
      %p44 = scmp.eq.s32.totalorder %s18, 0
      %p45 = por %p43, %p44
      %s47 = sadd.s32 %s46, 1
      %p50 = scmp.eq.s32.totalorder %s12, 1
      %p51 = scmp.ne.s32.totalorder %s46, %s48
      %p52 = scmp.eq.s32.totalorder %s12, 0
      %p53 = por %p51, %p52
      %p54 = scmp.ne.s32.totalorder %s46, %s48
      %p55 = scmp.eq.s32.totalorder %s17, 1
      %p56 = por %p54, %p55
      %p57 = scmp.ne.s32.totalorder %s48, %s49
      %p58 = scmp.eq.s32.totalorder %s17, 0
      %p59 = por %p57, %p58
      %p60 = scmp.ne.s32.totalorder %s48, %s49
      %p61 = scmp.eq.s32.totalorder %s18, 1
      %p62 = por %p60, %p61
      %p64 = scmp.ne.s32.totalorder %s49, %s63
      %p65 = scmp.eq.s32.totalorder %s18, 0
      %p66 = por %p64, %p65
      %s67 = ssub.s32 %s12, %s19
      %p68 = scmp.eq.s32.totalorder %s67, 0
      %s70 = sadd.s32 %s69, 1
      %s71 = scalar_select %p68, %s69, %s70
      %p74 = pneg %p68
      %p75 = scmp.eq.s32.totalorder %s12, 1
      %p76 = por %p74, %p75
      %p77 = scmp.ne.s32.totalorder %s69, %s72
      %p78 = scmp.eq.s32.totalorder %s12, 0
      %p79 = por %p77, %p78
      %p80 = scmp.ne.s32.totalorder %s69, %s72
      %p81 = scmp.eq.s32.totalorder %s17, 1
      %p82 = por %p80, %p81
      %p83 = scmp.ne.s32.totalorder %s72, %s73
      %p84 = scmp.eq.s32.totalorder %s17, 0
      %p85 = por %p83, %p84
      %p86 = scmp.ne.s32.totalorder %s72, %s73
      %p87 = scmp.eq.s32.totalorder %s18, 1
      %p88 = por %p86, %p87
      %p90 = scmp.ne.s32.totalorder %s73, %s89
      %p91 = scmp.eq.s32.totalorder %s18, 0
      %p92 = por %p90, %p91
      %s93 = ssub.s32 %s12, %s19
      %p94 = scmp.eq.s32.totalorder %s93, 0
      %s96 = sadd.s32 %s95, 1
      %s97 = scalar_select %p94, %s95, %s96
      %p100 = pneg %p94
      %p101 = scmp.eq.s32.totalorder %s12, 1
      %p102 = por %p100, %p101
      %p103 = scmp.ne.s32.totalorder %s95, %s98
      %p104 = scmp.eq.s32.totalorder %s12, 0
      %p105 = por %p103, %p104
      %p106 = scmp.ne.s32.totalorder %s95, %s98
      %p107 = scmp.eq.s32.totalorder %s17, 1
      %p108 = por %p106, %p107
      %p109 = scmp.ne.s32.totalorder %s98, %s99
      %p110 = scmp.eq.s32.totalorder %s17, 0
      %p111 = por %p109, %p110
      %p112 = scmp.ne.s32.totalorder %s98, %s99
      %p113 = scmp.eq.s32.totalorder %s18, 1
      %p114 = por %p112, %p113
      %p116 = scmp.ne.s32.totalorder %s99, %s115
      %p117 = scmp.eq.s32.totalorder %s18, 0
      %p118 = por %p116, %p117
      %s119 = ssub.s32 %s12, %s19
      %p120 = scmp.eq.s32.totalorder %s119, 0
      %s122 = sadd.s32 %s121, 1
      %s123 = scalar_select %p120, %s121, %s122
      %p126 = pneg %p120
      %p127 = scmp.eq.s32.totalorder %s12, 1
      %p128 = por %p126, %p127
      %p129 = scmp.ne.s32.totalorder %s121, %s124
      %p130 = scmp.eq.s32.totalorder %s12, 0
      %p131 = por %p129, %p130
      %p132 = scmp.ne.s32.totalorder %s121, %s124
      %p133 = scmp.eq.s32.totalorder %s17, 1
      %p134 = por %p132, %p133
      %p135 = scmp.ne.s32.totalorder %s124, %s125
      %p136 = scmp.eq.s32.totalorder %s17, 0
      %p137 = por %p135, %p136
      %p138 = scmp.ne.s32.totalorder %s124, %s125
      %p139 = scmp.eq.s32.totalorder %s18, 1
      %p140 = por %p138, %p139
      %p142 = scmp.ne.s32.totalorder %s125, %s141
      %p143 = scmp.eq.s32.totalorder %s18, 0
      %p144 = por %p142, %p143
      %p145 = scmp.le.s32.totalorder 1, %s12
      %p146 = scmp.lt.s32.totalorder %s12, 3
      %p147 = pnand %p145, %p146
      %p148 = pneg %p147
      // Predicated region
      $region9: #{netd_forward.5} parent=5 // pred_check
        _
      $region10: #{netd_forward.5} parent=5 // pred_check_branch
        %150 = sbr.rel (%p147) target = $region12
      $region11: #{netd_forward.5} parent=5 // pred_region
        %s151 = ssub.s32 %s12, 1
        // Predicated region
        $region13: #{netd_forward.5} parent=11 // pred_check
          %p152 = pneg %p59
        $region14: #{netd_forward.5} parent=11 // pred_check_branch
          %154 = sbr.rel (%p152) target = $region16
        $region15: #{netd_forward.5} parent=11 // pred_region
          %s156 = ssub.s32 128, 128
          %157 = vsyncadd [#allocation3], %s156
          %s158 = sshll.u32 [#allocation2], 4
          %s159 = int_to_ptr.vmem [resolvable:$true] %s158
          %164 = dma.hbm_to_vmem [thread:$0]  %s1, 128, %s159, [#allocation3], 64, 64, 4
        $region16: #{netd_forward.5} parent=11 // pred_fallthru
          _
      $region12: #{netd_forward.5} parent=5 // pred_fallthru
        _
      %p165 = scmp.lt.s32.totalorder %s12, 2
      // Predicated region
      $region17: #{netd_forward.5} parent=5 // pred_check
        %p166 = pneg %p165
      $region18: #{netd_forward.5} parent=5 // pred_check_branch
        %168 = sbr.rel (%p166) target = $region20
      $region19: #{netd_forward.5} parent=5 // pred_region
        // Predicated region
        $region21: #{netd_forward.5} parent=19 // pred_check
          %p169 = pneg %p32
        $region22: #{netd_forward.5} parent=19 // pred_check_branch
          %171 = sbr.rel (%p169) target = $region24
        $region23: #{netd_forward.5} parent=19 // pred_region
          %s172 = smul.u32 26, %s12
          %p173 = scmp.lt.s32.totalorder %s172, 51
          %s174 = scalar_select %p173, %s172, 51
          %s175 = smul.addr %s174, 4
          %s176 = scalar_lea.vmem %s0, %s175
          %s177 = smul.u32 26, %s12
        $region24: #{netd_forward.5} parent=19 // pred_fallthru
          _
      $region20: #{netd_forward.5} parent=5 // pred_fallthru
        _
      %p178 = scmp.le.s32.totalorder 1, %s12
      %p179 = scmp.lt.s32.totalorder %s12, 3
      %p180 = pnand %p178, %p179
      %p181 = pneg %p180
      // Predicated region
      $region25: #{netd_forward.5} parent=5 // pred_check
        _
      $region26: #{netd_forward.5} parent=5 // pred_check_branch
        %183 = sbr.rel (%p180) target = $region28
      $region27: #{netd_forward.5} parent=5 // pred_region
        %s184 = ssub.s32 %s12, 1
        // Predicated region
        $region29: #{netd_forward.5} parent=27 // pred_check
          %p185 = pneg %p59
        $region30: #{netd_forward.5} parent=27 // pred_check_branch
          %187 = sbr.rel (%p185) target = $region32
        $region31: #{netd_forward.5} parent=27 // pred_region
          %188 = dma.done [#allocation3], 128
        $region32: #{netd_forward.5} parent=27 // pred_fallthru
          _
        %s189 = smul.u32 26, %s17
        %p190 = scmp.lt.s32.totalorder %s189, 51
        %s191 = scalar_select %p190, %s189, 51
        %s192 = smul.addr %s191, 4
        %s193 = scalar_lea.vmem %s0, %s192
        %p194 = pneg %p38
        %p195 = pneg %p35
        %p196 = pneg %p59
        %p197 = pneg %p56
        %p198 = pneg %p85
        %p199 = pneg %p82
        %s200 = smul.u32 26, %s17
        %p201 = scmp.lt.s32.totalorder %s200, 51
        %s202 = scalar_select %p201, %s200, 51
        %s203 = smul.addr %s202, 4
        %s204 = scalar_lea.vmem %s2, %s203
        %p205 = pneg %p111
        %p206 = pneg %p108
        %p207 = scmp.lt.s32.totalorder %s17, 1
        %s208 = scalar_select %p207, %s17, 1
        %s209 = scalar_lea.vmem %s3, %s208
        %p210 = pneg %p137
        %p211 = pneg %p134
        %p212 = scmp.lt.s32.totalorder %s17, 1
        %s213 = scalar_select %p212, %s17, 1
        %s214 = scalar_lea.vmem %s4, %s213
        %s215 = smul.u32 26, %s17
        %p216 = scmp.lt.s32.totalorder %s215, 51
        %s217 = scalar_select %p216, %s215, 51
        %s218 = smul.addr %s217, 4
        %s219 = scalar_lea.vmem %s0, %s218
        %s220 = smul.u32 26, %s17
        %s221 = smul.u32 26, %s17
        %p222 = scmp.lt.s32.totalorder %s221, 51
        %s223 = scalar_select %p222, %s221, 51
        %s224 = smul.addr %s223, 4
        %s225 = scalar_lea.vmem %s2, %s224
        %s226 = smul.u32 26, %s17
        %p227 = scmp.lt.s32.totalorder %s17, 1
        %s228 = scalar_select %p227, %s17, 1
        %s229 = scalar_lea.vmem %s3, %s228
        %p230 = scmp.lt.s32.totalorder %s17, 1
        %s231 = scalar_select %p230, %s17, 1
        %s232 = scalar_lea.vmem %s4, %s231
        %v234 = vld [vmem:[%s219] sm:$0xf]
        %v235 = vld [vmem:[%s219 + $0x4] sm:$0xf]
        %v236 = vld [vmem:[%s219 + $0x8] sm:$0xf]
        %v237 = vld [vmem:[%s219 + $0xc] sm:$0xf]
        %v238 = vld [vmem:[%s219 + $0x10] sm:$0xf]
        %v239 = vld [vmem:[%s219 + $0x14] sm:$0xf]
        %v240 = vld [vmem:[%s219 + $0x18] sm:$0xf]
        %v241 = vld [vmem:[%s219 + $0x1c] sm:$0xf]
        %v242 = vld [vmem:[%s219 + $0x20] sm:$0xf]
        %v243 = vld [vmem:[%s219 + $0x24] sm:$0xf]
        %v244 = vld [vmem:[%s219 + $0x28] sm:$0xf]
        %v245 = vld [vmem:[%s219 + $0x2c] sm:$0xf]
        %v246 = vld [vmem:[%s219 + $0x30] sm:$0xf]
        %v247 = vld [vmem:[%s219 + $0x34] sm:$0xf]
        %v248 = vld [vmem:[%s219 + $0x38] sm:$0xf]
        %v249 = vld [vmem:[%s219 + $0x3c] sm:$0xf]
        %v250 = vld [vmem:[%s219 + $0x40] sm:$0xf]
        %v251 = vld [vmem:[%s219 + $0x44] sm:$0xf]
        %v252 = vld [vmem:[%s219 + $0x48] sm:$0xf]
        %v253 = vld [vmem:[%s219 + $0x4c] sm:$0xf]
        %v254 = vld [vmem:[%s219 + $0x50] sm:$0xf]
        %v255 = vld [vmem:[%s219 + $0x54] sm:$0xf]
        %v256 = vld [vmem:[%s219 + $0x58] sm:$0xf]
        %v257 = vld [vmem:[%s219 + $0x5c] sm:$0xf]
        %v258 = vld [vmem:[%s219 + $0x60] sm:$0xf]
        %v259 = vld [vmem:[%s219 + $0x64] sm:$0xf]
        %v260 = vld [vmem:[#allocation2] sm:$0xf]
        %v261 = vld [vmem:[#allocation2 + $0x4] sm:$0x1]
        %v288 = vunpack.c.l.b16 %v234
        %v289 = vunpack.c.l.b16 %v235
        %v290 = vunpack.c.l.b16 %v236
        %v291 = vunpack.c.l.b16 %v237
        %v292 = vunpack.c.l.b16 %v238
        %v293 = vunpack.c.l.b16 %v239
        %v294 = vunpack.c.l.b16 %v240
        %v295 = vunpack.c.l.b16 %v241
        %v296 = vunpack.c.l.b16 %v242
        %v297 = vunpack.c.l.b16 %v243
        %v298 = vunpack.c.l.b16 %v244
        %v299 = vunpack.c.l.b16 %v245
        %v300 = vunpack.c.l.b16 %v246
        %v301 = vunpack.c.l.b16 %v247
        %v302 = vunpack.c.l.b16 %v248
        %v303 = vunpack.c.l.b16 %v249
        %v304 = vunpack.c.l.b16 %v250
        %v305 = vunpack.c.l.b16 %v251
        %v306 = vunpack.c.l.b16 %v252
        %v307 = vunpack.c.l.b16 %v253
        %v308 = vunpack.c.l.b16 %v254
        %v309 = vunpack.c.l.b16 %v255
        %v310 = vunpack.c.l.b16 %v256
        %v311 = vunpack.c.l.b16 %v257
        %v312 = vunpack.c.l.b16 %v258
        %v313 = vunpack.c.l.b16 %v259
        %v314 = vpack.c.b16 %v289, %v288
        %v315 = vpack.c.b16 %v291, %v290
        %v316 = vpack.c.b16 %v293, %v292
        %v317 = vpack.c.b16 %v295, %v294
        %v318 = vpack.c.b16 %v297, %v296
        %v319 = vpack.c.b16 %v299, %v298
        %v320 = vpack.c.b16 %v301, %v300
        %v321 = vpack.c.b16 %v303, %v302
        %v322 = vpack.c.b16 %v305, %v304
        %v323 = vpack.c.b16 %v307, %v306
        %v324 = vpack.c.b16 %v309, %v308
        %v325 = vpack.c.b16 %v311, %v310
        %v326 = vpack.c.b16 %v313, %v312
        %v329 = vunpack.c.l.b16 %v260
        %v330 = vunpack.c.l.b16 %v261
        %v331 = vpack.c.b16 %v330, %v329
        %vm332 = vcmask 72704
        %v334 = vsel %vm332, %v314, 0
        %v337 = vsel %vm332, %v315, 0
        %v340 = vsel %vm332, %v316, 0
        %v343 = vsel %vm332, %v317, 0
        %v346 = vsel %vm332, %v318, 0
        %v349 = vsel %vm332, %v319, 0
        %v352 = vsel %vm332, %v320, 0
        %v355 = vsel %vm332, %v321, 0
        %v358 = vsel %vm332, %v322, 0
        %v361 = vsel %vm332, %v323, 0
        %v364 = vsel %vm332, %v324, 0
        %v367 = vsel %vm332, %v325, 0
        %v370 = vsel %vm332, %v326, 0
        %vm372 = vcmask 1043456
        %vm373 = vcmask 1044480
        %v374 = vsel %vm372, 4294967295, 65535
        %v375 = vsel %vm373, %v374, 0
        %v377 = vand.u32 %v331, %v375
        %379 = vmatprep.subr.bf16.mxu0 0
        %380 = vmatpush1.bf16.msra.mxu0 0
        %381 = vmatprep.subr.bf16.mxu0 0
        %382 = vmatpush1.bf16.msra.mxu0 0
        %383 = vmatprep.subr.bf16.mxu0 0
        %384 = vmatpush1.bf16.msra.mxu0 0
        %385 = vmatprep.subr.bf16.mxu0 0
        %386 = vmatpush1.bf16.msra.mxu0 0
        %387 = vmatprep.subr.bf16.mxu0 0
        %388 = vmatpush1.bf16.msra.mxu0 0
        %389 = vmatprep.subr.bf16.mxu0 0
        %390 = vmatpush1.bf16.msra.mxu0 0
        %391 = vmatprep.subr.bf16.mxu0 0
        %392 = vmatpush1.bf16.msra.mxu0 0
        %393 = vmatprep.subr.bf16.mxu0 0
        %394 = vmatpush1.bf16.msra.mxu0 %v377
        %395 = vmatprep.subr.bf16.mxu0 0
        %396 = vmatpush2.bf16.msra.mxu0 0
        %397 = vmatprep.subr.bf16.mxu0 0
        %398 = vmatpush2.bf16.msra.mxu0 0
        %399 = vmatprep.subr.bf16.mxu0 0
        %400 = vmatpush2.bf16.msra.mxu0 0
        %401 = vmatprep.subr.bf16.mxu0 0
        %402 = vmatpush2.bf16.msra.mxu0 0
        %403 = vmatprep.subr.bf16.mxu0 0
        %404 = vmatpush2.bf16.msra.mxu0 0
        %405 = vmatprep.subr.bf16.mxu0 0
        %406 = vmatpush2.bf16.msra.mxu0 0
        %407 = vmatprep.subr.bf16.mxu0 0
        %408 = vmatpush2.bf16.msra.mxu0 0
        %409 = vmatprep.subr.bf16.mxu0 0
        %410 = vmatpush2.bf16.msra.mxu0 0
        %411 = vmatprep.mubr.bf16.mxu0 0
        %412 = vmatmul.mubr.bf16.gmra.mxu0 %v334
        %v413 = vpop.f32.mrf.mxu0
        %v414 = vadd.f32 0.0, %v413
        %v415 = vpop.f32.mrf.mxu0
        %v416 = vpop.f32.mrf.mxu0
        %v417 = vadd.f32 0.0, %v416
        %v418 = vpop.f32.mrf.mxu0
        %419 = vmatprep.mubr.bf16.mxu0 0
        %420 = vmatmul.mubr.bf16.gmra.mxu0 %v337
        %v421 = vpop.f32.mrf.mxu0
        %v422 = vadd.f32 0.0, %v421
        %v423 = vpop.f32.mrf.mxu0
        %v424 = vpop.f32.mrf.mxu0
        %v425 = vadd.f32 0.0, %v424
        %v426 = vpop.f32.mrf.mxu0
        %427 = vmatprep.mubr.bf16.mxu0 0
        %428 = vmatmul.mubr.bf16.gmra.mxu0 %v340
        %v429 = vpop.f32.mrf.mxu0
        %v430 = vadd.f32 0.0, %v429
        %v431 = vpop.f32.mrf.mxu0
        %v432 = vpop.f32.mrf.mxu0
        %v433 = vadd.f32 0.0, %v432
        %v434 = vpop.f32.mrf.mxu0
        %435 = vmatprep.mubr.bf16.mxu0 0
        %436 = vmatmul.mubr.bf16.gmra.mxu0 %v343
        %v437 = vpop.f32.mrf.mxu0
        %v438 = vadd.f32 0.0, %v437
        %v439 = vpop.f32.mrf.mxu0
        %v440 = vpop.f32.mrf.mxu0
        %v441 = vadd.f32 0.0, %v440
        %v442 = vpop.f32.mrf.mxu0
        %443 = vmatprep.mubr.bf16.mxu0 0
        %444 = vmatmul.mubr.bf16.gmra.mxu0 %v346
        %v445 = vpop.f32.mrf.mxu0
        %v446 = vadd.f32 0.0, %v445
        %v447 = vpop.f32.mrf.mxu0
        %v448 = vpop.f32.mrf.mxu0
        %v449 = vadd.f32 0.0, %v448
        %v450 = vpop.f32.mrf.mxu0
        %451 = vmatprep.mubr.bf16.mxu0 0
        %452 = vmatmul.mubr.bf16.gmra.mxu0 %v349
        %v453 = vpop.f32.mrf.mxu0
        %v454 = vadd.f32 0.0, %v453
        %v455 = vpop.f32.mrf.mxu0
        %v456 = vpop.f32.mrf.mxu0
        %v457 = vadd.f32 0.0, %v456
        %v458 = vpop.f32.mrf.mxu0
        %459 = vmatprep.mubr.bf16.mxu0 0
        %460 = vmatmul.mubr.bf16.gmra.mxu0 %v352
        %v461 = vpop.f32.mrf.mxu0
        %v462 = vadd.f32 0.0, %v461
        %v463 = vpop.f32.mrf.mxu0
        %v464 = vpop.f32.mrf.mxu0
        %v465 = vadd.f32 0.0, %v464
        %v466 = vpop.f32.mrf.mxu0
        %467 = vmatprep.mubr.bf16.mxu0 0
        %468 = vmatmul.mubr.bf16.gmra.mxu0 %v355
        %v469 = vpop.f32.mrf.mxu0
        %v470 = vadd.f32 0.0, %v469
        %v471 = vpop.f32.mrf.mxu0
        %v472 = vpop.f32.mrf.mxu0
        %v473 = vadd.f32 0.0, %v472
        %v474 = vpop.f32.mrf.mxu0
        %475 = vmatprep.mubr.bf16.mxu0 0
        %476 = vmatmul.mubr.bf16.gmra.mxu0 %v358
        %v477 = vpop.f32.mrf.mxu0
        %v478 = vadd.f32 0.0, %v477
        %v479 = vpop.f32.mrf.mxu0
        %v480 = vpop.f32.mrf.mxu0
        %v481 = vadd.f32 0.0, %v480
        %v482 = vpop.f32.mrf.mxu0
        %483 = vmatprep.mubr.bf16.mxu0 0
        %484 = vmatmul.mubr.bf16.gmra.mxu0 %v361
        %v485 = vpop.f32.mrf.mxu0
        %v486 = vadd.f32 0.0, %v485
        %v487 = vpop.f32.mrf.mxu0
        %v488 = vpop.f32.mrf.mxu0
        %v489 = vadd.f32 0.0, %v488
        %v490 = vpop.f32.mrf.mxu0
        %491 = vmatprep.mubr.bf16.mxu0 0
        %492 = vmatmul.mubr.bf16.gmra.mxu0 %v364
        %v493 = vpop.f32.mrf.mxu0
        %v494 = vadd.f32 0.0, %v493
        %v495 = vpop.f32.mrf.mxu0
        %v496 = vpop.f32.mrf.mxu0
        %v497 = vadd.f32 0.0, %v496
        %v498 = vpop.f32.mrf.mxu0
        %499 = vmatprep.mubr.bf16.mxu0 0
        %500 = vmatmul.mubr.bf16.gmra.mxu0 %v367
        %v501 = vpop.f32.mrf.mxu0
        %v502 = vadd.f32 0.0, %v501
        %v503 = vpop.f32.mrf.mxu0
        %v504 = vpop.f32.mrf.mxu0
        %v505 = vadd.f32 0.0, %v504
        %v506 = vpop.f32.mrf.mxu0
        %507 = vmatprep.mubr.bf16.mxu0 0
        %508 = vmatmul.mubr.bf16.gmra.mxu0 %v370
        %v509 = vpop.f32.mrf.mxu0
        %v510 = vadd.f32 0.0, %v509
        %v511 = vpop.f32.mrf.mxu0
        %v512 = vpop.f32.mrf.mxu0
        %v513 = vadd.f32 0.0, %v512
        %v514 = vpop.f32.mrf.mxu0
        %515 = vdwg.mxu0
        %v516 = vpack.c.bf16 %v417, %v414
        %v517 = vpack.c.bf16 %v425, %v422
        %v518 = vpack.c.bf16 %v433, %v430
        %v519 = vpack.c.bf16 %v441, %v438
        %v520 = vpack.c.bf16 %v449, %v446
        %v521 = vpack.c.bf16 %v457, %v454
        %v522 = vpack.c.bf16 %v465, %v462
        %v523 = vpack.c.bf16 %v473, %v470
        %v524 = vpack.c.bf16 %v481, %v478
        %v525 = vpack.c.bf16 %v489, %v486
        %v526 = vpack.c.bf16 %v497, %v494
        %v527 = vpack.c.bf16 %v505, %v502
        %v528 = vpack.c.bf16 %v513, %v510
        %v542 = vunpack.c.l.b16 %v516
        %v543 = vunpack.c.h.b16 %v516
        %v544 = vunpack.c.l.b16 %v517
        %v545 = vunpack.c.h.b16 %v517
        %v546 = vunpack.c.l.b16 %v518
        %v547 = vunpack.c.h.b16 %v518
        %v548 = vunpack.c.l.b16 %v519
        %v549 = vunpack.c.h.b16 %v519
        %v550 = vunpack.c.l.b16 %v520
        %v551 = vunpack.c.h.b16 %v520
        %v552 = vunpack.c.l.b16 %v521
        %v553 = vunpack.c.h.b16 %v521
        %v554 = vunpack.c.l.b16 %v522
        %v555 = vunpack.c.h.b16 %v522
        %v556 = vunpack.c.l.b16 %v523
        %v557 = vunpack.c.h.b16 %v523
        %v558 = vunpack.c.l.b16 %v524
        %v559 = vunpack.c.h.b16 %v524
        %v560 = vunpack.c.l.b16 %v525
        %v561 = vunpack.c.h.b16 %v525
        %v562 = vunpack.c.l.b16 %v526
        %v563 = vunpack.c.h.b16 %v526
        %v564 = vunpack.c.l.b16 %v527
        %v565 = vunpack.c.h.b16 %v527
        %v566 = vunpack.c.l.b16 %v528
        %v567 = vunpack.c.h.b16 %v528
        %v568 = vpack.c.b16 %v542, %v542
        %v569 = vpack.c.b16 %v543, %v543
        %v570 = vpack.c.b16 %v544, %v544
        %v571 = vpack.c.b16 %v545, %v545
        %v572 = vpack.c.b16 %v546, %v546
        %v573 = vpack.c.b16 %v547, %v547
        %v574 = vpack.c.b16 %v548, %v548
        %v575 = vpack.c.b16 %v549, %v549
        %v576 = vpack.c.b16 %v550, %v550
        %v577 = vpack.c.b16 %v551, %v551
        %v578 = vpack.c.b16 %v552, %v552
        %v579 = vpack.c.b16 %v553, %v553
        %v580 = vpack.c.b16 %v554, %v554
        %v581 = vpack.c.b16 %v555, %v555
        %v582 = vpack.c.b16 %v556, %v556
        %v583 = vpack.c.b16 %v557, %v557
        %v584 = vpack.c.b16 %v558, %v558
        %v585 = vpack.c.b16 %v559, %v559
        %v586 = vpack.c.b16 %v560, %v560
        %v587 = vpack.c.b16 %v561, %v561
        %v588 = vpack.c.b16 %v562, %v562
        %v589 = vpack.c.b16 %v563, %v563
        %v590 = vpack.c.b16 %v564, %v564
        %v591 = vpack.c.b16 %v565, %v565
        %v592 = vpack.c.b16 %v566, %v566
        %v593 = vpack.c.b16 %v567, %v567
        %vm620 = vcmask 519168
        %621 = vst.msk [vmem:[%s225] sm:$0xf] %vm620, %v568
        %622 = vst.msk [vmem:[%s225 + $0x4] sm:$0xf] %vm620, %v569
        %623 = vst.msk [vmem:[%s225 + $0x8] sm:$0xf] %vm620, %v570
        %624 = vst.msk [vmem:[%s225 + $0xc] sm:$0xf] %vm620, %v571
        %625 = vst.msk [vmem:[%s225 + $0x10] sm:$0xf] %vm620, %v572
        %626 = vst.msk [vmem:[%s225 + $0x14] sm:$0xf] %vm620, %v573
        %627 = vst.msk [vmem:[%s225 + $0x18] sm:$0xf] %vm620, %v574
        %628 = vst.msk [vmem:[%s225 + $0x1c] sm:$0xf] %vm620, %v575
        %629 = vst.msk [vmem:[%s225 + $0x20] sm:$0xf] %vm620, %v576
        %630 = vst.msk [vmem:[%s225 + $0x24] sm:$0xf] %vm620, %v577
        %631 = vst.msk [vmem:[%s225 + $0x28] sm:$0xf] %vm620, %v578
        %632 = vst.msk [vmem:[%s225 + $0x2c] sm:$0xf] %vm620, %v579
        %633 = vst.msk [vmem:[%s225 + $0x30] sm:$0xf] %vm620, %v580
        %634 = vst.msk [vmem:[%s225 + $0x34] sm:$0xf] %vm620, %v581
        %635 = vst.msk [vmem:[%s225 + $0x38] sm:$0xf] %vm620, %v582
        %636 = vst.msk [vmem:[%s225 + $0x3c] sm:$0xf] %vm620, %v583
        %637 = vst.msk [vmem:[%s225 + $0x40] sm:$0xf] %vm620, %v584
        %638 = vst.msk [vmem:[%s225 + $0x44] sm:$0xf] %vm620, %v585
        %639 = vst.msk [vmem:[%s225 + $0x48] sm:$0xf] %vm620, %v586
        %640 = vst.msk [vmem:[%s225 + $0x4c] sm:$0xf] %vm620, %v587
        %641 = vst.msk [vmem:[%s225 + $0x50] sm:$0xf] %vm620, %v588
        %642 = vst.msk [vmem:[%s225 + $0x54] sm:$0xf] %vm620, %v589
        %643 = vst.msk [vmem:[%s225 + $0x58] sm:$0xf] %vm620, %v590
        %644 = vst.msk [vmem:[%s225 + $0x5c] sm:$0xf] %vm620, %v591
        %645 = vst.msk [vmem:[%s225 + $0x60] sm:$0xf] %vm620, %v592
        %646 = vst.msk [vmem:[%s225 + $0x64] sm:$0xf] %vm620, %v593
        %vm647 = vcmask 523264
        %v648 = vsel %vm647, %v414, 0.0
        %v649 = vsel %vm647, %v417, 0.0
        %v650 = vadd.f32 %v648, %v649
        %v651 = vsel %vm647, %v422, 0.0
        %v652 = vadd.f32 %v650, %v651
        %v653 = vsel %vm647, %v425, 0.0
        %v654 = vadd.f32 %v652, %v653
        %v655 = vsel %vm647, %v430, 0.0
        %v656 = vadd.f32 %v654, %v655
        %v657 = vsel %vm647, %v433, 0.0
        %v658 = vadd.f32 %v656, %v657
        %v659 = vsel %vm647, %v438, 0.0
        %v660 = vadd.f32 %v658, %v659
        %v661 = vsel %vm647, %v441, 0.0
        %v662 = vadd.f32 %v660, %v661
        %v663 = vsel %vm647, %v446, 0.0
        %v664 = vadd.f32 %v662, %v663
        %v665 = vsel %vm647, %v449, 0.0
        %v666 = vadd.f32 %v664, %v665
        %v667 = vsel %vm647, %v454, 0.0
        %v668 = vadd.f32 %v666, %v667
        %v669 = vsel %vm647, %v457, 0.0
        %v670 = vadd.f32 %v668, %v669
        %v671 = vsel %vm647, %v462, 0.0
        %v672 = vadd.f32 %v670, %v671
        %v673 = vsel %vm647, %v465, 0.0
        %v674 = vadd.f32 %v672, %v673
        %v675 = vsel %vm647, %v470, 0.0
        %v676 = vadd.f32 %v674, %v675
        %v677 = vsel %vm647, %v473, 0.0
        %v678 = vadd.f32 %v676, %v677
        %v679 = vsel %vm647, %v478, 0.0
        %v680 = vadd.f32 %v678, %v679
        %v681 = vsel %vm647, %v481, 0.0
        %v682 = vadd.f32 %v680, %v681
        %v683 = vsel %vm647, %v486, 0.0
        %v684 = vadd.f32 %v682, %v683
        %v685 = vsel %vm647, %v489, 0.0
        %v686 = vadd.f32 %v684, %v685
        %v687 = vsel %vm647, %v494, 0.0
        %v688 = vadd.f32 %v686, %v687
        %v689 = vsel %vm647, %v497, 0.0
        %v690 = vadd.f32 %v688, %v689
        %v691 = vsel %vm647, %v502, 0.0
        %v692 = vadd.f32 %v690, %v691
        %v693 = vsel %vm647, %v505, 0.0
        %v694 = vadd.f32 %v692, %v693
        %v695 = vsel %vm647, %v510, 0.0
        %v696 = vadd.f32 %v694, %v695
        %v697 = vsel %vm647, %v513, 0.0
        %v698 = vadd.f32 %v696, %v697
        %v699 = vrot.slane %v698, 4
        %v700 = vadd.f32 %v698, %v699
        %v701 = vrot.slane %v700, 2
        %v702 = vadd.f32 %v700, %v701
        %v703 = vrot.slane %v702, 1
        %v704 = vadd.f32 %v702, %v703
        %vm705 = vcmask 516096
        %706 = vst.msk [vmem:[%s229] sm:$0x1] %vm705, %v704
        %v707 = vmul.f32 %v414, %v414
        %v708 = vmul.f32 %v417, %v417
        %v709 = vmul.f32 %v422, %v422
        %v710 = vmul.f32 %v425, %v425
        %v711 = vmul.f32 %v430, %v430
        %v712 = vmul.f32 %v433, %v433
        %v713 = vmul.f32 %v438, %v438
        %v714 = vmul.f32 %v441, %v441
        %v715 = vmul.f32 %v446, %v446
        %v716 = vmul.f32 %v449, %v449
        %v717 = vmul.f32 %v454, %v454
        %v718 = vmul.f32 %v457, %v457
        %v719 = vmul.f32 %v462, %v462
        %v720 = vmul.f32 %v465, %v465
        %v721 = vmul.f32 %v470, %v470
        %v722 = vmul.f32 %v473, %v473
        %v723 = vmul.f32 %v478, %v478
        %v724 = vmul.f32 %v481, %v481
        %v725 = vmul.f32 %v486, %v486
        %v726 = vmul.f32 %v489, %v489
        %v727 = vmul.f32 %v494, %v494
        %v728 = vmul.f32 %v497, %v497
        %v729 = vmul.f32 %v502, %v502
        %v730 = vmul.f32 %v505, %v505
        %v731 = vmul.f32 %v510, %v510
        %v732 = vmul.f32 %v513, %v513
        %v733 = vsel %vm647, %v707, 0.0
        %v734 = vsel %vm647, %v708, 0.0
        %v735 = vadd.f32 %v733, %v734
        %v736 = vsel %vm647, %v709, 0.0
        %v737 = vadd.f32 %v735, %v736
        %v738 = vsel %vm647, %v710, 0.0
        %v739 = vadd.f32 %v737, %v738
        %v740 = vsel %vm647, %v711, 0.0
        %v741 = vadd.f32 %v739, %v740
        %v742 = vsel %vm647, %v712, 0.0
        %v743 = vadd.f32 %v741, %v742
        %v744 = vsel %vm647, %v713, 0.0
        %v745 = vadd.f32 %v743, %v744
        %v746 = vsel %vm647, %v714, 0.0
        %v747 = vadd.f32 %v745, %v746
        %v748 = vsel %vm647, %v715, 0.0
        %v749 = vadd.f32 %v747, %v748
        %v750 = vsel %vm647, %v716, 0.0
        %v751 = vadd.f32 %v749, %v750
        %v752 = vsel %vm647, %v717, 0.0
        %v753 = vadd.f32 %v751, %v752
        %v754 = vsel %vm647, %v718, 0.0
        %v755 = vadd.f32 %v753, %v754
        %v756 = vsel %vm647, %v719, 0.0
        %v757 = vadd.f32 %v755, %v756
        %v758 = vsel %vm647, %v720, 0.0
        %v759 = vadd.f32 %v757, %v758
        %v760 = vsel %vm647, %v721, 0.0
        %v761 = vadd.f32 %v759, %v760
        %v762 = vsel %vm647, %v722, 0.0
        %v763 = vadd.f32 %v761, %v762
        %v764 = vsel %vm647, %v723, 0.0
        %v765 = vadd.f32 %v763, %v764
        %v766 = vsel %vm647, %v724, 0.0
        %v767 = vadd.f32 %v765, %v766
        %v768 = vsel %vm647, %v725, 0.0
        %v769 = vadd.f32 %v767, %v768
        %v770 = vsel %vm647, %v726, 0.0
        %v771 = vadd.f32 %v769, %v770
        %v772 = vsel %vm647, %v727, 0.0
        %v773 = vadd.f32 %v771, %v772
        %v774 = vsel %vm647, %v728, 0.0
        %v775 = vadd.f32 %v773, %v774
        %v776 = vsel %vm647, %v729, 0.0
        %v777 = vadd.f32 %v775, %v776
        %v778 = vsel %vm647, %v730, 0.0
        %v779 = vadd.f32 %v777, %v778
        %v780 = vsel %vm647, %v731, 0.0
        %v781 = vadd.f32 %v779, %v780
        %v782 = vsel %vm647, %v732, 0.0
        %v783 = vadd.f32 %v781, %v782
        %v784 = vrot.slane %v783, 4
        %v785 = vadd.f32 %v783, %v784
        %v786 = vrot.slane %v785, 2
        %v787 = vadd.f32 %v785, %v786
        %v788 = vrot.slane %v787, 1
        %v789 = vadd.f32 %v787, %v788
        %790 = vst.msk [vmem:[%s232] sm:$0x1] %vm705, %v789
        %s791 = smul.u32 26, %s17
        %p792 = scmp.lt.s32.totalorder %s791, 51
        %s793 = scalar_select %p792, %s791, 51
        %s794 = smul.addr %s793, 4
        %s795 = scalar_lea.vmem %s2, %s794
        %p796 = scmp.lt.s32.totalorder %s17, 1
        %s797 = scalar_select %p796, %s17, 1
        %s798 = scalar_lea.vmem %s3, %s797
        %p799 = scmp.lt.s32.totalorder %s17, 1
        %s800 = scalar_select %p799, %s17, 1
        %s801 = scalar_lea.vmem %s4, %s800
        // Predicated region
        $region33: #{netd_forward.5} parent=27 // pred_check
          %p802 = pneg %p82
        $region34: #{netd_forward.5} parent=27 // pred_check_branch
          %804 = sbr.rel (%p802) target = $region36
        $region35: #{netd_forward.5} parent=27 // pred_region
          %s805 = smul.u32 26, %s17
        $region36: #{netd_forward.5} parent=27 // pred_fallthru
          _
        // Predicated region
        $region37: #{netd_forward.5} parent=27 // pred_check
          %p806 = pneg %p108
        $region38: #{netd_forward.5} parent=27 // pred_check_branch
          %808 = sbr.rel (%p806) target = $region40
        $region39: #{netd_forward.5} parent=27 // pred_region
          _
        $region40: #{netd_forward.5} parent=27 // pred_fallthru
          _
        // Predicated region
        $region41: #{netd_forward.5} parent=27 // pred_check
          %p809 = pneg %p134
        $region42: #{netd_forward.5} parent=27 // pred_check_branch
          %811 = sbr.rel (%p809) target = $region44
        $region43: #{netd_forward.5} parent=27 // pred_region
          _
        $region44: #{netd_forward.5} parent=27 // pred_fallthru
          _
      $region28: #{netd_forward.5} parent=5 // pred_fallthru
        _
      %p812 = scmp.le.s32.totalorder 2, %s12
      // Predicated region
      $region45: #{netd_forward.5} parent=5 // pred_check
        %p813 = pneg %p812
      $region46: #{netd_forward.5} parent=5 // pred_check_branch
        %815 = sbr.rel (%p813) target = $region48
      $region47: #{netd_forward.5} parent=5 // pred_region
        %s816 = ssub.s32 %s12, 2
        // Predicated region
        $region49: #{netd_forward.5} parent=47 // pred_check
          %p817 = pneg %p88
        $region50: #{netd_forward.5} parent=47 // pred_check_branch
          %819 = sbr.rel (%p817) target = $region52
        $region51: #{netd_forward.5} parent=47 // pred_region
          %s820 = smul.u32 26, %s18
          %p821 = scmp.lt.s32.totalorder %s820, 51
          %s822 = scalar_select %p821, %s820, 51
          %s823 = smul.addr %s822, 4
          %s824 = scalar_lea.vmem %s2, %s823
        $region52: #{netd_forward.5} parent=47 // pred_fallthru
          _
        // Predicated region
        $region53: #{netd_forward.5} parent=47 // pred_check
          %p825 = pneg %p114
        $region54: #{netd_forward.5} parent=47 // pred_check_branch
          %827 = sbr.rel (%p825) target = $region56
        $region55: #{netd_forward.5} parent=47 // pred_region
          %p828 = scmp.lt.s32.totalorder %s18, 1
          %s829 = scalar_select %p828, %s18, 1
          %s830 = scalar_lea.vmem %s3, %s829
        $region56: #{netd_forward.5} parent=47 // pred_fallthru
          _
        // Predicated region
        $region57: #{netd_forward.5} parent=47 // pred_check
          %p831 = pneg %p140
        $region58: #{netd_forward.5} parent=47 // pred_check_branch
          %833 = sbr.rel (%p831) target = $region60
        $region59: #{netd_forward.5} parent=47 // pred_region
          %p834 = scmp.lt.s32.totalorder %s18, 1
          %s835 = scalar_select %p834, %s18, 1
          %s836 = scalar_lea.vmem %s4, %s835
        $region60: #{netd_forward.5} parent=47 // pred_fallthru
          _
      $region48: #{netd_forward.5} parent=5 // pred_fallthru
        _
    $region6: #{netd_forward.5} parent=1 // loop_footer
      %s16 = sadd.s32 1, %s12
    $region7: #{netd_forward.5} parent=1 // loop_footer_branch
      %11 = sbr.rel target = $region3
    $region8: #{netd_forward.5} parent=1 // loop_exit
      _
    %837 = vsyncpa [#allocation3], 1
    %s838 = scalar_lea.sflag [#allocation3], 1
    %839 = vsyncpa %s838, 1

// kernel: netd_forward.8
$region0: #{netd_forward.8}
  #allocation0 [shape = 'u32[]', space=smem, size = 0x4, offset = 0x4, fixed_abs, tag = 'smem constant byte address 0x4 - core index']
  #allocation1 [shape = 'u32[144,128]{1,0:T(1,128)}', space=vmem, size = 0x12000, scoped, tag = 'internal scratch']
  %s0 = inlined_call_operand.vmem [shape: f32[2,1,128], index: 0, kind: input, shape index: {}]
  %s1 = inlined_call_operand.vmem [shape: f32[2,1,128], index: 1, kind: input, shape index: {}]
  %s2 = inlined_call_operand.vmem [shape: f32[1,128], index: 2, kind: input, shape index: {}]
  %s3 = inlined_call_operand.vmem [shape: f32[1,128], index: 3, kind: input, shape index: {}]
  %s4 = inlined_call_operand.vmem [shape: bf16[128,128], index: 4, kind: input, shape index: {}]
  %s5 = inlined_call_operand.vmem [shape: bf16[128,128], index: 5, kind: output, shape index: {}]
  %s6 = sld [smem:[#allocation0]]
  $region53: #{netd_forward.8} parent=0
    _
  %s8 = ssub.s32 1, %s6
  %s9 = scalar_select 0, %s8, %s6
  loop: start=0, step=1, limit=4
  $region2: #{netd_forward.8} parent=0 // loop_pre_header
    _
  $region3: #{netd_forward.8} parent=0 // loop_header
    %s11 = sphi 0, %s15
    %p12 = scmp.ge.s32.totalorder %s11, 4
    %s19 = sphi 0, %s19
    %s21 = sphi 0, %s19
    %s22 = sphi 0, %s21
    %s36 = sphi 0, %s22
    %s40 = sphi 0, %s40
    %s42 = sphi 0, %s40
    %s43 = sphi 0, %s42
    %s57 = sphi 0, %s43
    %s61 = sphi 0, %s61
    %s63 = sphi 0, %s61
    %s64 = sphi 0, %s63
    %s78 = sphi 0, %s64
    %s82 = sphi 0, %s82
    %s84 = sphi 0, %s82
    %s85 = sphi 0, %s84
    %s99 = sphi 0, %s85
    %s105 = sphi 0, %s107
    %s108 = sphi 0, %s105
    %s109 = sphi 0, %s108
    %s125 = sphi 0, %s109
    %s131 = sphi 0, %s133
    %s134 = sphi 0, %s131
    %s135 = sphi 0, %s134
    %s151 = sphi 0, %s135
  $region4: #{netd_forward.8} parent=0 // loop_header_branch
    %14 = sbr.rel (%p12) target = $region8
  $region5: #{netd_forward.8} parent=0 // loop_body
    %s16 = ssub.s32 %s11, 1
    %s17 = ssub.s32 %s11, 2
    %s18 = sadd.s32 %s11, 1
    %s20 = sadd.s32 %s19, 1
    %p23 = scmp.eq.s32.totalorder %s11, 1
    %p24 = scmp.ne.s32.totalorder %s19, %s21
    %p25 = scmp.eq.s32.totalorder %s11, 0
    %p26 = por %p24, %p25
    %p27 = scmp.ne.s32.totalorder %s19, %s21
    %p28 = scmp.eq.s32.totalorder %s16, 1
    %p29 = por %p27, %p28
    %p30 = scmp.ne.s32.totalorder %s21, %s22
    %p31 = scmp.eq.s32.totalorder %s16, 0
    %p32 = por %p30, %p31
    %p33 = scmp.ne.s32.totalorder %s21, %s22
    %p34 = scmp.eq.s32.totalorder %s17, 1
    %p35 = por %p33, %p34
    %p37 = scmp.ne.s32.totalorder %s22, %s36
    %p38 = scmp.eq.s32.totalorder %s17, 0
    %p39 = por %p37, %p38
    %s41 = sadd.s32 %s40, 1
    %p44 = scmp.eq.s32.totalorder %s11, 1
    %p45 = scmp.ne.s32.totalorder %s40, %s42
    %p46 = scmp.eq.s32.totalorder %s11, 0
    %p47 = por %p45, %p46
    %p48 = scmp.ne.s32.totalorder %s40, %s42
    %p49 = scmp.eq.s32.totalorder %s16, 1
    %p50 = por %p48, %p49
    %p51 = scmp.ne.s32.totalorder %s42, %s43
    %p52 = scmp.eq.s32.totalorder %s16, 0
    %p53 = por %p51, %p52
    %p54 = scmp.ne.s32.totalorder %s42, %s43
    %p55 = scmp.eq.s32.totalorder %s17, 1
    %p56 = por %p54, %p55
    %p58 = scmp.ne.s32.totalorder %s43, %s57
    %p59 = scmp.eq.s32.totalorder %s17, 0
    %p60 = por %p58, %p59
    %s62 = sadd.s32 %s61, 1
    %p65 = scmp.eq.s32.totalorder %s11, 1
    %p66 = scmp.ne.s32.totalorder %s61, %s63
    %p67 = scmp.eq.s32.totalorder %s11, 0
    %p68 = por %p66, %p67
    %p69 = scmp.ne.s32.totalorder %s61, %s63
    %p70 = scmp.eq.s32.totalorder %s16, 1
    %p71 = por %p69, %p70
    %p72 = scmp.ne.s32.totalorder %s63, %s64
    %p73 = scmp.eq.s32.totalorder %s16, 0
    %p74 = por %p72, %p73
    %p75 = scmp.ne.s32.totalorder %s63, %s64
    %p76 = scmp.eq.s32.totalorder %s17, 1
    %p77 = por %p75, %p76
    %p79 = scmp.ne.s32.totalorder %s64, %s78
    %p80 = scmp.eq.s32.totalorder %s17, 0
    %p81 = por %p79, %p80
    %s83 = sadd.s32 %s82, 1
    %p86 = scmp.eq.s32.totalorder %s11, 1
    %p87 = scmp.ne.s32.totalorder %s82, %s84
    %p88 = scmp.eq.s32.totalorder %s11, 0
    %p89 = por %p87, %p88
    %p90 = scmp.ne.s32.totalorder %s82, %s84
    %p91 = scmp.eq.s32.totalorder %s16, 1
    %p92 = por %p90, %p91
    %p93 = scmp.ne.s32.totalorder %s84, %s85
    %p94 = scmp.eq.s32.totalorder %s16, 0
    %p95 = por %p93, %p94
    %p96 = scmp.ne.s32.totalorder %s84, %s85
    %p97 = scmp.eq.s32.totalorder %s17, 1
    %p98 = por %p96, %p97
    %p100 = scmp.ne.s32.totalorder %s85, %s99
    %p101 = scmp.eq.s32.totalorder %s17, 0
    %p102 = por %p100, %p101
    %s103 = ssub.s32 %s11, %s18
    %p104 = scmp.eq.s32.totalorder %s103, 0
    %s106 = sadd.s32 %s105, 1
    %s107 = scalar_select %p104, %s105, %s106
    %p110 = pneg %p104
    %p111 = scmp.eq.s32.totalorder %s11, 1
    %p112 = por %p110, %p111
    %p113 = scmp.ne.s32.totalorder %s105, %s108
    %p114 = scmp.eq.s32.totalorder %s11, 0
    %p115 = por %p113, %p114
    %p116 = scmp.ne.s32.totalorder %s105, %s108
    %p117 = scmp.eq.s32.totalorder %s16, 1
    %p118 = por %p116, %p117
    %p119 = scmp.ne.s32.totalorder %s108, %s109
    %p120 = scmp.eq.s32.totalorder %s16, 0
    %p121 = por %p119, %p120
    %p122 = scmp.ne.s32.totalorder %s108, %s109
    %p123 = scmp.eq.s32.totalorder %s17, 1
    %p124 = por %p122, %p123
    %p126 = scmp.ne.s32.totalorder %s109, %s125
    %p127 = scmp.eq.s32.totalorder %s17, 0
    %p128 = por %p126, %p127
    %s129 = ssub.s32 %s11, %s18
    %p130 = scmp.eq.s32.totalorder %s129, 0
    %s132 = sadd.s32 %s131, 1
    %s133 = scalar_select %p130, %s131, %s132
    %p136 = pneg %p130
    %p137 = scmp.eq.s32.totalorder %s11, 1
    %p138 = por %p136, %p137
    %p139 = scmp.ne.s32.totalorder %s131, %s134
    %p140 = scmp.eq.s32.totalorder %s11, 0
    %p141 = por %p139, %p140
    %p142 = scmp.ne.s32.totalorder %s131, %s134
    %p143 = scmp.eq.s32.totalorder %s16, 1
    %p144 = por %p142, %p143
    %p145 = scmp.ne.s32.totalorder %s134, %s135
    %p146 = scmp.eq.s32.totalorder %s16, 0
    %p147 = por %p145, %p146
    %p148 = scmp.ne.s32.totalorder %s134, %s135
    %p149 = scmp.eq.s32.totalorder %s17, 1
    %p150 = por %p148, %p149
    %p152 = scmp.ne.s32.totalorder %s135, %s151
    %p153 = scmp.eq.s32.totalorder %s17, 0
    %p154 = por %p152, %p153
    %p155 = scmp.le.s32.totalorder 1, %s11
    %p156 = scmp.lt.s32.totalorder %s11, 3
    %p157 = pnand %p155, %p156
    %p158 = pneg %p157
    // Predicated region
    $region9: #{netd_forward.8} parent=5 // pred_check
      _
    $region10: #{netd_forward.8} parent=5 // pred_check_branch
      %160 = sbr.rel (%p157) target = $region12
    $region11: #{netd_forward.8} parent=5 // pred_region
      %s161 = ssub.s32 %s11, 1
      // Predicated region
      $region13: #{netd_forward.8} parent=11 // pred_check
        %p162 = pneg %p32
      $region14: #{netd_forward.8} parent=11 // pred_check_branch
        %164 = sbr.rel (%p162) target = $region16
      $region15: #{netd_forward.8} parent=11 // pred_region
        _
      $region16: #{netd_forward.8} parent=11 // pred_fallthru
        _
      // Predicated region
      $region17: #{netd_forward.8} parent=11 // pred_check
        %p165 = pneg %p53
      $region18: #{netd_forward.8} parent=11 // pred_check_branch
        %167 = sbr.rel (%p165) target = $region20
      $region19: #{netd_forward.8} parent=11 // pred_region
        _
      $region20: #{netd_forward.8} parent=11 // pred_fallthru
        _
      // Predicated region
      $region21: #{netd_forward.8} parent=11 // pred_check
        %p168 = pneg %p74
      $region22: #{netd_forward.8} parent=11 // pred_check_branch
        %170 = sbr.rel (%p168) target = $region24
      $region23: #{netd_forward.8} parent=11 // pred_region
        _
      $region24: #{netd_forward.8} parent=11 // pred_fallthru
        _
      // Predicated region
      $region25: #{netd_forward.8} parent=11 // pred_check
        %p171 = pneg %p95
      $region26: #{netd_forward.8} parent=11 // pred_check_branch
        %173 = sbr.rel (%p171) target = $region28
      $region27: #{netd_forward.8} parent=11 // pred_region
        _
      $region28: #{netd_forward.8} parent=11 // pred_fallthru
        _
    $region12: #{netd_forward.8} parent=5 // pred_fallthru
      _
    %p174 = scmp.lt.s32.totalorder %s11, 2
    // Predicated region
    $region29: #{netd_forward.8} parent=5 // pred_check
      %p175 = pneg %p174
    $region30: #{netd_forward.8} parent=5 // pred_check_branch
      %177 = sbr.rel (%p175) target = $region32
    $region31: #{netd_forward.8} parent=5 // pred_region
      // Predicated region
      $region33: #{netd_forward.8} parent=31 // pred_check
        %p178 = pneg %p115
      $region34: #{netd_forward.8} parent=31 // pred_check_branch
        %180 = sbr.rel (%p178) target = $region36
      $region35: #{netd_forward.8} parent=31 // pred_region
        %s181 = smul.u32 8, %s11
        %p182 = scmp.lt.s32.totalorder %s181, 15
        %s183 = scalar_select %p182, %s181, 15
        %s184 = smul.addr %s183, 4
        %s185 = scalar_lea.vmem %s4, %s184
        %s186 = smul.u32 8, %s11
      $region36: #{netd_forward.8} parent=31 // pred_fallthru
        _
    $region32: #{netd_forward.8} parent=5 // pred_fallthru
      _
    %p187 = scmp.le.s32.totalorder 1, %s11
    %p188 = scmp.lt.s32.totalorder %s11, 3
    %p189 = pnand %p187, %p188
    %p190 = pneg %p189
    // Predicated region
    $region37: #{netd_forward.8} parent=5 // pred_check
      _
    $region38: #{netd_forward.8} parent=5 // pred_check_branch
      %192 = sbr.rel (%p189) target = $region40
    $region39: #{netd_forward.8} parent=5 // pred_region
      %s193 = ssub.s32 %s11, 1
      %p194 = pneg %p32
      %p195 = pneg %p29
      %p196 = pneg %p53
      %p197 = pneg %p50
      %p198 = pneg %p74
      %p199 = pneg %p71
      %p200 = pneg %p95
      %p201 = pneg %p92
      %s202 = smul.u32 8, %s16
      %p203 = scmp.lt.s32.totalorder %s202, 15
      %s204 = scalar_select %p203, %s202, 15
      %s205 = smul.addr %s204, 4
      %s206 = scalar_lea.vmem %s4, %s205
      %p207 = pneg %p121
      %p208 = pneg %p118
      %p209 = pneg %p147
      %p210 = pneg %p144
      %s211 = smul.u32 8, %s16
      %p212 = scmp.lt.s32.totalorder %s211, 15
      %s213 = scalar_select %p212, %s211, 15
      %s214 = smul.addr %s213, 4
      %s215 = scalar_lea.vmem %s5, %s214
      %s216 = smul.u32 8, %s16
      %p217 = scmp.lt.s32.totalorder %s216, 15
      %s218 = scalar_select %p217, %s216, 15
      %s219 = smul.addr %s218, 4
      %s220 = scalar_lea.vmem %s4, %s219
      %s221 = smul.u32 8, %s16
      %s222 = smul.u32 8, %s16
      %p223 = scmp.lt.s32.totalorder %s222, 15
      %s224 = scalar_select %p223, %s222, 15
      %s225 = smul.addr %s224, 4
      %s226 = scalar_lea.vmem %s5, %s225
      %s227 = smul.u32 8, %s16
      %v228 = vld [vmem:[%s0] sm:$0x1]
      %v229 = vld [vmem:[%s0 + $0x1] sm:$0x1]
      %vm230 = vcmask 1040384
      %v231 = vsel %vm230, %v228, 0.0
      %v232 = vsel %vm230, %v229, 0.0
      %v233 = vadd.f32 %v231, %v232
      %v234 = vmul.f32 %v233, 0.010204081
      %v235 = vld [vmem:[%s1] sm:$0x1]
      %v236 = vld [vmem:[%s1 + $0x1] sm:$0x1]
      %v237 = vsel %vm230, %v235, 0.0
      %v238 = vsel %vm230, %v236, 0.0
      %v239 = vadd.f32 %v237, %v238
      %v240 = vmul.f32 %v239, 0.010204081
      %v241 = vmul.f32 %v234, %v234
      %v242 = vsub.f32 %v240, %v241
      %v243 = vmax.f32 %v242, 0.0
      %v244 = vld [vmem:[%s2] sm:$0x1]
      %v245 = vadd.f32 %v243, 1e-05
      %v246 = vrsqrt.pop %v245
      %v247 = vmul.f32 %v244, %v246
      %v248 = vld [vmem:[%s3] sm:$0x1]
      %v249 = vmul.f32 %v234, %v247
      %v250 = vsub.f32 %v248, %v249
      %v251 = vld [vmem:[%s220] sm:$0xf]
      %v252 = vld [vmem:[%s220 + $0x4] sm:$0xf]
      %v253 = vld [vmem:[%s220 + $0x8] sm:$0xf]
      %v254 = vld [vmem:[%s220 + $0xc] sm:$0xf]
      %v255 = vld [vmem:[%s220 + $0x10] sm:$0xf]
      %v256 = vld [vmem:[%s220 + $0x14] sm:$0xf]
      %v257 = vld [vmem:[%s220 + $0x18] sm:$0xf]
      %v258 = vld [vmem:[%s220 + $0x1c] sm:$0xf]
      %v259 = vunpack.c.l.bf16 %v251
      %v260 = vunpack.c.l.bf16 %v252
      %v261 = vunpack.c.l.bf16 %v253
      %v262 = vunpack.c.l.bf16 %v254
      %v263 = vunpack.c.l.bf16 %v255
      %v264 = vunpack.c.l.bf16 %v256
      %v265 = vunpack.c.l.bf16 %v257
      %v266 = vunpack.c.l.bf16 %v258
      %v268 = vlaneseq
      %v269 = vshrl.u32 %v268, 7
      %v270 = vsub.s32 0, %v269
      %v271 = vrot.slane %v247, %v270
      %v273 = vmul.f32 %v259, %v271
      %v274 = vmul.f32 %v260, %v271
      %v275 = vmul.f32 %v261, %v271
      %v276 = vmul.f32 %v262, %v271
      %v277 = vmul.f32 %v263, %v271
      %v278 = vmul.f32 %v264, %v271
      %v279 = vmul.f32 %v265, %v271
      %v280 = vmul.f32 %v266, %v271
      %v282 = vlaneseq
      %v283 = vshrl.u32 %v282, 7
      %v284 = vsub.s32 0, %v283
      %v285 = vrot.slane %v250, %v284
      %v287 = vadd.f32 %v273, %v285
      %v288 = vadd.f32 %v274, %v285
      %v289 = vadd.f32 %v275, %v285
      %v290 = vadd.f32 %v276, %v285
      %v291 = vadd.f32 %v277, %v285
      %v292 = vadd.f32 %v278, %v285
      %v293 = vadd.f32 %v279, %v285
      %v294 = vadd.f32 %v280, %v285
      %vm295 = vcmp.ge.f32.partialorder %v287, 0.0
      %vm296 = vcmp.ge.f32.partialorder %v288, 0.0
      %vm297 = vcmp.ge.f32.partialorder %v289, 0.0
      %vm298 = vcmp.ge.f32.partialorder %v290, 0.0
      %vm299 = vcmp.ge.f32.partialorder %v291, 0.0
      %vm300 = vcmp.ge.f32.partialorder %v292, 0.0
      %vm301 = vcmp.ge.f32.partialorder %v293, 0.0
      %vm302 = vcmp.ge.f32.partialorder %v294, 0.0
      %v303 = vmul.f32 %v287, 0.2
      %v304 = vmul.f32 %v288, 0.2
      %v305 = vmul.f32 %v289, 0.2
      %v306 = vmul.f32 %v290, 0.2
      %v307 = vmul.f32 %v291, 0.2
      %v308 = vmul.f32 %v292, 0.2
      %v309 = vmul.f32 %v293, 0.2
      %v310 = vmul.f32 %v294, 0.2
      %v311 = vsel %vm295, %v287, %v303
      %v312 = vsel %vm296, %v288, %v304
      %v313 = vsel %vm297, %v289, %v305
      %v314 = vsel %vm298, %v290, %v306
      %v315 = vsel %vm299, %v291, %v307
      %v316 = vsel %vm300, %v292, %v308
      %v317 = vsel %vm301, %v293, %v309
      %v318 = vsel %vm302, %v294, %v310
      %v319 = vpack.c.bf16 %v312, %v311
      %v320 = vpack.c.bf16 %v314, %v313
      %v321 = vpack.c.bf16 %v316, %v315
      %v322 = vpack.c.bf16 %v318, %v317
      %v327 = vunpack.c.l.b16 %v319
      %v328 = vunpack.c.h.b16 %v319
      %v329 = vunpack.c.l.b16 %v320
      %v330 = vunpack.c.h.b16 %v320
      %v331 = vunpack.c.l.b16 %v321
      %v332 = vunpack.c.h.b16 %v321
      %v333 = vunpack.c.l.b16 %v322
      %v334 = vunpack.c.h.b16 %v322
      %v335 = vpack.c.b16 %v327, %v327
      %v336 = vpack.c.b16 %v328, %v328
      %v337 = vpack.c.b16 %v329, %v329
      %v338 = vpack.c.b16 %v330, %v330
      %v339 = vpack.c.b16 %v331, %v331
      %v340 = vpack.c.b16 %v332, %v332
      %v341 = vpack.c.b16 %v333, %v333
      %v342 = vpack.c.b16 %v334, %v334
      %351 = vst [vmem:[%s226] sm:$0xf] %v335
      %352 = vst [vmem:[%s226 + $0x4] sm:$0xf] %v336
      %353 = vst [vmem:[%s226 + $0x8] sm:$0xf] %v337
      %354 = vst [vmem:[%s226 + $0xc] sm:$0xf] %v338
      %355 = vst [vmem:[%s226 + $0x10] sm:$0xf] %v339
      %356 = vst [vmem:[%s226 + $0x14] sm:$0xf] %v340
      %357 = vst [vmem:[%s226 + $0x18] sm:$0xf] %v341
      %358 = vst [vmem:[%s226 + $0x1c] sm:$0xf] %v342
      %s359 = smul.u32 8, %s16
      %p360 = scmp.lt.s32.totalorder %s359, 15
      %s361 = scalar_select %p360, %s359, 15
      %s362 = smul.addr %s361, 4
      %s363 = scalar_lea.vmem %s5, %s362
      // Predicated region
      $region41: #{netd_forward.8} parent=39 // pred_check
        %p364 = pneg %p144
      $region42: #{netd_forward.8} parent=39 // pred_check_branch
        %366 = sbr.rel (%p364) target = $region44
      $region43: #{netd_forward.8} parent=39 // pred_region
        %s367 = smul.u32 8, %s16
      $region44: #{netd_forward.8} parent=39 // pred_fallthru
        _
    $region40: #{netd_forward.8} parent=5 // pred_fallthru
      _
    %p368 = scmp.le.s32.totalorder 2, %s11
    // Predicated region
    $region45: #{netd_forward.8} parent=5 // pred_check
      %p369 = pneg %p368
    $region46: #{netd_forward.8} parent=5 // pred_check_branch
      %371 = sbr.rel (%p369) target = $region48
    $region47: #{netd_forward.8} parent=5 // pred_region
      %s372 = ssub.s32 %s11, 2
      // Predicated region
      $region49: #{netd_forward.8} parent=47 // pred_check
        %p373 = pneg %p150
      $region50: #{netd_forward.8} parent=47 // pred_check_branch
        %375 = sbr.rel (%p373) target = $region52
      $region51: #{netd_forward.8} parent=47 // pred_region
        %s376 = smul.u32 8, %s17
        %p377 = scmp.lt.s32.totalorder %s376, 15
        %s378 = scalar_select %p377, %s376, 15
        %s379 = smul.addr %s378, 4
        %s380 = scalar_lea.vmem %s5, %s379
      $region52: #{netd_forward.8} parent=47 // pred_fallthru
        _
    $region48: #{netd_forward.8} parent=5 // pred_fallthru
      _
  $region6: #{netd_forward.8} parent=0 // loop_footer
    %s15 = sadd.s32 1, %s11
  $region7: #{netd_forward.8} parent=0 // loop_footer_branch
    %10 = sbr.rel target = $region3
  $region8: #{netd_forward.8} parent=0 // loop_exit
    _

// kernel: netd_forward.7
$region0: #{netd_forward.7}
  #allocation0 [shape = 'u32[]', space=smem, size = 0x4, offset = 0x4, fixed_abs, tag = 'smem constant byte address 0x4 - core index']
  #allocation1 [shape = 'u32[144,128]{1,0:T(1,128)}', space=vmem, size = 0x12000, scoped, tag = 'internal scratch']
  %s0 = inlined_call_operand.vmem [shape: bf16[128,576], index: 0, kind: input, shape index: {}]
  %s1 = inlined_call_operand.vmem [shape: bf16[576,128], index: 1, kind: input, shape index: {}]
  %s2 = inlined_call_operand.vmem [shape: bf16[128,128], index: 2, kind: output, shape index: {0}]
  %s3 = inlined_call_operand.vmem [shape: f32[2,1,128], index: 3, kind: output, shape index: {1}]
  %s4 = inlined_call_operand.vmem [shape: f32[2,1,128], index: 4, kind: output, shape index: {2}]
  %5 = xla_tuple %s2, %s3, %s4
  %s6 = sld [smem:[#allocation0]]
  $region57: #{netd_forward.7} parent=0
    _
  %s8 = ssub.s32 1, %s6
  %s9 = scalar_select 0, %s8, %s6
  loop: start=0, step=1, limit=4
  $region2: #{netd_forward.7} parent=0 // loop_pre_header
    _
  $region3: #{netd_forward.7} parent=0 // loop_header
    %s11 = sphi 0, %s15
    %p12 = scmp.ge.s32.totalorder %s11, 4
    %s21 = sphi 0, %s23
    %s24 = sphi 0, %s21
    %s25 = sphi 0, %s24
    %s41 = sphi 0, %s25
    %s45 = sphi 0, %s45
    %s47 = sphi 0, %s45
    %s48 = sphi 0, %s47
    %s62 = sphi 0, %s48
    %s68 = sphi 0, %s70
    %s71 = sphi 0, %s68
    %s72 = sphi 0, %s71
    %s88 = sphi 0, %s72
    %s94 = sphi 0, %s96
    %s97 = sphi 0, %s94
    %s98 = sphi 0, %s97
    %s114 = sphi 0, %s98
    %s120 = sphi 0, %s122
    %s123 = sphi 0, %s120
    %s124 = sphi 0, %s123
    %s140 = sphi 0, %s124
  $region4: #{netd_forward.7} parent=0 // loop_header_branch
    %14 = sbr.rel (%p12) target = $region8
  $region5: #{netd_forward.7} parent=0 // loop_body
    %s16 = ssub.s32 %s11, 1
    %s17 = ssub.s32 %s11, 2
    %s18 = sadd.s32 %s11, 1
    %s19 = ssub.s32 %s11, %s18
    %p20 = scmp.eq.s32.totalorder %s19, 0
    %s22 = sadd.s32 %s21, 1
    %s23 = scalar_select %p20, %s21, %s22
    %p26 = pneg %p20
    %p27 = scmp.eq.s32.totalorder %s11, 1
    %p28 = por %p26, %p27
    %p29 = scmp.ne.s32.totalorder %s21, %s24
    %p30 = scmp.eq.s32.totalorder %s11, 0
    %p31 = por %p29, %p30
    %p32 = scmp.ne.s32.totalorder %s21, %s24
    %p33 = scmp.eq.s32.totalorder %s16, 1
    %p34 = por %p32, %p33
    %p35 = scmp.ne.s32.totalorder %s24, %s25
    %p36 = scmp.eq.s32.totalorder %s16, 0
    %p37 = por %p35, %p36
    %p38 = scmp.ne.s32.totalorder %s24, %s25
    %p39 = scmp.eq.s32.totalorder %s17, 1
    %p40 = por %p38, %p39
    %p42 = scmp.ne.s32.totalorder %s25, %s41
    %p43 = scmp.eq.s32.totalorder %s17, 0
    %p44 = por %p42, %p43
    %s46 = sadd.s32 %s45, 1
    %p49 = scmp.eq.s32.totalorder %s11, 1
    %p50 = scmp.ne.s32.totalorder %s45, %s47
    %p51 = scmp.eq.s32.totalorder %s11, 0
    %p52 = por %p50, %p51
    %p53 = scmp.ne.s32.totalorder %s45, %s47
    %p54 = scmp.eq.s32.totalorder %s16, 1
    %p55 = por %p53, %p54
    %p56 = scmp.ne.s32.totalorder %s47, %s48
    %p57 = scmp.eq.s32.totalorder %s16, 0
    %p58 = por %p56, %p57
    %p59 = scmp.ne.s32.totalorder %s47, %s48
    %p60 = scmp.eq.s32.totalorder %s17, 1
    %p61 = por %p59, %p60
    %p63 = scmp.ne.s32.totalorder %s48, %s62
    %p64 = scmp.eq.s32.totalorder %s17, 0
    %p65 = por %p63, %p64
    %s66 = ssub.s32 %s11, %s18
    %p67 = scmp.eq.s32.totalorder %s66, 0
    %s69 = sadd.s32 %s68, 1
    %s70 = scalar_select %p67, %s68, %s69
    %p73 = pneg %p67
    %p74 = scmp.eq.s32.totalorder %s11, 1
    %p75 = por %p73, %p74
    %p76 = scmp.ne.s32.totalorder %s68, %s71
    %p77 = scmp.eq.s32.totalorder %s11, 0
    %p78 = por %p76, %p77
    %p79 = scmp.ne.s32.totalorder %s68, %s71
    %p80 = scmp.eq.s32.totalorder %s16, 1
    %p81 = por %p79, %p80
    %p82 = scmp.ne.s32.totalorder %s71, %s72
    %p83 = scmp.eq.s32.totalorder %s16, 0
    %p84 = por %p82, %p83
    %p85 = scmp.ne.s32.totalorder %s71, %s72
    %p86 = scmp.eq.s32.totalorder %s17, 1
    %p87 = por %p85, %p86
    %p89 = scmp.ne.s32.totalorder %s72, %s88
    %p90 = scmp.eq.s32.totalorder %s17, 0
    %p91 = por %p89, %p90
    %s92 = ssub.s32 %s11, %s18
    %p93 = scmp.eq.s32.totalorder %s92, 0
    %s95 = sadd.s32 %s94, 1
    %s96 = scalar_select %p93, %s94, %s95
    %p99 = pneg %p93
    %p100 = scmp.eq.s32.totalorder %s11, 1
    %p101 = por %p99, %p100
    %p102 = scmp.ne.s32.totalorder %s94, %s97
    %p103 = scmp.eq.s32.totalorder %s11, 0
    %p104 = por %p102, %p103
    %p105 = scmp.ne.s32.totalorder %s94, %s97
    %p106 = scmp.eq.s32.totalorder %s16, 1
    %p107 = por %p105, %p106
    %p108 = scmp.ne.s32.totalorder %s97, %s98
    %p109 = scmp.eq.s32.totalorder %s16, 0
    %p110 = por %p108, %p109
    %p111 = scmp.ne.s32.totalorder %s97, %s98
    %p112 = scmp.eq.s32.totalorder %s17, 1
    %p113 = por %p111, %p112
    %p115 = scmp.ne.s32.totalorder %s98, %s114
    %p116 = scmp.eq.s32.totalorder %s17, 0
    %p117 = por %p115, %p116
    %s118 = ssub.s32 %s11, %s18
    %p119 = scmp.eq.s32.totalorder %s118, 0
    %s121 = sadd.s32 %s120, 1
    %s122 = scalar_select %p119, %s120, %s121
    %p125 = pneg %p119
    %p126 = scmp.eq.s32.totalorder %s11, 1
    %p127 = por %p125, %p126
    %p128 = scmp.ne.s32.totalorder %s120, %s123
    %p129 = scmp.eq.s32.totalorder %s11, 0
    %p130 = por %p128, %p129
    %p131 = scmp.ne.s32.totalorder %s120, %s123
    %p132 = scmp.eq.s32.totalorder %s16, 1
    %p133 = por %p131, %p132
    %p134 = scmp.ne.s32.totalorder %s123, %s124
    %p135 = scmp.eq.s32.totalorder %s16, 0
    %p136 = por %p134, %p135
    %p137 = scmp.ne.s32.totalorder %s123, %s124
    %p138 = scmp.eq.s32.totalorder %s17, 1
    %p139 = por %p137, %p138
    %p141 = scmp.ne.s32.totalorder %s124, %s140
    %p142 = scmp.eq.s32.totalorder %s17, 0
    %p143 = por %p141, %p142
    %p144 = scmp.le.s32.totalorder 1, %s11
    %p145 = scmp.lt.s32.totalorder %s11, 3
    %p146 = pnand %p144, %p145
    %p147 = pneg %p146
    // Predicated region
    $region9: #{netd_forward.7} parent=5 // pred_check
      _
    $region10: #{netd_forward.7} parent=5 // pred_check_branch
      %149 = sbr.rel (%p146) target = $region12
    $region11: #{netd_forward.7} parent=5 // pred_region
      %s150 = ssub.s32 %s11, 1
      // Predicated region
      $region13: #{netd_forward.7} parent=11 // pred_check
        %p151 = pneg %p58
      $region14: #{netd_forward.7} parent=11 // pred_check_branch
        %153 = sbr.rel (%p151) target = $region16
      $region15: #{netd_forward.7} parent=11 // pred_region
        _
      $region16: #{netd_forward.7} parent=11 // pred_fallthru
        _
    $region12: #{netd_forward.7} parent=5 // pred_fallthru
      _
    %p154 = scmp.lt.s32.totalorder %s11, 2
    // Predicated region
    $region17: #{netd_forward.7} parent=5 // pred_check
      %p155 = pneg %p154
    $region18: #{netd_forward.7} parent=5 // pred_check_branch
      %157 = sbr.rel (%p155) target = $region20
    $region19: #{netd_forward.7} parent=5 // pred_region
      // Predicated region
      $region21: #{netd_forward.7} parent=19 // pred_check
        %p158 = pneg %p31
      $region22: #{netd_forward.7} parent=19 // pred_check_branch
        %160 = sbr.rel (%p158) target = $region24
      $region23: #{netd_forward.7} parent=19 // pred_region
        %s161 = smul.u32 8, %s11
        %p162 = scmp.lt.s32.totalorder %s161, 15
        %s163 = scalar_select %p162, %s161, 15
        %s164 = smul.addr %s163, 5
        %s165 = smul.addr %s164, 4
        %s166 = scalar_lea.vmem %s0, %s165
        %s167 = smul.u32 8, %s11
      $region24: #{netd_forward.7} parent=19 // pred_fallthru
        _
    $region20: #{netd_forward.7} parent=5 // pred_fallthru
      _
    %p168 = scmp.le.s32.totalorder 1, %s11
    %p169 = scmp.lt.s32.totalorder %s11, 3
    %p170 = pnand %p168, %p169
    %p171 = pneg %p170
    // Predicated region
    $region25: #{netd_forward.7} parent=5 // pred_check
      _
    $region26: #{netd_forward.7} parent=5 // pred_check_branch
      %173 = sbr.rel (%p170) target = $region28
    $region27: #{netd_forward.7} parent=5 // pred_region
      %s174 = ssub.s32 %s11, 1
      %s175 = smul.u32 8, %s16
      %p176 = scmp.lt.s32.totalorder %s175, 15
      %s177 = scalar_select %p176, %s175, 15
      %s178 = smul.addr %s177, 5
      %s179 = smul.addr %s178, 4
      %s180 = scalar_lea.vmem %s0, %s179
      %p181 = pneg %p37
      %p182 = pneg %p34
      %p183 = pneg %p58
      %p184 = pneg %p55
      %p185 = pneg %p84
      %p186 = pneg %p81
      %s187 = smul.u32 8, %s16
      %p188 = scmp.lt.s32.totalorder %s187, 15
      %s189 = scalar_select %p188, %s187, 15
      %s190 = smul.addr %s189, 4
      %s191 = scalar_lea.vmem %s2, %s190
      %p192 = pneg %p110
      %p193 = pneg %p107
      %p194 = scmp.lt.s32.totalorder %s16, 1
      %s195 = scalar_select %p194, %s16, 1
      %s196 = scalar_lea.vmem %s3, %s195
      %p197 = pneg %p136
      %p198 = pneg %p133
      %p199 = scmp.lt.s32.totalorder %s16, 1
      %s200 = scalar_select %p199, %s16, 1
      %s201 = scalar_lea.vmem %s4, %s200
      %s202 = smul.u32 8, %s16
      %p203 = scmp.lt.s32.totalorder %s202, 15
      %s204 = scalar_select %p203, %s202, 15
      %s205 = smul.addr %s204, 5
      %s206 = smul.addr %s205, 4
      %s207 = scalar_lea.vmem %s0, %s206
      %s208 = smul.u32 8, %s16
      %s209 = smul.u32 8, %s16
      %p210 = scmp.lt.s32.totalorder %s209, 15
      %s211 = scalar_select %p210, %s209, 15
      %s212 = smul.addr %s211, 4
      %s213 = scalar_lea.vmem %s2, %s212
      %s214 = smul.u32 8, %s16
      %p215 = scmp.lt.s32.totalorder %s16, 1
      %s216 = scalar_select %p215, %s16, 1
      %s217 = scalar_lea.vmem %s3, %s216
      %p218 = scmp.lt.s32.totalorder %s16, 1
      %s219 = scalar_select %p218, %s16, 1
      %s220 = scalar_lea.vmem %s4, %s219
      %v222 = vld [vmem:[%s207] sm:$0xff]
      %v223 = vld [vmem:[%s207 + $0x8] sm:$0xff]
      %v224 = vld [vmem:[%s207 + $0x10] sm:$0xf]
      %v225 = vld [vmem:[%s207 + $0x14] sm:$0xff]
      %v226 = vld [vmem:[%s207 + $0x1c] sm:$0xff]
      %v227 = vld [vmem:[%s207 + $0x24] sm:$0xf]
      %v228 = vld [vmem:[%s207 + $0x28] sm:$0xff]
      %v229 = vld [vmem:[%s207 + $0x30] sm:$0xff]
      %v230 = vld [vmem:[%s207 + $0x38] sm:$0xf]
      %v231 = vld [vmem:[%s207 + $0x3c] sm:$0xff]
      %v232 = vld [vmem:[%s207 + $0x44] sm:$0xff]
      %v233 = vld [vmem:[%s207 + $0x4c] sm:$0xf]
      %v234 = vld [vmem:[%s207 + $0x50] sm:$0xff]
      %v235 = vld [vmem:[%s207 + $0x58] sm:$0xff]
      %v236 = vld [vmem:[%s207 + $0x60] sm:$0xf]
      %v237 = vld [vmem:[%s207 + $0x64] sm:$0xff]
      %v238 = vld [vmem:[%s207 + $0x6c] sm:$0xff]
      %v239 = vld [vmem:[%s207 + $0x74] sm:$0xf]
      %v240 = vld [vmem:[%s207 + $0x78] sm:$0xff]
      %v241 = vld [vmem:[%s207 + $0x80] sm:$0xff]
      %v242 = vld [vmem:[%s207 + $0x88] sm:$0xf]
      %v243 = vld [vmem:[%s207 + $0x8c] sm:$0xff]
      %v244 = vld [vmem:[%s207 + $0x94] sm:$0xff]
      %v245 = vld [vmem:[%s207 + $0x9c] sm:$0xf]
      %v246 = vld [vmem:[%s1] sm:$0xf]
      %v247 = vld [vmem:[%s1 + $0x4] sm:$0xf]
      %v248 = vld [vmem:[%s1 + $0x8] sm:$0xf]
      %v249 = vld [vmem:[%s1 + $0xc] sm:$0xf]
      %v250 = vld [vmem:[%s1 + $0x10] sm:$0xf]
      %v251 = vld [vmem:[%s1 + $0x14] sm:$0xf]
      %v252 = vld [vmem:[%s1 + $0x18] sm:$0xf]
      %v253 = vld [vmem:[%s1 + $0x1c] sm:$0xf]
      %v254 = vld [vmem:[%s1 + $0x20] sm:$0xf]
      %v255 = vld [vmem:[%s1 + $0x24] sm:$0xf]
      %v256 = vld [vmem:[%s1 + $0x28] sm:$0xf]
      %v257 = vld [vmem:[%s1 + $0x2c] sm:$0xf]
      %v258 = vld [vmem:[%s1 + $0x30] sm:$0xf]
      %v259 = vld [vmem:[%s1 + $0x34] sm:$0xf]
      %v260 = vld [vmem:[%s1 + $0x38] sm:$0xf]
      %v261 = vld [vmem:[%s1 + $0x3c] sm:$0xf]
      %v262 = vld [vmem:[%s1 + $0x40] sm:$0xf]
      %v263 = vld [vmem:[%s1 + $0x44] sm:$0xf]
      %v264 = vld [vmem:[%s1 + $0x48] sm:$0xf]
      %v265 = vld [vmem:[%s1 + $0x4c] sm:$0xf]
      %v266 = vld [vmem:[%s1 + $0x50] sm:$0xf]
      %v267 = vld [vmem:[%s1 + $0x54] sm:$0xf]
      %v268 = vld [vmem:[%s1 + $0x58] sm:$0xf]
      %v269 = vld [vmem:[%s1 + $0x5c] sm:$0xf]
      %v270 = vld [vmem:[%s1 + $0x60] sm:$0xf]
      %v271 = vld [vmem:[%s1 + $0x64] sm:$0xf]
      %v272 = vld [vmem:[%s1 + $0x68] sm:$0xf]
      %v273 = vld [vmem:[%s1 + $0x6c] sm:$0xf]
      %v274 = vld [vmem:[%s1 + $0x70] sm:$0xf]
      %v275 = vld [vmem:[%s1 + $0x74] sm:$0xf]
      %v276 = vld [vmem:[%s1 + $0x78] sm:$0xf]
      %v277 = vld [vmem:[%s1 + $0x7c] sm:$0xf]
      %v278 = vld [vmem:[%s1 + $0x80] sm:$0xf]
      %v279 = vld [vmem:[%s1 + $0x84] sm:$0xf]
      %v280 = vld [vmem:[%s1 + $0x88] sm:$0xf]
      %v281 = vld [vmem:[%s1 + $0x8c] sm:$0xf]
      %v282 = vld [vmem:[%s1 + $0x90] sm:$0xf]
      %v283 = vld [vmem:[%s1 + $0x94] sm:$0xf]
      %v284 = vld [vmem:[%s1 + $0x98] sm:$0xf]
      %v285 = vld [vmem:[%s1 + $0x9c] sm:$0xf]
      %v286 = vld [vmem:[%s1 + $0xa0] sm:$0xf]
      %v287 = vld [vmem:[%s1 + $0xa4] sm:$0xf]
      %v288 = vld [vmem:[%s1 + $0xa8] sm:$0xf]
      %v289 = vld [vmem:[%s1 + $0xac] sm:$0xf]
      %v290 = vld [vmem:[%s1 + $0xb0] sm:$0xf]
      %v291 = vld [vmem:[%s1 + $0xb4] sm:$0xf]
      %v292 = vld [vmem:[%s1 + $0xb8] sm:$0xf]
      %v293 = vld [vmem:[%s1 + $0xbc] sm:$0xf]
      %v294 = vld [vmem:[%s1 + $0xc0] sm:$0xf]
      %v295 = vld [vmem:[%s1 + $0xc4] sm:$0xf]
      %v296 = vld [vmem:[%s1 + $0xc8] sm:$0xf]
      %v297 = vld [vmem:[%s1 + $0xcc] sm:$0xf]
      %v298 = vld [vmem:[%s1 + $0xd0] sm:$0xf]
      %v299 = vld [vmem:[%s1 + $0xd4] sm:$0xf]
      %v300 = vld [vmem:[%s1 + $0xd8] sm:$0xf]
      %v301 = vld [vmem:[%s1 + $0xdc] sm:$0xf]
      %v302 = vld [vmem:[%s1 + $0xe0] sm:$0xf]
      %v303 = vld [vmem:[%s1 + $0xe4] sm:$0xf]
      %v304 = vld [vmem:[%s1 + $0xe8] sm:$0xf]
      %v305 = vld [vmem:[%s1 + $0xec] sm:$0xf]
      %v306 = vld [vmem:[%s1 + $0xf0] sm:$0xf]
      %v307 = vld [vmem:[%s1 + $0xf4] sm:$0xf]
      %v308 = vld [vmem:[%s1 + $0xf8] sm:$0xf]
      %v309 = vld [vmem:[%s1 + $0xfc] sm:$0xf]
      %v310 = vld [vmem:[%s1 + $0x100] sm:$0xf]
      %v311 = vld [vmem:[%s1 + $0x104] sm:$0xf]
      %v312 = vld [vmem:[%s1 + $0x108] sm:$0xf]
      %v313 = vld [vmem:[%s1 + $0x10c] sm:$0xf]
      %v314 = vld [vmem:[%s1 + $0x110] sm:$0xf]
      %v315 = vld [vmem:[%s1 + $0x114] sm:$0xf]
      %v316 = vld [vmem:[%s1 + $0x118] sm:$0xf]
      %v317 = vld [vmem:[%s1 + $0x11c] sm:$0xf]
      %v342 = vunpack.c.l.b16 %v222
      %v343 = vunpack.c.h.b16 %v222
      %v344 = vunpack.c.l.b16 %v223
      %v345 = vunpack.c.h.b16 %v223
      %v346 = vunpack.c.l.b16 %v224
      %v347 = vunpack.c.l.b16 %v225
      %v348 = vunpack.c.h.b16 %v225
      %v349 = vunpack.c.l.b16 %v226
      %v350 = vunpack.c.h.b16 %v226
      %v351 = vunpack.c.l.b16 %v227
      %v352 = vunpack.c.l.b16 %v228
      %v353 = vunpack.c.h.b16 %v228
      %v354 = vunpack.c.l.b16 %v229
      %v355 = vunpack.c.h.b16 %v229
      %v356 = vunpack.c.l.b16 %v230
      %v357 = vunpack.c.l.b16 %v231
      %v358 = vunpack.c.h.b16 %v231
      %v359 = vunpack.c.l.b16 %v232
      %v360 = vunpack.c.h.b16 %v232
      %v361 = vunpack.c.l.b16 %v233
      %v362 = vunpack.c.l.b16 %v234
      %v363 = vunpack.c.h.b16 %v234
      %v364 = vunpack.c.l.b16 %v235
      %v365 = vunpack.c.h.b16 %v235
      %v366 = vunpack.c.l.b16 %v236
      %v367 = vunpack.c.l.b16 %v237
      %v368 = vunpack.c.h.b16 %v237
      %v369 = vunpack.c.l.b16 %v238
      %v370 = vunpack.c.h.b16 %v238
      %v371 = vunpack.c.l.b16 %v239
      %v372 = vunpack.c.l.b16 %v240
      %v373 = vunpack.c.h.b16 %v240
      %v374 = vunpack.c.l.b16 %v241
      %v375 = vunpack.c.h.b16 %v241
      %v376 = vunpack.c.l.b16 %v242
      %v377 = vunpack.c.l.b16 %v243
      %v378 = vunpack.c.h.b16 %v243
      %v379 = vunpack.c.l.b16 %v244
      %v380 = vunpack.c.h.b16 %v244
      %v381 = vunpack.c.l.b16 %v245
      %v382 = vpack.c.b16 %v347, %v342
      %v383 = vpack.c.b16 %v348, %v343
      %v384 = vpack.c.b16 %v349, %v344
      %v385 = vpack.c.b16 %v350, %v345
      %v386 = vpack.c.b16 %v351, %v346
      %v387 = vpack.c.b16 %v357, %v352
      %v388 = vpack.c.b16 %v358, %v353
      %v389 = vpack.c.b16 %v359, %v354
      %v390 = vpack.c.b16 %v360, %v355
      %v391 = vpack.c.b16 %v361, %v356
      %v392 = vpack.c.b16 %v367, %v362
      %v393 = vpack.c.b16 %v368, %v363
      %v394 = vpack.c.b16 %v369, %v364
      %v395 = vpack.c.b16 %v370, %v365
      %v396 = vpack.c.b16 %v371, %v366
      %v397 = vpack.c.b16 %v377, %v372
      %v398 = vpack.c.b16 %v378, %v373
      %v399 = vpack.c.b16 %v379, %v374
      %v400 = vpack.c.b16 %v380, %v375
      %v401 = vpack.c.b16 %v381, %v376
      %v490 = vunpack.c.l.b16 %v246
      %v491 = vunpack.c.l.b16 %v247
      %v492 = vunpack.c.l.b16 %v248
      %v493 = vunpack.c.l.b16 %v249
      %v494 = vunpack.c.l.b16 %v250
      %v495 = vunpack.c.l.b16 %v251
      %v496 = vunpack.c.l.b16 %v252
      %v497 = vunpack.c.l.b16 %v253
      %v498 = vunpack.c.l.b16 %v254
      %v499 = vunpack.c.l.b16 %v255
      %v500 = vunpack.c.l.b16 %v256
      %v501 = vunpack.c.l.b16 %v257
      %v502 = vunpack.c.l.b16 %v258
      %v503 = vunpack.c.l.b16 %v259
      %v504 = vunpack.c.l.b16 %v260
      %v505 = vunpack.c.l.b16 %v261
      %v506 = vunpack.c.l.b16 %v262
      %v507 = vunpack.c.l.b16 %v263
      %v508 = vunpack.c.l.b16 %v264
      %v509 = vunpack.c.l.b16 %v265
      %v510 = vunpack.c.l.b16 %v266
      %v511 = vunpack.c.l.b16 %v267
      %v512 = vunpack.c.l.b16 %v268
      %v513 = vunpack.c.l.b16 %v269
      %v514 = vunpack.c.l.b16 %v270
      %v515 = vunpack.c.l.b16 %v271
      %v516 = vunpack.c.l.b16 %v272
      %v517 = vunpack.c.l.b16 %v273
      %v518 = vunpack.c.l.b16 %v274
      %v519 = vunpack.c.l.b16 %v275
      %v520 = vunpack.c.l.b16 %v276
      %v521 = vunpack.c.l.b16 %v277
      %v522 = vunpack.c.l.b16 %v278
      %v523 = vunpack.c.l.b16 %v279
      %v524 = vunpack.c.l.b16 %v280
      %v525 = vunpack.c.l.b16 %v281
      %v526 = vunpack.c.l.b16 %v282
      %v527 = vunpack.c.l.b16 %v283
      %v528 = vunpack.c.l.b16 %v284
      %v529 = vunpack.c.l.b16 %v285
      %v530 = vunpack.c.l.b16 %v286
      %v531 = vunpack.c.l.b16 %v287
      %v532 = vunpack.c.l.b16 %v288
      %v533 = vunpack.c.l.b16 %v289
      %v534 = vunpack.c.l.b16 %v290
      %v535 = vunpack.c.l.b16 %v291
      %v536 = vunpack.c.l.b16 %v292
      %v537 = vunpack.c.l.b16 %v293
      %v538 = vunpack.c.l.b16 %v294
      %v539 = vunpack.c.l.b16 %v295
      %v540 = vunpack.c.l.b16 %v296
      %v541 = vunpack.c.l.b16 %v297
      %v542 = vunpack.c.l.b16 %v298
      %v543 = vunpack.c.l.b16 %v299
      %v544 = vunpack.c.l.b16 %v300
      %v545 = vunpack.c.l.b16 %v301
      %v546 = vunpack.c.l.b16 %v302
      %v547 = vunpack.c.l.b16 %v303
      %v548 = vunpack.c.l.b16 %v304
      %v549 = vunpack.c.l.b16 %v305
      %v550 = vunpack.c.l.b16 %v306
      %v551 = vunpack.c.l.b16 %v307
      %v552 = vunpack.c.l.b16 %v308
      %v553 = vunpack.c.l.b16 %v309
      %v554 = vunpack.c.l.b16 %v310
      %v555 = vunpack.c.l.b16 %v311
      %v556 = vunpack.c.l.b16 %v312
      %v557 = vunpack.c.l.b16 %v313
      %v558 = vunpack.c.l.b16 %v314
      %v559 = vunpack.c.l.b16 %v315
      %v560 = vunpack.c.l.b16 %v316
      %v561 = vunpack.c.l.b16 %v317
      %v562 = vpack.c.b16 %v491, %v490
      %v563 = vpack.c.b16 %v493, %v492
      %v564 = vpack.c.b16 %v495, %v494
      %v565 = vpack.c.b16 %v497, %v496
      %v566 = vpack.c.b16 %v499, %v498
      %v567 = vpack.c.b16 %v501, %v500
      %v568 = vpack.c.b16 %v503, %v502
      %v569 = vpack.c.b16 %v505, %v504
      %v570 = vpack.c.b16 %v507, %v506
      %v571 = vpack.c.b16 %v509, %v508
      %v572 = vpack.c.b16 %v511, %v510
      %v573 = vpack.c.b16 %v513, %v512
      %v574 = vpack.c.b16 %v515, %v514
      %v575 = vpack.c.b16 %v517, %v516
      %v576 = vpack.c.b16 %v519, %v518
      %v577 = vpack.c.b16 %v521, %v520
      %v578 = vpack.c.b16 %v523, %v522
      %v579 = vpack.c.b16 %v525, %v524
      %v580 = vpack.c.b16 %v527, %v526
      %v581 = vpack.c.b16 %v529, %v528
      %v582 = vpack.c.b16 %v531, %v530
      %v583 = vpack.c.b16 %v533, %v532
      %v584 = vpack.c.b16 %v535, %v534
      %v585 = vpack.c.b16 %v537, %v536
      %v586 = vpack.c.b16 %v539, %v538
      %v587 = vpack.c.b16 %v541, %v540
      %v588 = vpack.c.b16 %v543, %v542
      %v589 = vpack.c.b16 %v545, %v544
      %v590 = vpack.c.b16 %v547, %v546
      %v591 = vpack.c.b16 %v549, %v548
      %v592 = vpack.c.b16 %v551, %v550
      %v593 = vpack.c.b16 %v553, %v552
      %v594 = vpack.c.b16 %v555, %v554
      %v595 = vpack.c.b16 %v557, %v556
      %v596 = vpack.c.b16 %v559, %v558
      %v597 = vpack.c.b16 %v561, %v560
      %vm634 = vcmask 523264
      %v636 = vsel %vm634, %v386, 0
      %v639 = vsel %vm634, %v391, 0
      %v642 = vsel %vm634, %v396, 0
      %v645 = vsel %vm634, %v401, 0
      %647 = vmatprep.subr.bf16.mxu0 0
      %648 = vmatpush1.bf16.msra.mxu0 %v569
      %649 = vmatprep.subr.bf16.mxu0 0
      %650 = vmatpush1.bf16.msra.mxu0 %v568
      %651 = vmatprep.subr.bf16.mxu0 0
      %652 = vmatpush1.bf16.msra.mxu0 %v567
      %653 = vmatprep.subr.bf16.mxu0 0
      %654 = vmatpush1.bf16.msra.mxu0 %v566
      %655 = vmatprep.subr.bf16.mxu0 0
      %656 = vmatpush1.bf16.msra.mxu0 %v565
      %657 = vmatprep.subr.bf16.mxu0 0
      %658 = vmatpush1.bf16.msra.mxu0 %v564
      %659 = vmatprep.subr.bf16.mxu0 0
      %660 = vmatpush1.bf16.msra.mxu0 %v563
      %661 = vmatprep.subr.bf16.mxu0 0
      %662 = vmatpush1.bf16.msra.mxu0 %v562
      %663 = vmatprep.subr.bf16.mxu0 0
      %664 = vmatpush2.bf16.msra.mxu0 %v577
      %665 = vmatprep.subr.bf16.mxu0 0
      %666 = vmatpush2.bf16.msra.mxu0 %v576
      %667 = vmatprep.subr.bf16.mxu0 0
      %668 = vmatpush2.bf16.msra.mxu0 %v575
      %669 = vmatprep.subr.bf16.mxu0 0
      %670 = vmatpush2.bf16.msra.mxu0 %v574
      %671 = vmatprep.subr.bf16.mxu0 0
      %672 = vmatpush2.bf16.msra.mxu0 %v573
      %673 = vmatprep.subr.bf16.mxu0 0
      %674 = vmatpush2.bf16.msra.mxu0 %v572
      %675 = vmatprep.subr.bf16.mxu0 0
      %676 = vmatpush2.bf16.msra.mxu0 %v571
      %677 = vmatprep.subr.bf16.mxu0 0
      %678 = vmatpush2.bf16.msra.mxu0 %v570
      %679 = vmatprep.mubr.bf16.mxu0 %v383
      %680 = vmatmul.mubr.bf16.gmra.mxu0 %v382
      %v681 = vpop.f32.mrf.mxu0
      %v682 = vadd.f32 0.0, %v681
      %v683 = vpop.f32.mrf.mxu0
      %v684 = vpop.f32.mrf.mxu0
      %v685 = vadd.f32 0.0, %v684
      %v686 = vpop.f32.mrf.mxu0
      %687 = vmatprep.mubr.bf16.mxu0 %v388
      %688 = vmatmul.mubr.bf16.gmra.mxu0 %v387
      %v689 = vpop.f32.mrf.mxu0
      %v690 = vadd.f32 0.0, %v689
      %v691 = vpop.f32.mrf.mxu0
      %v692 = vpop.f32.mrf.mxu0
      %v693 = vadd.f32 0.0, %v692
      %v694 = vpop.f32.mrf.mxu0
      %695 = vmatprep.mubr.bf16.mxu0 %v393
      %696 = vmatmul.mubr.bf16.gmra.mxu0 %v392
      %v697 = vpop.f32.mrf.mxu0
      %v698 = vadd.f32 0.0, %v697
      %v699 = vpop.f32.mrf.mxu0
      %v700 = vpop.f32.mrf.mxu0
      %v701 = vadd.f32 0.0, %v700
      %v702 = vpop.f32.mrf.mxu0
      %703 = vmatprep.mubr.bf16.mxu0 %v398
      %704 = vmatmul.mubr.bf16.gmra.mxu0 %v397
      %v705 = vpop.f32.mrf.mxu0
      %v706 = vadd.f32 0.0, %v705
      %v707 = vpop.f32.mrf.mxu0
      %v708 = vpop.f32.mrf.mxu0
      %v709 = vadd.f32 0.0, %v708
      %v710 = vpop.f32.mrf.mxu0
      %711 = vdwg.mxu0
      %712 = vmatprep.subr.bf16.mxu0 0
      %713 = vmatpush1.bf16.msra.mxu0 %v585
      %714 = vmatprep.subr.bf16.mxu0 0
      %715 = vmatpush1.bf16.msra.mxu0 %v584
      %716 = vmatprep.subr.bf16.mxu0 0
      %717 = vmatpush1.bf16.msra.mxu0 %v583
      %718 = vmatprep.subr.bf16.mxu0 0
      %719 = vmatpush1.bf16.msra.mxu0 %v582
      %720 = vmatprep.subr.bf16.mxu0 0
      %721 = vmatpush1.bf16.msra.mxu0 %v581
      %722 = vmatprep.subr.bf16.mxu0 0
      %723 = vmatpush1.bf16.msra.mxu0 %v580
      %724 = vmatprep.subr.bf16.mxu0 0
      %725 = vmatpush1.bf16.msra.mxu0 %v579
      %726 = vmatprep.subr.bf16.mxu0 0
      %727 = vmatpush1.bf16.msra.mxu0 %v578
      %728 = vmatprep.subr.bf16.mxu0 0
      %729 = vmatpush2.bf16.msra.mxu0 %v593
      %730 = vmatprep.subr.bf16.mxu0 0
      %731 = vmatpush2.bf16.msra.mxu0 %v592
      %732 = vmatprep.subr.bf16.mxu0 0
      %733 = vmatpush2.bf16.msra.mxu0 %v591
      %734 = vmatprep.subr.bf16.mxu0 0
      %735 = vmatpush2.bf16.msra.mxu0 %v590
      %736 = vmatprep.subr.bf16.mxu0 0
      %737 = vmatpush2.bf16.msra.mxu0 %v589
      %738 = vmatprep.subr.bf16.mxu0 0
      %739 = vmatpush2.bf16.msra.mxu0 %v588
      %740 = vmatprep.subr.bf16.mxu0 0
      %741 = vmatpush2.bf16.msra.mxu0 %v587
      %742 = vmatprep.subr.bf16.mxu0 0
      %743 = vmatpush2.bf16.msra.mxu0 %v586
      %744 = vmatprep.mubr.bf16.mxu0 %v385
      %745 = vmatmul.mubr.bf16.gmra.mxu0 %v384
      %v746 = vpop.f32.mrf.mxu0
      %v747 = vadd.f32 %v682, %v746
      %v748 = vpop.f32.mrf.mxu0
      %v749 = vpop.f32.mrf.mxu0
      %v750 = vadd.f32 %v685, %v749
      %v751 = vpop.f32.mrf.mxu0
      %752 = vmatprep.mubr.bf16.mxu0 %v390
      %753 = vmatmul.mubr.bf16.gmra.mxu0 %v389
      %v754 = vpop.f32.mrf.mxu0
      %v755 = vadd.f32 %v690, %v754
      %v756 = vpop.f32.mrf.mxu0
      %v757 = vpop.f32.mrf.mxu0
      %v758 = vadd.f32 %v693, %v757
      %v759 = vpop.f32.mrf.mxu0
      %760 = vmatprep.mubr.bf16.mxu0 %v395
      %761 = vmatmul.mubr.bf16.gmra.mxu0 %v394
      %v762 = vpop.f32.mrf.mxu0
      %v763 = vadd.f32 %v698, %v762
      %v764 = vpop.f32.mrf.mxu0
      %v765 = vpop.f32.mrf.mxu0
      %v766 = vadd.f32 %v701, %v765
      %v767 = vpop.f32.mrf.mxu0
      %768 = vmatprep.mubr.bf16.mxu0 %v400
      %769 = vmatmul.mubr.bf16.gmra.mxu0 %v399
      %v770 = vpop.f32.mrf.mxu0
      %v771 = vadd.f32 %v706, %v770
      %v772 = vpop.f32.mrf.mxu0
      %v773 = vpop.f32.mrf.mxu0
      %v774 = vadd.f32 %v709, %v773
      %v775 = vpop.f32.mrf.mxu0
      %776 = vdwg.mxu0
      %777 = vmatprep.subr.bf16.mxu0 0
      %778 = vmatpush1.bf16.msra.mxu0 0
      %779 = vmatprep.subr.bf16.mxu0 0
      %780 = vmatpush1.bf16.msra.mxu0 0
      %781 = vmatprep.subr.bf16.mxu0 0
      %782 = vmatpush1.bf16.msra.mxu0 0
      %783 = vmatprep.subr.bf16.mxu0 0
      %784 = vmatpush1.bf16.msra.mxu0 0
      %785 = vmatprep.subr.bf16.mxu0 0
      %786 = vmatpush1.bf16.msra.mxu0 %v597
      %787 = vmatprep.subr.bf16.mxu0 0
      %788 = vmatpush1.bf16.msra.mxu0 %v596
      %789 = vmatprep.subr.bf16.mxu0 0
      %790 = vmatpush1.bf16.msra.mxu0 %v595
      %791 = vmatprep.subr.bf16.mxu0 0
      %792 = vmatpush1.bf16.msra.mxu0 %v594
      %793 = vmatprep.subr.bf16.mxu0 0
      %794 = vmatpush2.bf16.msra.mxu0 0
      %795 = vmatprep.subr.bf16.mxu0 0
      %796 = vmatpush2.bf16.msra.mxu0 0
      %797 = vmatprep.subr.bf16.mxu0 0
      %798 = vmatpush2.bf16.msra.mxu0 0
      %799 = vmatprep.subr.bf16.mxu0 0
      %800 = vmatpush2.bf16.msra.mxu0 0
      %801 = vmatprep.subr.bf16.mxu0 0
      %802 = vmatpush2.bf16.msra.mxu0 0
      %803 = vmatprep.subr.bf16.mxu0 0
      %804 = vmatpush2.bf16.msra.mxu0 0
      %805 = vmatprep.subr.bf16.mxu0 0
      %806 = vmatpush2.bf16.msra.mxu0 0
      %807 = vmatprep.subr.bf16.mxu0 0
      %808 = vmatpush2.bf16.msra.mxu0 0
      %809 = vmatprep.mubr.bf16.mxu0 0
      %810 = vmatmul.mubr.bf16.gmra.mxu0 %v636
      %v811 = vpop.f32.mrf.mxu0
      %v812 = vadd.f32 %v747, %v811
      %v813 = vpop.f32.mrf.mxu0
      %v814 = vpop.f32.mrf.mxu0
      %v815 = vadd.f32 %v750, %v814
      %v816 = vpop.f32.mrf.mxu0
      %817 = vmatprep.mubr.bf16.mxu0 0
      %818 = vmatmul.mubr.bf16.gmra.mxu0 %v639
      %v819 = vpop.f32.mrf.mxu0
      %v820 = vadd.f32 %v755, %v819
      %v821 = vpop.f32.mrf.mxu0
      %v822 = vpop.f32.mrf.mxu0
      %v823 = vadd.f32 %v758, %v822
      %v824 = vpop.f32.mrf.mxu0
      %825 = vmatprep.mubr.bf16.mxu0 0
      %826 = vmatmul.mubr.bf16.gmra.mxu0 %v642
      %v827 = vpop.f32.mrf.mxu0
      %v828 = vadd.f32 %v763, %v827
      %v829 = vpop.f32.mrf.mxu0
      %v830 = vpop.f32.mrf.mxu0
      %v831 = vadd.f32 %v766, %v830
      %v832 = vpop.f32.mrf.mxu0
      %833 = vmatprep.mubr.bf16.mxu0 0
      %834 = vmatmul.mubr.bf16.gmra.mxu0 %v645
      %v835 = vpop.f32.mrf.mxu0
      %v836 = vadd.f32 %v771, %v835
      %v837 = vpop.f32.mrf.mxu0
      %v838 = vpop.f32.mrf.mxu0
      %v839 = vadd.f32 %v774, %v838
      %v840 = vpop.f32.mrf.mxu0
      %841 = vdwg.mxu0
      %v842 = vpack.c.bf16 %v815, %v812
      %v843 = vpack.c.bf16 %v823, %v820
      %v844 = vpack.c.bf16 %v831, %v828
      %v845 = vpack.c.bf16 %v839, %v836
      %v850 = vunpack.c.l.b16 %v842
      %v851 = vunpack.c.h.b16 %v842
      %v852 = vunpack.c.l.b16 %v843
      %v853 = vunpack.c.h.b16 %v843
      %v854 = vunpack.c.l.b16 %v844
      %v855 = vunpack.c.h.b16 %v844
      %v856 = vunpack.c.l.b16 %v845
      %v857 = vunpack.c.h.b16 %v845
      %v858 = vpack.c.b16 %v850, %v850
      %v859 = vpack.c.b16 %v851, %v851
      %v860 = vpack.c.b16 %v852, %v852
      %v861 = vpack.c.b16 %v853, %v853
      %v862 = vpack.c.b16 %v854, %v854
      %v863 = vpack.c.b16 %v855, %v855
      %v864 = vpack.c.b16 %v856, %v856
      %v865 = vpack.c.b16 %v857, %v857
      %874 = vst [vmem:[%s213] sm:$0xf] %v858
      %875 = vst [vmem:[%s213 + $0x4] sm:$0xf] %v859
      %876 = vst [vmem:[%s213 + $0x8] sm:$0xf] %v860
      %877 = vst [vmem:[%s213 + $0xc] sm:$0xf] %v861
      %878 = vst [vmem:[%s213 + $0x10] sm:$0xf] %v862
      %879 = vst [vmem:[%s213 + $0x14] sm:$0xf] %v863
      %880 = vst [vmem:[%s213 + $0x18] sm:$0xf] %v864
      %881 = vst [vmem:[%s213 + $0x1c] sm:$0xf] %v865
      %v882 = vadd.f32 %v812, %v815
      %v883 = vadd.f32 %v882, %v820
      %v884 = vadd.f32 %v883, %v823
      %v885 = vadd.f32 %v884, %v828
      %v886 = vadd.f32 %v885, %v831
      %v887 = vadd.f32 %v886, %v836
      %v888 = vadd.f32 %v887, %v839
      %v889 = vrot.slane %v888, 4
      %v890 = vadd.f32 %v888, %v889
      %v891 = vrot.slane %v890, 2
      %v892 = vadd.f32 %v890, %v891
      %v893 = vrot.slane %v892, 1
      %v894 = vadd.f32 %v892, %v893
      %895 = vst [vmem:[%s217] sm:$0x1] %v894
      %v896 = vmul.f32 %v812, %v812
      %v897 = vmul.f32 %v815, %v815
      %v898 = vmul.f32 %v820, %v820
      %v899 = vmul.f32 %v823, %v823
      %v900 = vmul.f32 %v828, %v828
      %v901 = vmul.f32 %v831, %v831
      %v902 = vmul.f32 %v836, %v836
      %v903 = vmul.f32 %v839, %v839
      %v904 = vadd.f32 %v896, %v897
      %v905 = vadd.f32 %v904, %v898
      %v906 = vadd.f32 %v905, %v899
      %v907 = vadd.f32 %v906, %v900
      %v908 = vadd.f32 %v907, %v901
      %v909 = vadd.f32 %v908, %v902
      %v910 = vadd.f32 %v909, %v903
      %v911 = vrot.slane %v910, 4
      %v912 = vadd.f32 %v910, %v911
      %v913 = vrot.slane %v912, 2
      %v914 = vadd.f32 %v912, %v913
      %v915 = vrot.slane %v914, 1
      %v916 = vadd.f32 %v914, %v915
      %917 = vst [vmem:[%s220] sm:$0x1] %v916
      %s918 = smul.u32 8, %s16
      %p919 = scmp.lt.s32.totalorder %s918, 15
      %s920 = scalar_select %p919, %s918, 15
      %s921 = smul.addr %s920, 4
      %s922 = scalar_lea.vmem %s2, %s921
      %p923 = scmp.lt.s32.totalorder %s16, 1
      %s924 = scalar_select %p923, %s16, 1
      %s925 = scalar_lea.vmem %s3, %s924
      %p926 = scmp.lt.s32.totalorder %s16, 1
      %s927 = scalar_select %p926, %s16, 1
      %s928 = scalar_lea.vmem %s4, %s927
      // Predicated region
      $region29: #{netd_forward.7} parent=27 // pred_check
        %p929 = pneg %p81
      $region30: #{netd_forward.7} parent=27 // pred_check_branch
        %931 = sbr.rel (%p929) target = $region32
      $region31: #{netd_forward.7} parent=27 // pred_region
        %s932 = smul.u32 8, %s16
      $region32: #{netd_forward.7} parent=27 // pred_fallthru
        _
      // Predicated region
      $region33: #{netd_forward.7} parent=27 // pred_check
        %p933 = pneg %p107
      $region34: #{netd_forward.7} parent=27 // pred_check_branch
        %935 = sbr.rel (%p933) target = $region36
      $region35: #{netd_forward.7} parent=27 // pred_region
        _
      $region36: #{netd_forward.7} parent=27 // pred_fallthru
        _
      // Predicated region
      $region37: #{netd_forward.7} parent=27 // pred_check
        %p936 = pneg %p133
      $region38: #{netd_forward.7} parent=27 // pred_check_branch
        %938 = sbr.rel (%p936) target = $region40
      $region39: #{netd_forward.7} parent=27 // pred_region
        _
      $region40: #{netd_forward.7} parent=27 // pred_fallthru
        _
    $region28: #{netd_forward.7} parent=5 // pred_fallthru
      _
    %p939 = scmp.le.s32.totalorder 2, %s11
    // Predicated region
    $region41: #{netd_forward.7} parent=5 // pred_check
      %p940 = pneg %p939
    $region42: #{netd_forward.7} parent=5 // pred_check_branch
      %942 = sbr.rel (%p940) target = $region44
    $region43: #{netd_forward.7} parent=5 // pred_region
      %s943 = ssub.s32 %s11, 2
      // Predicated region
      $region45: #{netd_forward.7} parent=43 // pred_check
        %p944 = pneg %p87
      $region46: #{netd_forward.7} parent=43 // pred_check_branch
        %946 = sbr.rel (%p944) target = $region48
      $region47: #{netd_forward.7} parent=43 // pred_region
        %s947 = smul.u32 8, %s17
        %p948 = scmp.lt.s32.totalorder %s947, 15
        %s949 = scalar_select %p948, %s947, 15
        %s950 = smul.addr %s949, 4
        %s951 = scalar_lea.vmem %s2, %s950
      $region48: #{netd_forward.7} parent=43 // pred_fallthru
        _
      // Predicated region
      $region49: #{netd_forward.7} parent=43 // pred_check
        %p952 = pneg %p113
      $region50: #{netd_forward.7} parent=43 // pred_check_branch
        %954 = sbr.rel (%p952) target = $region52
      $region51: #{netd_forward.7} parent=43 // pred_region
        %p955 = scmp.lt.s32.totalorder %s17, 1
        %s956 = scalar_select %p955, %s17, 1
        %s957 = scalar_lea.vmem %s3, %s956
      $region52: #{netd_forward.7} parent=43 // pred_fallthru
        _
      // Predicated region
      $region53: #{netd_forward.7} parent=43 // pred_check
        %p958 = pneg %p139
      $region54: #{netd_forward.7} parent=43 // pred_check_branch
        %960 = sbr.rel (%p958) target = $region56
      $region55: #{netd_forward.7} parent=43 // pred_region
        %p961 = scmp.lt.s32.totalorder %s17, 1
        %s962 = scalar_select %p961, %s17, 1
        %s963 = scalar_lea.vmem %s4, %s962
      $region56: #{netd_forward.7} parent=43 // pred_fallthru
        _
    $region44: #{netd_forward.7} parent=5 // pred_fallthru
      _
  $region6: #{netd_forward.7} parent=0 // loop_footer
    %s15 = sadd.s32 1, %s11
  $region7: #{netd_forward.7} parent=0 // loop_footer_branch
    %10 = sbr.rel target = $region3
  $region8: #{netd_forward.7} parent=0 // loop_exit
    _

// kernel: netd_forward.9
$region0: #{netd_forward.9}
  #allocation0 [shape = 'u32[]', space=smem, size = 0x4, offset = 0x4, fixed_abs, tag = 'smem constant byte address 0x4 - core index']
  #allocation1 [shape = 'u32[144,128]{1,0:T(1,128)}', space=vmem, size = 0x12000, scoped, tag = 'internal scratch']
  #allocation2 [shape = 'f32[1,1]{1,0:T(1,128)S(1)}', space=vmem, size = 0x200, scoped, tag = 'scoped memory for netd_forward.9']
  %s0 = inlined_call_operand.vmem [shape: bf16[8,6272], index: 0, kind: input, shape index: {}]
  %s1 = inlined_call_operand.vmem [shape: bf16[6272,256], index: 1, kind: input, shape index: {}]
  %s2 = inlined_call_operand.vmem [shape: f32[1,256], index: 2, kind: input, shape index: {}]
  %s3 = inlined_call_operand.vmem [shape: f32[1,256], index: 3, kind: input, shape index: {}]
  %s4 = inlined_call_operand.<no memory space> [shape: f32[1,1], index: 4, kind: input, shape index: {}]
  %s5 = inlined_call_operand.vmem [shape: f32[8,1], index: 5, kind: output, shape index: {}]
  %s6 = sld [smem:[#allocation0]]
  $region30: #{netd_forward.9} parent=0
    _
  %s8 = ssub.s32 1, %s6
  %s9 = scalar_select 0, %s8, %s6
  %v10 = vstv %s4
  %11 = vst [vmem:[#allocation2] sm:$0x1] %v10
  // Predicated region
  $region2: #{netd_forward.9} parent=0 // pred_check
    _
  $region3: #{netd_forward.9} parent=0 // pred_check_branch
    %13 = sbr.rel (0) target = $region5
  $region4: #{netd_forward.9} parent=0 // pred_region
    _
  $region5: #{netd_forward.9} parent=0 // pred_fallthru
    _
  // Predicated region
  $region6: #{netd_forward.9} parent=0 // pred_check
    _
  $region7: #{netd_forward.9} parent=0 // pred_check_branch
    %15 = sbr.rel (0) target = $region9
  $region8: #{netd_forward.9} parent=0 // pred_region
    _
  $region9: #{netd_forward.9} parent=0 // pred_fallthru
    _
  // Predicated region
  $region10: #{netd_forward.9} parent=0 // pred_check
    _
  $region11: #{netd_forward.9} parent=0 // pred_check_branch
    %17 = sbr.rel (0) target = $region13
  $region12: #{netd_forward.9} parent=0 // pred_region
    _
  $region13: #{netd_forward.9} parent=0 // pred_fallthru
    _
  // Predicated region
  $region14: #{netd_forward.9} parent=0 // pred_check
    _
  $region15: #{netd_forward.9} parent=0 // pred_check_branch
    %19 = sbr.rel (0) target = $region17
  $region16: #{netd_forward.9} parent=0 // pred_region
    _
  $region17: #{netd_forward.9} parent=0 // pred_fallthru
    _
  // Predicated region
  $region18: #{netd_forward.9} parent=0 // pred_check
    _
  $region19: #{netd_forward.9} parent=0 // pred_check_branch
    %21 = sbr.rel (0) target = $region21
  $region20: #{netd_forward.9} parent=0 // pred_region
    _
  $region21: #{netd_forward.9} parent=0 // pred_fallthru
    _
  %v23 = vld [vmem:[%s0] sm:$0xff]
  %v24 = vld [vmem:[%s0 + $0x8] sm:$0xff]
  %v25 = vld [vmem:[%s0 + $0x10] sm:$0xff]
  %v26 = vld [vmem:[%s0 + $0x18] sm:$0xff]
  %v27 = vld [vmem:[%s0 + $0x20] sm:$0xff]
  %v28 = vld [vmem:[%s0 + $0x28] sm:$0xff]
  %v29 = vld [vmem:[%s0 + $0x30] sm:$0xff]
  %v30 = vld [vmem:[%s0 + $0x38] sm:$0xff]
  %v31 = vld [vmem:[%s0 + $0x40] sm:$0xff]
  %v32 = vld [vmem:[%s0 + $0x48] sm:$0xff]
  %v33 = vld [vmem:[%s0 + $0x50] sm:$0xff]
  %v34 = vld [vmem:[%s0 + $0x58] sm:$0xff]
  %v35 = vld [vmem:[%s0 + $0x60] sm:$0xff]
  %v36 = vld [vmem:[%s0 + $0x68] sm:$0xff]
  %v37 = vld [vmem:[%s0 + $0x70] sm:$0xff]
  %v38 = vld [vmem:[%s0 + $0x78] sm:$0xff]
  %v39 = vld [vmem:[%s0 + $0x80] sm:$0xff]
  %v40 = vld [vmem:[%s0 + $0x88] sm:$0xff]
  %v41 = vld [vmem:[%s0 + $0x90] sm:$0xff]
  %v42 = vld [vmem:[%s0 + $0x98] sm:$0xff]
  %v43 = vld [vmem:[%s0 + $0xa0] sm:$0xff]
  %v44 = vld [vmem:[%s0 + $0xa8] sm:$0xff]
  %v45 = vld [vmem:[%s0 + $0xb0] sm:$0xff]
  %v46 = vld [vmem:[%s0 + $0xb8] sm:$0xff]
  %v47 = vld [vmem:[%s0 + $0xc0] sm:$0xf]
  %v48 = vld [vmem:[%s1] sm:$0xff]
  %v49 = vld [vmem:[%s1 + $0x8] sm:$0xff]
  %v50 = vld [vmem:[%s1 + $0x10] sm:$0xff]
  %v51 = vld [vmem:[%s1 + $0x18] sm:$0xff]
  %v52 = vld [vmem:[%s1 + $0x20] sm:$0xff]
  %v53 = vld [vmem:[%s1 + $0x28] sm:$0xff]
  %v54 = vld [vmem:[%s1 + $0x30] sm:$0xff]
  %v55 = vld [vmem:[%s1 + $0x38] sm:$0xff]
  %v56 = vld [vmem:[%s1 + $0x40] sm:$0xff]
  %v57 = vld [vmem:[%s1 + $0x48] sm:$0xff]
  %v58 = vld [vmem:[%s1 + $0x50] sm:$0xff]
  %v59 = vld [vmem:[%s1 + $0x58] sm:$0xff]
  %v60 = vld [vmem:[%s1 + $0x60] sm:$0xff]
  %v61 = vld [vmem:[%s1 + $0x68] sm:$0xff]
  %v62 = vld [vmem:[%s1 + $0x70] sm:$0xff]
  %v63 = vld [vmem:[%s1 + $0x78] sm:$0xff]
  %v64 = vld [vmem:[%s1 + $0x80] sm:$0xff]
  %v65 = vld [vmem:[%s1 + $0x88] sm:$0xff]
  %v66 = vld [vmem:[%s1 + $0x90] sm:$0xff]
  %v67 = vld [vmem:[%s1 + $0x98] sm:$0xff]
  %v68 = vld [vmem:[%s1 + $0xa0] sm:$0xff]
  %v69 = vld [vmem:[%s1 + $0xa8] sm:$0xff]
  %v70 = vld [vmem:[%s1 + $0xb0] sm:$0xff]
  %v71 = vld [vmem:[%s1 + $0xb8] sm:$0xff]
  %v72 = vld [vmem:[%s1 + $0xc0] sm:$0xff]
  %v73 = vld [vmem:[%s1 + $0xc8] sm:$0xff]
  %v74 = vld [vmem:[%s1 + $0xd0] sm:$0xff]
  %v75 = vld [vmem:[%s1 + $0xd8] sm:$0xff]
  %v76 = vld [vmem:[%s1 + $0xe0] sm:$0xff]
  %v77 = vld [vmem:[%s1 + $0xe8] sm:$0xff]
  %v78 = vld [vmem:[%s1 + $0xf0] sm:$0xff]
  %v79 = vld [vmem:[%s1 + $0xf8] sm:$0xff]
  %v80 = vld [vmem:[%s1 + $0x100] sm:$0xff]
  %v81 = vld [vmem:[%s1 + $0x108] sm:$0xff]
  %v82 = vld [vmem:[%s1 + $0x110] sm:$0xff]
  %v83 = vld [vmem:[%s1 + $0x118] sm:$0xff]
  %v84 = vld [vmem:[%s1 + $0x120] sm:$0xff]
  %v85 = vld [vmem:[%s1 + $0x128] sm:$0xff]
  %v86 = vld [vmem:[%s1 + $0x130] sm:$0xff]
  %v87 = vld [vmem:[%s1 + $0x138] sm:$0xff]
  %v88 = vld [vmem:[%s1 + $0x140] sm:$0xff]
  %v89 = vld [vmem:[%s1 + $0x148] sm:$0xff]
  %v90 = vld [vmem:[%s1 + $0x150] sm:$0xff]
  %v91 = vld [vmem:[%s1 + $0x158] sm:$0xff]
  %v92 = vld [vmem:[%s1 + $0x160] sm:$0xff]
  %v93 = vld [vmem:[%s1 + $0x168] sm:$0xff]
  %v94 = vld [vmem:[%s1 + $0x170] sm:$0xff]
  %v95 = vld [vmem:[%s1 + $0x178] sm:$0xff]
  %v96 = vld [vmem:[%s1 + $0x180] sm:$0xff]
  %v97 = vld [vmem:[%s1 + $0x188] sm:$0xff]
  %v98 = vld [vmem:[%s1 + $0x190] sm:$0xff]
  %v99 = vld [vmem:[%s1 + $0x198] sm:$0xff]
  %v100 = vld [vmem:[%s1 + $0x1a0] sm:$0xff]
  %v101 = vld [vmem:[%s1 + $0x1a8] sm:$0xff]
  %v102 = vld [vmem:[%s1 + $0x1b0] sm:$0xff]
  %v103 = vld [vmem:[%s1 + $0x1b8] sm:$0xff]
  %v104 = vld [vmem:[%s1 + $0x1c0] sm:$0xff]
  %v105 = vld [vmem:[%s1 + $0x1c8] sm:$0xff]
  %v106 = vld [vmem:[%s1 + $0x1d0] sm:$0xff]
  %v107 = vld [vmem:[%s1 + $0x1d8] sm:$0xff]
  %v108 = vld [vmem:[%s1 + $0x1e0] sm:$0xff]
  %v109 = vld [vmem:[%s1 + $0x1e8] sm:$0xff]
  %v110 = vld [vmem:[%s1 + $0x1f0] sm:$0xff]
  %v111 = vld [vmem:[%s1 + $0x1f8] sm:$0xff]
  %v112 = vld [vmem:[%s1 + $0x200] sm:$0xff]
  %v113 = vld [vmem:[%s1 + $0x208] sm:$0xff]
  %v114 = vld [vmem:[%s1 + $0x210] sm:$0xff]
  %v115 = vld [vmem:[%s1 + $0x218] sm:$0xff]
  %v116 = vld [vmem:[%s1 + $0x220] sm:$0xff]
  %v117 = vld [vmem:[%s1 + $0x228] sm:$0xff]
  %v118 = vld [vmem:[%s1 + $0x230] sm:$0xff]
  %v119 = vld [vmem:[%s1 + $0x238] sm:$0xff]
  %v120 = vld [vmem:[%s1 + $0x240] sm:$0xff]
  %v121 = vld [vmem:[%s1 + $0x248] sm:$0xff]
  %v122 = vld [vmem:[%s1 + $0x250] sm:$0xff]
  %v123 = vld [vmem:[%s1 + $0x258] sm:$0xff]
  %v124 = vld [vmem:[%s1 + $0x260] sm:$0xff]
  %v125 = vld [vmem:[%s1 + $0x268] sm:$0xff]
  %v126 = vld [vmem:[%s1 + $0x270] sm:$0xff]
  %v127 = vld [vmem:[%s1 + $0x278] sm:$0xff]
  %v128 = vld [vmem:[%s1 + $0x280] sm:$0xff]
  %v129 = vld [vmem:[%s1 + $0x288] sm:$0xff]
  %v130 = vld [vmem:[%s1 + $0x290] sm:$0xff]
  %v131 = vld [vmem:[%s1 + $0x298] sm:$0xff]
  %v132 = vld [vmem:[%s1 + $0x2a0] sm:$0xff]
  %v133 = vld [vmem:[%s1 + $0x2a8] sm:$0xff]
  %v134 = vld [vmem:[%s1 + $0x2b0] sm:$0xff]
  %v135 = vld [vmem:[%s1 + $0x2b8] sm:$0xff]
  %v136 = vld [vmem:[%s1 + $0x2c0] sm:$0xff]
  %v137 = vld [vmem:[%s1 + $0x2c8] sm:$0xff]
  %v138 = vld [vmem:[%s1 + $0x2d0] sm:$0xff]
  %v139 = vld [vmem:[%s1 + $0x2d8] sm:$0xff]
  %v140 = vld [vmem:[%s1 + $0x2e0] sm:$0xff]
  %v141 = vld [vmem:[%s1 + $0x2e8] sm:$0xff]
  %v142 = vld [vmem:[%s1 + $0x2f0] sm:$0xff]
  %v143 = vld [vmem:[%s1 + $0x2f8] sm:$0xff]
  %v144 = vld [vmem:[%s1 + $0x300] sm:$0xff]
  %v145 = vld [vmem:[%s1 + $0x308] sm:$0xff]
  %v146 = vld [vmem:[%s1 + $0x310] sm:$0xff]
  %v147 = vld [vmem:[%s1 + $0x318] sm:$0xff]
  %v148 = vld [vmem:[%s1 + $0x320] sm:$0xff]
  %v149 = vld [vmem:[%s1 + $0x328] sm:$0xff]
  %v150 = vld [vmem:[%s1 + $0x330] sm:$0xff]
  %v151 = vld [vmem:[%s1 + $0x338] sm:$0xff]
  %v152 = vld [vmem:[%s1 + $0x340] sm:$0xff]
  %v153 = vld [vmem:[%s1 + $0x348] sm:$0xff]
  %v154 = vld [vmem:[%s1 + $0x350] sm:$0xff]
  %v155 = vld [vmem:[%s1 + $0x358] sm:$0xff]
  %v156 = vld [vmem:[%s1 + $0x360] sm:$0xff]
  %v157 = vld [vmem:[%s1 + $0x368] sm:$0xff]
  %v158 = vld [vmem:[%s1 + $0x370] sm:$0xff]
  %v159 = vld [vmem:[%s1 + $0x378] sm:$0xff]
  %v160 = vld [vmem:[%s1 + $0x380] sm:$0xff]
  %v161 = vld [vmem:[%s1 + $0x388] sm:$0xff]
  %v162 = vld [vmem:[%s1 + $0x390] sm:$0xff]
  %v163 = vld [vmem:[%s1 + $0x398] sm:$0xff]
  %v164 = vld [vmem:[%s1 + $0x3a0] sm:$0xff]
  %v165 = vld [vmem:[%s1 + $0x3a8] sm:$0xff]
  %v166 = vld [vmem:[%s1 + $0x3b0] sm:$0xff]
  %v167 = vld [vmem:[%s1 + $0x3b8] sm:$0xff]
  %v168 = vld [vmem:[%s1 + $0x3c0] sm:$0xff]
  %v169 = vld [vmem:[%s1 + $0x3c8] sm:$0xff]
  %v170 = vld [vmem:[%s1 + $0x3d0] sm:$0xff]
  %v171 = vld [vmem:[%s1 + $0x3d8] sm:$0xff]
  %v172 = vld [vmem:[%s1 + $0x3e0] sm:$0xff]
  %v173 = vld [vmem:[%s1 + $0x3e8] sm:$0xff]
  %v174 = vld [vmem:[%s1 + $0x3f0] sm:$0xff]
  %v175 = vld [vmem:[%s1 + $0x3f8] sm:$0xff]
  %v176 = vld [vmem:[%s1 + $0x400] sm:$0xff]
  %v177 = vld [vmem:[%s1 + $0x408] sm:$0xff]
  %v178 = vld [vmem:[%s1 + $0x410] sm:$0xff]
  %v179 = vld [vmem:[%s1 + $0x418] sm:$0xff]
  %v180 = vld [vmem:[%s1 + $0x420] sm:$0xff]
  %v181 = vld [vmem:[%s1 + $0x428] sm:$0xff]
  %v182 = vld [vmem:[%s1 + $0x430] sm:$0xff]
  %v183 = vld [vmem:[%s1 + $0x438] sm:$0xff]
  %v184 = vld [vmem:[%s1 + $0x440] sm:$0xff]
  %v185 = vld [vmem:[%s1 + $0x448] sm:$0xff]
  %v186 = vld [vmem:[%s1 + $0x450] sm:$0xff]
  %v187 = vld [vmem:[%s1 + $0x458] sm:$0xff]
  %v188 = vld [vmem:[%s1 + $0x460] sm:$0xff]
  %v189 = vld [vmem:[%s1 + $0x468] sm:$0xff]
  %v190 = vld [vmem:[%s1 + $0x470] sm:$0xff]
  %v191 = vld [vmem:[%s1 + $0x478] sm:$0xff]
  %v192 = vld [vmem:[%s1 + $0x480] sm:$0xff]
  %v193 = vld [vmem:[%s1 + $0x488] sm:$0xff]
  %v194 = vld [vmem:[%s1 + $0x490] sm:$0xff]
  %v195 = vld [vmem:[%s1 + $0x498] sm:$0xff]
  %v196 = vld [vmem:[%s1 + $0x4a0] sm:$0xff]
  %v197 = vld [vmem:[%s1 + $0x4a8] sm:$0xff]
  %v198 = vld [vmem:[%s1 + $0x4b0] sm:$0xff]
  %v199 = vld [vmem:[%s1 + $0x4b8] sm:$0xff]
  %v200 = vld [vmem:[%s1 + $0x4c0] sm:$0xff]
  %v201 = vld [vmem:[%s1 + $0x4c8] sm:$0xff]
  %v202 = vld [vmem:[%s1 + $0x4d0] sm:$0xff]
  %v203 = vld [vmem:[%s1 + $0x4d8] sm:$0xff]
  %v204 = vld [vmem:[%s1 + $0x4e0] sm:$0xff]
  %v205 = vld [vmem:[%s1 + $0x4e8] sm:$0xff]
  %v206 = vld [vmem:[%s1 + $0x4f0] sm:$0xff]
  %v207 = vld [vmem:[%s1 + $0x4f8] sm:$0xff]
  %v208 = vld [vmem:[%s1 + $0x500] sm:$0xff]
  %v209 = vld [vmem:[%s1 + $0x508] sm:$0xff]
  %v210 = vld [vmem:[%s1 + $0x510] sm:$0xff]
  %v211 = vld [vmem:[%s1 + $0x518] sm:$0xff]
  %v212 = vld [vmem:[%s1 + $0x520] sm:$0xff]
  %v213 = vld [vmem:[%s1 + $0x528] sm:$0xff]
  %v214 = vld [vmem:[%s1 + $0x530] sm:$0xff]
  %v215 = vld [vmem:[%s1 + $0x538] sm:$0xff]
  %v216 = vld [vmem:[%s1 + $0x540] sm:$0xff]
  %v217 = vld [vmem:[%s1 + $0x548] sm:$0xff]
  %v218 = vld [vmem:[%s1 + $0x550] sm:$0xff]
  %v219 = vld [vmem:[%s1 + $0x558] sm:$0xff]
  %v220 = vld [vmem:[%s1 + $0x560] sm:$0xff]
  %v221 = vld [vmem:[%s1 + $0x568] sm:$0xff]
  %v222 = vld [vmem:[%s1 + $0x570] sm:$0xff]
  %v223 = vld [vmem:[%s1 + $0x578] sm:$0xff]
  %v224 = vld [vmem:[%s1 + $0x580] sm:$0xff]
  %v225 = vld [vmem:[%s1 + $0x588] sm:$0xff]
  %v226 = vld [vmem:[%s1 + $0x590] sm:$0xff]
  %v227 = vld [vmem:[%s1 + $0x598] sm:$0xff]
  %v228 = vld [vmem:[%s1 + $0x5a0] sm:$0xff]
  %v229 = vld [vmem:[%s1 + $0x5a8] sm:$0xff]
  %v230 = vld [vmem:[%s1 + $0x5b0] sm:$0xff]
  %v231 = vld [vmem:[%s1 + $0x5b8] sm:$0xff]
  %v232 = vld [vmem:[%s1 + $0x5c0] sm:$0xff]
  %v233 = vld [vmem:[%s1 + $0x5c8] sm:$0xff]
  %v234 = vld [vmem:[%s1 + $0x5d0] sm:$0xff]
  %v235 = vld [vmem:[%s1 + $0x5d8] sm:$0xff]
  %v236 = vld [vmem:[%s1 + $0x5e0] sm:$0xff]
  %v237 = vld [vmem:[%s1 + $0x5e8] sm:$0xff]
  %v238 = vld [vmem:[%s1 + $0x5f0] sm:$0xff]
  %v239 = vld [vmem:[%s1 + $0x5f8] sm:$0xff]
  %v240 = vld [vmem:[%s1 + $0x600] sm:$0xff]
  %v241 = vld [vmem:[%s1 + $0x608] sm:$0xff]
  %v242 = vld [vmem:[%s1 + $0x610] sm:$0xff]
  %v243 = vld [vmem:[%s1 + $0x618] sm:$0xff]
  %v244 = vld [vmem:[%s1 + $0x620] sm:$0xff]
  %v245 = vld [vmem:[%s1 + $0x628] sm:$0xff]
  %v246 = vld [vmem:[%s1 + $0x630] sm:$0xff]
  %v247 = vld [vmem:[%s1 + $0x638] sm:$0xff]
  %v248 = vld [vmem:[%s1 + $0x640] sm:$0xff]
  %v249 = vld [vmem:[%s1 + $0x648] sm:$0xff]
  %v250 = vld [vmem:[%s1 + $0x650] sm:$0xff]
  %v251 = vld [vmem:[%s1 + $0x658] sm:$0xff]
  %v252 = vld [vmem:[%s1 + $0x660] sm:$0xff]
  %v253 = vld [vmem:[%s1 + $0x668] sm:$0xff]
  %v254 = vld [vmem:[%s1 + $0x670] sm:$0xff]
  %v255 = vld [vmem:[%s1 + $0x678] sm:$0xff]
  %v256 = vld [vmem:[%s1 + $0x680] sm:$0xff]
  %v257 = vld [vmem:[%s1 + $0x688] sm:$0xff]
  %v258 = vld [vmem:[%s1 + $0x690] sm:$0xff]
  %v259 = vld [vmem:[%s1 + $0x698] sm:$0xff]
  %v260 = vld [vmem:[%s1 + $0x6a0] sm:$0xff]
  %v261 = vld [vmem:[%s1 + $0x6a8] sm:$0xff]
  %v262 = vld [vmem:[%s1 + $0x6b0] sm:$0xff]
  %v263 = vld [vmem:[%s1 + $0x6b8] sm:$0xff]
  %v264 = vld [vmem:[%s1 + $0x6c0] sm:$0xff]
  %v265 = vld [vmem:[%s1 + $0x6c8] sm:$0xff]
  %v266 = vld [vmem:[%s1 + $0x6d0] sm:$0xff]
  %v267 = vld [vmem:[%s1 + $0x6d8] sm:$0xff]
  %v268 = vld [vmem:[%s1 + $0x6e0] sm:$0xff]
  %v269 = vld [vmem:[%s1 + $0x6e8] sm:$0xff]
  %v270 = vld [vmem:[%s1 + $0x6f0] sm:$0xff]
  %v271 = vld [vmem:[%s1 + $0x6f8] sm:$0xff]
  %v272 = vld [vmem:[%s1 + $0x700] sm:$0xff]
  %v273 = vld [vmem:[%s1 + $0x708] sm:$0xff]
  %v274 = vld [vmem:[%s1 + $0x710] sm:$0xff]
  %v275 = vld [vmem:[%s1 + $0x718] sm:$0xff]
  %v276 = vld [vmem:[%s1 + $0x720] sm:$0xff]
  %v277 = vld [vmem:[%s1 + $0x728] sm:$0xff]
  %v278 = vld [vmem:[%s1 + $0x730] sm:$0xff]
  %v279 = vld [vmem:[%s1 + $0x738] sm:$0xff]
  %v280 = vld [vmem:[%s1 + $0x740] sm:$0xff]
  %v281 = vld [vmem:[%s1 + $0x748] sm:$0xff]
  %v282 = vld [vmem:[%s1 + $0x750] sm:$0xff]
  %v283 = vld [vmem:[%s1 + $0x758] sm:$0xff]
  %v284 = vld [vmem:[%s1 + $0x760] sm:$0xff]
  %v285 = vld [vmem:[%s1 + $0x768] sm:$0xff]
  %v286 = vld [vmem:[%s1 + $0x770] sm:$0xff]
  %v287 = vld [vmem:[%s1 + $0x778] sm:$0xff]
  %v288 = vld [vmem:[%s1 + $0x780] sm:$0xff]
  %v289 = vld [vmem:[%s1 + $0x788] sm:$0xff]
  %v290 = vld [vmem:[%s1 + $0x790] sm:$0xff]
  %v291 = vld [vmem:[%s1 + $0x798] sm:$0xff]
  %v292 = vld [vmem:[%s1 + $0x7a0] sm:$0xff]
  %v293 = vld [vmem:[%s1 + $0x7a8] sm:$0xff]
  %v294 = vld [vmem:[%s1 + $0x7b0] sm:$0xff]
  %v295 = vld [vmem:[%s1 + $0x7b8] sm:$0xff]
  %v296 = vld [vmem:[%s1 + $0x7c0] sm:$0xff]
  %v297 = vld [vmem:[%s1 + $0x7c8] sm:$0xff]
  %v298 = vld [vmem:[%s1 + $0x7d0] sm:$0xff]
  %v299 = vld [vmem:[%s1 + $0x7d8] sm:$0xff]
  %v300 = vld [vmem:[%s1 + $0x7e0] sm:$0xff]
  %v301 = vld [vmem:[%s1 + $0x7e8] sm:$0xff]
  %v302 = vld [vmem:[%s1 + $0x7f0] sm:$0xff]
  %v303 = vld [vmem:[%s1 + $0x7f8] sm:$0xff]
  %v304 = vld [vmem:[%s1 + $0x800] sm:$0xff]
  %v305 = vld [vmem:[%s1 + $0x808] sm:$0xff]
  %v306 = vld [vmem:[%s1 + $0x810] sm:$0xff]
  %v307 = vld [vmem:[%s1 + $0x818] sm:$0xff]
  %v308 = vld [vmem:[%s1 + $0x820] sm:$0xff]
  %v309 = vld [vmem:[%s1 + $0x828] sm:$0xff]
  %v310 = vld [vmem:[%s1 + $0x830] sm:$0xff]
  %v311 = vld [vmem:[%s1 + $0x838] sm:$0xff]
  %v312 = vld [vmem:[%s1 + $0x840] sm:$0xff]
  %v313 = vld [vmem:[%s1 + $0x848] sm:$0xff]
  %v314 = vld [vmem:[%s1 + $0x850] sm:$0xff]
  %v315 = vld [vmem:[%s1 + $0x858] sm:$0xff]
  %v316 = vld [vmem:[%s1 + $0x860] sm:$0xff]
  %v317 = vld [vmem:[%s1 + $0x868] sm:$0xff]
  %v318 = vld [vmem:[%s1 + $0x870] sm:$0xff]
  %v319 = vld [vmem:[%s1 + $0x878] sm:$0xff]
  %v320 = vld [vmem:[%s1 + $0x880] sm:$0xff]
  %v321 = vld [vmem:[%s1 + $0x888] sm:$0xff]
  %v322 = vld [vmem:[%s1 + $0x890] sm:$0xff]
  %v323 = vld [vmem:[%s1 + $0x898] sm:$0xff]
  %v324 = vld [vmem:[%s1 + $0x8a0] sm:$0xff]
  %v325 = vld [vmem:[%s1 + $0x8a8] sm:$0xff]
  %v326 = vld [vmem:[%s1 + $0x8b0] sm:$0xff]
  %v327 = vld [vmem:[%s1 + $0x8b8] sm:$0xff]
  %v328 = vld [vmem:[%s1 + $0x8c0] sm:$0xff]
  %v329 = vld [vmem:[%s1 + $0x8c8] sm:$0xff]
  %v330 = vld [vmem:[%s1 + $0x8d0] sm:$0xff]
  %v331 = vld [vmem:[%s1 + $0x8d8] sm:$0xff]
  %v332 = vld [vmem:[%s1 + $0x8e0] sm:$0xff]
  %v333 = vld [vmem:[%s1 + $0x8e8] sm:$0xff]
  %v334 = vld [vmem:[%s1 + $0x8f0] sm:$0xff]
  %v335 = vld [vmem:[%s1 + $0x8f8] sm:$0xff]
  %v336 = vld [vmem:[%s1 + $0x900] sm:$0xff]
  %v337 = vld [vmem:[%s1 + $0x908] sm:$0xff]
  %v338 = vld [vmem:[%s1 + $0x910] sm:$0xff]
  %v339 = vld [vmem:[%s1 + $0x918] sm:$0xff]
  %v340 = vld [vmem:[%s1 + $0x920] sm:$0xff]
  %v341 = vld [vmem:[%s1 + $0x928] sm:$0xff]
  %v342 = vld [vmem:[%s1 + $0x930] sm:$0xff]
  %v343 = vld [vmem:[%s1 + $0x938] sm:$0xff]
  %v344 = vld [vmem:[%s1 + $0x940] sm:$0xff]
  %v345 = vld [vmem:[%s1 + $0x948] sm:$0xff]
  %v346 = vld [vmem:[%s1 + $0x950] sm:$0xff]
  %v347 = vld [vmem:[%s1 + $0x958] sm:$0xff]
  %v348 = vld [vmem:[%s1 + $0x960] sm:$0xff]
  %v349 = vld [vmem:[%s1 + $0x968] sm:$0xff]
  %v350 = vld [vmem:[%s1 + $0x970] sm:$0xff]
  %v351 = vld [vmem:[%s1 + $0x978] sm:$0xff]
  %v352 = vld [vmem:[%s1 + $0x980] sm:$0xff]
  %v353 = vld [vmem:[%s1 + $0x988] sm:$0xff]
  %v354 = vld [vmem:[%s1 + $0x990] sm:$0xff]
  %v355 = vld [vmem:[%s1 + $0x998] sm:$0xff]
  %v356 = vld [vmem:[%s1 + $0x9a0] sm:$0xff]
  %v357 = vld [vmem:[%s1 + $0x9a8] sm:$0xff]
  %v358 = vld [vmem:[%s1 + $0x9b0] sm:$0xff]
  %v359 = vld [vmem:[%s1 + $0x9b8] sm:$0xff]
  %v360 = vld [vmem:[%s1 + $0x9c0] sm:$0xff]
  %v361 = vld [vmem:[%s1 + $0x9c8] sm:$0xff]
  %v362 = vld [vmem:[%s1 + $0x9d0] sm:$0xff]
  %v363 = vld [vmem:[%s1 + $0x9d8] sm:$0xff]
  %v364 = vld [vmem:[%s1 + $0x9e0] sm:$0xff]
  %v365 = vld [vmem:[%s1 + $0x9e8] sm:$0xff]
  %v366 = vld [vmem:[%s1 + $0x9f0] sm:$0xff]
  %v367 = vld [vmem:[%s1 + $0x9f8] sm:$0xff]
  %v368 = vld [vmem:[%s1 + $0xa00] sm:$0xff]
  %v369 = vld [vmem:[%s1 + $0xa08] sm:$0xff]
  %v370 = vld [vmem:[%s1 + $0xa10] sm:$0xff]
  %v371 = vld [vmem:[%s1 + $0xa18] sm:$0xff]
  %v372 = vld [vmem:[%s1 + $0xa20] sm:$0xff]
  %v373 = vld [vmem:[%s1 + $0xa28] sm:$0xff]
  %v374 = vld [vmem:[%s1 + $0xa30] sm:$0xff]
  %v375 = vld [vmem:[%s1 + $0xa38] sm:$0xff]
  %v376 = vld [vmem:[%s1 + $0xa40] sm:$0xff]
  %v377 = vld [vmem:[%s1 + $0xa48] sm:$0xff]
  %v378 = vld [vmem:[%s1 + $0xa50] sm:$0xff]
  %v379 = vld [vmem:[%s1 + $0xa58] sm:$0xff]
  %v380 = vld [vmem:[%s1 + $0xa60] sm:$0xff]
  %v381 = vld [vmem:[%s1 + $0xa68] sm:$0xff]
  %v382 = vld [vmem:[%s1 + $0xa70] sm:$0xff]
  %v383 = vld [vmem:[%s1 + $0xa78] sm:$0xff]
  %v384 = vld [vmem:[%s1 + $0xa80] sm:$0xff]
  %v385 = vld [vmem:[%s1 + $0xa88] sm:$0xff]
  %v386 = vld [vmem:[%s1 + $0xa90] sm:$0xff]
  %v387 = vld [vmem:[%s1 + $0xa98] sm:$0xff]
  %v388 = vld [vmem:[%s1 + $0xaa0] sm:$0xff]
  %v389 = vld [vmem:[%s1 + $0xaa8] sm:$0xff]
  %v390 = vld [vmem:[%s1 + $0xab0] sm:$0xff]
  %v391 = vld [vmem:[%s1 + $0xab8] sm:$0xff]
  %v392 = vld [vmem:[%s1 + $0xac0] sm:$0xff]
  %v393 = vld [vmem:[%s1 + $0xac8] sm:$0xff]
  %v394 = vld [vmem:[%s1 + $0xad0] sm:$0xff]
  %v395 = vld [vmem:[%s1 + $0xad8] sm:$0xff]
  %v396 = vld [vmem:[%s1 + $0xae0] sm:$0xff]
  %v397 = vld [vmem:[%s1 + $0xae8] sm:$0xff]
  %v398 = vld [vmem:[%s1 + $0xaf0] sm:$0xff]
  %v399 = vld [vmem:[%s1 + $0xaf8] sm:$0xff]
  %v400 = vld [vmem:[%s1 + $0xb00] sm:$0xff]
  %v401 = vld [vmem:[%s1 + $0xb08] sm:$0xff]
  %v402 = vld [vmem:[%s1 + $0xb10] sm:$0xff]
  %v403 = vld [vmem:[%s1 + $0xb18] sm:$0xff]
  %v404 = vld [vmem:[%s1 + $0xb20] sm:$0xff]
  %v405 = vld [vmem:[%s1 + $0xb28] sm:$0xff]
  %v406 = vld [vmem:[%s1 + $0xb30] sm:$0xff]
  %v407 = vld [vmem:[%s1 + $0xb38] sm:$0xff]
  %v408 = vld [vmem:[%s1 + $0xb40] sm:$0xff]
  %v409 = vld [vmem:[%s1 + $0xb48] sm:$0xff]
  %v410 = vld [vmem:[%s1 + $0xb50] sm:$0xff]
  %v411 = vld [vmem:[%s1 + $0xb58] sm:$0xff]
  %v412 = vld [vmem:[%s1 + $0xb60] sm:$0xff]
  %v413 = vld [vmem:[%s1 + $0xb68] sm:$0xff]
  %v414 = vld [vmem:[%s1 + $0xb70] sm:$0xff]
  %v415 = vld [vmem:[%s1 + $0xb78] sm:$0xff]
  %v416 = vld [vmem:[%s1 + $0xb80] sm:$0xff]
  %v417 = vld [vmem:[%s1 + $0xb88] sm:$0xff]
  %v418 = vld [vmem:[%s1 + $0xb90] sm:$0xff]
  %v419 = vld [vmem:[%s1 + $0xb98] sm:$0xff]
  %v420 = vld [vmem:[%s1 + $0xba0] sm:$0xff]
  %v421 = vld [vmem:[%s1 + $0xba8] sm:$0xff]
  %v422 = vld [vmem:[%s1 + $0xbb0] sm:$0xff]
  %v423 = vld [vmem:[%s1 + $0xbb8] sm:$0xff]
  %v424 = vld [vmem:[%s1 + $0xbc0] sm:$0xff]
  %v425 = vld [vmem:[%s1 + $0xbc8] sm:$0xff]
  %v426 = vld [vmem:[%s1 + $0xbd0] sm:$0xff]
  %v427 = vld [vmem:[%s1 + $0xbd8] sm:$0xff]
  %v428 = vld [vmem:[%s1 + $0xbe0] sm:$0xff]
  %v429 = vld [vmem:[%s1 + $0xbe8] sm:$0xff]
  %v430 = vld [vmem:[%s1 + $0xbf0] sm:$0xff]
  %v431 = vld [vmem:[%s1 + $0xbf8] sm:$0xff]
  %v432 = vld [vmem:[%s1 + $0xc00] sm:$0xff]
  %v433 = vld [vmem:[%s1 + $0xc08] sm:$0xff]
  %v434 = vld [vmem:[%s1 + $0xc10] sm:$0xff]
  %v435 = vld [vmem:[%s1 + $0xc18] sm:$0xff]
  %v436 = vld [vmem:[%s1 + $0xc20] sm:$0xff]
  %v437 = vld [vmem:[%s1 + $0xc28] sm:$0xff]
  %v438 = vld [vmem:[%s1 + $0xc30] sm:$0xff]
  %v439 = vld [vmem:[%s1 + $0xc38] sm:$0xff]
  %v440 = vld [vmem:[%s1 + $0xc40] sm:$0xff]
  %v441 = vld [vmem:[%s1 + $0xc48] sm:$0xff]
  %v442 = vld [vmem:[%s1 + $0xc50] sm:$0xff]
  %v443 = vld [vmem:[%s1 + $0xc58] sm:$0xff]
  %v444 = vld [vmem:[%s1 + $0xc60] sm:$0xff]
  %v445 = vld [vmem:[%s1 + $0xc68] sm:$0xff]
  %v446 = vld [vmem:[%s1 + $0xc70] sm:$0xff]
  %v447 = vld [vmem:[%s1 + $0xc78] sm:$0xff]
  %v448 = vld [vmem:[%s1 + $0xc80] sm:$0xff]
  %v449 = vld [vmem:[%s1 + $0xc88] sm:$0xff]
  %v450 = vld [vmem:[%s1 + $0xc90] sm:$0xff]
  %v451 = vld [vmem:[%s1 + $0xc98] sm:$0xff]
  %v452 = vld [vmem:[%s1 + $0xca0] sm:$0xff]
  %v453 = vld [vmem:[%s1 + $0xca8] sm:$0xff]
  %v454 = vld [vmem:[%s1 + $0xcb0] sm:$0xff]
  %v455 = vld [vmem:[%s1 + $0xcb8] sm:$0xff]
  %v456 = vld [vmem:[%s1 + $0xcc0] sm:$0xff]
  %v457 = vld [vmem:[%s1 + $0xcc8] sm:$0xff]
  %v458 = vld [vmem:[%s1 + $0xcd0] sm:$0xff]
  %v459 = vld [vmem:[%s1 + $0xcd8] sm:$0xff]
  %v460 = vld [vmem:[%s1 + $0xce0] sm:$0xff]
  %v461 = vld [vmem:[%s1 + $0xce8] sm:$0xff]
  %v462 = vld [vmem:[%s1 + $0xcf0] sm:$0xff]
  %v463 = vld [vmem:[%s1 + $0xcf8] sm:$0xff]
  %v464 = vld [vmem:[%s1 + $0xd00] sm:$0xff]
  %v465 = vld [vmem:[%s1 + $0xd08] sm:$0xff]
  %v466 = vld [vmem:[%s1 + $0xd10] sm:$0xff]
  %v467 = vld [vmem:[%s1 + $0xd18] sm:$0xff]
  %v468 = vld [vmem:[%s1 + $0xd20] sm:$0xff]
  %v469 = vld [vmem:[%s1 + $0xd28] sm:$0xff]
  %v470 = vld [vmem:[%s1 + $0xd30] sm:$0xff]
  %v471 = vld [vmem:[%s1 + $0xd38] sm:$0xff]
  %v472 = vld [vmem:[%s1 + $0xd40] sm:$0xff]
  %v473 = vld [vmem:[%s1 + $0xd48] sm:$0xff]
  %v474 = vld [vmem:[%s1 + $0xd50] sm:$0xff]
  %v475 = vld [vmem:[%s1 + $0xd58] sm:$0xff]
  %v476 = vld [vmem:[%s1 + $0xd60] sm:$0xff]
  %v477 = vld [vmem:[%s1 + $0xd68] sm:$0xff]
  %v478 = vld [vmem:[%s1 + $0xd70] sm:$0xff]
  %v479 = vld [vmem:[%s1 + $0xd78] sm:$0xff]
  %v480 = vld [vmem:[%s1 + $0xd80] sm:$0xff]
  %v481 = vld [vmem:[%s1 + $0xd88] sm:$0xff]
  %v482 = vld [vmem:[%s1 + $0xd90] sm:$0xff]
  %v483 = vld [vmem:[%s1 + $0xd98] sm:$0xff]
  %v484 = vld [vmem:[%s1 + $0xda0] sm:$0xff]
  %v485 = vld [vmem:[%s1 + $0xda8] sm:$0xff]
  %v486 = vld [vmem:[%s1 + $0xdb0] sm:$0xff]
  %v487 = vld [vmem:[%s1 + $0xdb8] sm:$0xff]
  %v488 = vld [vmem:[%s1 + $0xdc0] sm:$0xff]
  %v489 = vld [vmem:[%s1 + $0xdc8] sm:$0xff]
  %v490 = vld [vmem:[%s1 + $0xdd0] sm:$0xff]
  %v491 = vld [vmem:[%s1 + $0xdd8] sm:$0xff]
  %v492 = vld [vmem:[%s1 + $0xde0] sm:$0xff]
  %v493 = vld [vmem:[%s1 + $0xde8] sm:$0xff]
  %v494 = vld [vmem:[%s1 + $0xdf0] sm:$0xff]
  %v495 = vld [vmem:[%s1 + $0xdf8] sm:$0xff]
  %v496 = vld [vmem:[%s1 + $0xe00] sm:$0xff]
  %v497 = vld [vmem:[%s1 + $0xe08] sm:$0xff]
  %v498 = vld [vmem:[%s1 + $0xe10] sm:$0xff]
  %v499 = vld [vmem:[%s1 + $0xe18] sm:$0xff]
  %v500 = vld [vmem:[%s1 + $0xe20] sm:$0xff]
  %v501 = vld [vmem:[%s1 + $0xe28] sm:$0xff]
  %v502 = vld [vmem:[%s1 + $0xe30] sm:$0xff]
  %v503 = vld [vmem:[%s1 + $0xe38] sm:$0xff]
  %v504 = vld [vmem:[%s1 + $0xe40] sm:$0xff]
  %v505 = vld [vmem:[%s1 + $0xe48] sm:$0xff]
  %v506 = vld [vmem:[%s1 + $0xe50] sm:$0xff]
  %v507 = vld [vmem:[%s1 + $0xe58] sm:$0xff]
  %v508 = vld [vmem:[%s1 + $0xe60] sm:$0xff]
  %v509 = vld [vmem:[%s1 + $0xe68] sm:$0xff]
  %v510 = vld [vmem:[%s1 + $0xe70] sm:$0xff]
  %v511 = vld [vmem:[%s1 + $0xe78] sm:$0xff]
  %v512 = vld [vmem:[%s1 + $0xe80] sm:$0xff]
  %v513 = vld [vmem:[%s1 + $0xe88] sm:$0xff]
  %v514 = vld [vmem:[%s1 + $0xe90] sm:$0xff]
  %v515 = vld [vmem:[%s1 + $0xe98] sm:$0xff]
  %v516 = vld [vmem:[%s1 + $0xea0] sm:$0xff]
  %v517 = vld [vmem:[%s1 + $0xea8] sm:$0xff]
  %v518 = vld [vmem:[%s1 + $0xeb0] sm:$0xff]
  %v519 = vld [vmem:[%s1 + $0xeb8] sm:$0xff]
  %v520 = vld [vmem:[%s1 + $0xec0] sm:$0xff]
  %v521 = vld [vmem:[%s1 + $0xec8] sm:$0xff]
  %v522 = vld [vmem:[%s1 + $0xed0] sm:$0xff]
  %v523 = vld [vmem:[%s1 + $0xed8] sm:$0xff]
  %v524 = vld [vmem:[%s1 + $0xee0] sm:$0xff]
  %v525 = vld [vmem:[%s1 + $0xee8] sm:$0xff]
  %v526 = vld [vmem:[%s1 + $0xef0] sm:$0xff]
  %v527 = vld [vmem:[%s1 + $0xef8] sm:$0xff]
  %v528 = vld [vmem:[%s1 + $0xf00] sm:$0xff]
  %v529 = vld [vmem:[%s1 + $0xf08] sm:$0xff]
  %v530 = vld [vmem:[%s1 + $0xf10] sm:$0xff]
  %v531 = vld [vmem:[%s1 + $0xf18] sm:$0xff]
  %v532 = vld [vmem:[%s1 + $0xf20] sm:$0xff]
  %v533 = vld [vmem:[%s1 + $0xf28] sm:$0xff]
  %v534 = vld [vmem:[%s1 + $0xf30] sm:$0xff]
  %v535 = vld [vmem:[%s1 + $0xf38] sm:$0xff]
  %v536 = vld [vmem:[%s1 + $0xf40] sm:$0xff]
  %v537 = vld [vmem:[%s1 + $0xf48] sm:$0xff]
  %v538 = vld [vmem:[%s1 + $0xf50] sm:$0xff]
  %v539 = vld [vmem:[%s1 + $0xf58] sm:$0xff]
  %v540 = vld [vmem:[%s1 + $0xf60] sm:$0xff]
  %v541 = vld [vmem:[%s1 + $0xf68] sm:$0xff]
  %v542 = vld [vmem:[%s1 + $0xf70] sm:$0xff]
  %v543 = vld [vmem:[%s1 + $0xf78] sm:$0xff]
  %v544 = vld [vmem:[%s1 + $0xf80] sm:$0xff]
  %v545 = vld [vmem:[%s1 + $0xf88] sm:$0xff]
  %v546 = vld [vmem:[%s1 + $0xf90] sm:$0xff]
  %v547 = vld [vmem:[%s1 + $0xf98] sm:$0xff]
  %v548 = vld [vmem:[%s1 + $0xfa0] sm:$0xff]
  %v549 = vld [vmem:[%s1 + $0xfa8] sm:$0xff]
  %v550 = vld [vmem:[%s1 + $0xfb0] sm:$0xff]
  %v551 = vld [vmem:[%s1 + $0xfb8] sm:$0xff]
  %v552 = vld [vmem:[%s1 + $0xfc0] sm:$0xff]
  %v553 = vld [vmem:[%s1 + $0xfc8] sm:$0xff]
  %v554 = vld [vmem:[%s1 + $0xfd0] sm:$0xff]
  %v555 = vld [vmem:[%s1 + $0xfd8] sm:$0xff]
  %v556 = vld [vmem:[%s1 + $0xfe0] sm:$0xff]
  %v557 = vld [vmem:[%s1 + $0xfe8] sm:$0xff]
  %v558 = vld [vmem:[%s1 + $0xff0] sm:$0xff]
  %v559 = vld [vmem:[%s1 + $0xff8] sm:$0xff]
  %v560 = vld [vmem:[%s1 + $0x1000] sm:$0xff]
  %v561 = vld [vmem:[%s1 + $0x1008] sm:$0xff]
  %v562 = vld [vmem:[%s1 + $0x1010] sm:$0xff]
  %v563 = vld [vmem:[%s1 + $0x1018] sm:$0xff]
  %v564 = vld [vmem:[%s1 + $0x1020] sm:$0xff]
  %v565 = vld [vmem:[%s1 + $0x1028] sm:$0xff]
  %v566 = vld [vmem:[%s1 + $0x1030] sm:$0xff]
  %v567 = vld [vmem:[%s1 + $0x1038] sm:$0xff]
  %v568 = vld [vmem:[%s1 + $0x1040] sm:$0xff]
  %v569 = vld [vmem:[%s1 + $0x1048] sm:$0xff]
  %v570 = vld [vmem:[%s1 + $0x1050] sm:$0xff]
  %v571 = vld [vmem:[%s1 + $0x1058] sm:$0xff]
  %v572 = vld [vmem:[%s1 + $0x1060] sm:$0xff]
  %v573 = vld [vmem:[%s1 + $0x1068] sm:$0xff]
  %v574 = vld [vmem:[%s1 + $0x1070] sm:$0xff]
  %v575 = vld [vmem:[%s1 + $0x1078] sm:$0xff]
  %v576 = vld [vmem:[%s1 + $0x1080] sm:$0xff]
  %v577 = vld [vmem:[%s1 + $0x1088] sm:$0xff]
  %v578 = vld [vmem:[%s1 + $0x1090] sm:$0xff]
  %v579 = vld [vmem:[%s1 + $0x1098] sm:$0xff]
  %v580 = vld [vmem:[%s1 + $0x10a0] sm:$0xff]
  %v581 = vld [vmem:[%s1 + $0x10a8] sm:$0xff]
  %v582 = vld [vmem:[%s1 + $0x10b0] sm:$0xff]
  %v583 = vld [vmem:[%s1 + $0x10b8] sm:$0xff]
  %v584 = vld [vmem:[%s1 + $0x10c0] sm:$0xff]
  %v585 = vld [vmem:[%s1 + $0x10c8] sm:$0xff]
  %v586 = vld [vmem:[%s1 + $0x10d0] sm:$0xff]
  %v587 = vld [vmem:[%s1 + $0x10d8] sm:$0xff]
  %v588 = vld [vmem:[%s1 + $0x10e0] sm:$0xff]
  %v589 = vld [vmem:[%s1 + $0x10e8] sm:$0xff]
  %v590 = vld [vmem:[%s1 + $0x10f0] sm:$0xff]
  %v591 = vld [vmem:[%s1 + $0x10f8] sm:$0xff]
  %v592 = vld [vmem:[%s1 + $0x1100] sm:$0xff]
  %v593 = vld [vmem:[%s1 + $0x1108] sm:$0xff]
  %v594 = vld [vmem:[%s1 + $0x1110] sm:$0xff]
  %v595 = vld [vmem:[%s1 + $0x1118] sm:$0xff]
  %v596 = vld [vmem:[%s1 + $0x1120] sm:$0xff]
  %v597 = vld [vmem:[%s1 + $0x1128] sm:$0xff]
  %v598 = vld [vmem:[%s1 + $0x1130] sm:$0xff]
  %v599 = vld [vmem:[%s1 + $0x1138] sm:$0xff]
  %v600 = vld [vmem:[%s1 + $0x1140] sm:$0xff]
  %v601 = vld [vmem:[%s1 + $0x1148] sm:$0xff]
  %v602 = vld [vmem:[%s1 + $0x1150] sm:$0xff]
  %v603 = vld [vmem:[%s1 + $0x1158] sm:$0xff]
  %v604 = vld [vmem:[%s1 + $0x1160] sm:$0xff]
  %v605 = vld [vmem:[%s1 + $0x1168] sm:$0xff]
  %v606 = vld [vmem:[%s1 + $0x1170] sm:$0xff]
  %v607 = vld [vmem:[%s1 + $0x1178] sm:$0xff]
  %v608 = vld [vmem:[%s1 + $0x1180] sm:$0xff]
  %v609 = vld [vmem:[%s1 + $0x1188] sm:$0xff]
  %v610 = vld [vmem:[%s1 + $0x1190] sm:$0xff]
  %v611 = vld [vmem:[%s1 + $0x1198] sm:$0xff]
  %v612 = vld [vmem:[%s1 + $0x11a0] sm:$0xff]
  %v613 = vld [vmem:[%s1 + $0x11a8] sm:$0xff]
  %v614 = vld [vmem:[%s1 + $0x11b0] sm:$0xff]
  %v615 = vld [vmem:[%s1 + $0x11b8] sm:$0xff]
  %v616 = vld [vmem:[%s1 + $0x11c0] sm:$0xff]
  %v617 = vld [vmem:[%s1 + $0x11c8] sm:$0xff]
  %v618 = vld [vmem:[%s1 + $0x11d0] sm:$0xff]
  %v619 = vld [vmem:[%s1 + $0x11d8] sm:$0xff]
  %v620 = vld [vmem:[%s1 + $0x11e0] sm:$0xff]
  %v621 = vld [vmem:[%s1 + $0x11e8] sm:$0xff]
  %v622 = vld [vmem:[%s1 + $0x11f0] sm:$0xff]
  %v623 = vld [vmem:[%s1 + $0x11f8] sm:$0xff]
  %v624 = vld [vmem:[%s1 + $0x1200] sm:$0xff]
  %v625 = vld [vmem:[%s1 + $0x1208] sm:$0xff]
  %v626 = vld [vmem:[%s1 + $0x1210] sm:$0xff]
  %v627 = vld [vmem:[%s1 + $0x1218] sm:$0xff]
  %v628 = vld [vmem:[%s1 + $0x1220] sm:$0xff]
  %v629 = vld [vmem:[%s1 + $0x1228] sm:$0xff]
  %v630 = vld [vmem:[%s1 + $0x1230] sm:$0xff]
  %v631 = vld [vmem:[%s1 + $0x1238] sm:$0xff]
  %v632 = vld [vmem:[%s1 + $0x1240] sm:$0xff]
  %v633 = vld [vmem:[%s1 + $0x1248] sm:$0xff]
  %v634 = vld [vmem:[%s1 + $0x1250] sm:$0xff]
  %v635 = vld [vmem:[%s1 + $0x1258] sm:$0xff]
  %v636 = vld [vmem:[%s1 + $0x1260] sm:$0xff]
  %v637 = vld [vmem:[%s1 + $0x1268] sm:$0xff]
  %v638 = vld [vmem:[%s1 + $0x1270] sm:$0xff]
  %v639 = vld [vmem:[%s1 + $0x1278] sm:$0xff]
  %v640 = vld [vmem:[%s1 + $0x1280] sm:$0xff]
  %v641 = vld [vmem:[%s1 + $0x1288] sm:$0xff]
  %v642 = vld [vmem:[%s1 + $0x1290] sm:$0xff]
  %v643 = vld [vmem:[%s1 + $0x1298] sm:$0xff]
  %v644 = vld [vmem:[%s1 + $0x12a0] sm:$0xff]
  %v645 = vld [vmem:[%s1 + $0x12a8] sm:$0xff]
  %v646 = vld [vmem:[%s1 + $0x12b0] sm:$0xff]
  %v647 = vld [vmem:[%s1 + $0x12b8] sm:$0xff]
  %v648 = vld [vmem:[%s1 + $0x12c0] sm:$0xff]
  %v649 = vld [vmem:[%s1 + $0x12c8] sm:$0xff]
  %v650 = vld [vmem:[%s1 + $0x12d0] sm:$0xff]
  %v651 = vld [vmem:[%s1 + $0x12d8] sm:$0xff]
  %v652 = vld [vmem:[%s1 + $0x12e0] sm:$0xff]
  %v653 = vld [vmem:[%s1 + $0x12e8] sm:$0xff]
  %v654 = vld [vmem:[%s1 + $0x12f0] sm:$0xff]
  %v655 = vld [vmem:[%s1 + $0x12f8] sm:$0xff]
  %v656 = vld [vmem:[%s1 + $0x1300] sm:$0xff]
  %v657 = vld [vmem:[%s1 + $0x1308] sm:$0xff]
  %v658 = vld [vmem:[%s1 + $0x1310] sm:$0xff]
  %v659 = vld [vmem:[%s1 + $0x1318] sm:$0xff]
  %v660 = vld [vmem:[%s1 + $0x1320] sm:$0xff]
  %v661 = vld [vmem:[%s1 + $0x1328] sm:$0xff]
  %v662 = vld [vmem:[%s1 + $0x1330] sm:$0xff]
  %v663 = vld [vmem:[%s1 + $0x1338] sm:$0xff]
  %v664 = vld [vmem:[%s1 + $0x1340] sm:$0xff]
  %v665 = vld [vmem:[%s1 + $0x1348] sm:$0xff]
  %v666 = vld [vmem:[%s1 + $0x1350] sm:$0xff]
  %v667 = vld [vmem:[%s1 + $0x1358] sm:$0xff]
  %v668 = vld [vmem:[%s1 + $0x1360] sm:$0xff]
  %v669 = vld [vmem:[%s1 + $0x1368] sm:$0xff]
  %v670 = vld [vmem:[%s1 + $0x1370] sm:$0xff]
  %v671 = vld [vmem:[%s1 + $0x1378] sm:$0xff]
  %v672 = vld [vmem:[%s1 + $0x1380] sm:$0xff]
  %v673 = vld [vmem:[%s1 + $0x1388] sm:$0xff]
  %v674 = vld [vmem:[%s1 + $0x1390] sm:$0xff]
  %v675 = vld [vmem:[%s1 + $0x1398] sm:$0xff]
  %v676 = vld [vmem:[%s1 + $0x13a0] sm:$0xff]
  %v677 = vld [vmem:[%s1 + $0x13a8] sm:$0xff]
  %v678 = vld [vmem:[%s1 + $0x13b0] sm:$0xff]
  %v679 = vld [vmem:[%s1 + $0x13b8] sm:$0xff]
  %v680 = vld [vmem:[%s1 + $0x13c0] sm:$0xff]
  %v681 = vld [vmem:[%s1 + $0x13c8] sm:$0xff]
  %v682 = vld [vmem:[%s1 + $0x13d0] sm:$0xff]
  %v683 = vld [vmem:[%s1 + $0x13d8] sm:$0xff]
  %v684 = vld [vmem:[%s1 + $0x13e0] sm:$0xff]
  %v685 = vld [vmem:[%s1 + $0x13e8] sm:$0xff]
  %v686 = vld [vmem:[%s1 + $0x13f0] sm:$0xff]
  %v687 = vld [vmem:[%s1 + $0x13f8] sm:$0xff]
  %v688 = vld [vmem:[%s1 + $0x1400] sm:$0xff]
  %v689 = vld [vmem:[%s1 + $0x1408] sm:$0xff]
  %v690 = vld [vmem:[%s1 + $0x1410] sm:$0xff]
  %v691 = vld [vmem:[%s1 + $0x1418] sm:$0xff]
  %v692 = vld [vmem:[%s1 + $0x1420] sm:$0xff]
  %v693 = vld [vmem:[%s1 + $0x1428] sm:$0xff]
  %v694 = vld [vmem:[%s1 + $0x1430] sm:$0xff]
  %v695 = vld [vmem:[%s1 + $0x1438] sm:$0xff]
  %v696 = vld [vmem:[%s1 + $0x1440] sm:$0xff]
  %v697 = vld [vmem:[%s1 + $0x1448] sm:$0xff]
  %v698 = vld [vmem:[%s1 + $0x1450] sm:$0xff]
  %v699 = vld [vmem:[%s1 + $0x1458] sm:$0xff]
  %v700 = vld [vmem:[%s1 + $0x1460] sm:$0xff]
  %v701 = vld [vmem:[%s1 + $0x1468] sm:$0xff]
  %v702 = vld [vmem:[%s1 + $0x1470] sm:$0xff]
  %v703 = vld [vmem:[%s1 + $0x1478] sm:$0xff]
  %v704 = vld [vmem:[%s1 + $0x1480] sm:$0xff]
  %v705 = vld [vmem:[%s1 + $0x1488] sm:$0xff]
  %v706 = vld [vmem:[%s1 + $0x1490] sm:$0xff]
  %v707 = vld [vmem:[%s1 + $0x1498] sm:$0xff]
  %v708 = vld [vmem:[%s1 + $0x14a0] sm:$0xff]
  %v709 = vld [vmem:[%s1 + $0x14a8] sm:$0xff]
  %v710 = vld [vmem:[%s1 + $0x14b0] sm:$0xff]
  %v711 = vld [vmem:[%s1 + $0x14b8] sm:$0xff]
  %v712 = vld [vmem:[%s1 + $0x14c0] sm:$0xff]
  %v713 = vld [vmem:[%s1 + $0x14c8] sm:$0xff]
  %v714 = vld [vmem:[%s1 + $0x14d0] sm:$0xff]
  %v715 = vld [vmem:[%s1 + $0x14d8] sm:$0xff]
  %v716 = vld [vmem:[%s1 + $0x14e0] sm:$0xff]
  %v717 = vld [vmem:[%s1 + $0x14e8] sm:$0xff]
  %v718 = vld [vmem:[%s1 + $0x14f0] sm:$0xff]
  %v719 = vld [vmem:[%s1 + $0x14f8] sm:$0xff]
  %v720 = vld [vmem:[%s1 + $0x1500] sm:$0xff]
  %v721 = vld [vmem:[%s1 + $0x1508] sm:$0xff]
  %v722 = vld [vmem:[%s1 + $0x1510] sm:$0xff]
  %v723 = vld [vmem:[%s1 + $0x1518] sm:$0xff]
  %v724 = vld [vmem:[%s1 + $0x1520] sm:$0xff]
  %v725 = vld [vmem:[%s1 + $0x1528] sm:$0xff]
  %v726 = vld [vmem:[%s1 + $0x1530] sm:$0xff]
  %v727 = vld [vmem:[%s1 + $0x1538] sm:$0xff]
  %v728 = vld [vmem:[%s1 + $0x1540] sm:$0xff]
  %v729 = vld [vmem:[%s1 + $0x1548] sm:$0xff]
  %v730 = vld [vmem:[%s1 + $0x1550] sm:$0xff]
  %v731 = vld [vmem:[%s1 + $0x1558] sm:$0xff]
  %v732 = vld [vmem:[%s1 + $0x1560] sm:$0xff]
  %v733 = vld [vmem:[%s1 + $0x1568] sm:$0xff]
  %v734 = vld [vmem:[%s1 + $0x1570] sm:$0xff]
  %v735 = vld [vmem:[%s1 + $0x1578] sm:$0xff]
  %v736 = vld [vmem:[%s1 + $0x1580] sm:$0xff]
  %v737 = vld [vmem:[%s1 + $0x1588] sm:$0xff]
  %v738 = vld [vmem:[%s1 + $0x1590] sm:$0xff]
  %v739 = vld [vmem:[%s1 + $0x1598] sm:$0xff]
  %v740 = vld [vmem:[%s1 + $0x15a0] sm:$0xff]
  %v741 = vld [vmem:[%s1 + $0x15a8] sm:$0xff]
  %v742 = vld [vmem:[%s1 + $0x15b0] sm:$0xff]
  %v743 = vld [vmem:[%s1 + $0x15b8] sm:$0xff]
  %v744 = vld [vmem:[%s1 + $0x15c0] sm:$0xff]
  %v745 = vld [vmem:[%s1 + $0x15c8] sm:$0xff]
  %v746 = vld [vmem:[%s1 + $0x15d0] sm:$0xff]
  %v747 = vld [vmem:[%s1 + $0x15d8] sm:$0xff]
  %v748 = vld [vmem:[%s1 + $0x15e0] sm:$0xff]
  %v749 = vld [vmem:[%s1 + $0x15e8] sm:$0xff]
  %v750 = vld [vmem:[%s1 + $0x15f0] sm:$0xff]
  %v751 = vld [vmem:[%s1 + $0x15f8] sm:$0xff]
  %v752 = vld [vmem:[%s1 + $0x1600] sm:$0xff]
  %v753 = vld [vmem:[%s1 + $0x1608] sm:$0xff]
  %v754 = vld [vmem:[%s1 + $0x1610] sm:$0xff]
  %v755 = vld [vmem:[%s1 + $0x1618] sm:$0xff]
  %v756 = vld [vmem:[%s1 + $0x1620] sm:$0xff]
  %v757 = vld [vmem:[%s1 + $0x1628] sm:$0xff]
  %v758 = vld [vmem:[%s1 + $0x1630] sm:$0xff]
  %v759 = vld [vmem:[%s1 + $0x1638] sm:$0xff]
  %v760 = vld [vmem:[%s1 + $0x1640] sm:$0xff]
  %v761 = vld [vmem:[%s1 + $0x1648] sm:$0xff]
  %v762 = vld [vmem:[%s1 + $0x1650] sm:$0xff]
  %v763 = vld [vmem:[%s1 + $0x1658] sm:$0xff]
  %v764 = vld [vmem:[%s1 + $0x1660] sm:$0xff]
  %v765 = vld [vmem:[%s1 + $0x1668] sm:$0xff]
  %v766 = vld [vmem:[%s1 + $0x1670] sm:$0xff]
  %v767 = vld [vmem:[%s1 + $0x1678] sm:$0xff]
  %v768 = vld [vmem:[%s1 + $0x1680] sm:$0xff]
  %v769 = vld [vmem:[%s1 + $0x1688] sm:$0xff]
  %v770 = vld [vmem:[%s1 + $0x1690] sm:$0xff]
  %v771 = vld [vmem:[%s1 + $0x1698] sm:$0xff]
  %v772 = vld [vmem:[%s1 + $0x16a0] sm:$0xff]
  %v773 = vld [vmem:[%s1 + $0x16a8] sm:$0xff]
  %v774 = vld [vmem:[%s1 + $0x16b0] sm:$0xff]
  %v775 = vld [vmem:[%s1 + $0x16b8] sm:$0xff]
  %v776 = vld [vmem:[%s1 + $0x16c0] sm:$0xff]
  %v777 = vld [vmem:[%s1 + $0x16c8] sm:$0xff]
  %v778 = vld [vmem:[%s1 + $0x16d0] sm:$0xff]
  %v779 = vld [vmem:[%s1 + $0x16d8] sm:$0xff]
  %v780 = vld [vmem:[%s1 + $0x16e0] sm:$0xff]
  %v781 = vld [vmem:[%s1 + $0x16e8] sm:$0xff]
  %v782 = vld [vmem:[%s1 + $0x16f0] sm:$0xff]
  %v783 = vld [vmem:[%s1 + $0x16f8] sm:$0xff]
  %v784 = vld [vmem:[%s1 + $0x1700] sm:$0xff]
  %v785 = vld [vmem:[%s1 + $0x1708] sm:$0xff]
  %v786 = vld [vmem:[%s1 + $0x1710] sm:$0xff]
  %v787 = vld [vmem:[%s1 + $0x1718] sm:$0xff]
  %v788 = vld [vmem:[%s1 + $0x1720] sm:$0xff]
  %v789 = vld [vmem:[%s1 + $0x1728] sm:$0xff]
  %v790 = vld [vmem:[%s1 + $0x1730] sm:$0xff]
  %v791 = vld [vmem:[%s1 + $0x1738] sm:$0xff]
  %v792 = vld [vmem:[%s1 + $0x1740] sm:$0xff]
  %v793 = vld [vmem:[%s1 + $0x1748] sm:$0xff]
  %v794 = vld [vmem:[%s1 + $0x1750] sm:$0xff]
  %v795 = vld [vmem:[%s1 + $0x1758] sm:$0xff]
  %v796 = vld [vmem:[%s1 + $0x1760] sm:$0xff]
  %v797 = vld [vmem:[%s1 + $0x1768] sm:$0xff]
  %v798 = vld [vmem:[%s1 + $0x1770] sm:$0xff]
  %v799 = vld [vmem:[%s1 + $0x1778] sm:$0xff]
  %v800 = vld [vmem:[%s1 + $0x1780] sm:$0xff]
  %v801 = vld [vmem:[%s1 + $0x1788] sm:$0xff]
  %v802 = vld [vmem:[%s1 + $0x1790] sm:$0xff]
  %v803 = vld [vmem:[%s1 + $0x1798] sm:$0xff]
  %v804 = vld [vmem:[%s1 + $0x17a0] sm:$0xff]
  %v805 = vld [vmem:[%s1 + $0x17a8] sm:$0xff]
  %v806 = vld [vmem:[%s1 + $0x17b0] sm:$0xff]
  %v807 = vld [vmem:[%s1 + $0x17b8] sm:$0xff]
  %v808 = vld [vmem:[%s1 + $0x17c0] sm:$0xff]
  %v809 = vld [vmem:[%s1 + $0x17c8] sm:$0xff]
  %v810 = vld [vmem:[%s1 + $0x17d0] sm:$0xff]
  %v811 = vld [vmem:[%s1 + $0x17d8] sm:$0xff]
  %v812 = vld [vmem:[%s1 + $0x17e0] sm:$0xff]
  %v813 = vld [vmem:[%s1 + $0x17e8] sm:$0xff]
  %v814 = vld [vmem:[%s1 + $0x17f0] sm:$0xff]
  %v815 = vld [vmem:[%s1 + $0x17f8] sm:$0xff]
  %v816 = vld [vmem:[%s1 + $0x1800] sm:$0xff]
  %v817 = vld [vmem:[%s1 + $0x1808] sm:$0xff]
  %v818 = vld [vmem:[%s1 + $0x1810] sm:$0xff]
  %v819 = vld [vmem:[%s1 + $0x1818] sm:$0xff]
  %v820 = vld [vmem:[%s1 + $0x1820] sm:$0xff]
  %v821 = vld [vmem:[%s1 + $0x1828] sm:$0xff]
  %v822 = vld [vmem:[%s1 + $0x1830] sm:$0xff]
  %v823 = vld [vmem:[%s1 + $0x1838] sm:$0xff]
  %v824 = vld [vmem:[%s1 + $0x1840] sm:$0xff]
  %v825 = vld [vmem:[%s1 + $0x1848] sm:$0xff]
  %v826 = vld [vmem:[%s1 + $0x1850] sm:$0xff]
  %v827 = vld [vmem:[%s1 + $0x1858] sm:$0xff]
  %v828 = vld [vmem:[%s1 + $0x1860] sm:$0xff]
  %v829 = vld [vmem:[%s1 + $0x1868] sm:$0xff]
  %v830 = vld [vmem:[%s1 + $0x1870] sm:$0xff]
  %v831 = vld [vmem:[%s1 + $0x1878] sm:$0xff]
  %v832 = vld [vmem:[%s2] sm:$0x3]
  %v834 = vlaneseq
  %v835 = vshrl.u32 %v834, 7
  %v836 = vsub.s32 0, %v835
  %v837 = vrot.slane %v832, %v836
  %v838 = vlaneseq
  %v839 = vshrl.u32 %v838, 7
  %v840 = vsub.s32 1, %v839
  %v841 = vrot.slane %v832, %v840
  %v869 = vunpack.c.l.b16 %v23
  %v870 = vunpack.c.h.b16 %v23
  %v871 = vunpack.c.l.b16 %v24
  %v872 = vunpack.c.h.b16 %v24
  %v873 = vunpack.c.l.b16 %v25
  %v874 = vunpack.c.h.b16 %v25
  %v875 = vunpack.c.l.b16 %v26
  %v876 = vunpack.c.h.b16 %v26
  %v877 = vunpack.c.l.b16 %v27
  %v878 = vunpack.c.h.b16 %v27
  %v879 = vunpack.c.l.b16 %v28
  %v880 = vunpack.c.h.b16 %v28
  %v881 = vunpack.c.l.b16 %v29
  %v882 = vunpack.c.h.b16 %v29
  %v883 = vunpack.c.l.b16 %v30
  %v884 = vunpack.c.h.b16 %v30
  %v885 = vunpack.c.l.b16 %v31
  %v886 = vunpack.c.h.b16 %v31
  %v887 = vunpack.c.l.b16 %v32
  %v888 = vunpack.c.h.b16 %v32
  %v889 = vunpack.c.l.b16 %v33
  %v890 = vunpack.c.h.b16 %v33
  %v891 = vunpack.c.l.b16 %v34
  %v892 = vunpack.c.h.b16 %v34
  %v893 = vunpack.c.l.b16 %v35
  %v894 = vunpack.c.h.b16 %v35
  %v895 = vunpack.c.l.b16 %v36
  %v896 = vunpack.c.h.b16 %v36
  %v897 = vunpack.c.l.b16 %v37
  %v898 = vunpack.c.h.b16 %v37
  %v899 = vunpack.c.l.b16 %v38
  %v900 = vunpack.c.h.b16 %v38
  %v901 = vunpack.c.l.b16 %v39
  %v902 = vunpack.c.h.b16 %v39
  %v903 = vunpack.c.l.b16 %v40
  %v904 = vunpack.c.h.b16 %v40
  %v905 = vunpack.c.l.b16 %v41
  %v906 = vunpack.c.h.b16 %v41
  %v907 = vunpack.c.l.b16 %v42
  %v908 = vunpack.c.h.b16 %v42
  %v909 = vunpack.c.l.b16 %v43
  %v910 = vunpack.c.h.b16 %v43
  %v911 = vunpack.c.l.b16 %v44
  %v912 = vunpack.c.h.b16 %v44
  %v913 = vunpack.c.l.b16 %v45
  %v914 = vunpack.c.h.b16 %v45
  %v915 = vunpack.c.l.b16 %v46
  %v916 = vunpack.c.h.b16 %v46
  %v917 = vunpack.c.l.b16 %v47
  %v918 = vpack.c.b16 %v869, %v869
  %v919 = vpack.c.b16 %v870, %v870
  %v920 = vpack.c.b16 %v871, %v871
  %v921 = vpack.c.b16 %v872, %v872
  %v922 = vpack.c.b16 %v873, %v873
  %v923 = vpack.c.b16 %v874, %v874
  %v924 = vpack.c.b16 %v875, %v875
  %v925 = vpack.c.b16 %v876, %v876
  %v926 = vpack.c.b16 %v877, %v877
  %v927 = vpack.c.b16 %v878, %v878
  %v928 = vpack.c.b16 %v879, %v879
  %v929 = vpack.c.b16 %v880, %v880
  %v930 = vpack.c.b16 %v881, %v881
  %v931 = vpack.c.b16 %v882, %v882
  %v932 = vpack.c.b16 %v883, %v883
  %v933 = vpack.c.b16 %v884, %v884
  %v934 = vpack.c.b16 %v885, %v885
  %v935 = vpack.c.b16 %v886, %v886
  %v936 = vpack.c.b16 %v887, %v887
  %v937 = vpack.c.b16 %v888, %v888
  %v938 = vpack.c.b16 %v889, %v889
  %v939 = vpack.c.b16 %v890, %v890
  %v940 = vpack.c.b16 %v891, %v891
  %v941 = vpack.c.b16 %v892, %v892
  %v942 = vpack.c.b16 %v893, %v893
  %v943 = vpack.c.b16 %v894, %v894
  %v944 = vpack.c.b16 %v895, %v895
  %v945 = vpack.c.b16 %v896, %v896
  %v946 = vpack.c.b16 %v897, %v897
  %v947 = vpack.c.b16 %v898, %v898
  %v948 = vpack.c.b16 %v899, %v899
  %v949 = vpack.c.b16 %v900, %v900
  %v950 = vpack.c.b16 %v901, %v901
  %v951 = vpack.c.b16 %v902, %v902
  %v952 = vpack.c.b16 %v903, %v903
  %v953 = vpack.c.b16 %v904, %v904
  %v954 = vpack.c.b16 %v905, %v905
  %v955 = vpack.c.b16 %v906, %v906
  %v956 = vpack.c.b16 %v907, %v907
  %v957 = vpack.c.b16 %v908, %v908
  %v958 = vpack.c.b16 %v909, %v909
  %v959 = vpack.c.b16 %v910, %v910
  %v960 = vpack.c.b16 %v911, %v911
  %v961 = vpack.c.b16 %v912, %v912
  %v962 = vpack.c.b16 %v913, %v913
  %v963 = vpack.c.b16 %v914, %v914
  %v964 = vpack.c.b16 %v915, %v915
  %v965 = vpack.c.b16 %v916, %v916
  %v966 = vpack.c.b16 %v917, %v917
  %v1800 = vunpack.c.l.b16 %v48
  %v1801 = vunpack.c.h.b16 %v48
  %v1802 = vunpack.c.l.b16 %v49
  %v1803 = vunpack.c.h.b16 %v49
  %v1804 = vunpack.c.l.b16 %v50
  %v1805 = vunpack.c.h.b16 %v50
  %v1806 = vunpack.c.l.b16 %v51
  %v1807 = vunpack.c.h.b16 %v51
  %v1808 = vunpack.c.l.b16 %v52
  %v1809 = vunpack.c.h.b16 %v52
  %v1810 = vunpack.c.l.b16 %v53
  %v1811 = vunpack.c.h.b16 %v53
  %v1812 = vunpack.c.l.b16 %v54
  %v1813 = vunpack.c.h.b16 %v54
  %v1814 = vunpack.c.l.b16 %v55
  %v1815 = vunpack.c.h.b16 %v55
  %v1816 = vunpack.c.l.b16 %v56
  %v1817 = vunpack.c.h.b16 %v56
  %v1818 = vunpack.c.l.b16 %v57
  %v1819 = vunpack.c.h.b16 %v57
  %v1820 = vunpack.c.l.b16 %v58
  %v1821 = vunpack.c.h.b16 %v58
  %v1822 = vunpack.c.l.b16 %v59
  %v1823 = vunpack.c.h.b16 %v59
  %v1824 = vunpack.c.l.b16 %v60
  %v1825 = vunpack.c.h.b16 %v60
  %v1826 = vunpack.c.l.b16 %v61
  %v1827 = vunpack.c.h.b16 %v61
  %v1828 = vunpack.c.l.b16 %v62
  %v1829 = vunpack.c.h.b16 %v62
  %v1830 = vunpack.c.l.b16 %v63
  %v1831 = vunpack.c.h.b16 %v63
  %v1832 = vunpack.c.l.b16 %v64
  %v1833 = vunpack.c.h.b16 %v64
  %v1834 = vunpack.c.l.b16 %v65
  %v1835 = vunpack.c.h.b16 %v65
  %v1836 = vunpack.c.l.b16 %v66
  %v1837 = vunpack.c.h.b16 %v66
  %v1838 = vunpack.c.l.b16 %v67
  %v1839 = vunpack.c.h.b16 %v67
  %v1840 = vunpack.c.l.b16 %v68
  %v1841 = vunpack.c.h.b16 %v68
  %v1842 = vunpack.c.l.b16 %v69
  %v1843 = vunpack.c.h.b16 %v69
  %v1844 = vunpack.c.l.b16 %v70
  %v1845 = vunpack.c.h.b16 %v70
  %v1846 = vunpack.c.l.b16 %v71
  %v1847 = vunpack.c.h.b16 %v71
  %v1848 = vunpack.c.l.b16 %v72
  %v1849 = vunpack.c.h.b16 %v72
  %v1850 = vunpack.c.l.b16 %v73
  %v1851 = vunpack.c.h.b16 %v73
  %v1852 = vunpack.c.l.b16 %v74
  %v1853 = vunpack.c.h.b16 %v74
  %v1854 = vunpack.c.l.b16 %v75
  %v1855 = vunpack.c.h.b16 %v75
  %v1856 = vunpack.c.l.b16 %v76
  %v1857 = vunpack.c.h.b16 %v76
  %v1858 = vunpack.c.l.b16 %v77
  %v1859 = vunpack.c.h.b16 %v77
  %v1860 = vunpack.c.l.b16 %v78
  %v1861 = vunpack.c.h.b16 %v78
  %v1862 = vunpack.c.l.b16 %v79
  %v1863 = vunpack.c.h.b16 %v79
  %v1864 = vunpack.c.l.b16 %v80
  %v1865 = vunpack.c.h.b16 %v80
  %v1866 = vunpack.c.l.b16 %v81
  %v1867 = vunpack.c.h.b16 %v81
  %v1868 = vunpack.c.l.b16 %v82
  %v1869 = vunpack.c.h.b16 %v82
  %v1870 = vunpack.c.l.b16 %v83
  %v1871 = vunpack.c.h.b16 %v83
  %v1872 = vunpack.c.l.b16 %v84
  %v1873 = vunpack.c.h.b16 %v84
  %v1874 = vunpack.c.l.b16 %v85
  %v1875 = vunpack.c.h.b16 %v85
  %v1876 = vunpack.c.l.b16 %v86
  %v1877 = vunpack.c.h.b16 %v86
  %v1878 = vunpack.c.l.b16 %v87
  %v1879 = vunpack.c.h.b16 %v87
  %v1880 = vunpack.c.l.b16 %v88
  %v1881 = vunpack.c.h.b16 %v88
  %v1882 = vunpack.c.l.b16 %v89
  %v1883 = vunpack.c.h.b16 %v89
  %v1884 = vunpack.c.l.b16 %v90
  %v1885 = vunpack.c.h.b16 %v90
  %v1886 = vunpack.c.l.b16 %v91
  %v1887 = vunpack.c.h.b16 %v91
  %v1888 = vunpack.c.l.b16 %v92
  %v1889 = vunpack.c.h.b16 %v92
  %v1890 = vunpack.c.l.b16 %v93
  %v1891 = vunpack.c.h.b16 %v93
  %v1892 = vunpack.c.l.b16 %v94
  %v1893 = vunpack.c.h.b16 %v94
  %v1894 = vunpack.c.l.b16 %v95
  %v1895 = vunpack.c.h.b16 %v95
  %v1896 = vunpack.c.l.b16 %v96
  %v1897 = vunpack.c.h.b16 %v96
  %v1898 = vunpack.c.l.b16 %v97
  %v1899 = vunpack.c.h.b16 %v97
  %v1900 = vunpack.c.l.b16 %v98
  %v1901 = vunpack.c.h.b16 %v98
  %v1902 = vunpack.c.l.b16 %v99
  %v1903 = vunpack.c.h.b16 %v99
  %v1904 = vunpack.c.l.b16 %v100
  %v1905 = vunpack.c.h.b16 %v100
  %v1906 = vunpack.c.l.b16 %v101
  %v1907 = vunpack.c.h.b16 %v101
  %v1908 = vunpack.c.l.b16 %v102
  %v1909 = vunpack.c.h.b16 %v102
  %v1910 = vunpack.c.l.b16 %v103
  %v1911 = vunpack.c.h.b16 %v103
  %v1912 = vunpack.c.l.b16 %v104
  %v1913 = vunpack.c.h.b16 %v104
  %v1914 = vunpack.c.l.b16 %v105
  %v1915 = vunpack.c.h.b16 %v105
  %v1916 = vunpack.c.l.b16 %v106
  %v1917 = vunpack.c.h.b16 %v106
  %v1918 = vunpack.c.l.b16 %v107
  %v1919 = vunpack.c.h.b16 %v107
  %v1920 = vunpack.c.l.b16 %v108
  %v1921 = vunpack.c.h.b16 %v108
  %v1922 = vunpack.c.l.b16 %v109
  %v1923 = vunpack.c.h.b16 %v109
  %v1924 = vunpack.c.l.b16 %v110
  %v1925 = vunpack.c.h.b16 %v110
  %v1926 = vunpack.c.l.b16 %v111
  %v1927 = vunpack.c.h.b16 %v111
  %v1928 = vunpack.c.l.b16 %v112
  %v1929 = vunpack.c.h.b16 %v112
  %v1930 = vunpack.c.l.b16 %v113
  %v1931 = vunpack.c.h.b16 %v113
  %v1932 = vunpack.c.l.b16 %v114
  %v1933 = vunpack.c.h.b16 %v114
  %v1934 = vunpack.c.l.b16 %v115
  %v1935 = vunpack.c.h.b16 %v115
  %v1936 = vunpack.c.l.b16 %v116
  %v1937 = vunpack.c.h.b16 %v116
  %v1938 = vunpack.c.l.b16 %v117
  %v1939 = vunpack.c.h.b16 %v117
  %v1940 = vunpack.c.l.b16 %v118
  %v1941 = vunpack.c.h.b16 %v118
  %v1942 = vunpack.c.l.b16 %v119
  %v1943 = vunpack.c.h.b16 %v119
  %v1944 = vunpack.c.l.b16 %v120
  %v1945 = vunpack.c.h.b16 %v120
  %v1946 = vunpack.c.l.b16 %v121
  %v1947 = vunpack.c.h.b16 %v121
  %v1948 = vunpack.c.l.b16 %v122
  %v1949 = vunpack.c.h.b16 %v122
  %v1950 = vunpack.c.l.b16 %v123
  %v1951 = vunpack.c.h.b16 %v123
  %v1952 = vunpack.c.l.b16 %v124
  %v1953 = vunpack.c.h.b16 %v124
  %v1954 = vunpack.c.l.b16 %v125
  %v1955 = vunpack.c.h.b16 %v125
  %v1956 = vunpack.c.l.b16 %v126
  %v1957 = vunpack.c.h.b16 %v126
  %v1958 = vunpack.c.l.b16 %v127
  %v1959 = vunpack.c.h.b16 %v127
  %v1960 = vunpack.c.l.b16 %v128
  %v1961 = vunpack.c.h.b16 %v128
  %v1962 = vunpack.c.l.b16 %v129
  %v1963 = vunpack.c.h.b16 %v129
  %v1964 = vunpack.c.l.b16 %v130
  %v1965 = vunpack.c.h.b16 %v130
  %v1966 = vunpack.c.l.b16 %v131
  %v1967 = vunpack.c.h.b16 %v131
  %v1968 = vunpack.c.l.b16 %v132
  %v1969 = vunpack.c.h.b16 %v132
  %v1970 = vunpack.c.l.b16 %v133
  %v1971 = vunpack.c.h.b16 %v133
  %v1972 = vunpack.c.l.b16 %v134
  %v1973 = vunpack.c.h.b16 %v134
  %v1974 = vunpack.c.l.b16 %v135
  %v1975 = vunpack.c.h.b16 %v135
  %v1976 = vunpack.c.l.b16 %v136
  %v1977 = vunpack.c.h.b16 %v136
  %v1978 = vunpack.c.l.b16 %v137
  %v1979 = vunpack.c.h.b16 %v137
  %v1980 = vunpack.c.l.b16 %v138
  %v1981 = vunpack.c.h.b16 %v138
  %v1982 = vunpack.c.l.b16 %v139
  %v1983 = vunpack.c.h.b16 %v139
  %v1984 = vunpack.c.l.b16 %v140
  %v1985 = vunpack.c.h.b16 %v140
  %v1986 = vunpack.c.l.b16 %v141
  %v1987 = vunpack.c.h.b16 %v141
  %v1988 = vunpack.c.l.b16 %v142
  %v1989 = vunpack.c.h.b16 %v142
  %v1990 = vunpack.c.l.b16 %v143
  %v1991 = vunpack.c.h.b16 %v143
  %v1992 = vunpack.c.l.b16 %v144
  %v1993 = vunpack.c.h.b16 %v144
  %v1994 = vunpack.c.l.b16 %v145
  %v1995 = vunpack.c.h.b16 %v145
  %v1996 = vunpack.c.l.b16 %v146
  %v1997 = vunpack.c.h.b16 %v146
  %v1998 = vunpack.c.l.b16 %v147
  %v1999 = vunpack.c.h.b16 %v147
  %v2000 = vunpack.c.l.b16 %v148
  %v2001 = vunpack.c.h.b16 %v148
  %v2002 = vunpack.c.l.b16 %v149
  %v2003 = vunpack.c.h.b16 %v149
  %v2004 = vunpack.c.l.b16 %v150
  %v2005 = vunpack.c.h.b16 %v150
  %v2006 = vunpack.c.l.b16 %v151
  %v2007 = vunpack.c.h.b16 %v151
  %v2008 = vunpack.c.l.b16 %v152
  %v2009 = vunpack.c.h.b16 %v152
  %v2010 = vunpack.c.l.b16 %v153
  %v2011 = vunpack.c.h.b16 %v153
  %v2012 = vunpack.c.l.b16 %v154
  %v2013 = vunpack.c.h.b16 %v154
  %v2014 = vunpack.c.l.b16 %v155
  %v2015 = vunpack.c.h.b16 %v155
  %v2016 = vunpack.c.l.b16 %v156
  %v2017 = vunpack.c.h.b16 %v156
  %v2018 = vunpack.c.l.b16 %v157
  %v2019 = vunpack.c.h.b16 %v157
  %v2020 = vunpack.c.l.b16 %v158
  %v2021 = vunpack.c.h.b16 %v158
  %v2022 = vunpack.c.l.b16 %v159
  %v2023 = vunpack.c.h.b16 %v159
  %v2024 = vunpack.c.l.b16 %v160
  %v2025 = vunpack.c.h.b16 %v160
  %v2026 = vunpack.c.l.b16 %v161
  %v2027 = vunpack.c.h.b16 %v161
  %v2028 = vunpack.c.l.b16 %v162
  %v2029 = vunpack.c.h.b16 %v162
  %v2030 = vunpack.c.l.b16 %v163
  %v2031 = vunpack.c.h.b16 %v163
  %v2032 = vunpack.c.l.b16 %v164
  %v2033 = vunpack.c.h.b16 %v164
  %v2034 = vunpack.c.l.b16 %v165
  %v2035 = vunpack.c.h.b16 %v165
  %v2036 = vunpack.c.l.b16 %v166
  %v2037 = vunpack.c.h.b16 %v166
  %v2038 = vunpack.c.l.b16 %v167
  %v2039 = vunpack.c.h.b16 %v167
  %v2040 = vunpack.c.l.b16 %v168
  %v2041 = vunpack.c.h.b16 %v168
  %v2042 = vunpack.c.l.b16 %v169
  %v2043 = vunpack.c.h.b16 %v169
  %v2044 = vunpack.c.l.b16 %v170
  %v2045 = vunpack.c.h.b16 %v170
  %v2046 = vunpack.c.l.b16 %v171
  %v2047 = vunpack.c.h.b16 %v171
  %v2048 = vunpack.c.l.b16 %v172
  %v2049 = vunpack.c.h.b16 %v172
  %v2050 = vunpack.c.l.b16 %v173
  %v2051 = vunpack.c.h.b16 %v173
  %v2052 = vunpack.c.l.b16 %v174
  %v2053 = vunpack.c.h.b16 %v174
  %v2054 = vunpack.c.l.b16 %v175
  %v2055 = vunpack.c.h.b16 %v175
  %v2056 = vunpack.c.l.b16 %v176
  %v2057 = vunpack.c.h.b16 %v176
  %v2058 = vunpack.c.l.b16 %v177
  %v2059 = vunpack.c.h.b16 %v177
  %v2060 = vunpack.c.l.b16 %v178
  %v2061 = vunpack.c.h.b16 %v178
  %v2062 = vunpack.c.l.b16 %v179
  %v2063 = vunpack.c.h.b16 %v179
  %v2064 = vunpack.c.l.b16 %v180
  %v2065 = vunpack.c.h.b16 %v180
  %v2066 = vunpack.c.l.b16 %v181
  %v2067 = vunpack.c.h.b16 %v181
  %v2068 = vunpack.c.l.b16 %v182
  %v2069 = vunpack.c.h.b16 %v182
  %v2070 = vunpack.c.l.b16 %v183
  %v2071 = vunpack.c.h.b16 %v183
  %v2072 = vunpack.c.l.b16 %v184
  %v2073 = vunpack.c.h.b16 %v184
  %v2074 = vunpack.c.l.b16 %v185
  %v2075 = vunpack.c.h.b16 %v185
  %v2076 = vunpack.c.l.b16 %v186
  %v2077 = vunpack.c.h.b16 %v186
  %v2078 = vunpack.c.l.b16 %v187
  %v2079 = vunpack.c.h.b16 %v187
  %v2080 = vunpack.c.l.b16 %v188
  %v2081 = vunpack.c.h.b16 %v188
  %v2082 = vunpack.c.l.b16 %v189
  %v2083 = vunpack.c.h.b16 %v189
  %v2084 = vunpack.c.l.b16 %v190
  %v2085 = vunpack.c.h.b16 %v190
  %v2086 = vunpack.c.l.b16 %v191
  %v2087 = vunpack.c.h.b16 %v191
  %v2088 = vunpack.c.l.b16 %v192
  %v2089 = vunpack.c.h.b16 %v192
  %v2090 = vunpack.c.l.b16 %v193
  %v2091 = vunpack.c.h.b16 %v193
  %v2092 = vunpack.c.l.b16 %v194
  %v2093 = vunpack.c.h.b16 %v194
  %v2094 = vunpack.c.l.b16 %v195
  %v2095 = vunpack.c.h.b16 %v195
  %v2096 = vunpack.c.l.b16 %v196
  %v2097 = vunpack.c.h.b16 %v196
  %v2098 = vunpack.c.l.b16 %v197
  %v2099 = vunpack.c.h.b16 %v197
  %v2100 = vunpack.c.l.b16 %v198
  %v2101 = vunpack.c.h.b16 %v198
  %v2102 = vunpack.c.l.b16 %v199
  %v2103 = vunpack.c.h.b16 %v199
  %v2104 = vunpack.c.l.b16 %v200
  %v2105 = vunpack.c.h.b16 %v200
  %v2106 = vunpack.c.l.b16 %v201
  %v2107 = vunpack.c.h.b16 %v201
  %v2108 = vunpack.c.l.b16 %v202
  %v2109 = vunpack.c.h.b16 %v202
  %v2110 = vunpack.c.l.b16 %v203
  %v2111 = vunpack.c.h.b16 %v203
  %v2112 = vunpack.c.l.b16 %v204
  %v2113 = vunpack.c.h.b16 %v204
  %v2114 = vunpack.c.l.b16 %v205
  %v2115 = vunpack.c.h.b16 %v205
  %v2116 = vunpack.c.l.b16 %v206
  %v2117 = vunpack.c.h.b16 %v206
  %v2118 = vunpack.c.l.b16 %v207
  %v2119 = vunpack.c.h.b16 %v207
  %v2120 = vunpack.c.l.b16 %v208
  %v2121 = vunpack.c.h.b16 %v208
  %v2122 = vunpack.c.l.b16 %v209
  %v2123 = vunpack.c.h.b16 %v209
  %v2124 = vunpack.c.l.b16 %v210
  %v2125 = vunpack.c.h.b16 %v210
  %v2126 = vunpack.c.l.b16 %v211
  %v2127 = vunpack.c.h.b16 %v211
  %v2128 = vunpack.c.l.b16 %v212
  %v2129 = vunpack.c.h.b16 %v212
  %v2130 = vunpack.c.l.b16 %v213
  %v2131 = vunpack.c.h.b16 %v213
  %v2132 = vunpack.c.l.b16 %v214
  %v2133 = vunpack.c.h.b16 %v214
  %v2134 = vunpack.c.l.b16 %v215
  %v2135 = vunpack.c.h.b16 %v215
  %v2136 = vunpack.c.l.b16 %v216
  %v2137 = vunpack.c.h.b16 %v216
  %v2138 = vunpack.c.l.b16 %v217
  %v2139 = vunpack.c.h.b16 %v217
  %v2140 = vunpack.c.l.b16 %v218
  %v2141 = vunpack.c.h.b16 %v218
  %v2142 = vunpack.c.l.b16 %v219
  %v2143 = vunpack.c.h.b16 %v219
  %v2144 = vunpack.c.l.b16 %v220
  %v2145 = vunpack.c.h.b16 %v220
  %v2146 = vunpack.c.l.b16 %v221
  %v2147 = vunpack.c.h.b16 %v221
  %v2148 = vunpack.c.l.b16 %v222
  %v2149 = vunpack.c.h.b16 %v222
  %v2150 = vunpack.c.l.b16 %v223
  %v2151 = vunpack.c.h.b16 %v223
  %v2152 = vunpack.c.l.b16 %v224
  %v2153 = vunpack.c.h.b16 %v224
  %v2154 = vunpack.c.l.b16 %v225
  %v2155 = vunpack.c.h.b16 %v225
  %v2156 = vunpack.c.l.b16 %v226
  %v2157 = vunpack.c.h.b16 %v226
  %v2158 = vunpack.c.l.b16 %v227
  %v2159 = vunpack.c.h.b16 %v227
  %v2160 = vunpack.c.l.b16 %v228
  %v2161 = vunpack.c.h.b16 %v228
  %v2162 = vunpack.c.l.b16 %v229
  %v2163 = vunpack.c.h.b16 %v229
  %v2164 = vunpack.c.l.b16 %v230
  %v2165 = vunpack.c.h.b16 %v230
  %v2166 = vunpack.c.l.b16 %v231
  %v2167 = vunpack.c.h.b16 %v231
  %v2168 = vunpack.c.l.b16 %v232
  %v2169 = vunpack.c.h.b16 %v232
  %v2170 = vunpack.c.l.b16 %v233
  %v2171 = vunpack.c.h.b16 %v233
  %v2172 = vunpack.c.l.b16 %v234
  %v2173 = vunpack.c.h.b16 %v234
  %v2174 = vunpack.c.l.b16 %v235
  %v2175 = vunpack.c.h.b16 %v235
  %v2176 = vunpack.c.l.b16 %v236
  %v2177 = vunpack.c.h.b16 %v236
  %v2178 = vunpack.c.l.b16 %v237
  %v2179 = vunpack.c.h.b16 %v237
  %v2180 = vunpack.c.l.b16 %v238
  %v2181 = vunpack.c.h.b16 %v238
  %v2182 = vunpack.c.l.b16 %v239
  %v2183 = vunpack.c.h.b16 %v239
  %v2184 = vunpack.c.l.b16 %v240
  %v2185 = vunpack.c.h.b16 %v240
  %v2186 = vunpack.c.l.b16 %v241
  %v2187 = vunpack.c.h.b16 %v241
  %v2188 = vunpack.c.l.b16 %v242
  %v2189 = vunpack.c.h.b16 %v242
  %v2190 = vunpack.c.l.b16 %v243
  %v2191 = vunpack.c.h.b16 %v243
  %v2192 = vunpack.c.l.b16 %v244
  %v2193 = vunpack.c.h.b16 %v244
  %v2194 = vunpack.c.l.b16 %v245
  %v2195 = vunpack.c.h.b16 %v245
  %v2196 = vunpack.c.l.b16 %v246
  %v2197 = vunpack.c.h.b16 %v246
  %v2198 = vunpack.c.l.b16 %v247
  %v2199 = vunpack.c.h.b16 %v247
  %v2200 = vunpack.c.l.b16 %v248
  %v2201 = vunpack.c.h.b16 %v248
  %v2202 = vunpack.c.l.b16 %v249
  %v2203 = vunpack.c.h.b16 %v249
  %v2204 = vunpack.c.l.b16 %v250
  %v2205 = vunpack.c.h.b16 %v250
  %v2206 = vunpack.c.l.b16 %v251
  %v2207 = vunpack.c.h.b16 %v251
  %v2208 = vunpack.c.l.b16 %v252
  %v2209 = vunpack.c.h.b16 %v252
  %v2210 = vunpack.c.l.b16 %v253
  %v2211 = vunpack.c.h.b16 %v253
  %v2212 = vunpack.c.l.b16 %v254
  %v2213 = vunpack.c.h.b16 %v254
  %v2214 = vunpack.c.l.b16 %v255
  %v2215 = vunpack.c.h.b16 %v255
  %v2216 = vunpack.c.l.b16 %v256
  %v2217 = vunpack.c.h.b16 %v256
  %v2218 = vunpack.c.l.b16 %v257
  %v2219 = vunpack.c.h.b16 %v257
  %v2220 = vunpack.c.l.b16 %v258
  %v2221 = vunpack.c.h.b16 %v258
  %v2222 = vunpack.c.l.b16 %v259
  %v2223 = vunpack.c.h.b16 %v259
  %v2224 = vunpack.c.l.b16 %v260
  %v2225 = vunpack.c.h.b16 %v260
  %v2226 = vunpack.c.l.b16 %v261
  %v2227 = vunpack.c.h.b16 %v261
  %v2228 = vunpack.c.l.b16 %v262
  %v2229 = vunpack.c.h.b16 %v262
  %v2230 = vunpack.c.l.b16 %v263
  %v2231 = vunpack.c.h.b16 %v263
  %v2232 = vunpack.c.l.b16 %v264
  %v2233 = vunpack.c.h.b16 %v264
  %v2234 = vunpack.c.l.b16 %v265
  %v2235 = vunpack.c.h.b16 %v265
  %v2236 = vunpack.c.l.b16 %v266
  %v2237 = vunpack.c.h.b16 %v266
  %v2238 = vunpack.c.l.b16 %v267
  %v2239 = vunpack.c.h.b16 %v267
  %v2240 = vunpack.c.l.b16 %v268
  %v2241 = vunpack.c.h.b16 %v268
  %v2242 = vunpack.c.l.b16 %v269
  %v2243 = vunpack.c.h.b16 %v269
  %v2244 = vunpack.c.l.b16 %v270
  %v2245 = vunpack.c.h.b16 %v270
  %v2246 = vunpack.c.l.b16 %v271
  %v2247 = vunpack.c.h.b16 %v271
  %v2248 = vunpack.c.l.b16 %v272
  %v2249 = vunpack.c.h.b16 %v272
  %v2250 = vunpack.c.l.b16 %v273
  %v2251 = vunpack.c.h.b16 %v273
  %v2252 = vunpack.c.l.b16 %v274
  %v2253 = vunpack.c.h.b16 %v274
  %v2254 = vunpack.c.l.b16 %v275
  %v2255 = vunpack.c.h.b16 %v275
  %v2256 = vunpack.c.l.b16 %v276
  %v2257 = vunpack.c.h.b16 %v276
  %v2258 = vunpack.c.l.b16 %v277
  %v2259 = vunpack.c.h.b16 %v277
  %v2260 = vunpack.c.l.b16 %v278
  %v2261 = vunpack.c.h.b16 %v278
  %v2262 = vunpack.c.l.b16 %v279
  %v2263 = vunpack.c.h.b16 %v279
  %v2264 = vunpack.c.l.b16 %v280
  %v2265 = vunpack.c.h.b16 %v280
  %v2266 = vunpack.c.l.b16 %v281
  %v2267 = vunpack.c.h.b16 %v281
  %v2268 = vunpack.c.l.b16 %v282
  %v2269 = vunpack.c.h.b16 %v282
  %v2270 = vunpack.c.l.b16 %v283
  %v2271 = vunpack.c.h.b16 %v283
  %v2272 = vunpack.c.l.b16 %v284
  %v2273 = vunpack.c.h.b16 %v284
  %v2274 = vunpack.c.l.b16 %v285
  %v2275 = vunpack.c.h.b16 %v285
  %v2276 = vunpack.c.l.b16 %v286
  %v2277 = vunpack.c.h.b16 %v286
  %v2278 = vunpack.c.l.b16 %v287
  %v2279 = vunpack.c.h.b16 %v287
  %v2280 = vunpack.c.l.b16 %v288
  %v2281 = vunpack.c.h.b16 %v288
  %v2282 = vunpack.c.l.b16 %v289
  %v2283 = vunpack.c.h.b16 %v289
  %v2284 = vunpack.c.l.b16 %v290
  %v2285 = vunpack.c.h.b16 %v290
  %v2286 = vunpack.c.l.b16 %v291
  %v2287 = vunpack.c.h.b16 %v291
  %v2288 = vunpack.c.l.b16 %v292
  %v2289 = vunpack.c.h.b16 %v292
  %v2290 = vunpack.c.l.b16 %v293
  %v2291 = vunpack.c.h.b16 %v293
  %v2292 = vunpack.c.l.b16 %v294
  %v2293 = vunpack.c.h.b16 %v294
  %v2294 = vunpack.c.l.b16 %v295
  %v2295 = vunpack.c.h.b16 %v295
  %v2296 = vunpack.c.l.b16 %v296
  %v2297 = vunpack.c.h.b16 %v296
  %v2298 = vunpack.c.l.b16 %v297
  %v2299 = vunpack.c.h.b16 %v297
  %v2300 = vunpack.c.l.b16 %v298
  %v2301 = vunpack.c.h.b16 %v298
  %v2302 = vunpack.c.l.b16 %v299
  %v2303 = vunpack.c.h.b16 %v299
  %v2304 = vunpack.c.l.b16 %v300
  %v2305 = vunpack.c.h.b16 %v300
  %v2306 = vunpack.c.l.b16 %v301
  %v2307 = vunpack.c.h.b16 %v301
  %v2308 = vunpack.c.l.b16 %v302
  %v2309 = vunpack.c.h.b16 %v302
  %v2310 = vunpack.c.l.b16 %v303
  %v2311 = vunpack.c.h.b16 %v303
  %v2312 = vunpack.c.l.b16 %v304
  %v2313 = vunpack.c.h.b16 %v304
  %v2314 = vunpack.c.l.b16 %v305
  %v2315 = vunpack.c.h.b16 %v305
  %v2316 = vunpack.c.l.b16 %v306
  %v2317 = vunpack.c.h.b16 %v306
  %v2318 = vunpack.c.l.b16 %v307
  %v2319 = vunpack.c.h.b16 %v307
  %v2320 = vunpack.c.l.b16 %v308
  %v2321 = vunpack.c.h.b16 %v308
  %v2322 = vunpack.c.l.b16 %v309
  %v2323 = vunpack.c.h.b16 %v309
  %v2324 = vunpack.c.l.b16 %v310
  %v2325 = vunpack.c.h.b16 %v310
  %v2326 = vunpack.c.l.b16 %v311
  %v2327 = vunpack.c.h.b16 %v311
  %v2328 = vunpack.c.l.b16 %v312
  %v2329 = vunpack.c.h.b16 %v312
  %v2330 = vunpack.c.l.b16 %v313
  %v2331 = vunpack.c.h.b16 %v313
  %v2332 = vunpack.c.l.b16 %v314
  %v2333 = vunpack.c.h.b16 %v314
  %v2334 = vunpack.c.l.b16 %v315
  %v2335 = vunpack.c.h.b16 %v315
  %v2336 = vunpack.c.l.b16 %v316
  %v2337 = vunpack.c.h.b16 %v316
  %v2338 = vunpack.c.l.b16 %v317
  %v2339 = vunpack.c.h.b16 %v317
  %v2340 = vunpack.c.l.b16 %v318
  %v2341 = vunpack.c.h.b16 %v318
  %v2342 = vunpack.c.l.b16 %v319
  %v2343 = vunpack.c.h.b16 %v319
  %v2344 = vunpack.c.l.b16 %v320
  %v2345 = vunpack.c.h.b16 %v320
  %v2346 = vunpack.c.l.b16 %v321
  %v2347 = vunpack.c.h.b16 %v321
  %v2348 = vunpack.c.l.b16 %v322
  %v2349 = vunpack.c.h.b16 %v322
  %v2350 = vunpack.c.l.b16 %v323
  %v2351 = vunpack.c.h.b16 %v323
  %v2352 = vunpack.c.l.b16 %v324
  %v2353 = vunpack.c.h.b16 %v324
  %v2354 = vunpack.c.l.b16 %v325
  %v2355 = vunpack.c.h.b16 %v325
  %v2356 = vunpack.c.l.b16 %v326
  %v2357 = vunpack.c.h.b16 %v326
  %v2358 = vunpack.c.l.b16 %v327
  %v2359 = vunpack.c.h.b16 %v327
  %v2360 = vunpack.c.l.b16 %v328
  %v2361 = vunpack.c.h.b16 %v328
  %v2362 = vunpack.c.l.b16 %v329
  %v2363 = vunpack.c.h.b16 %v329
  %v2364 = vunpack.c.l.b16 %v330
  %v2365 = vunpack.c.h.b16 %v330
  %v2366 = vunpack.c.l.b16 %v331
  %v2367 = vunpack.c.h.b16 %v331
  %v2368 = vunpack.c.l.b16 %v332
  %v2369 = vunpack.c.h.b16 %v332
  %v2370 = vunpack.c.l.b16 %v333
  %v2371 = vunpack.c.h.b16 %v333
  %v2372 = vunpack.c.l.b16 %v334
  %v2373 = vunpack.c.h.b16 %v334
  %v2374 = vunpack.c.l.b16 %v335
  %v2375 = vunpack.c.h.b16 %v335
  %v2376 = vunpack.c.l.b16 %v336
  %v2377 = vunpack.c.h.b16 %v336
  %v2378 = vunpack.c.l.b16 %v337
  %v2379 = vunpack.c.h.b16 %v337
  %v2380 = vunpack.c.l.b16 %v338
  %v2381 = vunpack.c.h.b16 %v338
  %v2382 = vunpack.c.l.b16 %v339
  %v2383 = vunpack.c.h.b16 %v339
  %v2384 = vunpack.c.l.b16 %v340
  %v2385 = vunpack.c.h.b16 %v340
  %v2386 = vunpack.c.l.b16 %v341
  %v2387 = vunpack.c.h.b16 %v341
  %v2388 = vunpack.c.l.b16 %v342
  %v2389 = vunpack.c.h.b16 %v342
  %v2390 = vunpack.c.l.b16 %v343
  %v2391 = vunpack.c.h.b16 %v343
  %v2392 = vunpack.c.l.b16 %v344
  %v2393 = vunpack.c.h.b16 %v344
  %v2394 = vunpack.c.l.b16 %v345
  %v2395 = vunpack.c.h.b16 %v345
  %v2396 = vunpack.c.l.b16 %v346
  %v2397 = vunpack.c.h.b16 %v346
  %v2398 = vunpack.c.l.b16 %v347
  %v2399 = vunpack.c.h.b16 %v347
  %v2400 = vunpack.c.l.b16 %v348
  %v2401 = vunpack.c.h.b16 %v348
  %v2402 = vunpack.c.l.b16 %v349
  %v2403 = vunpack.c.h.b16 %v349
  %v2404 = vunpack.c.l.b16 %v350
  %v2405 = vunpack.c.h.b16 %v350
  %v2406 = vunpack.c.l.b16 %v351
  %v2407 = vunpack.c.h.b16 %v351
  %v2408 = vunpack.c.l.b16 %v352
  %v2409 = vunpack.c.h.b16 %v352
  %v2410 = vunpack.c.l.b16 %v353
  %v2411 = vunpack.c.h.b16 %v353
  %v2412 = vunpack.c.l.b16 %v354
  %v2413 = vunpack.c.h.b16 %v354
  %v2414 = vunpack.c.l.b16 %v355
  %v2415 = vunpack.c.h.b16 %v355
  %v2416 = vunpack.c.l.b16 %v356
  %v2417 = vunpack.c.h.b16 %v356
  %v2418 = vunpack.c.l.b16 %v357
  %v2419 = vunpack.c.h.b16 %v357
  %v2420 = vunpack.c.l.b16 %v358
  %v2421 = vunpack.c.h.b16 %v358
  %v2422 = vunpack.c.l.b16 %v359
  %v2423 = vunpack.c.h.b16 %v359
  %v2424 = vunpack.c.l.b16 %v360
  %v2425 = vunpack.c.h.b16 %v360
  %v2426 = vunpack.c.l.b16 %v361
  %v2427 = vunpack.c.h.b16 %v361
  %v2428 = vunpack.c.l.b16 %v362
  %v2429 = vunpack.c.h.b16 %v362
  %v2430 = vunpack.c.l.b16 %v363
  %v2431 = vunpack.c.h.b16 %v363
  %v2432 = vunpack.c.l.b16 %v364
  %v2433 = vunpack.c.h.b16 %v364
  %v2434 = vunpack.c.l.b16 %v365
  %v2435 = vunpack.c.h.b16 %v365
  %v2436 = vunpack.c.l.b16 %v366
  %v2437 = vunpack.c.h.b16 %v366
  %v2438 = vunpack.c.l.b16 %v367
  %v2439 = vunpack.c.h.b16 %v367
  %v2440 = vunpack.c.l.b16 %v368
  %v2441 = vunpack.c.h.b16 %v368
  %v2442 = vunpack.c.l.b16 %v369
  %v2443 = vunpack.c.h.b16 %v369
  %v2444 = vunpack.c.l.b16 %v370
  %v2445 = vunpack.c.h.b16 %v370
  %v2446 = vunpack.c.l.b16 %v371
  %v2447 = vunpack.c.h.b16 %v371
  %v2448 = vunpack.c.l.b16 %v372
  %v2449 = vunpack.c.h.b16 %v372
  %v2450 = vunpack.c.l.b16 %v373
  %v2451 = vunpack.c.h.b16 %v373
  %v2452 = vunpack.c.l.b16 %v374
  %v2453 = vunpack.c.h.b16 %v374
  %v2454 = vunpack.c.l.b16 %v375
  %v2455 = vunpack.c.h.b16 %v375
  %v2456 = vunpack.c.l.b16 %v376
  %v2457 = vunpack.c.h.b16 %v376
  %v2458 = vunpack.c.l.b16 %v377
  %v2459 = vunpack.c.h.b16 %v377
  %v2460 = vunpack.c.l.b16 %v378
  %v2461 = vunpack.c.h.b16 %v378
  %v2462 = vunpack.c.l.b16 %v379
  %v2463 = vunpack.c.h.b16 %v379
  %v2464 = vunpack.c.l.b16 %v380
  %v2465 = vunpack.c.h.b16 %v380
  %v2466 = vunpack.c.l.b16 %v381
  %v2467 = vunpack.c.h.b16 %v381
  %v2468 = vunpack.c.l.b16 %v382
  %v2469 = vunpack.c.h.b16 %v382
  %v2470 = vunpack.c.l.b16 %v383
  %v2471 = vunpack.c.h.b16 %v383
  %v2472 = vunpack.c.l.b16 %v384
  %v2473 = vunpack.c.h.b16 %v384
  %v2474 = vunpack.c.l.b16 %v385
  %v2475 = vunpack.c.h.b16 %v385
  %v2476 = vunpack.c.l.b16 %v386
  %v2477 = vunpack.c.h.b16 %v386
  %v2478 = vunpack.c.l.b16 %v387
  %v2479 = vunpack.c.h.b16 %v387
  %v2480 = vunpack.c.l.b16 %v388
  %v2481 = vunpack.c.h.b16 %v388
  %v2482 = vunpack.c.l.b16 %v389
  %v2483 = vunpack.c.h.b16 %v389
  %v2484 = vunpack.c.l.b16 %v390
  %v2485 = vunpack.c.h.b16 %v390
  %v2486 = vunpack.c.l.b16 %v391
  %v2487 = vunpack.c.h.b16 %v391
  %v2488 = vunpack.c.l.b16 %v392
  %v2489 = vunpack.c.h.b16 %v392
  %v2490 = vunpack.c.l.b16 %v393
  %v2491 = vunpack.c.h.b16 %v393
  %v2492 = vunpack.c.l.b16 %v394
  %v2493 = vunpack.c.h.b16 %v394
  %v2494 = vunpack.c.l.b16 %v395
  %v2495 = vunpack.c.h.b16 %v395
  %v2496 = vunpack.c.l.b16 %v396
  %v2497 = vunpack.c.h.b16 %v396
  %v2498 = vunpack.c.l.b16 %v397
  %v2499 = vunpack.c.h.b16 %v397
  %v2500 = vunpack.c.l.b16 %v398
  %v2501 = vunpack.c.h.b16 %v398
  %v2502 = vunpack.c.l.b16 %v399
  %v2503 = vunpack.c.h.b16 %v399
  %v2504 = vunpack.c.l.b16 %v400
  %v2505 = vunpack.c.h.b16 %v400
  %v2506 = vunpack.c.l.b16 %v401
  %v2507 = vunpack.c.h.b16 %v401
  %v2508 = vunpack.c.l.b16 %v402
  %v2509 = vunpack.c.h.b16 %v402
  %v2510 = vunpack.c.l.b16 %v403
  %v2511 = vunpack.c.h.b16 %v403
  %v2512 = vunpack.c.l.b16 %v404
  %v2513 = vunpack.c.h.b16 %v404
  %v2514 = vunpack.c.l.b16 %v405
  %v2515 = vunpack.c.h.b16 %v405
  %v2516 = vunpack.c.l.b16 %v406
  %v2517 = vunpack.c.h.b16 %v406
  %v2518 = vunpack.c.l.b16 %v407
  %v2519 = vunpack.c.h.b16 %v407
  %v2520 = vunpack.c.l.b16 %v408
  %v2521 = vunpack.c.h.b16 %v408
  %v2522 = vunpack.c.l.b16 %v409
  %v2523 = vunpack.c.h.b16 %v409
  %v2524 = vunpack.c.l.b16 %v410
  %v2525 = vunpack.c.h.b16 %v410
  %v2526 = vunpack.c.l.b16 %v411
  %v2527 = vunpack.c.h.b16 %v411
  %v2528 = vunpack.c.l.b16 %v412
  %v2529 = vunpack.c.h.b16 %v412
  %v2530 = vunpack.c.l.b16 %v413
  %v2531 = vunpack.c.h.b16 %v413
  %v2532 = vunpack.c.l.b16 %v414
  %v2533 = vunpack.c.h.b16 %v414
  %v2534 = vunpack.c.l.b16 %v415
  %v2535 = vunpack.c.h.b16 %v415
  %v2536 = vunpack.c.l.b16 %v416
  %v2537 = vunpack.c.h.b16 %v416
  %v2538 = vunpack.c.l.b16 %v417
  %v2539 = vunpack.c.h.b16 %v417
  %v2540 = vunpack.c.l.b16 %v418
  %v2541 = vunpack.c.h.b16 %v418
  %v2542 = vunpack.c.l.b16 %v419
  %v2543 = vunpack.c.h.b16 %v419
  %v2544 = vunpack.c.l.b16 %v420
  %v2545 = vunpack.c.h.b16 %v420
  %v2546 = vunpack.c.l.b16 %v421
  %v2547 = vunpack.c.h.b16 %v421
  %v2548 = vunpack.c.l.b16 %v422
  %v2549 = vunpack.c.h.b16 %v422
  %v2550 = vunpack.c.l.b16 %v423
  %v2551 = vunpack.c.h.b16 %v423
  %v2552 = vunpack.c.l.b16 %v424
  %v2553 = vunpack.c.h.b16 %v424
  %v2554 = vunpack.c.l.b16 %v425
  %v2555 = vunpack.c.h.b16 %v425
  %v2556 = vunpack.c.l.b16 %v426
  %v2557 = vunpack.c.h.b16 %v426
  %v2558 = vunpack.c.l.b16 %v427
  %v2559 = vunpack.c.h.b16 %v427
  %v2560 = vunpack.c.l.b16 %v428
  %v2561 = vunpack.c.h.b16 %v428
  %v2562 = vunpack.c.l.b16 %v429
  %v2563 = vunpack.c.h.b16 %v429
  %v2564 = vunpack.c.l.b16 %v430
  %v2565 = vunpack.c.h.b16 %v430
  %v2566 = vunpack.c.l.b16 %v431
  %v2567 = vunpack.c.h.b16 %v431
  %v2568 = vunpack.c.l.b16 %v432
  %v2569 = vunpack.c.h.b16 %v432
  %v2570 = vunpack.c.l.b16 %v433
  %v2571 = vunpack.c.h.b16 %v433
  %v2572 = vunpack.c.l.b16 %v434
  %v2573 = vunpack.c.h.b16 %v434
  %v2574 = vunpack.c.l.b16 %v435
  %v2575 = vunpack.c.h.b16 %v435
  %v2576 = vunpack.c.l.b16 %v436
  %v2577 = vunpack.c.h.b16 %v436
  %v2578 = vunpack.c.l.b16 %v437
  %v2579 = vunpack.c.h.b16 %v437
  %v2580 = vunpack.c.l.b16 %v438
  %v2581 = vunpack.c.h.b16 %v438
  %v2582 = vunpack.c.l.b16 %v439
  %v2583 = vunpack.c.h.b16 %v439
  %v2584 = vunpack.c.l.b16 %v440
  %v2585 = vunpack.c.h.b16 %v440
  %v2586 = vunpack.c.l.b16 %v441
  %v2587 = vunpack.c.h.b16 %v441
  %v2588 = vunpack.c.l.b16 %v442
  %v2589 = vunpack.c.h.b16 %v442
  %v2590 = vunpack.c.l.b16 %v443
  %v2591 = vunpack.c.h.b16 %v443
  %v2592 = vunpack.c.l.b16 %v444
  %v2593 = vunpack.c.h.b16 %v444
  %v2594 = vunpack.c.l.b16 %v445
  %v2595 = vunpack.c.h.b16 %v445
  %v2596 = vunpack.c.l.b16 %v446
  %v2597 = vunpack.c.h.b16 %v446
  %v2598 = vunpack.c.l.b16 %v447
  %v2599 = vunpack.c.h.b16 %v447
  %v2600 = vunpack.c.l.b16 %v448
  %v2601 = vunpack.c.h.b16 %v448
  %v2602 = vunpack.c.l.b16 %v449
  %v2603 = vunpack.c.h.b16 %v449
  %v2604 = vunpack.c.l.b16 %v450
  %v2605 = vunpack.c.h.b16 %v450
  %v2606 = vunpack.c.l.b16 %v451
  %v2607 = vunpack.c.h.b16 %v451
  %v2608 = vunpack.c.l.b16 %v452
  %v2609 = vunpack.c.h.b16 %v452
  %v2610 = vunpack.c.l.b16 %v453
  %v2611 = vunpack.c.h.b16 %v453
  %v2612 = vunpack.c.l.b16 %v454
  %v2613 = vunpack.c.h.b16 %v454
  %v2614 = vunpack.c.l.b16 %v455
  %v2615 = vunpack.c.h.b16 %v455
  %v2616 = vunpack.c.l.b16 %v456
  %v2617 = vunpack.c.h.b16 %v456
  %v2618 = vunpack.c.l.b16 %v457
  %v2619 = vunpack.c.h.b16 %v457
  %v2620 = vunpack.c.l.b16 %v458
  %v2621 = vunpack.c.h.b16 %v458
  %v2622 = vunpack.c.l.b16 %v459
  %v2623 = vunpack.c.h.b16 %v459
  %v2624 = vunpack.c.l.b16 %v460
  %v2625 = vunpack.c.h.b16 %v460
  %v2626 = vunpack.c.l.b16 %v461
  %v2627 = vunpack.c.h.b16 %v461
  %v2628 = vunpack.c.l.b16 %v462
  %v2629 = vunpack.c.h.b16 %v462
  %v2630 = vunpack.c.l.b16 %v463
  %v2631 = vunpack.c.h.b16 %v463
  %v2632 = vunpack.c.l.b16 %v464
  %v2633 = vunpack.c.h.b16 %v464
  %v2634 = vunpack.c.l.b16 %v465
  %v2635 = vunpack.c.h.b16 %v465
  %v2636 = vunpack.c.l.b16 %v466
  %v2637 = vunpack.c.h.b16 %v466
  %v2638 = vunpack.c.l.b16 %v467
  %v2639 = vunpack.c.h.b16 %v467
  %v2640 = vunpack.c.l.b16 %v468
  %v2641 = vunpack.c.h.b16 %v468
  %v2642 = vunpack.c.l.b16 %v469
  %v2643 = vunpack.c.h.b16 %v469
  %v2644 = vunpack.c.l.b16 %v470
  %v2645 = vunpack.c.h.b16 %v470
  %v2646 = vunpack.c.l.b16 %v471
  %v2647 = vunpack.c.h.b16 %v471
  %v2648 = vunpack.c.l.b16 %v472
  %v2649 = vunpack.c.h.b16 %v472
  %v2650 = vunpack.c.l.b16 %v473
  %v2651 = vunpack.c.h.b16 %v473
  %v2652 = vunpack.c.l.b16 %v474
  %v2653 = vunpack.c.h.b16 %v474
  %v2654 = vunpack.c.l.b16 %v475
  %v2655 = vunpack.c.h.b16 %v475
  %v2656 = vunpack.c.l.b16 %v476
  %v2657 = vunpack.c.h.b16 %v476
  %v2658 = vunpack.c.l.b16 %v477
  %v2659 = vunpack.c.h.b16 %v477
  %v2660 = vunpack.c.l.b16 %v478
  %v2661 = vunpack.c.h.b16 %v478
  %v2662 = vunpack.c.l.b16 %v479
  %v2663 = vunpack.c.h.b16 %v479
  %v2664 = vunpack.c.l.b16 %v480
  %v2665 = vunpack.c.h.b16 %v480
  %v2666 = vunpack.c.l.b16 %v481
  %v2667 = vunpack.c.h.b16 %v481
  %v2668 = vunpack.c.l.b16 %v482
  %v2669 = vunpack.c.h.b16 %v482
  %v2670 = vunpack.c.l.b16 %v483
  %v2671 = vunpack.c.h.b16 %v483
  %v2672 = vunpack.c.l.b16 %v484
  %v2673 = vunpack.c.h.b16 %v484
  %v2674 = vunpack.c.l.b16 %v485
  %v2675 = vunpack.c.h.b16 %v485
  %v2676 = vunpack.c.l.b16 %v486
  %v2677 = vunpack.c.h.b16 %v486
  %v2678 = vunpack.c.l.b16 %v487
  %v2679 = vunpack.c.h.b16 %v487
  %v2680 = vunpack.c.l.b16 %v488
  %v2681 = vunpack.c.h.b16 %v488
  %v2682 = vunpack.c.l.b16 %v489
  %v2683 = vunpack.c.h.b16 %v489
  %v2684 = vunpack.c.l.b16 %v490
  %v2685 = vunpack.c.h.b16 %v490
  %v2686 = vunpack.c.l.b16 %v491
  %v2687 = vunpack.c.h.b16 %v491
  %v2688 = vunpack.c.l.b16 %v492
  %v2689 = vunpack.c.h.b16 %v492
  %v2690 = vunpack.c.l.b16 %v493
  %v2691 = vunpack.c.h.b16 %v493
  %v2692 = vunpack.c.l.b16 %v494
  %v2693 = vunpack.c.h.b16 %v494
  %v2694 = vunpack.c.l.b16 %v495
  %v2695 = vunpack.c.h.b16 %v495
  %v2696 = vunpack.c.l.b16 %v496
  %v2697 = vunpack.c.h.b16 %v496
  %v2698 = vunpack.c.l.b16 %v497
  %v2699 = vunpack.c.h.b16 %v497
  %v2700 = vunpack.c.l.b16 %v498
  %v2701 = vunpack.c.h.b16 %v498
  %v2702 = vunpack.c.l.b16 %v499
  %v2703 = vunpack.c.h.b16 %v499
  %v2704 = vunpack.c.l.b16 %v500
  %v2705 = vunpack.c.h.b16 %v500
  %v2706 = vunpack.c.l.b16 %v501
  %v2707 = vunpack.c.h.b16 %v501
  %v2708 = vunpack.c.l.b16 %v502
  %v2709 = vunpack.c.h.b16 %v502
  %v2710 = vunpack.c.l.b16 %v503
  %v2711 = vunpack.c.h.b16 %v503
  %v2712 = vunpack.c.l.b16 %v504
  %v2713 = vunpack.c.h.b16 %v504
  %v2714 = vunpack.c.l.b16 %v505
  %v2715 = vunpack.c.h.b16 %v505
  %v2716 = vunpack.c.l.b16 %v506
  %v2717 = vunpack.c.h.b16 %v506
  %v2718 = vunpack.c.l.b16 %v507
  %v2719 = vunpack.c.h.b16 %v507
  %v2720 = vunpack.c.l.b16 %v508
  %v2721 = vunpack.c.h.b16 %v508
  %v2722 = vunpack.c.l.b16 %v509
  %v2723 = vunpack.c.h.b16 %v509
  %v2724 = vunpack.c.l.b16 %v510
  %v2725 = vunpack.c.h.b16 %v510
  %v2726 = vunpack.c.l.b16 %v511
  %v2727 = vunpack.c.h.b16 %v511
  %v2728 = vunpack.c.l.b16 %v512
  %v2729 = vunpack.c.h.b16 %v512
  %v2730 = vunpack.c.l.b16 %v513
  %v2731 = vunpack.c.h.b16 %v513
  %v2732 = vunpack.c.l.b16 %v514
  %v2733 = vunpack.c.h.b16 %v514
  %v2734 = vunpack.c.l.b16 %v515
  %v2735 = vunpack.c.h.b16 %v515
  %v2736 = vunpack.c.l.b16 %v516
  %v2737 = vunpack.c.h.b16 %v516
  %v2738 = vunpack.c.l.b16 %v517
  %v2739 = vunpack.c.h.b16 %v517
  %v2740 = vunpack.c.l.b16 %v518
  %v2741 = vunpack.c.h.b16 %v518
  %v2742 = vunpack.c.l.b16 %v519
  %v2743 = vunpack.c.h.b16 %v519
  %v2744 = vunpack.c.l.b16 %v520
  %v2745 = vunpack.c.h.b16 %v520
  %v2746 = vunpack.c.l.b16 %v521
  %v2747 = vunpack.c.h.b16 %v521
  %v2748 = vunpack.c.l.b16 %v522
  %v2749 = vunpack.c.h.b16 %v522
  %v2750 = vunpack.c.l.b16 %v523
  %v2751 = vunpack.c.h.b16 %v523
  %v2752 = vunpack.c.l.b16 %v524
  %v2753 = vunpack.c.h.b16 %v524
  %v2754 = vunpack.c.l.b16 %v525
  %v2755 = vunpack.c.h.b16 %v525
  %v2756 = vunpack.c.l.b16 %v526
  %v2757 = vunpack.c.h.b16 %v526
  %v2758 = vunpack.c.l.b16 %v527
  %v2759 = vunpack.c.h.b16 %v527
  %v2760 = vunpack.c.l.b16 %v528
  %v2761 = vunpack.c.h.b16 %v528
  %v2762 = vunpack.c.l.b16 %v529
  %v2763 = vunpack.c.h.b16 %v529
  %v2764 = vunpack.c.l.b16 %v530
  %v2765 = vunpack.c.h.b16 %v530
  %v2766 = vunpack.c.l.b16 %v531
  %v2767 = vunpack.c.h.b16 %v531
  %v2768 = vunpack.c.l.b16 %v532
  %v2769 = vunpack.c.h.b16 %v532
  %v2770 = vunpack.c.l.b16 %v533
  %v2771 = vunpack.c.h.b16 %v533
  %v2772 = vunpack.c.l.b16 %v534
  %v2773 = vunpack.c.h.b16 %v534
  %v2774 = vunpack.c.l.b16 %v535
  %v2775 = vunpack.c.h.b16 %v535
  %v2776 = vunpack.c.l.b16 %v536
  %v2777 = vunpack.c.h.b16 %v536
  %v2778 = vunpack.c.l.b16 %v537
  %v2779 = vunpack.c.h.b16 %v537
  %v2780 = vunpack.c.l.b16 %v538
  %v2781 = vunpack.c.h.b16 %v538
  %v2782 = vunpack.c.l.b16 %v539
  %v2783 = vunpack.c.h.b16 %v539
  %v2784 = vunpack.c.l.b16 %v540
  %v2785 = vunpack.c.h.b16 %v540
  %v2786 = vunpack.c.l.b16 %v541
  %v2787 = vunpack.c.h.b16 %v541
  %v2788 = vunpack.c.l.b16 %v542
  %v2789 = vunpack.c.h.b16 %v542
  %v2790 = vunpack.c.l.b16 %v543
  %v2791 = vunpack.c.h.b16 %v543
  %v2792 = vunpack.c.l.b16 %v544
  %v2793 = vunpack.c.h.b16 %v544
  %v2794 = vunpack.c.l.b16 %v545
  %v2795 = vunpack.c.h.b16 %v545
  %v2796 = vunpack.c.l.b16 %v546
  %v2797 = vunpack.c.h.b16 %v546
  %v2798 = vunpack.c.l.b16 %v547
  %v2799 = vunpack.c.h.b16 %v547
  %v2800 = vunpack.c.l.b16 %v548
  %v2801 = vunpack.c.h.b16 %v548
  %v2802 = vunpack.c.l.b16 %v549
  %v2803 = vunpack.c.h.b16 %v549
  %v2804 = vunpack.c.l.b16 %v550
  %v2805 = vunpack.c.h.b16 %v550
  %v2806 = vunpack.c.l.b16 %v551
  %v2807 = vunpack.c.h.b16 %v551
  %v2808 = vunpack.c.l.b16 %v552
  %v2809 = vunpack.c.h.b16 %v552
  %v2810 = vunpack.c.l.b16 %v553
  %v2811 = vunpack.c.h.b16 %v553
  %v2812 = vunpack.c.l.b16 %v554
  %v2813 = vunpack.c.h.b16 %v554
  %v2814 = vunpack.c.l.b16 %v555
  %v2815 = vunpack.c.h.b16 %v555
  %v2816 = vunpack.c.l.b16 %v556
  %v2817 = vunpack.c.h.b16 %v556
  %v2818 = vunpack.c.l.b16 %v557
  %v2819 = vunpack.c.h.b16 %v557
  %v2820 = vunpack.c.l.b16 %v558
  %v2821 = vunpack.c.h.b16 %v558
  %v2822 = vunpack.c.l.b16 %v559
  %v2823 = vunpack.c.h.b16 %v559
  %v2824 = vunpack.c.l.b16 %v560
  %v2825 = vunpack.c.h.b16 %v560
  %v2826 = vunpack.c.l.b16 %v561
  %v2827 = vunpack.c.h.b16 %v561
  %v2828 = vunpack.c.l.b16 %v562
  %v2829 = vunpack.c.h.b16 %v562
  %v2830 = vunpack.c.l.b16 %v563
  %v2831 = vunpack.c.h.b16 %v563
  %v2832 = vunpack.c.l.b16 %v564
  %v2833 = vunpack.c.h.b16 %v564
  %v2834 = vunpack.c.l.b16 %v565
  %v2835 = vunpack.c.h.b16 %v565
  %v2836 = vunpack.c.l.b16 %v566
  %v2837 = vunpack.c.h.b16 %v566
  %v2838 = vunpack.c.l.b16 %v567
  %v2839 = vunpack.c.h.b16 %v567
  %v2840 = vunpack.c.l.b16 %v568
  %v2841 = vunpack.c.h.b16 %v568
  %v2842 = vunpack.c.l.b16 %v569
  %v2843 = vunpack.c.h.b16 %v569
  %v2844 = vunpack.c.l.b16 %v570
  %v2845 = vunpack.c.h.b16 %v570
  %v2846 = vunpack.c.l.b16 %v571
  %v2847 = vunpack.c.h.b16 %v571
  %v2848 = vunpack.c.l.b16 %v572
  %v2849 = vunpack.c.h.b16 %v572
  %v2850 = vunpack.c.l.b16 %v573
  %v2851 = vunpack.c.h.b16 %v573
  %v2852 = vunpack.c.l.b16 %v574
  %v2853 = vunpack.c.h.b16 %v574
  %v2854 = vunpack.c.l.b16 %v575
  %v2855 = vunpack.c.h.b16 %v575
  %v2856 = vunpack.c.l.b16 %v576
  %v2857 = vunpack.c.h.b16 %v576
  %v2858 = vunpack.c.l.b16 %v577
  %v2859 = vunpack.c.h.b16 %v577
  %v2860 = vunpack.c.l.b16 %v578
  %v2861 = vunpack.c.h.b16 %v578
  %v2862 = vunpack.c.l.b16 %v579
  %v2863 = vunpack.c.h.b16 %v579
  %v2864 = vunpack.c.l.b16 %v580
  %v2865 = vunpack.c.h.b16 %v580
  %v2866 = vunpack.c.l.b16 %v581
  %v2867 = vunpack.c.h.b16 %v581
  %v2868 = vunpack.c.l.b16 %v582
  %v2869 = vunpack.c.h.b16 %v582
  %v2870 = vunpack.c.l.b16 %v583
  %v2871 = vunpack.c.h.b16 %v583
  %v2872 = vunpack.c.l.b16 %v584
  %v2873 = vunpack.c.h.b16 %v584
  %v2874 = vunpack.c.l.b16 %v585
  %v2875 = vunpack.c.h.b16 %v585
  %v2876 = vunpack.c.l.b16 %v586
  %v2877 = vunpack.c.h.b16 %v586
  %v2878 = vunpack.c.l.b16 %v587
  %v2879 = vunpack.c.h.b16 %v587
  %v2880 = vunpack.c.l.b16 %v588
  %v2881 = vunpack.c.h.b16 %v588
  %v2882 = vunpack.c.l.b16 %v589
  %v2883 = vunpack.c.h.b16 %v589
  %v2884 = vunpack.c.l.b16 %v590
  %v2885 = vunpack.c.h.b16 %v590
  %v2886 = vunpack.c.l.b16 %v591
  %v2887 = vunpack.c.h.b16 %v591
  %v2888 = vunpack.c.l.b16 %v592
  %v2889 = vunpack.c.h.b16 %v592
  %v2890 = vunpack.c.l.b16 %v593
  %v2891 = vunpack.c.h.b16 %v593
  %v2892 = vunpack.c.l.b16 %v594
  %v2893 = vunpack.c.h.b16 %v594
  %v2894 = vunpack.c.l.b16 %v595
  %v2895 = vunpack.c.h.b16 %v595
  %v2896 = vunpack.c.l.b16 %v596
  %v2897 = vunpack.c.h.b16 %v596
  %v2898 = vunpack.c.l.b16 %v597
  %v2899 = vunpack.c.h.b16 %v597
  %v2900 = vunpack.c.l.b16 %v598
  %v2901 = vunpack.c.h.b16 %v598
  %v2902 = vunpack.c.l.b16 %v599
  %v2903 = vunpack.c.h.b16 %v599
  %v2904 = vunpack.c.l.b16 %v600
  %v2905 = vunpack.c.h.b16 %v600
  %v2906 = vunpack.c.l.b16 %v601
  %v2907 = vunpack.c.h.b16 %v601
  %v2908 = vunpack.c.l.b16 %v602
  %v2909 = vunpack.c.h.b16 %v602
  %v2910 = vunpack.c.l.b16 %v603
  %v2911 = vunpack.c.h.b16 %v603
  %v2912 = vunpack.c.l.b16 %v604
  %v2913 = vunpack.c.h.b16 %v604
  %v2914 = vunpack.c.l.b16 %v605
  %v2915 = vunpack.c.h.b16 %v605
  %v2916 = vunpack.c.l.b16 %v606
  %v2917 = vunpack.c.h.b16 %v606
  %v2918 = vunpack.c.l.b16 %v607
  %v2919 = vunpack.c.h.b16 %v607
  %v2920 = vunpack.c.l.b16 %v608
  %v2921 = vunpack.c.h.b16 %v608
  %v2922 = vunpack.c.l.b16 %v609
  %v2923 = vunpack.c.h.b16 %v609
  %v2924 = vunpack.c.l.b16 %v610
  %v2925 = vunpack.c.h.b16 %v610
  %v2926 = vunpack.c.l.b16 %v611
  %v2927 = vunpack.c.h.b16 %v611
  %v2928 = vunpack.c.l.b16 %v612
  %v2929 = vunpack.c.h.b16 %v612
  %v2930 = vunpack.c.l.b16 %v613
  %v2931 = vunpack.c.h.b16 %v613
  %v2932 = vunpack.c.l.b16 %v614
  %v2933 = vunpack.c.h.b16 %v614
  %v2934 = vunpack.c.l.b16 %v615
  %v2935 = vunpack.c.h.b16 %v615
  %v2936 = vunpack.c.l.b16 %v616
  %v2937 = vunpack.c.h.b16 %v616
  %v2938 = vunpack.c.l.b16 %v617
  %v2939 = vunpack.c.h.b16 %v617
  %v2940 = vunpack.c.l.b16 %v618
  %v2941 = vunpack.c.h.b16 %v618
  %v2942 = vunpack.c.l.b16 %v619
  %v2943 = vunpack.c.h.b16 %v619
  %v2944 = vunpack.c.l.b16 %v620
  %v2945 = vunpack.c.h.b16 %v620
  %v2946 = vunpack.c.l.b16 %v621
  %v2947 = vunpack.c.h.b16 %v621
  %v2948 = vunpack.c.l.b16 %v622
  %v2949 = vunpack.c.h.b16 %v622
  %v2950 = vunpack.c.l.b16 %v623
  %v2951 = vunpack.c.h.b16 %v623
  %v2952 = vunpack.c.l.b16 %v624
  %v2953 = vunpack.c.h.b16 %v624
  %v2954 = vunpack.c.l.b16 %v625
  %v2955 = vunpack.c.h.b16 %v625
  %v2956 = vunpack.c.l.b16 %v626
  %v2957 = vunpack.c.h.b16 %v626
  %v2958 = vunpack.c.l.b16 %v627
  %v2959 = vunpack.c.h.b16 %v627
  %v2960 = vunpack.c.l.b16 %v628
  %v2961 = vunpack.c.h.b16 %v628
  %v2962 = vunpack.c.l.b16 %v629
  %v2963 = vunpack.c.h.b16 %v629
  %v2964 = vunpack.c.l.b16 %v630
  %v2965 = vunpack.c.h.b16 %v630
  %v2966 = vunpack.c.l.b16 %v631
  %v2967 = vunpack.c.h.b16 %v631
  %v2968 = vunpack.c.l.b16 %v632
  %v2969 = vunpack.c.h.b16 %v632
  %v2970 = vunpack.c.l.b16 %v633
  %v2971 = vunpack.c.h.b16 %v633
  %v2972 = vunpack.c.l.b16 %v634
  %v2973 = vunpack.c.h.b16 %v634
  %v2974 = vunpack.c.l.b16 %v635
  %v2975 = vunpack.c.h.b16 %v635
  %v2976 = vunpack.c.l.b16 %v636
  %v2977 = vunpack.c.h.b16 %v636
  %v2978 = vunpack.c.l.b16 %v637
  %v2979 = vunpack.c.h.b16 %v637
  %v2980 = vunpack.c.l.b16 %v638
  %v2981 = vunpack.c.h.b16 %v638
  %v2982 = vunpack.c.l.b16 %v639
  %v2983 = vunpack.c.h.b16 %v639
  %v2984 = vunpack.c.l.b16 %v640
  %v2985 = vunpack.c.h.b16 %v640
  %v2986 = vunpack.c.l.b16 %v641
  %v2987 = vunpack.c.h.b16 %v641
  %v2988 = vunpack.c.l.b16 %v642
  %v2989 = vunpack.c.h.b16 %v642
  %v2990 = vunpack.c.l.b16 %v643
  %v2991 = vunpack.c.h.b16 %v643
  %v2992 = vunpack.c.l.b16 %v644
  %v2993 = vunpack.c.h.b16 %v644
  %v2994 = vunpack.c.l.b16 %v645
  %v2995 = vunpack.c.h.b16 %v645
  %v2996 = vunpack.c.l.b16 %v646
  %v2997 = vunpack.c.h.b16 %v646
  %v2998 = vunpack.c.l.b16 %v647
  %v2999 = vunpack.c.h.b16 %v647
  %v3000 = vunpack.c.l.b16 %v648
  %v3001 = vunpack.c.h.b16 %v648
  %v3002 = vunpack.c.l.b16 %v649
  %v3003 = vunpack.c.h.b16 %v649
  %v3004 = vunpack.c.l.b16 %v650
  %v3005 = vunpack.c.h.b16 %v650
  %v3006 = vunpack.c.l.b16 %v651
  %v3007 = vunpack.c.h.b16 %v651
  %v3008 = vunpack.c.l.b16 %v652
  %v3009 = vunpack.c.h.b16 %v652
  %v3010 = vunpack.c.l.b16 %v653
  %v3011 = vunpack.c.h.b16 %v653
  %v3012 = vunpack.c.l.b16 %v654
  %v3013 = vunpack.c.h.b16 %v654
  %v3014 = vunpack.c.l.b16 %v655
  %v3015 = vunpack.c.h.b16 %v655
  %v3016 = vunpack.c.l.b16 %v656
  %v3017 = vunpack.c.h.b16 %v656
  %v3018 = vunpack.c.l.b16 %v657
  %v3019 = vunpack.c.h.b16 %v657
  %v3020 = vunpack.c.l.b16 %v658
  %v3021 = vunpack.c.h.b16 %v658
  %v3022 = vunpack.c.l.b16 %v659
  %v3023 = vunpack.c.h.b16 %v659
  %v3024 = vunpack.c.l.b16 %v660
  %v3025 = vunpack.c.h.b16 %v660
  %v3026 = vunpack.c.l.b16 %v661
  %v3027 = vunpack.c.h.b16 %v661
  %v3028 = vunpack.c.l.b16 %v662
  %v3029 = vunpack.c.h.b16 %v662
  %v3030 = vunpack.c.l.b16 %v663
  %v3031 = vunpack.c.h.b16 %v663
  %v3032 = vunpack.c.l.b16 %v664
  %v3033 = vunpack.c.h.b16 %v664
  %v3034 = vunpack.c.l.b16 %v665
  %v3035 = vunpack.c.h.b16 %v665
  %v3036 = vunpack.c.l.b16 %v666
  %v3037 = vunpack.c.h.b16 %v666
  %v3038 = vunpack.c.l.b16 %v667
  %v3039 = vunpack.c.h.b16 %v667
  %v3040 = vunpack.c.l.b16 %v668
  %v3041 = vunpack.c.h.b16 %v668
  %v3042 = vunpack.c.l.b16 %v669
  %v3043 = vunpack.c.h.b16 %v669
  %v3044 = vunpack.c.l.b16 %v670
  %v3045 = vunpack.c.h.b16 %v670
  %v3046 = vunpack.c.l.b16 %v671
  %v3047 = vunpack.c.h.b16 %v671
  %v3048 = vunpack.c.l.b16 %v672
  %v3049 = vunpack.c.h.b16 %v672
  %v3050 = vunpack.c.l.b16 %v673
  %v3051 = vunpack.c.h.b16 %v673
  %v3052 = vunpack.c.l.b16 %v674
  %v3053 = vunpack.c.h.b16 %v674
  %v3054 = vunpack.c.l.b16 %v675
  %v3055 = vunpack.c.h.b16 %v675
  %v3056 = vunpack.c.l.b16 %v676
  %v3057 = vunpack.c.h.b16 %v676
  %v3058 = vunpack.c.l.b16 %v677
  %v3059 = vunpack.c.h.b16 %v677
  %v3060 = vunpack.c.l.b16 %v678
  %v3061 = vunpack.c.h.b16 %v678
  %v3062 = vunpack.c.l.b16 %v679
  %v3063 = vunpack.c.h.b16 %v679
  %v3064 = vunpack.c.l.b16 %v680
  %v3065 = vunpack.c.h.b16 %v680
  %v3066 = vunpack.c.l.b16 %v681
  %v3067 = vunpack.c.h.b16 %v681
  %v3068 = vunpack.c.l.b16 %v682
  %v3069 = vunpack.c.h.b16 %v682
  %v3070 = vunpack.c.l.b16 %v683
  %v3071 = vunpack.c.h.b16 %v683
  %v3072 = vunpack.c.l.b16 %v684
  %v3073 = vunpack.c.h.b16 %v684
  %v3074 = vunpack.c.l.b16 %v685
  %v3075 = vunpack.c.h.b16 %v685
  %v3076 = vunpack.c.l.b16 %v686
  %v3077 = vunpack.c.h.b16 %v686
  %v3078 = vunpack.c.l.b16 %v687
  %v3079 = vunpack.c.h.b16 %v687
  %v3080 = vunpack.c.l.b16 %v688
  %v3081 = vunpack.c.h.b16 %v688
  %v3082 = vunpack.c.l.b16 %v689
  %v3083 = vunpack.c.h.b16 %v689
  %v3084 = vunpack.c.l.b16 %v690
  %v3085 = vunpack.c.h.b16 %v690
  %v3086 = vunpack.c.l.b16 %v691
  %v3087 = vunpack.c.h.b16 %v691
  %v3088 = vunpack.c.l.b16 %v692
  %v3089 = vunpack.c.h.b16 %v692
  %v3090 = vunpack.c.l.b16 %v693
  %v3091 = vunpack.c.h.b16 %v693
  %v3092 = vunpack.c.l.b16 %v694
  %v3093 = vunpack.c.h.b16 %v694
  %v3094 = vunpack.c.l.b16 %v695
  %v3095 = vunpack.c.h.b16 %v695
  %v3096 = vunpack.c.l.b16 %v696
  %v3097 = vunpack.c.h.b16 %v696
  %v3098 = vunpack.c.l.b16 %v697
  %v3099 = vunpack.c.h.b16 %v697
  %v3100 = vunpack.c.l.b16 %v698
  %v3101 = vunpack.c.h.b16 %v698
  %v3102 = vunpack.c.l.b16 %v699
  %v3103 = vunpack.c.h.b16 %v699
  %v3104 = vunpack.c.l.b16 %v700
  %v3105 = vunpack.c.h.b16 %v700
  %v3106 = vunpack.c.l.b16 %v701
  %v3107 = vunpack.c.h.b16 %v701
  %v3108 = vunpack.c.l.b16 %v702
  %v3109 = vunpack.c.h.b16 %v702
  %v3110 = vunpack.c.l.b16 %v703
  %v3111 = vunpack.c.h.b16 %v703
  %v3112 = vunpack.c.l.b16 %v704
  %v3113 = vunpack.c.h.b16 %v704
  %v3114 = vunpack.c.l.b16 %v705
  %v3115 = vunpack.c.h.b16 %v705
  %v3116 = vunpack.c.l.b16 %v706
  %v3117 = vunpack.c.h.b16 %v706
  %v3118 = vunpack.c.l.b16 %v707
  %v3119 = vunpack.c.h.b16 %v707
  %v3120 = vunpack.c.l.b16 %v708
  %v3121 = vunpack.c.h.b16 %v708
  %v3122 = vunpack.c.l.b16 %v709
  %v3123 = vunpack.c.h.b16 %v709
  %v3124 = vunpack.c.l.b16 %v710
  %v3125 = vunpack.c.h.b16 %v710
  %v3126 = vunpack.c.l.b16 %v711
  %v3127 = vunpack.c.h.b16 %v711
  %v3128 = vunpack.c.l.b16 %v712
  %v3129 = vunpack.c.h.b16 %v712
  %v3130 = vunpack.c.l.b16 %v713
  %v3131 = vunpack.c.h.b16 %v713
  %v3132 = vunpack.c.l.b16 %v714
  %v3133 = vunpack.c.h.b16 %v714
  %v3134 = vunpack.c.l.b16 %v715
  %v3135 = vunpack.c.h.b16 %v715
  %v3136 = vunpack.c.l.b16 %v716
  %v3137 = vunpack.c.h.b16 %v716
  %v3138 = vunpack.c.l.b16 %v717
  %v3139 = vunpack.c.h.b16 %v717
  %v3140 = vunpack.c.l.b16 %v718
  %v3141 = vunpack.c.h.b16 %v718
  %v3142 = vunpack.c.l.b16 %v719
  %v3143 = vunpack.c.h.b16 %v719
  %v3144 = vunpack.c.l.b16 %v720
  %v3145 = vunpack.c.h.b16 %v720
  %v3146 = vunpack.c.l.b16 %v721
  %v3147 = vunpack.c.h.b16 %v721
  %v3148 = vunpack.c.l.b16 %v722
  %v3149 = vunpack.c.h.b16 %v722
  %v3150 = vunpack.c.l.b16 %v723
  %v3151 = vunpack.c.h.b16 %v723
  %v3152 = vunpack.c.l.b16 %v724
  %v3153 = vunpack.c.h.b16 %v724
  %v3154 = vunpack.c.l.b16 %v725
  %v3155 = vunpack.c.h.b16 %v725
  %v3156 = vunpack.c.l.b16 %v726
  %v3157 = vunpack.c.h.b16 %v726
  %v3158 = vunpack.c.l.b16 %v727
  %v3159 = vunpack.c.h.b16 %v727
  %v3160 = vunpack.c.l.b16 %v728
  %v3161 = vunpack.c.h.b16 %v728
  %v3162 = vunpack.c.l.b16 %v729
  %v3163 = vunpack.c.h.b16 %v729
  %v3164 = vunpack.c.l.b16 %v730
  %v3165 = vunpack.c.h.b16 %v730
  %v3166 = vunpack.c.l.b16 %v731
  %v3167 = vunpack.c.h.b16 %v731
  %v3168 = vunpack.c.l.b16 %v732
  %v3169 = vunpack.c.h.b16 %v732
  %v3170 = vunpack.c.l.b16 %v733
  %v3171 = vunpack.c.h.b16 %v733
  %v3172 = vunpack.c.l.b16 %v734
  %v3173 = vunpack.c.h.b16 %v734
  %v3174 = vunpack.c.l.b16 %v735
  %v3175 = vunpack.c.h.b16 %v735
  %v3176 = vunpack.c.l.b16 %v736
  %v3177 = vunpack.c.h.b16 %v736
  %v3178 = vunpack.c.l.b16 %v737
  %v3179 = vunpack.c.h.b16 %v737
  %v3180 = vunpack.c.l.b16 %v738
  %v3181 = vunpack.c.h.b16 %v738
  %v3182 = vunpack.c.l.b16 %v739
  %v3183 = vunpack.c.h.b16 %v739
  %v3184 = vunpack.c.l.b16 %v740
  %v3185 = vunpack.c.h.b16 %v740
  %v3186 = vunpack.c.l.b16 %v741
  %v3187 = vunpack.c.h.b16 %v741
  %v3188 = vunpack.c.l.b16 %v742
  %v3189 = vunpack.c.h.b16 %v742
  %v3190 = vunpack.c.l.b16 %v743
  %v3191 = vunpack.c.h.b16 %v743
  %v3192 = vunpack.c.l.b16 %v744
  %v3193 = vunpack.c.h.b16 %v744
  %v3194 = vunpack.c.l.b16 %v745
  %v3195 = vunpack.c.h.b16 %v745
  %v3196 = vunpack.c.l.b16 %v746
  %v3197 = vunpack.c.h.b16 %v746
  %v3198 = vunpack.c.l.b16 %v747
  %v3199 = vunpack.c.h.b16 %v747
  %v3200 = vunpack.c.l.b16 %v748
  %v3201 = vunpack.c.h.b16 %v748
  %v3202 = vunpack.c.l.b16 %v749
  %v3203 = vunpack.c.h.b16 %v749
  %v3204 = vunpack.c.l.b16 %v750
  %v3205 = vunpack.c.h.b16 %v750
  %v3206 = vunpack.c.l.b16 %v751
  %v3207 = vunpack.c.h.b16 %v751
  %v3208 = vunpack.c.l.b16 %v752
  %v3209 = vunpack.c.h.b16 %v752
  %v3210 = vunpack.c.l.b16 %v753
  %v3211 = vunpack.c.h.b16 %v753
  %v3212 = vunpack.c.l.b16 %v754
  %v3213 = vunpack.c.h.b16 %v754
  %v3214 = vunpack.c.l.b16 %v755
  %v3215 = vunpack.c.h.b16 %v755
  %v3216 = vunpack.c.l.b16 %v756
  %v3217 = vunpack.c.h.b16 %v756
  %v3218 = vunpack.c.l.b16 %v757
  %v3219 = vunpack.c.h.b16 %v757
  %v3220 = vunpack.c.l.b16 %v758
  %v3221 = vunpack.c.h.b16 %v758
  %v3222 = vunpack.c.l.b16 %v759
  %v3223 = vunpack.c.h.b16 %v759
  %v3224 = vunpack.c.l.b16 %v760
  %v3225 = vunpack.c.h.b16 %v760
  %v3226 = vunpack.c.l.b16 %v761
  %v3227 = vunpack.c.h.b16 %v761
  %v3228 = vunpack.c.l.b16 %v762
  %v3229 = vunpack.c.h.b16 %v762
  %v3230 = vunpack.c.l.b16 %v763
  %v3231 = vunpack.c.h.b16 %v763
  %v3232 = vunpack.c.l.b16 %v764
  %v3233 = vunpack.c.h.b16 %v764
  %v3234 = vunpack.c.l.b16 %v765
  %v3235 = vunpack.c.h.b16 %v765
  %v3236 = vunpack.c.l.b16 %v766
  %v3237 = vunpack.c.h.b16 %v766
  %v3238 = vunpack.c.l.b16 %v767
  %v3239 = vunpack.c.h.b16 %v767
  %v3240 = vunpack.c.l.b16 %v768
  %v3241 = vunpack.c.h.b16 %v768
  %v3242 = vunpack.c.l.b16 %v769
  %v3243 = vunpack.c.h.b16 %v769
  %v3244 = vunpack.c.l.b16 %v770
  %v3245 = vunpack.c.h.b16 %v770
  %v3246 = vunpack.c.l.b16 %v771
  %v3247 = vunpack.c.h.b16 %v771
  %v3248 = vunpack.c.l.b16 %v772
  %v3249 = vunpack.c.h.b16 %v772
  %v3250 = vunpack.c.l.b16 %v773
  %v3251 = vunpack.c.h.b16 %v773
  %v3252 = vunpack.c.l.b16 %v774
  %v3253 = vunpack.c.h.b16 %v774
  %v3254 = vunpack.c.l.b16 %v775
  %v3255 = vunpack.c.h.b16 %v775
  %v3256 = vunpack.c.l.b16 %v776
  %v3257 = vunpack.c.h.b16 %v776
  %v3258 = vunpack.c.l.b16 %v777
  %v3259 = vunpack.c.h.b16 %v777
  %v3260 = vunpack.c.l.b16 %v778
  %v3261 = vunpack.c.h.b16 %v778
  %v3262 = vunpack.c.l.b16 %v779
  %v3263 = vunpack.c.h.b16 %v779
  %v3264 = vunpack.c.l.b16 %v780
  %v3265 = vunpack.c.h.b16 %v780
  %v3266 = vunpack.c.l.b16 %v781
  %v3267 = vunpack.c.h.b16 %v781
  %v3268 = vunpack.c.l.b16 %v782
  %v3269 = vunpack.c.h.b16 %v782
  %v3270 = vunpack.c.l.b16 %v783
  %v3271 = vunpack.c.h.b16 %v783
  %v3272 = vunpack.c.l.b16 %v784
  %v3273 = vunpack.c.h.b16 %v784
  %v3274 = vunpack.c.l.b16 %v785
  %v3275 = vunpack.c.h.b16 %v785
  %v3276 = vunpack.c.l.b16 %v786
  %v3277 = vunpack.c.h.b16 %v786
  %v3278 = vunpack.c.l.b16 %v787
  %v3279 = vunpack.c.h.b16 %v787
  %v3280 = vunpack.c.l.b16 %v788
  %v3281 = vunpack.c.h.b16 %v788
  %v3282 = vunpack.c.l.b16 %v789
  %v3283 = vunpack.c.h.b16 %v789
  %v3284 = vunpack.c.l.b16 %v790
  %v3285 = vunpack.c.h.b16 %v790
  %v3286 = vunpack.c.l.b16 %v791
  %v3287 = vunpack.c.h.b16 %v791
  %v3288 = vunpack.c.l.b16 %v792
  %v3289 = vunpack.c.h.b16 %v792
  %v3290 = vunpack.c.l.b16 %v793
  %v3291 = vunpack.c.h.b16 %v793
  %v3292 = vunpack.c.l.b16 %v794
  %v3293 = vunpack.c.h.b16 %v794
  %v3294 = vunpack.c.l.b16 %v795
  %v3295 = vunpack.c.h.b16 %v795
  %v3296 = vunpack.c.l.b16 %v796
  %v3297 = vunpack.c.h.b16 %v796
  %v3298 = vunpack.c.l.b16 %v797
  %v3299 = vunpack.c.h.b16 %v797
  %v3300 = vunpack.c.l.b16 %v798
  %v3301 = vunpack.c.h.b16 %v798
  %v3302 = vunpack.c.l.b16 %v799
  %v3303 = vunpack.c.h.b16 %v799
  %v3304 = vunpack.c.l.b16 %v800
  %v3305 = vunpack.c.h.b16 %v800
  %v3306 = vunpack.c.l.b16 %v801
  %v3307 = vunpack.c.h.b16 %v801
  %v3308 = vunpack.c.l.b16 %v802
  %v3309 = vunpack.c.h.b16 %v802
  %v3310 = vunpack.c.l.b16 %v803
  %v3311 = vunpack.c.h.b16 %v803
  %v3312 = vunpack.c.l.b16 %v804
  %v3313 = vunpack.c.h.b16 %v804
  %v3314 = vunpack.c.l.b16 %v805
  %v3315 = vunpack.c.h.b16 %v805
  %v3316 = vunpack.c.l.b16 %v806
  %v3317 = vunpack.c.h.b16 %v806
  %v3318 = vunpack.c.l.b16 %v807
  %v3319 = vunpack.c.h.b16 %v807
  %v3320 = vunpack.c.l.b16 %v808
  %v3321 = vunpack.c.h.b16 %v808
  %v3322 = vunpack.c.l.b16 %v809
  %v3323 = vunpack.c.h.b16 %v809
  %v3324 = vunpack.c.l.b16 %v810
  %v3325 = vunpack.c.h.b16 %v810
  %v3326 = vunpack.c.l.b16 %v811
  %v3327 = vunpack.c.h.b16 %v811
  %v3328 = vunpack.c.l.b16 %v812
  %v3329 = vunpack.c.h.b16 %v812
  %v3330 = vunpack.c.l.b16 %v813
  %v3331 = vunpack.c.h.b16 %v813
  %v3332 = vunpack.c.l.b16 %v814
  %v3333 = vunpack.c.h.b16 %v814
  %v3334 = vunpack.c.l.b16 %v815
  %v3335 = vunpack.c.h.b16 %v815
  %v3336 = vunpack.c.l.b16 %v816
  %v3337 = vunpack.c.h.b16 %v816
  %v3338 = vunpack.c.l.b16 %v817
  %v3339 = vunpack.c.h.b16 %v817
  %v3340 = vunpack.c.l.b16 %v818
  %v3341 = vunpack.c.h.b16 %v818
  %v3342 = vunpack.c.l.b16 %v819
  %v3343 = vunpack.c.h.b16 %v819
  %v3344 = vunpack.c.l.b16 %v820
  %v3345 = vunpack.c.h.b16 %v820
  %v3346 = vunpack.c.l.b16 %v821
  %v3347 = vunpack.c.h.b16 %v821
  %v3348 = vunpack.c.l.b16 %v822
  %v3349 = vunpack.c.h.b16 %v822
  %v3350 = vunpack.c.l.b16 %v823
  %v3351 = vunpack.c.h.b16 %v823
  %v3352 = vunpack.c.l.b16 %v824
  %v3353 = vunpack.c.h.b16 %v824
  %v3354 = vunpack.c.l.b16 %v825
  %v3355 = vunpack.c.h.b16 %v825
  %v3356 = vunpack.c.l.b16 %v826
  %v3357 = vunpack.c.h.b16 %v826
  %v3358 = vunpack.c.l.b16 %v827
  %v3359 = vunpack.c.h.b16 %v827
  %v3360 = vunpack.c.l.b16 %v828
  %v3361 = vunpack.c.h.b16 %v828
  %v3362 = vunpack.c.l.b16 %v829
  %v3363 = vunpack.c.h.b16 %v829
  %v3364 = vunpack.c.l.b16 %v830
  %v3365 = vunpack.c.h.b16 %v830
  %v3366 = vunpack.c.l.b16 %v831
  %v3367 = vunpack.c.h.b16 %v831
  %v3368 = vpack.c.b16 %v1802, %v1800
  %v3369 = vpack.c.b16 %v1803, %v1801
  %v3370 = vpack.c.b16 %v1806, %v1804
  %v3371 = vpack.c.b16 %v1807, %v1805
  %v3372 = vpack.c.b16 %v1810, %v1808
  %v3373 = vpack.c.b16 %v1811, %v1809
  %v3374 = vpack.c.b16 %v1814, %v1812
  %v3375 = vpack.c.b16 %v1815, %v1813
  %v3376 = vpack.c.b16 %v1818, %v1816
  %v3377 = vpack.c.b16 %v1819, %v1817
  %v3378 = vpack.c.b16 %v1822, %v1820
  %v3379 = vpack.c.b16 %v1823, %v1821
  %v3380 = vpack.c.b16 %v1826, %v1824
  %v3381 = vpack.c.b16 %v1827, %v1825
  %v3382 = vpack.c.b16 %v1830, %v1828
  %v3383 = vpack.c.b16 %v1831, %v1829
  %v3384 = vpack.c.b16 %v1834, %v1832
  %v3385 = vpack.c.b16 %v1835, %v1833
  %v3386 = vpack.c.b16 %v1838, %v1836
  %v3387 = vpack.c.b16 %v1839, %v1837
  %v3388 = vpack.c.b16 %v1842, %v1840
  %v3389 = vpack.c.b16 %v1843, %v1841
  %v3390 = vpack.c.b16 %v1846, %v1844
  %v3391 = vpack.c.b16 %v1847, %v1845
  %v3392 = vpack.c.b16 %v1850, %v1848
  %v3393 = vpack.c.b16 %v1851, %v1849
  %v3394 = vpack.c.b16 %v1854, %v1852
  %v3395 = vpack.c.b16 %v1855, %v1853
  %v3396 = vpack.c.b16 %v1858, %v1856
  %v3397 = vpack.c.b16 %v1859, %v1857
  %v3398 = vpack.c.b16 %v1862, %v1860
  %v3399 = vpack.c.b16 %v1863, %v1861
  %v3400 = vpack.c.b16 %v1866, %v1864
  %v3401 = vpack.c.b16 %v1867, %v1865
  %v3402 = vpack.c.b16 %v1870, %v1868
  %v3403 = vpack.c.b16 %v1871, %v1869
  %v3404 = vpack.c.b16 %v1874, %v1872
  %v3405 = vpack.c.b16 %v1875, %v1873
  %v3406 = vpack.c.b16 %v1878, %v1876
  %v3407 = vpack.c.b16 %v1879, %v1877
  %v3408 = vpack.c.b16 %v1882, %v1880
  %v3409 = vpack.c.b16 %v1883, %v1881
  %v3410 = vpack.c.b16 %v1886, %v1884
  %v3411 = vpack.c.b16 %v1887, %v1885
  %v3412 = vpack.c.b16 %v1890, %v1888
  %v3413 = vpack.c.b16 %v1891, %v1889
  %v3414 = vpack.c.b16 %v1894, %v1892
  %v3415 = vpack.c.b16 %v1895, %v1893
  %v3416 = vpack.c.b16 %v1898, %v1896
  %v3417 = vpack.c.b16 %v1899, %v1897
  %v3418 = vpack.c.b16 %v1902, %v1900
  %v3419 = vpack.c.b16 %v1903, %v1901
  %v3420 = vpack.c.b16 %v1906, %v1904
  %v3421 = vpack.c.b16 %v1907, %v1905
  %v3422 = vpack.c.b16 %v1910, %v1908
  %v3423 = vpack.c.b16 %v1911, %v1909
  %v3424 = vpack.c.b16 %v1914, %v1912
  %v3425 = vpack.c.b16 %v1915, %v1913
  %v3426 = vpack.c.b16 %v1918, %v1916
  %v3427 = vpack.c.b16 %v1919, %v1917
  %v3428 = vpack.c.b16 %v1922, %v1920
  %v3429 = vpack.c.b16 %v1923, %v1921
  %v3430 = vpack.c.b16 %v1926, %v1924
  %v3431 = vpack.c.b16 %v1927, %v1925
  %v3432 = vpack.c.b16 %v1930, %v1928
  %v3433 = vpack.c.b16 %v1931, %v1929
  %v3434 = vpack.c.b16 %v1934, %v1932
  %v3435 = vpack.c.b16 %v1935, %v1933
  %v3436 = vpack.c.b16 %v1938, %v1936
  %v3437 = vpack.c.b16 %v1939, %v1937
  %v3438 = vpack.c.b16 %v1942, %v1940
  %v3439 = vpack.c.b16 %v1943, %v1941
  %v3440 = vpack.c.b16 %v1946, %v1944
  %v3441 = vpack.c.b16 %v1947, %v1945
  %v3442 = vpack.c.b16 %v1950, %v1948
  %v3443 = vpack.c.b16 %v1951, %v1949
  %v3444 = vpack.c.b16 %v1954, %v1952
  %v3445 = vpack.c.b16 %v1955, %v1953
  %v3446 = vpack.c.b16 %v1958, %v1956
  %v3447 = vpack.c.b16 %v1959, %v1957
  %v3448 = vpack.c.b16 %v1962, %v1960
  %v3449 = vpack.c.b16 %v1963, %v1961
  %v3450 = vpack.c.b16 %v1966, %v1964
  %v3451 = vpack.c.b16 %v1967, %v1965
  %v3452 = vpack.c.b16 %v1970, %v1968
  %v3453 = vpack.c.b16 %v1971, %v1969
  %v3454 = vpack.c.b16 %v1974, %v1972
  %v3455 = vpack.c.b16 %v1975, %v1973
  %v3456 = vpack.c.b16 %v1978, %v1976
  %v3457 = vpack.c.b16 %v1979, %v1977
  %v3458 = vpack.c.b16 %v1982, %v1980
  %v3459 = vpack.c.b16 %v1983, %v1981
  %v3460 = vpack.c.b16 %v1986, %v1984
  %v3461 = vpack.c.b16 %v1987, %v1985
  %v3462 = vpack.c.b16 %v1990, %v1988
  %v3463 = vpack.c.b16 %v1991, %v1989
  %v3464 = vpack.c.b16 %v1994, %v1992
  %v3465 = vpack.c.b16 %v1995, %v1993
  %v3466 = vpack.c.b16 %v1998, %v1996
  %v3467 = vpack.c.b16 %v1999, %v1997
  %v3468 = vpack.c.b16 %v2002, %v2000
  %v3469 = vpack.c.b16 %v2003, %v2001
  %v3470 = vpack.c.b16 %v2006, %v2004
  %v3471 = vpack.c.b16 %v2007, %v2005
  %v3472 = vpack.c.b16 %v2010, %v2008
  %v3473 = vpack.c.b16 %v2011, %v2009
  %v3474 = vpack.c.b16 %v2014, %v2012
  %v3475 = vpack.c.b16 %v2015, %v2013
  %v3476 = vpack.c.b16 %v2018, %v2016
  %v3477 = vpack.c.b16 %v2019, %v2017
  %v3478 = vpack.c.b16 %v2022, %v2020
  %v3479 = vpack.c.b16 %v2023, %v2021
  %v3480 = vpack.c.b16 %v2026, %v2024
  %v3481 = vpack.c.b16 %v2027, %v2025
  %v3482 = vpack.c.b16 %v2030, %v2028
  %v3483 = vpack.c.b16 %v2031, %v2029
  %v3484 = vpack.c.b16 %v2034, %v2032
  %v3485 = vpack.c.b16 %v2035, %v2033
  %v3486 = vpack.c.b16 %v2038, %v2036
  %v3487 = vpack.c.b16 %v2039, %v2037
  %v3488 = vpack.c.b16 %v2042, %v2040
  %v3489 = vpack.c.b16 %v2043, %v2041
  %v3490 = vpack.c.b16 %v2046, %v2044
  %v3491 = vpack.c.b16 %v2047, %v2045
  %v3492 = vpack.c.b16 %v2050, %v2048
  %v3493 = vpack.c.b16 %v2051, %v2049
  %v3494 = vpack.c.b16 %v2054, %v2052
  %v3495 = vpack.c.b16 %v2055, %v2053
  %v3496 = vpack.c.b16 %v2058, %v2056
  %v3497 = vpack.c.b16 %v2059, %v2057
  %v3498 = vpack.c.b16 %v2062, %v2060
  %v3499 = vpack.c.b16 %v2063, %v2061
  %v3500 = vpack.c.b16 %v2066, %v2064
  %v3501 = vpack.c.b16 %v2067, %v2065
  %v3502 = vpack.c.b16 %v2070, %v2068
  %v3503 = vpack.c.b16 %v2071, %v2069
  %v3504 = vpack.c.b16 %v2074, %v2072
  %v3505 = vpack.c.b16 %v2075, %v2073
  %v3506 = vpack.c.b16 %v2078, %v2076
  %v3507 = vpack.c.b16 %v2079, %v2077
  %v3508 = vpack.c.b16 %v2082, %v2080
  %v3509 = vpack.c.b16 %v2083, %v2081
  %v3510 = vpack.c.b16 %v2086, %v2084
  %v3511 = vpack.c.b16 %v2087, %v2085
  %v3512 = vpack.c.b16 %v2090, %v2088
  %v3513 = vpack.c.b16 %v2091, %v2089
  %v3514 = vpack.c.b16 %v2094, %v2092
  %v3515 = vpack.c.b16 %v2095, %v2093
  %v3516 = vpack.c.b16 %v2098, %v2096
  %v3517 = vpack.c.b16 %v2099, %v2097
  %v3518 = vpack.c.b16 %v2102, %v2100
  %v3519 = vpack.c.b16 %v2103, %v2101
  %v3520 = vpack.c.b16 %v2106, %v2104
  %v3521 = vpack.c.b16 %v2107, %v2105
  %v3522 = vpack.c.b16 %v2110, %v2108
  %v3523 = vpack.c.b16 %v2111, %v2109
  %v3524 = vpack.c.b16 %v2114, %v2112
  %v3525 = vpack.c.b16 %v2115, %v2113
  %v3526 = vpack.c.b16 %v2118, %v2116
  %v3527 = vpack.c.b16 %v2119, %v2117
  %v3528 = vpack.c.b16 %v2122, %v2120
  %v3529 = vpack.c.b16 %v2123, %v2121
  %v3530 = vpack.c.b16 %v2126, %v2124
  %v3531 = vpack.c.b16 %v2127, %v2125
  %v3532 = vpack.c.b16 %v2130, %v2128
  %v3533 = vpack.c.b16 %v2131, %v2129
  %v3534 = vpack.c.b16 %v2134, %v2132
  %v3535 = vpack.c.b16 %v2135, %v2133
  %v3536 = vpack.c.b16 %v2138, %v2136
  %v3537 = vpack.c.b16 %v2139, %v2137
  %v3538 = vpack.c.b16 %v2142, %v2140
  %v3539 = vpack.c.b16 %v2143, %v2141
  %v3540 = vpack.c.b16 %v2146, %v2144
  %v3541 = vpack.c.b16 %v2147, %v2145
  %v3542 = vpack.c.b16 %v2150, %v2148
  %v3543 = vpack.c.b16 %v2151, %v2149
  %v3544 = vpack.c.b16 %v2154, %v2152
  %v3545 = vpack.c.b16 %v2155, %v2153
  %v3546 = vpack.c.b16 %v2158, %v2156
  %v3547 = vpack.c.b16 %v2159, %v2157
  %v3548 = vpack.c.b16 %v2162, %v2160
  %v3549 = vpack.c.b16 %v2163, %v2161
  %v3550 = vpack.c.b16 %v2166, %v2164
  %v3551 = vpack.c.b16 %v2167, %v2165
  %v3552 = vpack.c.b16 %v2170, %v2168
  %v3553 = vpack.c.b16 %v2171, %v2169
  %v3554 = vpack.c.b16 %v2174, %v2172
  %v3555 = vpack.c.b16 %v2175, %v2173
  %v3556 = vpack.c.b16 %v2178, %v2176
  %v3557 = vpack.c.b16 %v2179, %v2177
  %v3558 = vpack.c.b16 %v2182, %v2180
  %v3559 = vpack.c.b16 %v2183, %v2181
  %v3560 = vpack.c.b16 %v2186, %v2184
  %v3561 = vpack.c.b16 %v2187, %v2185
  %v3562 = vpack.c.b16 %v2190, %v2188
  %v3563 = vpack.c.b16 %v2191, %v2189
  %v3564 = vpack.c.b16 %v2194, %v2192
  %v3565 = vpack.c.b16 %v2195, %v2193
  %v3566 = vpack.c.b16 %v2198, %v2196
  %v3567 = vpack.c.b16 %v2199, %v2197
  %v3568 = vpack.c.b16 %v2202, %v2200
  %v3569 = vpack.c.b16 %v2203, %v2201
  %v3570 = vpack.c.b16 %v2206, %v2204
  %v3571 = vpack.c.b16 %v2207, %v2205
  %v3572 = vpack.c.b16 %v2210, %v2208
  %v3573 = vpack.c.b16 %v2211, %v2209
  %v3574 = vpack.c.b16 %v2214, %v2212
  %v3575 = vpack.c.b16 %v2215, %v2213
  %v3576 = vpack.c.b16 %v2218, %v2216
  %v3577 = vpack.c.b16 %v2219, %v2217
  %v3578 = vpack.c.b16 %v2222, %v2220
  %v3579 = vpack.c.b16 %v2223, %v2221
  %v3580 = vpack.c.b16 %v2226, %v2224
  %v3581 = vpack.c.b16 %v2227, %v2225
  %v3582 = vpack.c.b16 %v2230, %v2228
  %v3583 = vpack.c.b16 %v2231, %v2229
  %v3584 = vpack.c.b16 %v2234, %v2232
  %v3585 = vpack.c.b16 %v2235, %v2233
  %v3586 = vpack.c.b16 %v2238, %v2236
  %v3587 = vpack.c.b16 %v2239, %v2237
  %v3588 = vpack.c.b16 %v2242, %v2240
  %v3589 = vpack.c.b16 %v2243, %v2241
  %v3590 = vpack.c.b16 %v2246, %v2244
  %v3591 = vpack.c.b16 %v2247, %v2245
  %v3592 = vpack.c.b16 %v2250, %v2248
  %v3593 = vpack.c.b16 %v2251, %v2249
  %v3594 = vpack.c.b16 %v2254, %v2252
  %v3595 = vpack.c.b16 %v2255, %v2253
  %v3596 = vpack.c.b16 %v2258, %v2256
  %v3597 = vpack.c.b16 %v2259, %v2257
  %v3598 = vpack.c.b16 %v2262, %v2260
  %v3599 = vpack.c.b16 %v2263, %v2261
  %v3600 = vpack.c.b16 %v2266, %v2264
  %v3601 = vpack.c.b16 %v2267, %v2265
  %v3602 = vpack.c.b16 %v2270, %v2268
  %v3603 = vpack.c.b16 %v2271, %v2269
  %v3604 = vpack.c.b16 %v2274, %v2272
  %v3605 = vpack.c.b16 %v2275, %v2273
  %v3606 = vpack.c.b16 %v2278, %v2276
  %v3607 = vpack.c.b16 %v2279, %v2277
  %v3608 = vpack.c.b16 %v2282, %v2280
  %v3609 = vpack.c.b16 %v2283, %v2281
  %v3610 = vpack.c.b16 %v2286, %v2284
  %v3611 = vpack.c.b16 %v2287, %v2285
  %v3612 = vpack.c.b16 %v2290, %v2288
  %v3613 = vpack.c.b16 %v2291, %v2289
  %v3614 = vpack.c.b16 %v2294, %v2292
  %v3615 = vpack.c.b16 %v2295, %v2293
  %v3616 = vpack.c.b16 %v2298, %v2296
  %v3617 = vpack.c.b16 %v2299, %v2297
  %v3618 = vpack.c.b16 %v2302, %v2300
  %v3619 = vpack.c.b16 %v2303, %v2301
  %v3620 = vpack.c.b16 %v2306, %v2304
  %v3621 = vpack.c.b16 %v2307, %v2305
  %v3622 = vpack.c.b16 %v2310, %v2308
  %v3623 = vpack.c.b16 %v2311, %v2309
  %v3624 = vpack.c.b16 %v2314, %v2312
  %v3625 = vpack.c.b16 %v2315, %v2313
  %v3626 = vpack.c.b16 %v2318, %v2316
  %v3627 = vpack.c.b16 %v2319, %v2317
  %v3628 = vpack.c.b16 %v2322, %v2320
  %v3629 = vpack.c.b16 %v2323, %v2321
  %v3630 = vpack.c.b16 %v2326, %v2324
  %v3631 = vpack.c.b16 %v2327, %v2325
  %v3632 = vpack.c.b16 %v2330, %v2328
  %v3633 = vpack.c.b16 %v2331, %v2329
  %v3634 = vpack.c.b16 %v2334, %v2332
  %v3635 = vpack.c.b16 %v2335, %v2333
  %v3636 = vpack.c.b16 %v2338, %v2336
  %v3637 = vpack.c.b16 %v2339, %v2337
  %v3638 = vpack.c.b16 %v2342, %v2340
  %v3639 = vpack.c.b16 %v2343, %v2341
  %v3640 = vpack.c.b16 %v2346, %v2344
  %v3641 = vpack.c.b16 %v2347, %v2345
  %v3642 = vpack.c.b16 %v2350, %v2348
  %v3643 = vpack.c.b16 %v2351, %v2349
  %v3644 = vpack.c.b16 %v2354, %v2352
  %v3645 = vpack.c.b16 %v2355, %v2353
  %v3646 = vpack.c.b16 %v2358, %v2356
  %v3647 = vpack.c.b16 %v2359, %v2357
  %v3648 = vpack.c.b16 %v2362, %v2360
  %v3649 = vpack.c.b16 %v2363, %v2361
  %v3650 = vpack.c.b16 %v2366, %v2364
  %v3651 = vpack.c.b16 %v2367, %v2365
  %v3652 = vpack.c.b16 %v2370, %v2368
  %v3653 = vpack.c.b16 %v2371, %v2369
  %v3654 = vpack.c.b16 %v2374, %v2372
  %v3655 = vpack.c.b16 %v2375, %v2373
  %v3656 = vpack.c.b16 %v2378, %v2376
  %v3657 = vpack.c.b16 %v2379, %v2377
  %v3658 = vpack.c.b16 %v2382, %v2380
  %v3659 = vpack.c.b16 %v2383, %v2381
  %v3660 = vpack.c.b16 %v2386, %v2384
  %v3661 = vpack.c.b16 %v2387, %v2385
  %v3662 = vpack.c.b16 %v2390, %v2388
  %v3663 = vpack.c.b16 %v2391, %v2389
  %v3664 = vpack.c.b16 %v2394, %v2392
  %v3665 = vpack.c.b16 %v2395, %v2393
  %v3666 = vpack.c.b16 %v2398, %v2396
  %v3667 = vpack.c.b16 %v2399, %v2397
  %v3668 = vpack.c.b16 %v2402, %v2400
  %v3669 = vpack.c.b16 %v2403, %v2401
  %v3670 = vpack.c.b16 %v2406, %v2404
  %v3671 = vpack.c.b16 %v2407, %v2405
  %v3672 = vpack.c.b16 %v2410, %v2408
  %v3673 = vpack.c.b16 %v2411, %v2409
  %v3674 = vpack.c.b16 %v2414, %v2412
  %v3675 = vpack.c.b16 %v2415, %v2413
  %v3676 = vpack.c.b16 %v2418, %v2416
  %v3677 = vpack.c.b16 %v2419, %v2417
  %v3678 = vpack.c.b16 %v2422, %v2420
  %v3679 = vpack.c.b16 %v2423, %v2421
  %v3680 = vpack.c.b16 %v2426, %v2424
  %v3681 = vpack.c.b16 %v2427, %v2425
  %v3682 = vpack.c.b16 %v2430, %v2428
  %v3683 = vpack.c.b16 %v2431, %v2429
  %v3684 = vpack.c.b16 %v2434, %v2432
  %v3685 = vpack.c.b16 %v2435, %v2433
  %v3686 = vpack.c.b16 %v2438, %v2436
  %v3687 = vpack.c.b16 %v2439, %v2437
  %v3688 = vpack.c.b16 %v2442, %v2440
  %v3689 = vpack.c.b16 %v2443, %v2441
  %v3690 = vpack.c.b16 %v2446, %v2444
  %v3691 = vpack.c.b16 %v2447, %v2445
  %v3692 = vpack.c.b16 %v2450, %v2448
  %v3693 = vpack.c.b16 %v2451, %v2449
  %v3694 = vpack.c.b16 %v2454, %v2452
  %v3695 = vpack.c.b16 %v2455, %v2453
  %v3696 = vpack.c.b16 %v2458, %v2456
  %v3697 = vpack.c.b16 %v2459, %v2457
  %v3698 = vpack.c.b16 %v2462, %v2460
  %v3699 = vpack.c.b16 %v2463, %v2461
  %v3700 = vpack.c.b16 %v2466, %v2464
  %v3701 = vpack.c.b16 %v2467, %v2465
  %v3702 = vpack.c.b16 %v2470, %v2468
  %v3703 = vpack.c.b16 %v2471, %v2469
  %v3704 = vpack.c.b16 %v2474, %v2472
  %v3705 = vpack.c.b16 %v2475, %v2473
  %v3706 = vpack.c.b16 %v2478, %v2476
  %v3707 = vpack.c.b16 %v2479, %v2477
  %v3708 = vpack.c.b16 %v2482, %v2480
  %v3709 = vpack.c.b16 %v2483, %v2481
  %v3710 = vpack.c.b16 %v2486, %v2484
  %v3711 = vpack.c.b16 %v2487, %v2485
  %v3712 = vpack.c.b16 %v2490, %v2488
  %v3713 = vpack.c.b16 %v2491, %v2489
  %v3714 = vpack.c.b16 %v2494, %v2492
  %v3715 = vpack.c.b16 %v2495, %v2493
  %v3716 = vpack.c.b16 %v2498, %v2496
  %v3717 = vpack.c.b16 %v2499, %v2497
  %v3718 = vpack.c.b16 %v2502, %v2500
  %v3719 = vpack.c.b16 %v2503, %v2501
  %v3720 = vpack.c.b16 %v2506, %v2504
  %v3721 = vpack.c.b16 %v2507, %v2505
  %v3722 = vpack.c.b16 %v2510, %v2508
  %v3723 = vpack.c.b16 %v2511, %v2509
  %v3724 = vpack.c.b16 %v2514, %v2512
  %v3725 = vpack.c.b16 %v2515, %v2513
  %v3726 = vpack.c.b16 %v2518, %v2516
  %v3727 = vpack.c.b16 %v2519, %v2517
  %v3728 = vpack.c.b16 %v2522, %v2520
  %v3729 = vpack.c.b16 %v2523, %v2521
  %v3730 = vpack.c.b16 %v2526, %v2524
  %v3731 = vpack.c.b16 %v2527, %v2525
  %v3732 = vpack.c.b16 %v2530, %v2528
  %v3733 = vpack.c.b16 %v2531, %v2529
  %v3734 = vpack.c.b16 %v2534, %v2532
  %v3735 = vpack.c.b16 %v2535, %v2533
  %v3736 = vpack.c.b16 %v2538, %v2536
  %v3737 = vpack.c.b16 %v2539, %v2537
  %v3738 = vpack.c.b16 %v2542, %v2540
  %v3739 = vpack.c.b16 %v2543, %v2541
  %v3740 = vpack.c.b16 %v2546, %v2544
  %v3741 = vpack.c.b16 %v2547, %v2545
  %v3742 = vpack.c.b16 %v2550, %v2548
  %v3743 = vpack.c.b16 %v2551, %v2549
  %v3744 = vpack.c.b16 %v2554, %v2552
  %v3745 = vpack.c.b16 %v2555, %v2553
  %v3746 = vpack.c.b16 %v2558, %v2556
  %v3747 = vpack.c.b16 %v2559, %v2557
  %v3748 = vpack.c.b16 %v2562, %v2560
  %v3749 = vpack.c.b16 %v2563, %v2561
  %v3750 = vpack.c.b16 %v2566, %v2564
  %v3751 = vpack.c.b16 %v2567, %v2565
  %v3752 = vpack.c.b16 %v2570, %v2568
  %v3753 = vpack.c.b16 %v2571, %v2569
  %v3754 = vpack.c.b16 %v2574, %v2572
  %v3755 = vpack.c.b16 %v2575, %v2573
  %v3756 = vpack.c.b16 %v2578, %v2576
  %v3757 = vpack.c.b16 %v2579, %v2577
  %v3758 = vpack.c.b16 %v2582, %v2580
  %v3759 = vpack.c.b16 %v2583, %v2581
  %v3760 = vpack.c.b16 %v2586, %v2584
  %v3761 = vpack.c.b16 %v2587, %v2585
  %v3762 = vpack.c.b16 %v2590, %v2588
  %v3763 = vpack.c.b16 %v2591, %v2589
  %v3764 = vpack.c.b16 %v2594, %v2592
  %v3765 = vpack.c.b16 %v2595, %v2593
  %v3766 = vpack.c.b16 %v2598, %v2596
  %v3767 = vpack.c.b16 %v2599, %v2597
  %v3768 = vpack.c.b16 %v2602, %v2600
  %v3769 = vpack.c.b16 %v2603, %v2601
  %v3770 = vpack.c.b16 %v2606, %v2604
  %v3771 = vpack.c.b16 %v2607, %v2605
  %v3772 = vpack.c.b16 %v2610, %v2608
  %v3773 = vpack.c.b16 %v2611, %v2609
  %v3774 = vpack.c.b16 %v2614, %v2612
  %v3775 = vpack.c.b16 %v2615, %v2613
  %v3776 = vpack.c.b16 %v2618, %v2616
  %v3777 = vpack.c.b16 %v2619, %v2617
  %v3778 = vpack.c.b16 %v2622, %v2620
  %v3779 = vpack.c.b16 %v2623, %v2621
  %v3780 = vpack.c.b16 %v2626, %v2624
  %v3781 = vpack.c.b16 %v2627, %v2625
  %v3782 = vpack.c.b16 %v2630, %v2628
  %v3783 = vpack.c.b16 %v2631, %v2629
  %v3784 = vpack.c.b16 %v2634, %v2632
  %v3785 = vpack.c.b16 %v2635, %v2633
  %v3786 = vpack.c.b16 %v2638, %v2636
  %v3787 = vpack.c.b16 %v2639, %v2637
  %v3788 = vpack.c.b16 %v2642, %v2640
  %v3789 = vpack.c.b16 %v2643, %v2641
  %v3790 = vpack.c.b16 %v2646, %v2644
  %v3791 = vpack.c.b16 %v2647, %v2645
  %v3792 = vpack.c.b16 %v2650, %v2648
  %v3793 = vpack.c.b16 %v2651, %v2649
  %v3794 = vpack.c.b16 %v2654, %v2652
  %v3795 = vpack.c.b16 %v2655, %v2653
  %v3796 = vpack.c.b16 %v2658, %v2656
  %v3797 = vpack.c.b16 %v2659, %v2657
  %v3798 = vpack.c.b16 %v2662, %v2660
  %v3799 = vpack.c.b16 %v2663, %v2661
  %v3800 = vpack.c.b16 %v2666, %v2664
  %v3801 = vpack.c.b16 %v2667, %v2665
  %v3802 = vpack.c.b16 %v2670, %v2668
  %v3803 = vpack.c.b16 %v2671, %v2669
  %v3804 = vpack.c.b16 %v2674, %v2672
  %v3805 = vpack.c.b16 %v2675, %v2673
  %v3806 = vpack.c.b16 %v2678, %v2676
  %v3807 = vpack.c.b16 %v2679, %v2677
  %v3808 = vpack.c.b16 %v2682, %v2680
  %v3809 = vpack.c.b16 %v2683, %v2681
  %v3810 = vpack.c.b16 %v2686, %v2684
  %v3811 = vpack.c.b16 %v2687, %v2685
  %v3812 = vpack.c.b16 %v2690, %v2688
  %v3813 = vpack.c.b16 %v2691, %v2689
  %v3814 = vpack.c.b16 %v2694, %v2692
  %v3815 = vpack.c.b16 %v2695, %v2693
  %v3816 = vpack.c.b16 %v2698, %v2696
  %v3817 = vpack.c.b16 %v2699, %v2697
  %v3818 = vpack.c.b16 %v2702, %v2700
  %v3819 = vpack.c.b16 %v2703, %v2701
  %v3820 = vpack.c.b16 %v2706, %v2704
  %v3821 = vpack.c.b16 %v2707, %v2705
  %v3822 = vpack.c.b16 %v2710, %v2708
  %v3823 = vpack.c.b16 %v2711, %v2709
  %v3824 = vpack.c.b16 %v2714, %v2712
  %v3825 = vpack.c.b16 %v2715, %v2713
  %v3826 = vpack.c.b16 %v2718, %v2716
  %v3827 = vpack.c.b16 %v2719, %v2717
  %v3828 = vpack.c.b16 %v2722, %v2720
  %v3829 = vpack.c.b16 %v2723, %v2721
  %v3830 = vpack.c.b16 %v2726, %v2724
  %v3831 = vpack.c.b16 %v2727, %v2725
  %v3832 = vpack.c.b16 %v2730, %v2728
  %v3833 = vpack.c.b16 %v2731, %v2729
  %v3834 = vpack.c.b16 %v2734, %v2732
  %v3835 = vpack.c.b16 %v2735, %v2733
  %v3836 = vpack.c.b16 %v2738, %v2736
  %v3837 = vpack.c.b16 %v2739, %v2737
  %v3838 = vpack.c.b16 %v2742, %v2740
  %v3839 = vpack.c.b16 %v2743, %v2741
  %v3840 = vpack.c.b16 %v2746, %v2744
  %v3841 = vpack.c.b16 %v2747, %v2745
  %v3842 = vpack.c.b16 %v2750, %v2748
  %v3843 = vpack.c.b16 %v2751, %v2749
  %v3844 = vpack.c.b16 %v2754, %v2752
  %v3845 = vpack.c.b16 %v2755, %v2753
  %v3846 = vpack.c.b16 %v2758, %v2756
  %v3847 = vpack.c.b16 %v2759, %v2757
  %v3848 = vpack.c.b16 %v2762, %v2760
  %v3849 = vpack.c.b16 %v2763, %v2761
  %v3850 = vpack.c.b16 %v2766, %v2764
  %v3851 = vpack.c.b16 %v2767, %v2765
  %v3852 = vpack.c.b16 %v2770, %v2768
  %v3853 = vpack.c.b16 %v2771, %v2769
  %v3854 = vpack.c.b16 %v2774, %v2772
  %v3855 = vpack.c.b16 %v2775, %v2773
  %v3856 = vpack.c.b16 %v2778, %v2776
  %v3857 = vpack.c.b16 %v2779, %v2777
  %v3858 = vpack.c.b16 %v2782, %v2780
  %v3859 = vpack.c.b16 %v2783, %v2781
  %v3860 = vpack.c.b16 %v2786, %v2784
  %v3861 = vpack.c.b16 %v2787, %v2785
  %v3862 = vpack.c.b16 %v2790, %v2788
  %v3863 = vpack.c.b16 %v2791, %v2789
  %v3864 = vpack.c.b16 %v2794, %v2792
  %v3865 = vpack.c.b16 %v2795, %v2793
  %v3866 = vpack.c.b16 %v2798, %v2796
  %v3867 = vpack.c.b16 %v2799, %v2797
  %v3868 = vpack.c.b16 %v2802, %v2800
  %v3869 = vpack.c.b16 %v2803, %v2801
  %v3870 = vpack.c.b16 %v2806, %v2804
  %v3871 = vpack.c.b16 %v2807, %v2805
  %v3872 = vpack.c.b16 %v2810, %v2808
  %v3873 = vpack.c.b16 %v2811, %v2809
  %v3874 = vpack.c.b16 %v2814, %v2812
  %v3875 = vpack.c.b16 %v2815, %v2813
  %v3876 = vpack.c.b16 %v2818, %v2816
  %v3877 = vpack.c.b16 %v2819, %v2817
  %v3878 = vpack.c.b16 %v2822, %v2820
  %v3879 = vpack.c.b16 %v2823, %v2821
  %v3880 = vpack.c.b16 %v2826, %v2824
  %v3881 = vpack.c.b16 %v2827, %v2825
  %v3882 = vpack.c.b16 %v2830, %v2828
  %v3883 = vpack.c.b16 %v2831, %v2829
  %v3884 = vpack.c.b16 %v2834, %v2832
  %v3885 = vpack.c.b16 %v2835, %v2833
  %v3886 = vpack.c.b16 %v2838, %v2836
  %v3887 = vpack.c.b16 %v2839, %v2837
  %v3888 = vpack.c.b16 %v2842, %v2840
  %v3889 = vpack.c.b16 %v2843, %v2841
  %v3890 = vpack.c.b16 %v2846, %v2844
  %v3891 = vpack.c.b16 %v2847, %v2845
  %v3892 = vpack.c.b16 %v2850, %v2848
  %v3893 = vpack.c.b16 %v2851, %v2849
  %v3894 = vpack.c.b16 %v2854, %v2852
  %v3895 = vpack.c.b16 %v2855, %v2853
  %v3896 = vpack.c.b16 %v2858, %v2856
  %v3897 = vpack.c.b16 %v2859, %v2857
  %v3898 = vpack.c.b16 %v2862, %v2860
  %v3899 = vpack.c.b16 %v2863, %v2861
  %v3900 = vpack.c.b16 %v2866, %v2864
  %v3901 = vpack.c.b16 %v2867, %v2865
  %v3902 = vpack.c.b16 %v2870, %v2868
  %v3903 = vpack.c.b16 %v2871, %v2869
  %v3904 = vpack.c.b16 %v2874, %v2872
  %v3905 = vpack.c.b16 %v2875, %v2873
  %v3906 = vpack.c.b16 %v2878, %v2876
  %v3907 = vpack.c.b16 %v2879, %v2877
  %v3908 = vpack.c.b16 %v2882, %v2880
  %v3909 = vpack.c.b16 %v2883, %v2881
  %v3910 = vpack.c.b16 %v2886, %v2884
  %v3911 = vpack.c.b16 %v2887, %v2885
  %v3912 = vpack.c.b16 %v2890, %v2888
  %v3913 = vpack.c.b16 %v2891, %v2889
  %v3914 = vpack.c.b16 %v2894, %v2892
  %v3915 = vpack.c.b16 %v2895, %v2893
  %v3916 = vpack.c.b16 %v2898, %v2896
  %v3917 = vpack.c.b16 %v2899, %v2897
  %v3918 = vpack.c.b16 %v2902, %v2900
  %v3919 = vpack.c.b16 %v2903, %v2901
  %v3920 = vpack.c.b16 %v2906, %v2904
  %v3921 = vpack.c.b16 %v2907, %v2905
  %v3922 = vpack.c.b16 %v2910, %v2908
  %v3923 = vpack.c.b16 %v2911, %v2909
  %v3924 = vpack.c.b16 %v2914, %v2912
  %v3925 = vpack.c.b16 %v2915, %v2913
  %v3926 = vpack.c.b16 %v2918, %v2916
  %v3927 = vpack.c.b16 %v2919, %v2917
  %v3928 = vpack.c.b16 %v2922, %v2920
  %v3929 = vpack.c.b16 %v2923, %v2921
  %v3930 = vpack.c.b16 %v2926, %v2924
  %v3931 = vpack.c.b16 %v2927, %v2925
  %v3932 = vpack.c.b16 %v2930, %v2928
  %v3933 = vpack.c.b16 %v2931, %v2929
  %v3934 = vpack.c.b16 %v2934, %v2932
  %v3935 = vpack.c.b16 %v2935, %v2933
  %v3936 = vpack.c.b16 %v2938, %v2936
  %v3937 = vpack.c.b16 %v2939, %v2937
  %v3938 = vpack.c.b16 %v2942, %v2940
  %v3939 = vpack.c.b16 %v2943, %v2941
  %v3940 = vpack.c.b16 %v2946, %v2944
  %v3941 = vpack.c.b16 %v2947, %v2945
  %v3942 = vpack.c.b16 %v2950, %v2948
  %v3943 = vpack.c.b16 %v2951, %v2949
  %v3944 = vpack.c.b16 %v2954, %v2952
  %v3945 = vpack.c.b16 %v2955, %v2953
  %v3946 = vpack.c.b16 %v2958, %v2956
  %v3947 = vpack.c.b16 %v2959, %v2957
  %v3948 = vpack.c.b16 %v2962, %v2960
  %v3949 = vpack.c.b16 %v2963, %v2961
  %v3950 = vpack.c.b16 %v2966, %v2964
  %v3951 = vpack.c.b16 %v2967, %v2965
  %v3952 = vpack.c.b16 %v2970, %v2968
  %v3953 = vpack.c.b16 %v2971, %v2969
  %v3954 = vpack.c.b16 %v2974, %v2972
  %v3955 = vpack.c.b16 %v2975, %v2973
  %v3956 = vpack.c.b16 %v2978, %v2976
  %v3957 = vpack.c.b16 %v2979, %v2977
  %v3958 = vpack.c.b16 %v2982, %v2980
  %v3959 = vpack.c.b16 %v2983, %v2981
  %v3960 = vpack.c.b16 %v2986, %v2984
  %v3961 = vpack.c.b16 %v2987, %v2985
  %v3962 = vpack.c.b16 %v2990, %v2988
  %v3963 = vpack.c.b16 %v2991, %v2989
  %v3964 = vpack.c.b16 %v2994, %v2992
  %v3965 = vpack.c.b16 %v2995, %v2993
  %v3966 = vpack.c.b16 %v2998, %v2996
  %v3967 = vpack.c.b16 %v2999, %v2997
  %v3968 = vpack.c.b16 %v3002, %v3000
  %v3969 = vpack.c.b16 %v3003, %v3001
  %v3970 = vpack.c.b16 %v3006, %v3004
  %v3971 = vpack.c.b16 %v3007, %v3005
  %v3972 = vpack.c.b16 %v3010, %v3008
  %v3973 = vpack.c.b16 %v3011, %v3009
  %v3974 = vpack.c.b16 %v3014, %v3012
  %v3975 = vpack.c.b16 %v3015, %v3013
  %v3976 = vpack.c.b16 %v3018, %v3016
  %v3977 = vpack.c.b16 %v3019, %v3017
  %v3978 = vpack.c.b16 %v3022, %v3020
  %v3979 = vpack.c.b16 %v3023, %v3021
  %v3980 = vpack.c.b16 %v3026, %v3024
  %v3981 = vpack.c.b16 %v3027, %v3025
  %v3982 = vpack.c.b16 %v3030, %v3028
  %v3983 = vpack.c.b16 %v3031, %v3029
  %v3984 = vpack.c.b16 %v3034, %v3032
  %v3985 = vpack.c.b16 %v3035, %v3033
  %v3986 = vpack.c.b16 %v3038, %v3036
  %v3987 = vpack.c.b16 %v3039, %v3037
  %v3988 = vpack.c.b16 %v3042, %v3040
  %v3989 = vpack.c.b16 %v3043, %v3041
  %v3990 = vpack.c.b16 %v3046, %v3044
  %v3991 = vpack.c.b16 %v3047, %v3045
  %v3992 = vpack.c.b16 %v3050, %v3048
  %v3993 = vpack.c.b16 %v3051, %v3049
  %v3994 = vpack.c.b16 %v3054, %v3052
  %v3995 = vpack.c.b16 %v3055, %v3053
  %v3996 = vpack.c.b16 %v3058, %v3056
  %v3997 = vpack.c.b16 %v3059, %v3057
  %v3998 = vpack.c.b16 %v3062, %v3060
  %v3999 = vpack.c.b16 %v3063, %v3061
  %v4000 = vpack.c.b16 %v3066, %v3064
  %v4001 = vpack.c.b16 %v3067, %v3065
  %v4002 = vpack.c.b16 %v3070, %v3068
  %v4003 = vpack.c.b16 %v3071, %v3069
  %v4004 = vpack.c.b16 %v3074, %v3072
  %v4005 = vpack.c.b16 %v3075, %v3073
  %v4006 = vpack.c.b16 %v3078, %v3076
  %v4007 = vpack.c.b16 %v3079, %v3077
  %v4008 = vpack.c.b16 %v3082, %v3080
  %v4009 = vpack.c.b16 %v3083, %v3081
  %v4010 = vpack.c.b16 %v3086, %v3084
  %v4011 = vpack.c.b16 %v3087, %v3085
  %v4012 = vpack.c.b16 %v3090, %v3088
  %v4013 = vpack.c.b16 %v3091, %v3089
  %v4014 = vpack.c.b16 %v3094, %v3092
  %v4015 = vpack.c.b16 %v3095, %v3093
  %v4016 = vpack.c.b16 %v3098, %v3096
  %v4017 = vpack.c.b16 %v3099, %v3097
  %v4018 = vpack.c.b16 %v3102, %v3100
  %v4019 = vpack.c.b16 %v3103, %v3101
  %v4020 = vpack.c.b16 %v3106, %v3104
  %v4021 = vpack.c.b16 %v3107, %v3105
  %v4022 = vpack.c.b16 %v3110, %v3108
  %v4023 = vpack.c.b16 %v3111, %v3109
  %v4024 = vpack.c.b16 %v3114, %v3112
  %v4025 = vpack.c.b16 %v3115, %v3113
  %v4026 = vpack.c.b16 %v3118, %v3116
  %v4027 = vpack.c.b16 %v3119, %v3117
  %v4028 = vpack.c.b16 %v3122, %v3120
  %v4029 = vpack.c.b16 %v3123, %v3121
  %v4030 = vpack.c.b16 %v3126, %v3124
  %v4031 = vpack.c.b16 %v3127, %v3125
  %v4032 = vpack.c.b16 %v3130, %v3128
  %v4033 = vpack.c.b16 %v3131, %v3129
  %v4034 = vpack.c.b16 %v3134, %v3132
  %v4035 = vpack.c.b16 %v3135, %v3133
  %v4036 = vpack.c.b16 %v3138, %v3136
  %v4037 = vpack.c.b16 %v3139, %v3137
  %v4038 = vpack.c.b16 %v3142, %v3140
  %v4039 = vpack.c.b16 %v3143, %v3141
  %v4040 = vpack.c.b16 %v3146, %v3144
  %v4041 = vpack.c.b16 %v3147, %v3145
  %v4042 = vpack.c.b16 %v3150, %v3148
  %v4043 = vpack.c.b16 %v3151, %v3149
  %v4044 = vpack.c.b16 %v3154, %v3152
  %v4045 = vpack.c.b16 %v3155, %v3153
  %v4046 = vpack.c.b16 %v3158, %v3156
  %v4047 = vpack.c.b16 %v3159, %v3157
  %v4048 = vpack.c.b16 %v3162, %v3160
  %v4049 = vpack.c.b16 %v3163, %v3161
  %v4050 = vpack.c.b16 %v3166, %v3164
  %v4051 = vpack.c.b16 %v3167, %v3165
  %v4052 = vpack.c.b16 %v3170, %v3168
  %v4053 = vpack.c.b16 %v3171, %v3169
  %v4054 = vpack.c.b16 %v3174, %v3172
  %v4055 = vpack.c.b16 %v3175, %v3173
  %v4056 = vpack.c.b16 %v3178, %v3176
  %v4057 = vpack.c.b16 %v3179, %v3177
  %v4058 = vpack.c.b16 %v3182, %v3180
  %v4059 = vpack.c.b16 %v3183, %v3181
  %v4060 = vpack.c.b16 %v3186, %v3184
  %v4061 = vpack.c.b16 %v3187, %v3185
  %v4062 = vpack.c.b16 %v3190, %v3188
  %v4063 = vpack.c.b16 %v3191, %v3189
  %v4064 = vpack.c.b16 %v3194, %v3192
  %v4065 = vpack.c.b16 %v3195, %v3193
  %v4066 = vpack.c.b16 %v3198, %v3196
  %v4067 = vpack.c.b16 %v3199, %v3197
  %v4068 = vpack.c.b16 %v3202, %v3200
  %v4069 = vpack.c.b16 %v3203, %v3201
  %v4070 = vpack.c.b16 %v3206, %v3204
  %v4071 = vpack.c.b16 %v3207, %v3205
  %v4072 = vpack.c.b16 %v3210, %v3208
  %v4073 = vpack.c.b16 %v3211, %v3209
  %v4074 = vpack.c.b16 %v3214, %v3212
  %v4075 = vpack.c.b16 %v3215, %v3213
  %v4076 = vpack.c.b16 %v3218, %v3216
  %v4077 = vpack.c.b16 %v3219, %v3217
  %v4078 = vpack.c.b16 %v3222, %v3220
  %v4079 = vpack.c.b16 %v3223, %v3221
  %v4080 = vpack.c.b16 %v3226, %v3224
  %v4081 = vpack.c.b16 %v3227, %v3225
  %v4082 = vpack.c.b16 %v3230, %v3228
  %v4083 = vpack.c.b16 %v3231, %v3229
  %v4084 = vpack.c.b16 %v3234, %v3232
  %v4085 = vpack.c.b16 %v3235, %v3233
  %v4086 = vpack.c.b16 %v3238, %v3236
  %v4087 = vpack.c.b16 %v3239, %v3237
  %v4088 = vpack.c.b16 %v3242, %v3240
  %v4089 = vpack.c.b16 %v3243, %v3241
  %v4090 = vpack.c.b16 %v3246, %v3244
  %v4091 = vpack.c.b16 %v3247, %v3245
  %v4092 = vpack.c.b16 %v3250, %v3248
  %v4093 = vpack.c.b16 %v3251, %v3249
  %v4094 = vpack.c.b16 %v3254, %v3252
  %v4095 = vpack.c.b16 %v3255, %v3253
  %v4096 = vpack.c.b16 %v3258, %v3256
  %v4097 = vpack.c.b16 %v3259, %v3257
  %v4098 = vpack.c.b16 %v3262, %v3260
  %v4099 = vpack.c.b16 %v3263, %v3261
  %v4100 = vpack.c.b16 %v3266, %v3264
  %v4101 = vpack.c.b16 %v3267, %v3265
  %v4102 = vpack.c.b16 %v3270, %v3268
  %v4103 = vpack.c.b16 %v3271, %v3269
  %v4104 = vpack.c.b16 %v3274, %v3272
  %v4105 = vpack.c.b16 %v3275, %v3273
  %v4106 = vpack.c.b16 %v3278, %v3276
  %v4107 = vpack.c.b16 %v3279, %v3277
  %v4108 = vpack.c.b16 %v3282, %v3280
  %v4109 = vpack.c.b16 %v3283, %v3281
  %v4110 = vpack.c.b16 %v3286, %v3284
  %v4111 = vpack.c.b16 %v3287, %v3285
  %v4112 = vpack.c.b16 %v3290, %v3288
  %v4113 = vpack.c.b16 %v3291, %v3289
  %v4114 = vpack.c.b16 %v3294, %v3292
  %v4115 = vpack.c.b16 %v3295, %v3293
  %v4116 = vpack.c.b16 %v3298, %v3296
  %v4117 = vpack.c.b16 %v3299, %v3297
  %v4118 = vpack.c.b16 %v3302, %v3300
  %v4119 = vpack.c.b16 %v3303, %v3301
  %v4120 = vpack.c.b16 %v3306, %v3304
  %v4121 = vpack.c.b16 %v3307, %v3305
  %v4122 = vpack.c.b16 %v3310, %v3308
  %v4123 = vpack.c.b16 %v3311, %v3309
  %v4124 = vpack.c.b16 %v3314, %v3312
  %v4125 = vpack.c.b16 %v3315, %v3313
  %v4126 = vpack.c.b16 %v3318, %v3316
  %v4127 = vpack.c.b16 %v3319, %v3317
  %v4128 = vpack.c.b16 %v3322, %v3320
  %v4129 = vpack.c.b16 %v3323, %v3321
  %v4130 = vpack.c.b16 %v3326, %v3324
  %v4131 = vpack.c.b16 %v3327, %v3325
  %v4132 = vpack.c.b16 %v3330, %v3328
  %v4133 = vpack.c.b16 %v3331, %v3329
  %v4134 = vpack.c.b16 %v3334, %v3332
  %v4135 = vpack.c.b16 %v3335, %v3333
  %v4136 = vpack.c.b16 %v3338, %v3336
  %v4137 = vpack.c.b16 %v3339, %v3337
  %v4138 = vpack.c.b16 %v3342, %v3340
  %v4139 = vpack.c.b16 %v3343, %v3341
  %v4140 = vpack.c.b16 %v3346, %v3344
  %v4141 = vpack.c.b16 %v3347, %v3345
  %v4142 = vpack.c.b16 %v3350, %v3348
  %v4143 = vpack.c.b16 %v3351, %v3349
  %v4144 = vpack.c.b16 %v3354, %v3352
  %v4145 = vpack.c.b16 %v3355, %v3353
  %v4146 = vpack.c.b16 %v3358, %v3356
  %v4147 = vpack.c.b16 %v3359, %v3357
  %v4148 = vpack.c.b16 %v3362, %v3360
  %v4149 = vpack.c.b16 %v3363, %v3361
  %v4150 = vpack.c.b16 %v3366, %v3364
  %v4151 = vpack.c.b16 %v3367, %v3365
  %4936 = vmatprep.subr.bf16.mxu0 %v3383
  %4937 = vmatpush1.bf16.msra.mxu0 %v3382
  %4938 = vmatprep.subr.bf16.mxu0 %v3381
  %4939 = vmatpush1.bf16.msra.mxu0 %v3380
  %4940 = vmatprep.subr.bf16.mxu0 %v3379
  %4941 = vmatpush1.bf16.msra.mxu0 %v3378
  %4942 = vmatprep.subr.bf16.mxu0 %v3377
  %4943 = vmatpush1.bf16.msra.mxu0 %v3376
  %4944 = vmatprep.subr.bf16.mxu0 %v3375
  %4945 = vmatpush1.bf16.msra.mxu0 %v3374
  %4946 = vmatprep.subr.bf16.mxu0 %v3373
  %4947 = vmatpush1.bf16.msra.mxu0 %v3372
  %4948 = vmatprep.subr.bf16.mxu0 %v3371
  %4949 = vmatpush1.bf16.msra.mxu0 %v3370
  %4950 = vmatprep.subr.bf16.mxu0 %v3369
  %4951 = vmatpush1.bf16.msra.mxu0 %v3368
  %4952 = vmatprep.subr.bf16.mxu0 %v3399
  %4953 = vmatpush2.bf16.msra.mxu0 %v3398
  %4954 = vmatprep.subr.bf16.mxu0 %v3397
  %4955 = vmatpush2.bf16.msra.mxu0 %v3396
  %4956 = vmatprep.subr.bf16.mxu0 %v3395
  %4957 = vmatpush2.bf16.msra.mxu0 %v3394
  %4958 = vmatprep.subr.bf16.mxu0 %v3393
  %4959 = vmatpush2.bf16.msra.mxu0 %v3392
  %4960 = vmatprep.subr.bf16.mxu0 %v3391
  %4961 = vmatpush2.bf16.msra.mxu0 %v3390
  %4962 = vmatprep.subr.bf16.mxu0 %v3389
  %4963 = vmatpush2.bf16.msra.mxu0 %v3388
  %4964 = vmatprep.subr.bf16.mxu0 %v3387
  %4965 = vmatpush2.bf16.msra.mxu0 %v3386
  %4966 = vmatprep.subr.bf16.mxu0 %v3385
  %4967 = vmatpush2.bf16.msra.mxu0 %v3384
  %4968 = vmatprep.mubr.bf16.mxu0 %v919
  %4969 = vmatmul.mubr.bf16.gmra.mxu0 %v918
  %v4970 = vpop.f32.mrf.mxu0
  %v4971 = vadd.f32 %v837, %v4970
  %v4972 = vpop.f32.mrf.mxu0
  %v4973 = vadd.f32 %v841, %v4972
  %v4974 = vpop.f32.mrf.mxu0
  %v4975 = vpop.f32.mrf.mxu0
  %4976 = vdwg.mxu0
  %4977 = vmatprep.subr.bf16.mxu0 %v3415
  %4978 = vmatpush1.bf16.msra.mxu0 %v3414
  %4979 = vmatprep.subr.bf16.mxu0 %v3413
  %4980 = vmatpush1.bf16.msra.mxu0 %v3412
  %4981 = vmatprep.subr.bf16.mxu0 %v3411
  %4982 = vmatpush1.bf16.msra.mxu0 %v3410
  %4983 = vmatprep.subr.bf16.mxu0 %v3409
  %4984 = vmatpush1.bf16.msra.mxu0 %v3408
  %4985 = vmatprep.subr.bf16.mxu0 %v3407
  %4986 = vmatpush1.bf16.msra.mxu0 %v3406
  %4987 = vmatprep.subr.bf16.mxu0 %v3405
  %4988 = vmatpush1.bf16.msra.mxu0 %v3404
  %4989 = vmatprep.subr.bf16.mxu0 %v3403
  %4990 = vmatpush1.bf16.msra.mxu0 %v3402
  %4991 = vmatprep.subr.bf16.mxu0 %v3401
  %4992 = vmatpush1.bf16.msra.mxu0 %v3400
  %4993 = vmatprep.subr.bf16.mxu0 %v3431
  %4994 = vmatpush2.bf16.msra.mxu0 %v3430
  %4995 = vmatprep.subr.bf16.mxu0 %v3429
  %4996 = vmatpush2.bf16.msra.mxu0 %v3428
  %4997 = vmatprep.subr.bf16.mxu0 %v3427
  %4998 = vmatpush2.bf16.msra.mxu0 %v3426
  %4999 = vmatprep.subr.bf16.mxu0 %v3425
  %5000 = vmatpush2.bf16.msra.mxu0 %v3424
  %5001 = vmatprep.subr.bf16.mxu0 %v3423
  %5002 = vmatpush2.bf16.msra.mxu0 %v3422
  %5003 = vmatprep.subr.bf16.mxu0 %v3421
  %5004 = vmatpush2.bf16.msra.mxu0 %v3420
  %5005 = vmatprep.subr.bf16.mxu0 %v3419
  %5006 = vmatpush2.bf16.msra.mxu0 %v3418
  %5007 = vmatprep.subr.bf16.mxu0 %v3417
  %5008 = vmatpush2.bf16.msra.mxu0 %v3416
  %5009 = vmatprep.mubr.bf16.mxu0 %v921
  %5010 = vmatmul.mubr.bf16.gmra.mxu0 %v920
  %v5011 = vpop.f32.mrf.mxu0
  %v5012 = vadd.f32 %v4971, %v5011
  %v5013 = vpop.f32.mrf.mxu0
  %v5014 = vadd.f32 %v4973, %v5013
  %v5015 = vpop.f32.mrf.mxu0
  %v5016 = vpop.f32.mrf.mxu0
  %5017 = vdwg.mxu0
  %5018 = vmatprep.subr.bf16.mxu0 %v3447
  %5019 = vmatpush1.bf16.msra.mxu0 %v3446
  %5020 = vmatprep.subr.bf16.mxu0 %v3445
  %5021 = vmatpush1.bf16.msra.mxu0 %v3444
  %5022 = vmatprep.subr.bf16.mxu0 %v3443
  %5023 = vmatpush1.bf16.msra.mxu0 %v3442
  %5024 = vmatprep.subr.bf16.mxu0 %v3441
  %5025 = vmatpush1.bf16.msra.mxu0 %v3440
  %5026 = vmatprep.subr.bf16.mxu0 %v3439
  %5027 = vmatpush1.bf16.msra.mxu0 %v3438
  %5028 = vmatprep.subr.bf16.mxu0 %v3437
  %5029 = vmatpush1.bf16.msra.mxu0 %v3436
  %5030 = vmatprep.subr.bf16.mxu0 %v3435
  %5031 = vmatpush1.bf16.msra.mxu0 %v3434
  %5032 = vmatprep.subr.bf16.mxu0 %v3433
  %5033 = vmatpush1.bf16.msra.mxu0 %v3432
  %5034 = vmatprep.subr.bf16.mxu0 %v3463
  %5035 = vmatpush2.bf16.msra.mxu0 %v3462
  %5036 = vmatprep.subr.bf16.mxu0 %v3461
  %5037 = vmatpush2.bf16.msra.mxu0 %v3460
  %5038 = vmatprep.subr.bf16.mxu0 %v3459
  %5039 = vmatpush2.bf16.msra.mxu0 %v3458
  %5040 = vmatprep.subr.bf16.mxu0 %v3457
  %5041 = vmatpush2.bf16.msra.mxu0 %v3456
  %5042 = vmatprep.subr.bf16.mxu0 %v3455
  %5043 = vmatpush2.bf16.msra.mxu0 %v3454
  %5044 = vmatprep.subr.bf16.mxu0 %v3453
  %5045 = vmatpush2.bf16.msra.mxu0 %v3452
  %5046 = vmatprep.subr.bf16.mxu0 %v3451
  %5047 = vmatpush2.bf16.msra.mxu0 %v3450
  %5048 = vmatprep.subr.bf16.mxu0 %v3449
  %5049 = vmatpush2.bf16.msra.mxu0 %v3448
  %5050 = vmatprep.mubr.bf16.mxu0 %v923
  %5051 = vmatmul.mubr.bf16.gmra.mxu0 %v922
  %v5052 = vpop.f32.mrf.mxu0
  %v5053 = vadd.f32 %v5012, %v5052
  %v5054 = vpop.f32.mrf.mxu0
  %v5055 = vadd.f32 %v5014, %v5054
  %v5056 = vpop.f32.mrf.mxu0
  %v5057 = vpop.f32.mrf.mxu0
  %5058 = vdwg.mxu0
  %5059 = vmatprep.subr.bf16.mxu0 %v3479
  %5060 = vmatpush1.bf16.msra.mxu0 %v3478
  %5061 = vmatprep.subr.bf16.mxu0 %v3477
  %5062 = vmatpush1.bf16.msra.mxu0 %v3476
  %5063 = vmatprep.subr.bf16.mxu0 %v3475
  %5064 = vmatpush1.bf16.msra.mxu0 %v3474
  %5065 = vmatprep.subr.bf16.mxu0 %v3473
  %5066 = vmatpush1.bf16.msra.mxu0 %v3472
  %5067 = vmatprep.subr.bf16.mxu0 %v3471
  %5068 = vmatpush1.bf16.msra.mxu0 %v3470
  %5069 = vmatprep.subr.bf16.mxu0 %v3469
  %5070 = vmatpush1.bf16.msra.mxu0 %v3468
  %5071 = vmatprep.subr.bf16.mxu0 %v3467
  %5072 = vmatpush1.bf16.msra.mxu0 %v3466
  %5073 = vmatprep.subr.bf16.mxu0 %v3465
  %5074 = vmatpush1.bf16.msra.mxu0 %v3464
  %5075 = vmatprep.subr.bf16.mxu0 %v3495
  %5076 = vmatpush2.bf16.msra.mxu0 %v3494
  %5077 = vmatprep.subr.bf16.mxu0 %v3493
  %5078 = vmatpush2.bf16.msra.mxu0 %v3492
  %5079 = vmatprep.subr.bf16.mxu0 %v3491
  %5080 = vmatpush2.bf16.msra.mxu0 %v3490
  %5081 = vmatprep.subr.bf16.mxu0 %v3489
  %5082 = vmatpush2.bf16.msra.mxu0 %v3488
  %5083 = vmatprep.subr.bf16.mxu0 %v3487
  %5084 = vmatpush2.bf16.msra.mxu0 %v3486
  %5085 = vmatprep.subr.bf16.mxu0 %v3485
  %5086 = vmatpush2.bf16.msra.mxu0 %v3484
  %5087 = vmatprep.subr.bf16.mxu0 %v3483
  %5088 = vmatpush2.bf16.msra.mxu0 %v3482
  %5089 = vmatprep.subr.bf16.mxu0 %v3481
  %5090 = vmatpush2.bf16.msra.mxu0 %v3480
  %5091 = vmatprep.mubr.bf16.mxu0 %v925
  %5092 = vmatmul.mubr.bf16.gmra.mxu0 %v924
  %v5093 = vpop.f32.mrf.mxu0
  %v5094 = vadd.f32 %v5053, %v5093
  %v5095 = vpop.f32.mrf.mxu0
  %v5096 = vadd.f32 %v5055, %v5095
  %v5097 = vpop.f32.mrf.mxu0
  %v5098 = vpop.f32.mrf.mxu0
  %5099 = vdwg.mxu0
  %5100 = vmatprep.subr.bf16.mxu0 %v3511
  %5101 = vmatpush1.bf16.msra.mxu0 %v3510
  %5102 = vmatprep.subr.bf16.mxu0 %v3509
  %5103 = vmatpush1.bf16.msra.mxu0 %v3508
  %5104 = vmatprep.subr.bf16.mxu0 %v3507
  %5105 = vmatpush1.bf16.msra.mxu0 %v3506
  %5106 = vmatprep.subr.bf16.mxu0 %v3505
  %5107 = vmatpush1.bf16.msra.mxu0 %v3504
  %5108 = vmatprep.subr.bf16.mxu0 %v3503
  %5109 = vmatpush1.bf16.msra.mxu0 %v3502
  %5110 = vmatprep.subr.bf16.mxu0 %v3501
  %5111 = vmatpush1.bf16.msra.mxu0 %v3500
  %5112 = vmatprep.subr.bf16.mxu0 %v3499
  %5113 = vmatpush1.bf16.msra.mxu0 %v3498
  %5114 = vmatprep.subr.bf16.mxu0 %v3497
  %5115 = vmatpush1.bf16.msra.mxu0 %v3496
  %5116 = vmatprep.subr.bf16.mxu0 %v3527
  %5117 = vmatpush2.bf16.msra.mxu0 %v3526
  %5118 = vmatprep.subr.bf16.mxu0 %v3525
  %5119 = vmatpush2.bf16.msra.mxu0 %v3524
  %5120 = vmatprep.subr.bf16.mxu0 %v3523
  %5121 = vmatpush2.bf16.msra.mxu0 %v3522
  %5122 = vmatprep.subr.bf16.mxu0 %v3521
  %5123 = vmatpush2.bf16.msra.mxu0 %v3520
  %5124 = vmatprep.subr.bf16.mxu0 %v3519
  %5125 = vmatpush2.bf16.msra.mxu0 %v3518
  %5126 = vmatprep.subr.bf16.mxu0 %v3517
  %5127 = vmatpush2.bf16.msra.mxu0 %v3516
  %5128 = vmatprep.subr.bf16.mxu0 %v3515
  %5129 = vmatpush2.bf16.msra.mxu0 %v3514
  %5130 = vmatprep.subr.bf16.mxu0 %v3513
  %5131 = vmatpush2.bf16.msra.mxu0 %v3512
  %5132 = vmatprep.mubr.bf16.mxu0 %v927
  %5133 = vmatmul.mubr.bf16.gmra.mxu0 %v926
  %v5134 = vpop.f32.mrf.mxu0
  %v5135 = vadd.f32 %v5094, %v5134
  %v5136 = vpop.f32.mrf.mxu0
  %v5137 = vadd.f32 %v5096, %v5136
  %v5138 = vpop.f32.mrf.mxu0
  %v5139 = vpop.f32.mrf.mxu0
  %5140 = vdwg.mxu0
  %5141 = vmatprep.subr.bf16.mxu0 %v3543
  %5142 = vmatpush1.bf16.msra.mxu0 %v3542
  %5143 = vmatprep.subr.bf16.mxu0 %v3541
  %5144 = vmatpush1.bf16.msra.mxu0 %v3540
  %5145 = vmatprep.subr.bf16.mxu0 %v3539
  %5146 = vmatpush1.bf16.msra.mxu0 %v3538
  %5147 = vmatprep.subr.bf16.mxu0 %v3537
  %5148 = vmatpush1.bf16.msra.mxu0 %v3536
  %5149 = vmatprep.subr.bf16.mxu0 %v3535
  %5150 = vmatpush1.bf16.msra.mxu0 %v3534
  %5151 = vmatprep.subr.bf16.mxu0 %v3533
  %5152 = vmatpush1.bf16.msra.mxu0 %v3532
  %5153 = vmatprep.subr.bf16.mxu0 %v3531
  %5154 = vmatpush1.bf16.msra.mxu0 %v3530
  %5155 = vmatprep.subr.bf16.mxu0 %v3529
  %5156 = vmatpush1.bf16.msra.mxu0 %v3528
  %5157 = vmatprep.subr.bf16.mxu0 %v3559
  %5158 = vmatpush2.bf16.msra.mxu0 %v3558
  %5159 = vmatprep.subr.bf16.mxu0 %v3557
  %5160 = vmatpush2.bf16.msra.mxu0 %v3556
  %5161 = vmatprep.subr.bf16.mxu0 %v3555
  %5162 = vmatpush2.bf16.msra.mxu0 %v3554
  %5163 = vmatprep.subr.bf16.mxu0 %v3553
  %5164 = vmatpush2.bf16.msra.mxu0 %v3552
  %5165 = vmatprep.subr.bf16.mxu0 %v3551
  %5166 = vmatpush2.bf16.msra.mxu0 %v3550
  %5167 = vmatprep.subr.bf16.mxu0 %v3549
  %5168 = vmatpush2.bf16.msra.mxu0 %v3548
  %5169 = vmatprep.subr.bf16.mxu0 %v3547
  %5170 = vmatpush2.bf16.msra.mxu0 %v3546
  %5171 = vmatprep.subr.bf16.mxu0 %v3545
  %5172 = vmatpush2.bf16.msra.mxu0 %v3544
  %5173 = vmatprep.mubr.bf16.mxu0 %v929
  %5174 = vmatmul.mubr.bf16.gmra.mxu0 %v928
  %v5175 = vpop.f32.mrf.mxu0
  %v5176 = vadd.f32 %v5135, %v5175
  %v5177 = vpop.f32.mrf.mxu0
  %v5178 = vadd.f32 %v5137, %v5177
  %v5179 = vpop.f32.mrf.mxu0
  %v5180 = vpop.f32.mrf.mxu0
  %5181 = vdwg.mxu0
  %5182 = vmatprep.subr.bf16.mxu0 %v3575
  %5183 = vmatpush1.bf16.msra.mxu0 %v3574
  %5184 = vmatprep.subr.bf16.mxu0 %v3573
  %5185 = vmatpush1.bf16.msra.mxu0 %v3572
  %5186 = vmatprep.subr.bf16.mxu0 %v3571
  %5187 = vmatpush1.bf16.msra.mxu0 %v3570
  %5188 = vmatprep.subr.bf16.mxu0 %v3569
  %5189 = vmatpush1.bf16.msra.mxu0 %v3568
  %5190 = vmatprep.subr.bf16.mxu0 %v3567
  %5191 = vmatpush1.bf16.msra.mxu0 %v3566
  %5192 = vmatprep.subr.bf16.mxu0 %v3565
  %5193 = vmatpush1.bf16.msra.mxu0 %v3564
  %5194 = vmatprep.subr.bf16.mxu0 %v3563
  %5195 = vmatpush1.bf16.msra.mxu0 %v3562
  %5196 = vmatprep.subr.bf16.mxu0 %v3561
  %5197 = vmatpush1.bf16.msra.mxu0 %v3560
  %5198 = vmatprep.subr.bf16.mxu0 %v3591
  %5199 = vmatpush2.bf16.msra.mxu0 %v3590
  %5200 = vmatprep.subr.bf16.mxu0 %v3589
  %5201 = vmatpush2.bf16.msra.mxu0 %v3588
  %5202 = vmatprep.subr.bf16.mxu0 %v3587
  %5203 = vmatpush2.bf16.msra.mxu0 %v3586
  %5204 = vmatprep.subr.bf16.mxu0 %v3585
  %5205 = vmatpush2.bf16.msra.mxu0 %v3584
  %5206 = vmatprep.subr.bf16.mxu0 %v3583
  %5207 = vmatpush2.bf16.msra.mxu0 %v3582
  %5208 = vmatprep.subr.bf16.mxu0 %v3581
  %5209 = vmatpush2.bf16.msra.mxu0 %v3580
  %5210 = vmatprep.subr.bf16.mxu0 %v3579
  %5211 = vmatpush2.bf16.msra.mxu0 %v3578
  %5212 = vmatprep.subr.bf16.mxu0 %v3577
  %5213 = vmatpush2.bf16.msra.mxu0 %v3576
  %5214 = vmatprep.mubr.bf16.mxu0 %v931
  %5215 = vmatmul.mubr.bf16.gmra.mxu0 %v930
  %v5216 = vpop.f32.mrf.mxu0
  %v5217 = vadd.f32 %v5176, %v5216
  %v5218 = vpop.f32.mrf.mxu0
  %v5219 = vadd.f32 %v5178, %v5218
  %v5220 = vpop.f32.mrf.mxu0
  %v5221 = vpop.f32.mrf.mxu0
  %5222 = vdwg.mxu0
  %5223 = vmatprep.subr.bf16.mxu0 %v3607
  %5224 = vmatpush1.bf16.msra.mxu0 %v3606
  %5225 = vmatprep.subr.bf16.mxu0 %v3605
  %5226 = vmatpush1.bf16.msra.mxu0 %v3604
  %5227 = vmatprep.subr.bf16.mxu0 %v3603
  %5228 = vmatpush1.bf16.msra.mxu0 %v3602
  %5229 = vmatprep.subr.bf16.mxu0 %v3601
  %5230 = vmatpush1.bf16.msra.mxu0 %v3600
  %5231 = vmatprep.subr.bf16.mxu0 %v3599
  %5232 = vmatpush1.bf16.msra.mxu0 %v3598
  %5233 = vmatprep.subr.bf16.mxu0 %v3597
  %5234 = vmatpush1.bf16.msra.mxu0 %v3596
  %5235 = vmatprep.subr.bf16.mxu0 %v3595
  %5236 = vmatpush1.bf16.msra.mxu0 %v3594
  %5237 = vmatprep.subr.bf16.mxu0 %v3593
  %5238 = vmatpush1.bf16.msra.mxu0 %v3592
  %5239 = vmatprep.subr.bf16.mxu0 %v3623
  %5240 = vmatpush2.bf16.msra.mxu0 %v3622
  %5241 = vmatprep.subr.bf16.mxu0 %v3621
  %5242 = vmatpush2.bf16.msra.mxu0 %v3620
  %5243 = vmatprep.subr.bf16.mxu0 %v3619
  %5244 = vmatpush2.bf16.msra.mxu0 %v3618
  %5245 = vmatprep.subr.bf16.mxu0 %v3617
  %5246 = vmatpush2.bf16.msra.mxu0 %v3616
  %5247 = vmatprep.subr.bf16.mxu0 %v3615
  %5248 = vmatpush2.bf16.msra.mxu0 %v3614
  %5249 = vmatprep.subr.bf16.mxu0 %v3613
  %5250 = vmatpush2.bf16.msra.mxu0 %v3612
  %5251 = vmatprep.subr.bf16.mxu0 %v3611
  %5252 = vmatpush2.bf16.msra.mxu0 %v3610
  %5253 = vmatprep.subr.bf16.mxu0 %v3609
  %5254 = vmatpush2.bf16.msra.mxu0 %v3608
  %5255 = vmatprep.mubr.bf16.mxu0 %v933
  %5256 = vmatmul.mubr.bf16.gmra.mxu0 %v932
  %v5257 = vpop.f32.mrf.mxu0
  %v5258 = vadd.f32 %v5217, %v5257
  %v5259 = vpop.f32.mrf.mxu0
  %v5260 = vadd.f32 %v5219, %v5259
  %v5261 = vpop.f32.mrf.mxu0
  %v5262 = vpop.f32.mrf.mxu0
  %5263 = vdwg.mxu0
  %5264 = vmatprep.subr.bf16.mxu0 %v3639
  %5265 = vmatpush1.bf16.msra.mxu0 %v3638
  %5266 = vmatprep.subr.bf16.mxu0 %v3637
  %5267 = vmatpush1.bf16.msra.mxu0 %v3636
  %5268 = vmatprep.subr.bf16.mxu0 %v3635
  %5269 = vmatpush1.bf16.msra.mxu0 %v3634
  %5270 = vmatprep.subr.bf16.mxu0 %v3633
  %5271 = vmatpush1.bf16.msra.mxu0 %v3632
  %5272 = vmatprep.subr.bf16.mxu0 %v3631
  %5273 = vmatpush1.bf16.msra.mxu0 %v3630
  %5274 = vmatprep.subr.bf16.mxu0 %v3629
  %5275 = vmatpush1.bf16.msra.mxu0 %v3628
  %5276 = vmatprep.subr.bf16.mxu0 %v3627
  %5277 = vmatpush1.bf16.msra.mxu0 %v3626
  %5278 = vmatprep.subr.bf16.mxu0 %v3625
  %5279 = vmatpush1.bf16.msra.mxu0 %v3624
  %5280 = vmatprep.subr.bf16.mxu0 %v3655
  %5281 = vmatpush2.bf16.msra.mxu0 %v3654
  %5282 = vmatprep.subr.bf16.mxu0 %v3653
  %5283 = vmatpush2.bf16.msra.mxu0 %v3652
  %5284 = vmatprep.subr.bf16.mxu0 %v3651
  %5285 = vmatpush2.bf16.msra.mxu0 %v3650
  %5286 = vmatprep.subr.bf16.mxu0 %v3649
  %5287 = vmatpush2.bf16.msra.mxu0 %v3648
  %5288 = vmatprep.subr.bf16.mxu0 %v3647
  %5289 = vmatpush2.bf16.msra.mxu0 %v3646
  %5290 = vmatprep.subr.bf16.mxu0 %v3645
  %5291 = vmatpush2.bf16.msra.mxu0 %v3644
  %5292 = vmatprep.subr.bf16.mxu0 %v3643
  %5293 = vmatpush2.bf16.msra.mxu0 %v3642
  %5294 = vmatprep.subr.bf16.mxu0 %v3641
  %5295 = vmatpush2.bf16.msra.mxu0 %v3640
  %5296 = vmatprep.mubr.bf16.mxu0 %v935
  %5297 = vmatmul.mubr.bf16.gmra.mxu0 %v934
  %v5298 = vpop.f32.mrf.mxu0
  %v5299 = vadd.f32 %v5258, %v5298
  %v5300 = vpop.f32.mrf.mxu0
  %v5301 = vadd.f32 %v5260, %v5300
  %v5302 = vpop.f32.mrf.mxu0
  %v5303 = vpop.f32.mrf.mxu0
  %5304 = vdwg.mxu0
  %5305 = vmatprep.subr.bf16.mxu0 %v3671
  %5306 = vmatpush1.bf16.msra.mxu0 %v3670
  %5307 = vmatprep.subr.bf16.mxu0 %v3669
  %5308 = vmatpush1.bf16.msra.mxu0 %v3668
  %5309 = vmatprep.subr.bf16.mxu0 %v3667
  %5310 = vmatpush1.bf16.msra.mxu0 %v3666
  %5311 = vmatprep.subr.bf16.mxu0 %v3665
  %5312 = vmatpush1.bf16.msra.mxu0 %v3664
  %5313 = vmatprep.subr.bf16.mxu0 %v3663
  %5314 = vmatpush1.bf16.msra.mxu0 %v3662
  %5315 = vmatprep.subr.bf16.mxu0 %v3661
  %5316 = vmatpush1.bf16.msra.mxu0 %v3660
  %5317 = vmatprep.subr.bf16.mxu0 %v3659
  %5318 = vmatpush1.bf16.msra.mxu0 %v3658
  %5319 = vmatprep.subr.bf16.mxu0 %v3657
  %5320 = vmatpush1.bf16.msra.mxu0 %v3656
  %5321 = vmatprep.subr.bf16.mxu0 %v3687
  %5322 = vmatpush2.bf16.msra.mxu0 %v3686
  %5323 = vmatprep.subr.bf16.mxu0 %v3685
  %5324 = vmatpush2.bf16.msra.mxu0 %v3684
  %5325 = vmatprep.subr.bf16.mxu0 %v3683
  %5326 = vmatpush2.bf16.msra.mxu0 %v3682
  %5327 = vmatprep.subr.bf16.mxu0 %v3681
  %5328 = vmatpush2.bf16.msra.mxu0 %v3680
  %5329 = vmatprep.subr.bf16.mxu0 %v3679
  %5330 = vmatpush2.bf16.msra.mxu0 %v3678
  %5331 = vmatprep.subr.bf16.mxu0 %v3677
  %5332 = vmatpush2.bf16.msra.mxu0 %v3676
  %5333 = vmatprep.subr.bf16.mxu0 %v3675
  %5334 = vmatpush2.bf16.msra.mxu0 %v3674
  %5335 = vmatprep.subr.bf16.mxu0 %v3673
  %5336 = vmatpush2.bf16.msra.mxu0 %v3672
  %5337 = vmatprep.mubr.bf16.mxu0 %v937
  %5338 = vmatmul.mubr.bf16.gmra.mxu0 %v936
  %v5339 = vpop.f32.mrf.mxu0
  %v5340 = vadd.f32 %v5299, %v5339
  %v5341 = vpop.f32.mrf.mxu0
  %v5342 = vadd.f32 %v5301, %v5341
  %v5343 = vpop.f32.mrf.mxu0
  %v5344 = vpop.f32.mrf.mxu0
  %5345 = vdwg.mxu0
  %5346 = vmatprep.subr.bf16.mxu0 %v3703
  %5347 = vmatpush1.bf16.msra.mxu0 %v3702
  %5348 = vmatprep.subr.bf16.mxu0 %v3701
  %5349 = vmatpush1.bf16.msra.mxu0 %v3700
  %5350 = vmatprep.subr.bf16.mxu0 %v3699
  %5351 = vmatpush1.bf16.msra.mxu0 %v3698
  %5352 = vmatprep.subr.bf16.mxu0 %v3697
  %5353 = vmatpush1.bf16.msra.mxu0 %v3696
  %5354 = vmatprep.subr.bf16.mxu0 %v3695
  %5355 = vmatpush1.bf16.msra.mxu0 %v3694
  %5356 = vmatprep.subr.bf16.mxu0 %v3693
  %5357 = vmatpush1.bf16.msra.mxu0 %v3692
  %5358 = vmatprep.subr.bf16.mxu0 %v3691
  %5359 = vmatpush1.bf16.msra.mxu0 %v3690
  %5360 = vmatprep.subr.bf16.mxu0 %v3689
  %5361 = vmatpush1.bf16.msra.mxu0 %v3688
  %5362 = vmatprep.subr.bf16.mxu0 %v3719
  %5363 = vmatpush2.bf16.msra.mxu0 %v3718
  %5364 = vmatprep.subr.bf16.mxu0 %v3717
  %5365 = vmatpush2.bf16.msra.mxu0 %v3716
  %5366 = vmatprep.subr.bf16.mxu0 %v3715
  %5367 = vmatpush2.bf16.msra.mxu0 %v3714
  %5368 = vmatprep.subr.bf16.mxu0 %v3713
  %5369 = vmatpush2.bf16.msra.mxu0 %v3712
  %5370 = vmatprep.subr.bf16.mxu0 %v3711
  %5371 = vmatpush2.bf16.msra.mxu0 %v3710
  %5372 = vmatprep.subr.bf16.mxu0 %v3709
  %5373 = vmatpush2.bf16.msra.mxu0 %v3708
  %5374 = vmatprep.subr.bf16.mxu0 %v3707
  %5375 = vmatpush2.bf16.msra.mxu0 %v3706
  %5376 = vmatprep.subr.bf16.mxu0 %v3705
  %5377 = vmatpush2.bf16.msra.mxu0 %v3704
  %5378 = vmatprep.mubr.bf16.mxu0 %v939
  %5379 = vmatmul.mubr.bf16.gmra.mxu0 %v938
  %v5380 = vpop.f32.mrf.mxu0
  %v5381 = vadd.f32 %v5340, %v5380
  %v5382 = vpop.f32.mrf.mxu0
  %v5383 = vadd.f32 %v5342, %v5382
  %v5384 = vpop.f32.mrf.mxu0
  %v5385 = vpop.f32.mrf.mxu0
  %5386 = vdwg.mxu0
  %5387 = vmatprep.subr.bf16.mxu0 %v3735
  %5388 = vmatpush1.bf16.msra.mxu0 %v3734
  %5389 = vmatprep.subr.bf16.mxu0 %v3733
  %5390 = vmatpush1.bf16.msra.mxu0 %v3732
  %5391 = vmatprep.subr.bf16.mxu0 %v3731
  %5392 = vmatpush1.bf16.msra.mxu0 %v3730
  %5393 = vmatprep.subr.bf16.mxu0 %v3729
  %5394 = vmatpush1.bf16.msra.mxu0 %v3728
  %5395 = vmatprep.subr.bf16.mxu0 %v3727
  %5396 = vmatpush1.bf16.msra.mxu0 %v3726
  %5397 = vmatprep.subr.bf16.mxu0 %v3725
  %5398 = vmatpush1.bf16.msra.mxu0 %v3724
  %5399 = vmatprep.subr.bf16.mxu0 %v3723
  %5400 = vmatpush1.bf16.msra.mxu0 %v3722
  %5401 = vmatprep.subr.bf16.mxu0 %v3721
  %5402 = vmatpush1.bf16.msra.mxu0 %v3720
  %5403 = vmatprep.subr.bf16.mxu0 %v3751
  %5404 = vmatpush2.bf16.msra.mxu0 %v3750
  %5405 = vmatprep.subr.bf16.mxu0 %v3749
  %5406 = vmatpush2.bf16.msra.mxu0 %v3748
  %5407 = vmatprep.subr.bf16.mxu0 %v3747
  %5408 = vmatpush2.bf16.msra.mxu0 %v3746
  %5409 = vmatprep.subr.bf16.mxu0 %v3745
  %5410 = vmatpush2.bf16.msra.mxu0 %v3744
  %5411 = vmatprep.subr.bf16.mxu0 %v3743
  %5412 = vmatpush2.bf16.msra.mxu0 %v3742
  %5413 = vmatprep.subr.bf16.mxu0 %v3741
  %5414 = vmatpush2.bf16.msra.mxu0 %v3740
  %5415 = vmatprep.subr.bf16.mxu0 %v3739
  %5416 = vmatpush2.bf16.msra.mxu0 %v3738
  %5417 = vmatprep.subr.bf16.mxu0 %v3737
  %5418 = vmatpush2.bf16.msra.mxu0 %v3736
  %5419 = vmatprep.mubr.bf16.mxu0 %v941
  %5420 = vmatmul.mubr.bf16.gmra.mxu0 %v940
  %v5421 = vpop.f32.mrf.mxu0
  %v5422 = vadd.f32 %v5381, %v5421
  %v5423 = vpop.f32.mrf.mxu0
  %v5424 = vadd.f32 %v5383, %v5423
  %v5425 = vpop.f32.mrf.mxu0
  %v5426 = vpop.f32.mrf.mxu0
  %5427 = vdwg.mxu0
  %5428 = vmatprep.subr.bf16.mxu0 %v3767
  %5429 = vmatpush1.bf16.msra.mxu0 %v3766
  %5430 = vmatprep.subr.bf16.mxu0 %v3765
  %5431 = vmatpush1.bf16.msra.mxu0 %v3764
  %5432 = vmatprep.subr.bf16.mxu0 %v3763
  %5433 = vmatpush1.bf16.msra.mxu0 %v3762
  %5434 = vmatprep.subr.bf16.mxu0 %v3761
  %5435 = vmatpush1.bf16.msra.mxu0 %v3760
  %5436 = vmatprep.subr.bf16.mxu0 %v3759
  %5437 = vmatpush1.bf16.msra.mxu0 %v3758
  %5438 = vmatprep.subr.bf16.mxu0 %v3757
  %5439 = vmatpush1.bf16.msra.mxu0 %v3756
  %5440 = vmatprep.subr.bf16.mxu0 %v3755
  %5441 = vmatpush1.bf16.msra.mxu0 %v3754
  %5442 = vmatprep.subr.bf16.mxu0 %v3753
  %5443 = vmatpush1.bf16.msra.mxu0 %v3752
  %5444 = vmatprep.subr.bf16.mxu0 %v3783
  %5445 = vmatpush2.bf16.msra.mxu0 %v3782
  %5446 = vmatprep.subr.bf16.mxu0 %v3781
  %5447 = vmatpush2.bf16.msra.mxu0 %v3780
  %5448 = vmatprep.subr.bf16.mxu0 %v3779
  %5449 = vmatpush2.bf16.msra.mxu0 %v3778
  %5450 = vmatprep.subr.bf16.mxu0 %v3777
  %5451 = vmatpush2.bf16.msra.mxu0 %v3776
  %5452 = vmatprep.subr.bf16.mxu0 %v3775
  %5453 = vmatpush2.bf16.msra.mxu0 %v3774
  %5454 = vmatprep.subr.bf16.mxu0 %v3773
  %5455 = vmatpush2.bf16.msra.mxu0 %v3772
  %5456 = vmatprep.subr.bf16.mxu0 %v3771
  %5457 = vmatpush2.bf16.msra.mxu0 %v3770
  %5458 = vmatprep.subr.bf16.mxu0 %v3769
  %5459 = vmatpush2.bf16.msra.mxu0 %v3768
  %5460 = vmatprep.mubr.bf16.mxu0 %v943
  %5461 = vmatmul.mubr.bf16.gmra.mxu0 %v942
  %v5462 = vpop.f32.mrf.mxu0
  %v5463 = vadd.f32 %v5422, %v5462
  %v5464 = vpop.f32.mrf.mxu0
  %v5465 = vadd.f32 %v5424, %v5464
  %v5466 = vpop.f32.mrf.mxu0
  %v5467 = vpop.f32.mrf.mxu0
  %5468 = vdwg.mxu0
  %5469 = vmatprep.subr.bf16.mxu0 %v3799
  %5470 = vmatpush1.bf16.msra.mxu0 %v3798
  %5471 = vmatprep.subr.bf16.mxu0 %v3797
  %5472 = vmatpush1.bf16.msra.mxu0 %v3796
  %5473 = vmatprep.subr.bf16.mxu0 %v3795
  %5474 = vmatpush1.bf16.msra.mxu0 %v3794
  %5475 = vmatprep.subr.bf16.mxu0 %v3793
  %5476 = vmatpush1.bf16.msra.mxu0 %v3792
  %5477 = vmatprep.subr.bf16.mxu0 %v3791
  %5478 = vmatpush1.bf16.msra.mxu0 %v3790
  %5479 = vmatprep.subr.bf16.mxu0 %v3789
  %5480 = vmatpush1.bf16.msra.mxu0 %v3788
  %5481 = vmatprep.subr.bf16.mxu0 %v3787
  %5482 = vmatpush1.bf16.msra.mxu0 %v3786
  %5483 = vmatprep.subr.bf16.mxu0 %v3785
  %5484 = vmatpush1.bf16.msra.mxu0 %v3784
  %5485 = vmatprep.subr.bf16.mxu0 %v3815
  %5486 = vmatpush2.bf16.msra.mxu0 %v3814
  %5487 = vmatprep.subr.bf16.mxu0 %v3813
  %5488 = vmatpush2.bf16.msra.mxu0 %v3812
  %5489 = vmatprep.subr.bf16.mxu0 %v3811
  %5490 = vmatpush2.bf16.msra.mxu0 %v3810
  %5491 = vmatprep.subr.bf16.mxu0 %v3809
  %5492 = vmatpush2.bf16.msra.mxu0 %v3808
  %5493 = vmatprep.subr.bf16.mxu0 %v3807
  %5494 = vmatpush2.bf16.msra.mxu0 %v3806
  %5495 = vmatprep.subr.bf16.mxu0 %v3805
  %5496 = vmatpush2.bf16.msra.mxu0 %v3804
  %5497 = vmatprep.subr.bf16.mxu0 %v3803
  %5498 = vmatpush2.bf16.msra.mxu0 %v3802
  %5499 = vmatprep.subr.bf16.mxu0 %v3801
  %5500 = vmatpush2.bf16.msra.mxu0 %v3800
  %5501 = vmatprep.mubr.bf16.mxu0 %v945
  %5502 = vmatmul.mubr.bf16.gmra.mxu0 %v944
  %v5503 = vpop.f32.mrf.mxu0
  %v5504 = vadd.f32 %v5463, %v5503
  %v5505 = vpop.f32.mrf.mxu0
  %v5506 = vadd.f32 %v5465, %v5505
  %v5507 = vpop.f32.mrf.mxu0
  %v5508 = vpop.f32.mrf.mxu0
  %5509 = vdwg.mxu0
  %5510 = vmatprep.subr.bf16.mxu0 %v3831
  %5511 = vmatpush1.bf16.msra.mxu0 %v3830
  %5512 = vmatprep.subr.bf16.mxu0 %v3829
  %5513 = vmatpush1.bf16.msra.mxu0 %v3828
  %5514 = vmatprep.subr.bf16.mxu0 %v3827
  %5515 = vmatpush1.bf16.msra.mxu0 %v3826
  %5516 = vmatprep.subr.bf16.mxu0 %v3825
  %5517 = vmatpush1.bf16.msra.mxu0 %v3824
  %5518 = vmatprep.subr.bf16.mxu0 %v3823
  %5519 = vmatpush1.bf16.msra.mxu0 %v3822
  %5520 = vmatprep.subr.bf16.mxu0 %v3821
  %5521 = vmatpush1.bf16.msra.mxu0 %v3820
  %5522 = vmatprep.subr.bf16.mxu0 %v3819
  %5523 = vmatpush1.bf16.msra.mxu0 %v3818
  %5524 = vmatprep.subr.bf16.mxu0 %v3817
  %5525 = vmatpush1.bf16.msra.mxu0 %v3816
  %5526 = vmatprep.subr.bf16.mxu0 %v3847
  %5527 = vmatpush2.bf16.msra.mxu0 %v3846
  %5528 = vmatprep.subr.bf16.mxu0 %v3845
  %5529 = vmatpush2.bf16.msra.mxu0 %v3844
  %5530 = vmatprep.subr.bf16.mxu0 %v3843
  %5531 = vmatpush2.bf16.msra.mxu0 %v3842
  %5532 = vmatprep.subr.bf16.mxu0 %v3841
  %5533 = vmatpush2.bf16.msra.mxu0 %v3840
  %5534 = vmatprep.subr.bf16.mxu0 %v3839
  %5535 = vmatpush2.bf16.msra.mxu0 %v3838
  %5536 = vmatprep.subr.bf16.mxu0 %v3837
  %5537 = vmatpush2.bf16.msra.mxu0 %v3836
  %5538 = vmatprep.subr.bf16.mxu0 %v3835
  %5539 = vmatpush2.bf16.msra.mxu0 %v3834
  %5540 = vmatprep.subr.bf16.mxu0 %v3833
  %5541 = vmatpush2.bf16.msra.mxu0 %v3832
  %5542 = vmatprep.mubr.bf16.mxu0 %v947
  %5543 = vmatmul.mubr.bf16.gmra.mxu0 %v946
  %v5544 = vpop.f32.mrf.mxu0
  %v5545 = vadd.f32 %v5504, %v5544
  %v5546 = vpop.f32.mrf.mxu0
  %v5547 = vadd.f32 %v5506, %v5546
  %v5548 = vpop.f32.mrf.mxu0
  %v5549 = vpop.f32.mrf.mxu0
  %5550 = vdwg.mxu0
  %5551 = vmatprep.subr.bf16.mxu0 %v3863
  %5552 = vmatpush1.bf16.msra.mxu0 %v3862
  %5553 = vmatprep.subr.bf16.mxu0 %v3861
  %5554 = vmatpush1.bf16.msra.mxu0 %v3860
  %5555 = vmatprep.subr.bf16.mxu0 %v3859
  %5556 = vmatpush1.bf16.msra.mxu0 %v3858
  %5557 = vmatprep.subr.bf16.mxu0 %v3857
  %5558 = vmatpush1.bf16.msra.mxu0 %v3856
  %5559 = vmatprep.subr.bf16.mxu0 %v3855
  %5560 = vmatpush1.bf16.msra.mxu0 %v3854
  %5561 = vmatprep.subr.bf16.mxu0 %v3853
  %5562 = vmatpush1.bf16.msra.mxu0 %v3852
  %5563 = vmatprep.subr.bf16.mxu0 %v3851
  %5564 = vmatpush1.bf16.msra.mxu0 %v3850
  %5565 = vmatprep.subr.bf16.mxu0 %v3849
  %5566 = vmatpush1.bf16.msra.mxu0 %v3848
  %5567 = vmatprep.subr.bf16.mxu0 %v3879
  %5568 = vmatpush2.bf16.msra.mxu0 %v3878
  %5569 = vmatprep.subr.bf16.mxu0 %v3877
  %5570 = vmatpush2.bf16.msra.mxu0 %v3876
  %5571 = vmatprep.subr.bf16.mxu0 %v3875
  %5572 = vmatpush2.bf16.msra.mxu0 %v3874
  %5573 = vmatprep.subr.bf16.mxu0 %v3873
  %5574 = vmatpush2.bf16.msra.mxu0 %v3872
  %5575 = vmatprep.subr.bf16.mxu0 %v3871
  %5576 = vmatpush2.bf16.msra.mxu0 %v3870
  %5577 = vmatprep.subr.bf16.mxu0 %v3869
  %5578 = vmatpush2.bf16.msra.mxu0 %v3868
  %5579 = vmatprep.subr.bf16.mxu0 %v3867
  %5580 = vmatpush2.bf16.msra.mxu0 %v3866
  %5581 = vmatprep.subr.bf16.mxu0 %v3865
  %5582 = vmatpush2.bf16.msra.mxu0 %v3864
  %5583 = vmatprep.mubr.bf16.mxu0 %v949
  %5584 = vmatmul.mubr.bf16.gmra.mxu0 %v948
  %v5585 = vpop.f32.mrf.mxu0
  %v5586 = vadd.f32 %v5545, %v5585
  %v5587 = vpop.f32.mrf.mxu0
  %v5588 = vadd.f32 %v5547, %v5587
  %v5589 = vpop.f32.mrf.mxu0
  %v5590 = vpop.f32.mrf.mxu0
  %5591 = vdwg.mxu0
  %5592 = vmatprep.subr.bf16.mxu0 %v3895
  %5593 = vmatpush1.bf16.msra.mxu0 %v3894
  %5594 = vmatprep.subr.bf16.mxu0 %v3893
  %5595 = vmatpush1.bf16.msra.mxu0 %v3892
  %5596 = vmatprep.subr.bf16.mxu0 %v3891
  %5597 = vmatpush1.bf16.msra.mxu0 %v3890
  %5598 = vmatprep.subr.bf16.mxu0 %v3889
  %5599 = vmatpush1.bf16.msra.mxu0 %v3888
  %5600 = vmatprep.subr.bf16.mxu0 %v3887
  %5601 = vmatpush1.bf16.msra.mxu0 %v3886
  %5602 = vmatprep.subr.bf16.mxu0 %v3885
  %5603 = vmatpush1.bf16.msra.mxu0 %v3884
  %5604 = vmatprep.subr.bf16.mxu0 %v3883
  %5605 = vmatpush1.bf16.msra.mxu0 %v3882
  %5606 = vmatprep.subr.bf16.mxu0 %v3881
  %5607 = vmatpush1.bf16.msra.mxu0 %v3880
  %5608 = vmatprep.subr.bf16.mxu0 %v3911
  %5609 = vmatpush2.bf16.msra.mxu0 %v3910
  %5610 = vmatprep.subr.bf16.mxu0 %v3909
  %5611 = vmatpush2.bf16.msra.mxu0 %v3908
  %5612 = vmatprep.subr.bf16.mxu0 %v3907
  %5613 = vmatpush2.bf16.msra.mxu0 %v3906
  %5614 = vmatprep.subr.bf16.mxu0 %v3905
  %5615 = vmatpush2.bf16.msra.mxu0 %v3904
  %5616 = vmatprep.subr.bf16.mxu0 %v3903
  %5617 = vmatpush2.bf16.msra.mxu0 %v3902
  %5618 = vmatprep.subr.bf16.mxu0 %v3901
  %5619 = vmatpush2.bf16.msra.mxu0 %v3900
  %5620 = vmatprep.subr.bf16.mxu0 %v3899
  %5621 = vmatpush2.bf16.msra.mxu0 %v3898
  %5622 = vmatprep.subr.bf16.mxu0 %v3897
  %5623 = vmatpush2.bf16.msra.mxu0 %v3896
  %5624 = vmatprep.mubr.bf16.mxu0 %v951
  %5625 = vmatmul.mubr.bf16.gmra.mxu0 %v950
  %v5626 = vpop.f32.mrf.mxu0
  %v5627 = vadd.f32 %v5586, %v5626
  %v5628 = vpop.f32.mrf.mxu0
  %v5629 = vadd.f32 %v5588, %v5628
  %v5630 = vpop.f32.mrf.mxu0
  %v5631 = vpop.f32.mrf.mxu0
  %5632 = vdwg.mxu0
  %5633 = vmatprep.subr.bf16.mxu0 %v3927
  %5634 = vmatpush1.bf16.msra.mxu0 %v3926
  %5635 = vmatprep.subr.bf16.mxu0 %v3925
  %5636 = vmatpush1.bf16.msra.mxu0 %v3924
  %5637 = vmatprep.subr.bf16.mxu0 %v3923
  %5638 = vmatpush1.bf16.msra.mxu0 %v3922
  %5639 = vmatprep.subr.bf16.mxu0 %v3921
  %5640 = vmatpush1.bf16.msra.mxu0 %v3920
  %5641 = vmatprep.subr.bf16.mxu0 %v3919
  %5642 = vmatpush1.bf16.msra.mxu0 %v3918
  %5643 = vmatprep.subr.bf16.mxu0 %v3917
  %5644 = vmatpush1.bf16.msra.mxu0 %v3916
  %5645 = vmatprep.subr.bf16.mxu0 %v3915
  %5646 = vmatpush1.bf16.msra.mxu0 %v3914
  %5647 = vmatprep.subr.bf16.mxu0 %v3913
  %5648 = vmatpush1.bf16.msra.mxu0 %v3912
  %5649 = vmatprep.subr.bf16.mxu0 %v3943
  %5650 = vmatpush2.bf16.msra.mxu0 %v3942
  %5651 = vmatprep.subr.bf16.mxu0 %v3941
  %5652 = vmatpush2.bf16.msra.mxu0 %v3940
  %5653 = vmatprep.subr.bf16.mxu0 %v3939
  %5654 = vmatpush2.bf16.msra.mxu0 %v3938
  %5655 = vmatprep.subr.bf16.mxu0 %v3937
  %5656 = vmatpush2.bf16.msra.mxu0 %v3936
  %5657 = vmatprep.subr.bf16.mxu0 %v3935
  %5658 = vmatpush2.bf16.msra.mxu0 %v3934
  %5659 = vmatprep.subr.bf16.mxu0 %v3933
  %5660 = vmatpush2.bf16.msra.mxu0 %v3932
  %5661 = vmatprep.subr.bf16.mxu0 %v3931
  %5662 = vmatpush2.bf16.msra.mxu0 %v3930
  %5663 = vmatprep.subr.bf16.mxu0 %v3929
  %5664 = vmatpush2.bf16.msra.mxu0 %v3928
  %5665 = vmatprep.mubr.bf16.mxu0 %v953
  %5666 = vmatmul.mubr.bf16.gmra.mxu0 %v952
  %v5667 = vpop.f32.mrf.mxu0
  %v5668 = vadd.f32 %v5627, %v5667
  %v5669 = vpop.f32.mrf.mxu0
  %v5670 = vadd.f32 %v5629, %v5669
  %v5671 = vpop.f32.mrf.mxu0
  %v5672 = vpop.f32.mrf.mxu0
  %5673 = vdwg.mxu0
  %5674 = vmatprep.subr.bf16.mxu0 %v3959
  %5675 = vmatpush1.bf16.msra.mxu0 %v3958
  %5676 = vmatprep.subr.bf16.mxu0 %v3957
  %5677 = vmatpush1.bf16.msra.mxu0 %v3956
  %5678 = vmatprep.subr.bf16.mxu0 %v3955
  %5679 = vmatpush1.bf16.msra.mxu0 %v3954
  %5680 = vmatprep.subr.bf16.mxu0 %v3953
  %5681 = vmatpush1.bf16.msra.mxu0 %v3952
  %5682 = vmatprep.subr.bf16.mxu0 %v3951
  %5683 = vmatpush1.bf16.msra.mxu0 %v3950
  %5684 = vmatprep.subr.bf16.mxu0 %v3949
  %5685 = vmatpush1.bf16.msra.mxu0 %v3948
  %5686 = vmatprep.subr.bf16.mxu0 %v3947
  %5687 = vmatpush1.bf16.msra.mxu0 %v3946
  %5688 = vmatprep.subr.bf16.mxu0 %v3945
  %5689 = vmatpush1.bf16.msra.mxu0 %v3944
  %5690 = vmatprep.subr.bf16.mxu0 %v3975
  %5691 = vmatpush2.bf16.msra.mxu0 %v3974
  %5692 = vmatprep.subr.bf16.mxu0 %v3973
  %5693 = vmatpush2.bf16.msra.mxu0 %v3972
  %5694 = vmatprep.subr.bf16.mxu0 %v3971
  %5695 = vmatpush2.bf16.msra.mxu0 %v3970
  %5696 = vmatprep.subr.bf16.mxu0 %v3969
  %5697 = vmatpush2.bf16.msra.mxu0 %v3968
  %5698 = vmatprep.subr.bf16.mxu0 %v3967
  %5699 = vmatpush2.bf16.msra.mxu0 %v3966
  %5700 = vmatprep.subr.bf16.mxu0 %v3965
  %5701 = vmatpush2.bf16.msra.mxu0 %v3964
  %5702 = vmatprep.subr.bf16.mxu0 %v3963
  %5703 = vmatpush2.bf16.msra.mxu0 %v3962
  %5704 = vmatprep.subr.bf16.mxu0 %v3961
  %5705 = vmatpush2.bf16.msra.mxu0 %v3960
  %5706 = vmatprep.mubr.bf16.mxu0 %v955
  %5707 = vmatmul.mubr.bf16.gmra.mxu0 %v954
  %v5708 = vpop.f32.mrf.mxu0
  %v5709 = vadd.f32 %v5668, %v5708
  %v5710 = vpop.f32.mrf.mxu0
  %v5711 = vadd.f32 %v5670, %v5710
  %v5712 = vpop.f32.mrf.mxu0
  %v5713 = vpop.f32.mrf.mxu0
  %5714 = vdwg.mxu0
  %5715 = vmatprep.subr.bf16.mxu0 %v3991
  %5716 = vmatpush1.bf16.msra.mxu0 %v3990
  %5717 = vmatprep.subr.bf16.mxu0 %v3989
  %5718 = vmatpush1.bf16.msra.mxu0 %v3988
  %5719 = vmatprep.subr.bf16.mxu0 %v3987
  %5720 = vmatpush1.bf16.msra.mxu0 %v3986
  %5721 = vmatprep.subr.bf16.mxu0 %v3985
  %5722 = vmatpush1.bf16.msra.mxu0 %v3984
  %5723 = vmatprep.subr.bf16.mxu0 %v3983
  %5724 = vmatpush1.bf16.msra.mxu0 %v3982
  %5725 = vmatprep.subr.bf16.mxu0 %v3981
  %5726 = vmatpush1.bf16.msra.mxu0 %v3980
  %5727 = vmatprep.subr.bf16.mxu0 %v3979
  %5728 = vmatpush1.bf16.msra.mxu0 %v3978
  %5729 = vmatprep.subr.bf16.mxu0 %v3977
  %5730 = vmatpush1.bf16.msra.mxu0 %v3976
  %5731 = vmatprep.subr.bf16.mxu0 %v4007
  %5732 = vmatpush2.bf16.msra.mxu0 %v4006
  %5733 = vmatprep.subr.bf16.mxu0 %v4005
  %5734 = vmatpush2.bf16.msra.mxu0 %v4004
  %5735 = vmatprep.subr.bf16.mxu0 %v4003
  %5736 = vmatpush2.bf16.msra.mxu0 %v4002
  %5737 = vmatprep.subr.bf16.mxu0 %v4001
  %5738 = vmatpush2.bf16.msra.mxu0 %v4000
  %5739 = vmatprep.subr.bf16.mxu0 %v3999
  %5740 = vmatpush2.bf16.msra.mxu0 %v3998
  %5741 = vmatprep.subr.bf16.mxu0 %v3997
  %5742 = vmatpush2.bf16.msra.mxu0 %v3996
  %5743 = vmatprep.subr.bf16.mxu0 %v3995
  %5744 = vmatpush2.bf16.msra.mxu0 %v3994
  %5745 = vmatprep.subr.bf16.mxu0 %v3993
  %5746 = vmatpush2.bf16.msra.mxu0 %v3992
  %5747 = vmatprep.mubr.bf16.mxu0 %v957
  %5748 = vmatmul.mubr.bf16.gmra.mxu0 %v956
  %v5749 = vpop.f32.mrf.mxu0
  %v5750 = vadd.f32 %v5709, %v5749
  %v5751 = vpop.f32.mrf.mxu0
  %v5752 = vadd.f32 %v5711, %v5751
  %v5753 = vpop.f32.mrf.mxu0
  %v5754 = vpop.f32.mrf.mxu0
  %5755 = vdwg.mxu0
  %5756 = vmatprep.subr.bf16.mxu0 %v4023
  %5757 = vmatpush1.bf16.msra.mxu0 %v4022
  %5758 = vmatprep.subr.bf16.mxu0 %v4021
  %5759 = vmatpush1.bf16.msra.mxu0 %v4020
  %5760 = vmatprep.subr.bf16.mxu0 %v4019
  %5761 = vmatpush1.bf16.msra.mxu0 %v4018
  %5762 = vmatprep.subr.bf16.mxu0 %v4017
  %5763 = vmatpush1.bf16.msra.mxu0 %v4016
  %5764 = vmatprep.subr.bf16.mxu0 %v4015
  %5765 = vmatpush1.bf16.msra.mxu0 %v4014
  %5766 = vmatprep.subr.bf16.mxu0 %v4013
  %5767 = vmatpush1.bf16.msra.mxu0 %v4012
  %5768 = vmatprep.subr.bf16.mxu0 %v4011
  %5769 = vmatpush1.bf16.msra.mxu0 %v4010
  %5770 = vmatprep.subr.bf16.mxu0 %v4009
  %5771 = vmatpush1.bf16.msra.mxu0 %v4008
  %5772 = vmatprep.subr.bf16.mxu0 %v4039
  %5773 = vmatpush2.bf16.msra.mxu0 %v4038
  %5774 = vmatprep.subr.bf16.mxu0 %v4037
  %5775 = vmatpush2.bf16.msra.mxu0 %v4036
  %5776 = vmatprep.subr.bf16.mxu0 %v4035
  %5777 = vmatpush2.bf16.msra.mxu0 %v4034
  %5778 = vmatprep.subr.bf16.mxu0 %v4033
  %5779 = vmatpush2.bf16.msra.mxu0 %v4032
  %5780 = vmatprep.subr.bf16.mxu0 %v4031
  %5781 = vmatpush2.bf16.msra.mxu0 %v4030
  %5782 = vmatprep.subr.bf16.mxu0 %v4029
  %5783 = vmatpush2.bf16.msra.mxu0 %v4028
  %5784 = vmatprep.subr.bf16.mxu0 %v4027
  %5785 = vmatpush2.bf16.msra.mxu0 %v4026
  %5786 = vmatprep.subr.bf16.mxu0 %v4025
  %5787 = vmatpush2.bf16.msra.mxu0 %v4024
  %5788 = vmatprep.mubr.bf16.mxu0 %v959
  %5789 = vmatmul.mubr.bf16.gmra.mxu0 %v958
  %v5790 = vpop.f32.mrf.mxu0
  %v5791 = vadd.f32 %v5750, %v5790
  %v5792 = vpop.f32.mrf.mxu0
  %v5793 = vadd.f32 %v5752, %v5792
  %v5794 = vpop.f32.mrf.mxu0
  %v5795 = vpop.f32.mrf.mxu0
  %5796 = vdwg.mxu0
  %5797 = vmatprep.subr.bf16.mxu0 %v4055
  %5798 = vmatpush1.bf16.msra.mxu0 %v4054
  %5799 = vmatprep.subr.bf16.mxu0 %v4053
  %5800 = vmatpush1.bf16.msra.mxu0 %v4052
  %5801 = vmatprep.subr.bf16.mxu0 %v4051
  %5802 = vmatpush1.bf16.msra.mxu0 %v4050
  %5803 = vmatprep.subr.bf16.mxu0 %v4049
  %5804 = vmatpush1.bf16.msra.mxu0 %v4048
  %5805 = vmatprep.subr.bf16.mxu0 %v4047
  %5806 = vmatpush1.bf16.msra.mxu0 %v4046
  %5807 = vmatprep.subr.bf16.mxu0 %v4045
  %5808 = vmatpush1.bf16.msra.mxu0 %v4044
  %5809 = vmatprep.subr.bf16.mxu0 %v4043
  %5810 = vmatpush1.bf16.msra.mxu0 %v4042
  %5811 = vmatprep.subr.bf16.mxu0 %v4041
  %5812 = vmatpush1.bf16.msra.mxu0 %v4040
  %5813 = vmatprep.subr.bf16.mxu0 %v4071
  %5814 = vmatpush2.bf16.msra.mxu0 %v4070
  %5815 = vmatprep.subr.bf16.mxu0 %v4069
  %5816 = vmatpush2.bf16.msra.mxu0 %v4068
  %5817 = vmatprep.subr.bf16.mxu0 %v4067
  %5818 = vmatpush2.bf16.msra.mxu0 %v4066
  %5819 = vmatprep.subr.bf16.mxu0 %v4065
  %5820 = vmatpush2.bf16.msra.mxu0 %v4064
  %5821 = vmatprep.subr.bf16.mxu0 %v4063
  %5822 = vmatpush2.bf16.msra.mxu0 %v4062
  %5823 = vmatprep.subr.bf16.mxu0 %v4061
  %5824 = vmatpush2.bf16.msra.mxu0 %v4060
  %5825 = vmatprep.subr.bf16.mxu0 %v4059
  %5826 = vmatpush2.bf16.msra.mxu0 %v4058
  %5827 = vmatprep.subr.bf16.mxu0 %v4057
  %5828 = vmatpush2.bf16.msra.mxu0 %v4056
  %5829 = vmatprep.mubr.bf16.mxu0 %v961
  %5830 = vmatmul.mubr.bf16.gmra.mxu0 %v960
  %v5831 = vpop.f32.mrf.mxu0
  %v5832 = vadd.f32 %v5791, %v5831
  %v5833 = vpop.f32.mrf.mxu0
  %v5834 = vadd.f32 %v5793, %v5833
  %v5835 = vpop.f32.mrf.mxu0
  %v5836 = vpop.f32.mrf.mxu0
  %5837 = vdwg.mxu0
  %5838 = vmatprep.subr.bf16.mxu0 %v4087
  %5839 = vmatpush1.bf16.msra.mxu0 %v4086
  %5840 = vmatprep.subr.bf16.mxu0 %v4085
  %5841 = vmatpush1.bf16.msra.mxu0 %v4084
  %5842 = vmatprep.subr.bf16.mxu0 %v4083
  %5843 = vmatpush1.bf16.msra.mxu0 %v4082
  %5844 = vmatprep.subr.bf16.mxu0 %v4081
  %5845 = vmatpush1.bf16.msra.mxu0 %v4080
  %5846 = vmatprep.subr.bf16.mxu0 %v4079
  %5847 = vmatpush1.bf16.msra.mxu0 %v4078
  %5848 = vmatprep.subr.bf16.mxu0 %v4077
  %5849 = vmatpush1.bf16.msra.mxu0 %v4076
  %5850 = vmatprep.subr.bf16.mxu0 %v4075
  %5851 = vmatpush1.bf16.msra.mxu0 %v4074
  %5852 = vmatprep.subr.bf16.mxu0 %v4073
  %5853 = vmatpush1.bf16.msra.mxu0 %v4072
  %5854 = vmatprep.subr.bf16.mxu0 %v4103
  %5855 = vmatpush2.bf16.msra.mxu0 %v4102
  %5856 = vmatprep.subr.bf16.mxu0 %v4101
  %5857 = vmatpush2.bf16.msra.mxu0 %v4100
  %5858 = vmatprep.subr.bf16.mxu0 %v4099
  %5859 = vmatpush2.bf16.msra.mxu0 %v4098
  %5860 = vmatprep.subr.bf16.mxu0 %v4097
  %5861 = vmatpush2.bf16.msra.mxu0 %v4096
  %5862 = vmatprep.subr.bf16.mxu0 %v4095
  %5863 = vmatpush2.bf16.msra.mxu0 %v4094
  %5864 = vmatprep.subr.bf16.mxu0 %v4093
  %5865 = vmatpush2.bf16.msra.mxu0 %v4092
  %5866 = vmatprep.subr.bf16.mxu0 %v4091
  %5867 = vmatpush2.bf16.msra.mxu0 %v4090
  %5868 = vmatprep.subr.bf16.mxu0 %v4089
  %5869 = vmatpush2.bf16.msra.mxu0 %v4088
  %5870 = vmatprep.mubr.bf16.mxu0 %v963
  %5871 = vmatmul.mubr.bf16.gmra.mxu0 %v962
  %v5872 = vpop.f32.mrf.mxu0
  %v5873 = vadd.f32 %v5832, %v5872
  %v5874 = vpop.f32.mrf.mxu0
  %v5875 = vadd.f32 %v5834, %v5874
  %v5876 = vpop.f32.mrf.mxu0
  %v5877 = vpop.f32.mrf.mxu0
  %5878 = vdwg.mxu0
  %5879 = vmatprep.subr.bf16.mxu0 %v4119
  %5880 = vmatpush1.bf16.msra.mxu0 %v4118
  %5881 = vmatprep.subr.bf16.mxu0 %v4117
  %5882 = vmatpush1.bf16.msra.mxu0 %v4116
  %5883 = vmatprep.subr.bf16.mxu0 %v4115
  %5884 = vmatpush1.bf16.msra.mxu0 %v4114
  %5885 = vmatprep.subr.bf16.mxu0 %v4113
  %5886 = vmatpush1.bf16.msra.mxu0 %v4112
  %5887 = vmatprep.subr.bf16.mxu0 %v4111
  %5888 = vmatpush1.bf16.msra.mxu0 %v4110
  %5889 = vmatprep.subr.bf16.mxu0 %v4109
  %5890 = vmatpush1.bf16.msra.mxu0 %v4108
  %5891 = vmatprep.subr.bf16.mxu0 %v4107
  %5892 = vmatpush1.bf16.msra.mxu0 %v4106
  %5893 = vmatprep.subr.bf16.mxu0 %v4105
  %5894 = vmatpush1.bf16.msra.mxu0 %v4104
  %5895 = vmatprep.subr.bf16.mxu0 %v4135
  %5896 = vmatpush2.bf16.msra.mxu0 %v4134
  %5897 = vmatprep.subr.bf16.mxu0 %v4133
  %5898 = vmatpush2.bf16.msra.mxu0 %v4132
  %5899 = vmatprep.subr.bf16.mxu0 %v4131
  %5900 = vmatpush2.bf16.msra.mxu0 %v4130
  %5901 = vmatprep.subr.bf16.mxu0 %v4129
  %5902 = vmatpush2.bf16.msra.mxu0 %v4128
  %5903 = vmatprep.subr.bf16.mxu0 %v4127
  %5904 = vmatpush2.bf16.msra.mxu0 %v4126
  %5905 = vmatprep.subr.bf16.mxu0 %v4125
  %5906 = vmatpush2.bf16.msra.mxu0 %v4124
  %5907 = vmatprep.subr.bf16.mxu0 %v4123
  %5908 = vmatpush2.bf16.msra.mxu0 %v4122
  %5909 = vmatprep.subr.bf16.mxu0 %v4121
  %5910 = vmatpush2.bf16.msra.mxu0 %v4120
  %5911 = vmatprep.mubr.bf16.mxu0 %v965
  %5912 = vmatmul.mubr.bf16.gmra.mxu0 %v964
  %v5913 = vpop.f32.mrf.mxu0
  %v5914 = vadd.f32 %v5873, %v5913
  %v5915 = vpop.f32.mrf.mxu0
  %v5916 = vadd.f32 %v5875, %v5915
  %v5917 = vpop.f32.mrf.mxu0
  %v5918 = vpop.f32.mrf.mxu0
  %5919 = vdwg.mxu0
  %5920 = vmatprep.subr.bf16.mxu0 %v4151
  %5921 = vmatpush1.bf16.msra.mxu0 %v4150
  %5922 = vmatprep.subr.bf16.mxu0 %v4149
  %5923 = vmatpush1.bf16.msra.mxu0 %v4148
  %5924 = vmatprep.subr.bf16.mxu0 %v4147
  %5925 = vmatpush1.bf16.msra.mxu0 %v4146
  %5926 = vmatprep.subr.bf16.mxu0 %v4145
  %5927 = vmatpush1.bf16.msra.mxu0 %v4144
  %5928 = vmatprep.subr.bf16.mxu0 %v4143
  %5929 = vmatpush1.bf16.msra.mxu0 %v4142
  %5930 = vmatprep.subr.bf16.mxu0 %v4141
  %5931 = vmatpush1.bf16.msra.mxu0 %v4140
  %5932 = vmatprep.subr.bf16.mxu0 %v4139
  %5933 = vmatpush1.bf16.msra.mxu0 %v4138
  %5934 = vmatprep.subr.bf16.mxu0 %v4137
  %5935 = vmatpush1.bf16.msra.mxu0 %v4136
  %5936 = vmatprep.subr.bf16.mxu0 0
  %5937 = vmatpush2.bf16.msra.mxu0 0
  %5938 = vmatprep.subr.bf16.mxu0 0
  %5939 = vmatpush2.bf16.msra.mxu0 0
  %5940 = vmatprep.subr.bf16.mxu0 0
  %5941 = vmatpush2.bf16.msra.mxu0 0
  %5942 = vmatprep.subr.bf16.mxu0 0
  %5943 = vmatpush2.bf16.msra.mxu0 0
  %5944 = vmatprep.subr.bf16.mxu0 0
  %5945 = vmatpush2.bf16.msra.mxu0 0
  %5946 = vmatprep.subr.bf16.mxu0 0
  %5947 = vmatpush2.bf16.msra.mxu0 0
  %5948 = vmatprep.subr.bf16.mxu0 0
  %5949 = vmatpush2.bf16.msra.mxu0 0
  %5950 = vmatprep.subr.bf16.mxu0 0
  %5951 = vmatpush2.bf16.msra.mxu0 0
  %5952 = vmatprep.mubr.bf16.mxu0 0
  %5953 = vmatmul.mubr.bf16.gmra.mxu0 %v966
  %v5954 = vpop.f32.mrf.mxu0
  %v5955 = vadd.f32 %v5914, %v5954
  %v5956 = vpop.f32.mrf.mxu0
  %v5957 = vadd.f32 %v5916, %v5956
  %v5958 = vpop.f32.mrf.mxu0
  %v5959 = vpop.f32.mrf.mxu0
  %5960 = vdwg.mxu0
  %v5961 = vmax.f32 %v5955, 0.0
  %v5962 = vmax.f32 %v5957, 0.0
  %v5963 = vld [vmem:[%s3] sm:$0x3]
  %v5965 = vlaneseq
  %v5966 = vshrl.u32 %v5965, 7
  %v5967 = vsub.s32 0, %v5966
  %v5968 = vrot.slane %v5963, %v5967
  %v5969 = vlaneseq
  %v5970 = vshrl.u32 %v5969, 7
  %v5971 = vsub.s32 1, %v5970
  %v5972 = vrot.slane %v5963, %v5971
  %v5975 = vmul.f32 %v5961, %v5968
  %v5976 = vmul.f32 %v5962, %v5972
  %v5977 = vadd.f32 %v5975, %v5976
  %5978 = vadd.xlane.f32.xlu0 %v5977
  %v5979 = vpop.xlane.xlu0 %5978
  %v5980 = vld [vmem:[#allocation2] sm:$0x1]
  %v5982 = vlaneseq
  %v5983 = vshrl.u32 %v5982, 7
  %v5984 = vsub.s32 0, %v5983
  %v5985 = vrot.slane %v5980, %v5984
  %v5987 = vadd.f32 %v5979, %v5985
  %v5988 = vsub.f32 0.0, %v5987
  %v5989 = vmul.f32 %v5988, 1.442695
  %v5990 = vpow.pop %v5989
  %v5991 = vadd.f32 %v5990, 1.0
  %v5992 = vrcp.pop %v5991
  %vm5993 = vcmask 7168
  %5994 = vst.msk [vmem:[%s5] sm:$0xff] %vm5993, %v5992
  // Predicated region
  $region22: #{netd_forward.9} parent=0 // pred_check
    _
  $region23: #{netd_forward.9} parent=0 // pred_check_branch
    %5996 = sbr.rel (0) target = $region25
  $region24: #{netd_forward.9} parent=0 // pred_region
    _
  $region25: #{netd_forward.9} parent=0 // pred_fallthru
    _
  // Predicated region
  $region26: #{netd_forward.9} parent=0 // pred_check
    _
  $region27: #{netd_forward.9} parent=0 // pred_check_branch
    %5998 = sbr.rel (0) target = $region29
  $region28: #{netd_forward.9} parent=0 // pred_region
    _
  $region29: #{netd_forward.9} parent=0 // pred_fallthru
    _

</llo_original>
